<compile_context>
chip_gen: v7x
topology: tpu7x:2x2x1
jax: 0.10.0
libtpu: 0.0.40
codegen_flags: <defaults>
</compile_context>

<pallas_src>
import jax
import jax.numpy as jnp
import numpy as np
from jax.experimental import pallas as pl
from jax.experimental.pallas import tpu as pltpu

BN_EPS = 1e-5
LRELU_SLOPE = 0.1

_VMEM = pl.BlockSpec(memory_space=pltpu.MemorySpace.VMEM)


# ---------------------------------------------------------------------------
# Pallas kernels
# ---------------------------------------------------------------------------
def conv_bn_kernel(p_ref, w_ref, b_ref, g_ref, beta_ref, o_ref):
    """Fused conv(matmul)+bias+LeakyReLU+BatchNorm (training-mode batch stats).

    p:[P,K]  w:[K,C]  b,g,beta:[1,C]  o:[P,C]
    """
    z = jnp.dot(p_ref[...], w_ref[...], preferred_element_type=jnp.float32)
    z = z + b_ref[...]
    a = jnp.maximum(z, LRELU_SLOPE * z)
    # Single-pass statistics: var = E[x^2] - mean^2.
    inv_p = 1.0 / a.shape[0]
    mean = jnp.sum(a, axis=0, keepdims=True) * inv_p
    ex2 = jnp.sum(a * a, axis=0, keepdims=True) * inv_p
    var = ex2 - mean * mean
    inv = jax.lax.rsqrt(var + BN_EPS)
    o_ref[...] = (a - mean) * (inv * g_ref[...]) + beta_ref[...]


def conv_lrelu_kernel(p_ref, w_ref, b_ref, o_ref):
    """Fused conv(matmul)+bias+LeakyReLU (no BN)."""
    z = jnp.dot(p_ref[...], w_ref[...], preferred_element_type=jnp.float32)
    z = z + b_ref[...]
    o_ref[...] = jnp.maximum(z, LRELU_SLOPE * z)


def conv_heads_kernel(p_ref, w_ref, b_ref, wh_ref, bh_ref, o_ref):
    """Final conv (spatially 1x1) + LeakyReLU + fused mu/logvar heads.

    p:[N,K]  w:[K,C]  b:[1,C]  wh:[C,2L]  bh:[1,2L]  o:[N,2L]
    """
    z = jnp.dot(p_ref[...], w_ref[...], preferred_element_type=jnp.float32)
    z = z + b_ref[...]
    a = jnp.maximum(z, LRELU_SLOPE * z)          # == flattened features (1x1 spatial)
    o_ref[...] = jnp.dot(a, wh_ref[...], preferred_element_type=jnp.float32) + bh_ref[...]


def heads_kernel(x_ref, wh_ref, bh_ref, o_ref):
    """Fallback fused mu/logvar heads on pre-flattened features."""
    o_ref[...] = (jnp.dot(x_ref[...], wh_ref[...], preferred_element_type=jnp.float32)
                  + bh_ref[...])


# ---------------------------------------------------------------------------
# JAX glue (patch extraction / parameter plumbing)
# ---------------------------------------------------------------------------
def _im2col(x_nhwc, kh, kw, stride, ph, pw):
    """x:(N,H,W,C) -> patches:(N*Ho*Wo, kh*kw*C) in native (kernel-pos, C) order."""
    n, h, w, c = x_nhwc.shape
    xp = jnp.pad(x_nhwc, ((0, 0), (ph, ph), (pw, pw), (0, 0)))
    ho = (h + 2 * ph - kh) // stride + 1
    wo = (w + 2 * pw - kw) // stride + 1
    cols = []
    for i in range(kh):
        for j in range(kw):
            cols.append(xp[:, i:i + stride * ho:stride, j:j + stride * wo:stride, :])
    p = jnp.stack(cols, axis=3)                  # (N,Ho,Wo,kh*kw,C) — no transpose
    return p.reshape(n * ho * wo, kh * kw * c), ho, wo


def _conv_weight_2d(w_oihw):
    """(Cout,Cin,kh,kw) -> (kh*kw*Cin, Cout) matching _im2col ordering."""
    cout, cin, kh, kw = w_oihw.shape
    return jnp.transpose(w_oihw, (2, 3, 1, 0)).reshape(kh * kw * cin, cout)


# ---------------------------------------------------------------------------
# Parameters (deterministic, synthetic)
# ---------------------------------------------------------------------------
CONV_CFG = [
    # (cin, cout, kh, kw, stride, (ph, pw), has_bn_after)
    (1,   32, 3, 3, 2, (0, 0), True),
    (32,  32, 3, 4, 2, (1, 1), True),
    (32,  64, 3, 4, 2, (0, 1), True),
    (64, 128, 4, 4, 2, (1, 1), True),
    (128, 128, 4, 4, 2, (1, 1), False),
]


def init_params(key, latent_dims, n_features):
    params = {"conv": [], "bn": []}
    for (cin, cout, kh, kw, _, _, has_bn) in CONV_CFG:
        key, kw_, kb_ = jax.random.split(key, 3)
        fan_in = cin * kh * kw
        w = jax.random.normal(kw_, (cout, cin, kh, kw), jnp.float32) / np.sqrt(fan_in)
        b = jax.random.normal(kb_, (cout,), jnp.float32) * 0.01
        params["conv"].append((w, b))
        if has_bn:
            # PyTorch default init: gamma=1, beta=0
            params["bn"].append((jnp.ones((cout,), jnp.float32),
                                 jnp.zeros((cout,), jnp.float32)))
        else:
            params["bn"].append(None)
    key, k1, k2, k3, k4 = jax.random.split(key, 5)
    params["w_mu"] = jax.random.normal(k1, (latent_dims, n_features), jnp.float32) / np.sqrt(n_features)
    params["b_mu"] = jax.random.normal(k2, (latent_dims,), jnp.float32) * 0.01
    params["w_lv"] = jax.random.normal(k3, (latent_dims, n_features), jnp.float32) / np.sqrt(n_features)
    params["b_lv"] = jax.random.normal(k4, (latent_dims,), jnp.float32) * 0.01
    # Pre-transposed, concatenated head weights: one (F, 2*latent) matmul.
    params["w_heads"] = jnp.concatenate([params["w_mu"].T, params["w_lv"].T], axis=1)
    params["b_heads"] = jnp.concatenate([params["b_mu"], params["b_lv"]]).reshape(1, 2 * latent_dims)
    return params


# ---------------------------------------------------------------------------
# Encoder forward (Pallas)
# ---------------------------------------------------------------------------
def encoder_forward(params, x_nchw):
    latent = params["w_heads"].shape[1] // 2
    x = jnp.transpose(x_nchw, (0, 2, 3, 1)).astype(jnp.float32)   # NCHW -> NHWC
    n_layers = len(CONV_CFG)

    for idx, (cin, cout, kh, kw, stride, (ph, pw), has_bn) in enumerate(CONV_CFG):
        w, b = params["conv"][idx]
        patches, ho, wo = _im2col(x, kh, kw, stride, ph, pw)
        w2 = _conv_weight_2d(w)
        b2 = b.reshape(1, cout)
        p_rows = patches.shape[0]
        is_last = idx == n_layers - 1

        if has_bn:
            gamma, beta = params["bn"][idx]
            out = pl.pallas_call(
                conv_bn_kernel,
                out_shape=jax.ShapeDtypeStruct((p_rows, cout), jnp.float32),
                in_specs=[_VMEM] * 5,
                out_specs=_VMEM,
            )(patches, w2, b2, gamma.reshape(1, cout), beta.reshape(1, cout))
            x = out.reshape(x.shape[0], ho, wo, cout)
        elif is_last and ho == 1 and wo == 1:
            # Spatially 1x1 -> flatten is identity; fuse conv + heads.
            out = pl.pallas_call(
                conv_heads_kernel,
                out_shape=jax.ShapeDtypeStruct((p_rows, 2 * latent), jnp.float32),
                in_specs=[_VMEM] * 5,
                out_specs=_VMEM,
            )(patches, w2, b2, params["w_heads"], params["b_heads"])
            return out[:, :latent], out[:, latent:]
        else:
            out = pl.pallas_call(
                conv_lrelu_kernel,
                out_shape=jax.ShapeDtypeStruct((p_rows, cout), jnp.float32),
                in_specs=[_VMEM] * 3,
                out_specs=_VMEM,
            )(patches, w2, b2)
            x = out.reshape(x.shape[0], ho, wo, cout)

    # General fallback: flatten with PyTorch (c, h, w) ordering, then fused heads.
    n = x.shape[0]
    feat = jnp.transpose(x, (0, 3, 1, 2)).reshape(n, -1)
    out = pl.pallas_call(
        heads_kernel,
        out_shape=jax.ShapeDtypeStruct((n, 2 * latent), jnp.float32),
        in_specs=[_VMEM] * 3,
        out_specs=_VMEM,
    )(feat, params["w_heads"], params["b_heads"])
    return out[:, :latent], out[:, latent:]


# ---------------------------------------------------------------------------
# Pure-JAX reference for verification
# ---------------------------------------------------------------------------
def encoder_reference(params, x_nchw):
    x = jnp.transpose(x_nchw, (0, 2, 3, 1)).astype(jnp.float32)
    for idx, (cin, cout, kh, kw, stride, pad, has_bn) in enumerate(CONV_CFG):
        w, b = params["conv"][idx]
        w_hwio = jnp.transpose(w, (2, 3, 1, 0))
        x = jax.lax.conv_general_dilated(
            x, w_hwio, window_strides=(stride, stride),
            padding=[(pad[0], pad[0]), (pad[1], pad[1])],
            dimension_numbers=("NHWC", "HWIO", "NHWC")) + b.reshape(1, 1, 1, cout)
        x = jnp.maximum(x, LRELU_SLOPE * x)
        if has_bn:
            gamma, beta = params["bn"][idx]
            mean = jnp.mean(x, axis=(0, 1, 2), keepdims=True)
            var = jnp.mean((x - mean) ** 2, axis=(0, 1, 2), keepdims=True)
            x = (x - mean) * jax.lax.rsqrt(var + BN_EPS) * gamma + beta
    n = x.shape[0]
    feat = jnp.transpose(x, (0, 3, 1, 2)).reshape(n, -1)
    mu = feat @ params["w_mu"].T + params["b_mu"]
    lv = feat @ params["w_lv"].T + params["b_lv"]
    return mu, lv


# ---------------------------------------------------------------------------
if __name__ == "__main__":
    batch, width, height = 2, 64, 64
    latent_dims = 16

    # Derive n_features exactly like the torch module does (conv chain math).
    h, w = width, height
    for (_, cout, kh, kw, s, (ph, pw), _) in CONV_CFG:
        h = (h + 2 * ph - kh) // s + 1
        w = (w + 2 * pw - kw) // s + 1
    n_features = CONV_CFG[-1][1] * h * w   # 128 * 1 * 1 = 128

    key = jax.random.PRNGKey(0)
    key, kx = jax.random.split(key)
    params = init_params(key, latent_dims, n_features)
    x = jax.random.normal(kx, (batch, 1, width, height), jnp.float32)

    mu, logvar = jax.jit(encoder_forward)(params, x)
    jax.block_until_ready((mu, logvar))

    mu_ref, lv_ref = encoder_reference(params, x)
    np.testing.assert_allclose(np.asarray(mu), np.asarray(mu_ref), rtol=1e-4, atol=1e-4)
    np.testing.assert_allclose(np.asarray(logvar), np.asarray(lv_ref), rtol=1e-4, atol=1e-4)

    assert mu.shape == (batch, latent_dims) and logvar.shape == (batch, latent_dims)
    print("KERNEL_OK")
</pallas_src>

<mosaic_0001>
module attributes {stable_mosaic.version = 11 : i64} {
  func.func @conv_bn_kernel(%arg0: memref<1922x9xf32, #tpu.memory_space<vmem>>, %arg1: memref<9x32xf32, #tpu.memory_space<vmem>>, %arg2: memref<1x32xf32, #tpu.memory_space<vmem>>, %arg3: memref<1x32xf32, #tpu.memory_space<vmem>>, %arg4: memref<1x32xf32, #tpu.memory_space<vmem>>, %arg5: memref<1922x32xf32, #tpu.memory_space<vmem>>) attributes {dimension_semantics = [], scalar_prefetch = 0 : i64, scratch_operands = 0 : i64, tpu.core_type = #tpu.core_type<tc>} {
    %c0 = arith.constant 0 : index
    %c0_0 = arith.constant 0 : index
    %0 = vector.load %arg0[%c0, %c0_0] : memref<1922x9xf32, #tpu.memory_space<vmem>>, vector<1922x9xf32>
    %c0_1 = arith.constant 0 : index
    %c0_2 = arith.constant 0 : index
    %1 = vector.load %arg1[%c0_1, %c0_2] : memref<9x32xf32, #tpu.memory_space<vmem>>, vector<9x32xf32>
    %cst = arith.constant dense<0.000000e+00> : vector<1922x32xf32>
    %2 = tpu.matmul %0, %1, %cst {dimension_numbers = #tpu.dot_dimension_numbers<[1], [0], [0], [1], [0, 0, 1, 1], [], []>} : vector<1922x9xf32>, vector<9x32xf32>, vector<1922x32xf32> -> vector<1922x32xf32>
    %c0_3 = arith.constant 0 : index
    %c0_4 = arith.constant 0 : index
    %3 = vector.load %arg2[%c0_3, %c0_4] : memref<1x32xf32, #tpu.memory_space<vmem>>, vector<1x32xf32>
    %4 = vector.broadcast %3 : vector<1x32xf32> to vector<1922x32xf32>
    %5 = arith.addf %2, %4 : vector<1922x32xf32>
    %cst_5 = arith.constant 1.000000e-01 : f32
    %6 = vector.broadcast %cst_5 : f32 to vector<1922x32xf32>
    %7 = arith.mulf %6, %5 : vector<1922x32xf32>
    %8 = arith.maximumf %5, %7 : vector<1922x32xf32>
    %cst_6 = arith.constant dense<0.000000e+00> : vector<32xf32>
    %9 = vector.multi_reduction <add>, %8, %cst_6 [0] : vector<1922x32xf32> to vector<32xf32>
    %10 = vector.shape_cast %9 : vector<32xf32> to vector<1x32xf32>
    %cst_7 = arith.constant 5.20291389E-4 : f32
    %11 = vector.broadcast %cst_7 : f32 to vector<1x32xf32>
    %12 = arith.mulf %10, %11 : vector<1x32xf32>
    %13 = arith.mulf %8, %8 : vector<1922x32xf32>
    %cst_8 = arith.constant dense<0.000000e+00> : vector<32xf32>
    %14 = vector.multi_reduction <add>, %13, %cst_8 [0] : vector<1922x32xf32> to vector<32xf32>
    %15 = vector.shape_cast %14 : vector<32xf32> to vector<1x32xf32>
    %cst_9 = arith.constant 5.20291389E-4 : f32
    %16 = vector.broadcast %cst_9 : f32 to vector<1x32xf32>
    %17 = arith.mulf %15, %16 : vector<1x32xf32>
    %18 = arith.mulf %12, %12 : vector<1x32xf32>
    %19 = arith.subf %17, %18 : vector<1x32xf32>
    %cst_10 = arith.constant 9.99999974E-6 : f32
    %20 = vector.broadcast %cst_10 : f32 to vector<1x32xf32>
    %21 = arith.addf %19, %20 : vector<1x32xf32>
    %22 = math.rsqrt %21 : vector<1x32xf32>
    %23 = vector.broadcast %12 : vector<1x32xf32> to vector<1922x32xf32>
    %24 = arith.subf %8, %23 : vector<1922x32xf32>
    %c0_11 = arith.constant 0 : index
    %c0_12 = arith.constant 0 : index
    %25 = vector.load %arg3[%c0_11, %c0_12] : memref<1x32xf32, #tpu.memory_space<vmem>>, vector<1x32xf32>
    %26 = arith.mulf %22, %25 : vector<1x32xf32>
    %27 = vector.broadcast %26 : vector<1x32xf32> to vector<1922x32xf32>
    %28 = arith.mulf %24, %27 : vector<1922x32xf32>
    %c0_13 = arith.constant 0 : index
    %c0_14 = arith.constant 0 : index
    %29 = vector.load %arg4[%c0_13, %c0_14] : memref<1x32xf32, #tpu.memory_space<vmem>>, vector<1x32xf32>
    %30 = vector.broadcast %29 : vector<1x32xf32> to vector<1922x32xf32>
    %31 = arith.addf %28, %30 : vector<1922x32xf32>
    %c0_15 = arith.constant 0 : index
    %c0_16 = arith.constant 0 : index
    %32 = vector.load %arg5[%c0_15, %c0_16] : memref<1922x32xf32, #tpu.memory_space<vmem>>, vector<1922x32xf32>
    tpu.vector_store %arg5[%c0_15, %c0_16], %31 {strides = array<i32>} : memref<1922x32xf32, #tpu.memory_space<vmem>>, vector<1922x32xf32>,
    return
  }
}

module attributes {stable_mosaic.version = 11 : i64} {
  func.func @conv_bn_kernel(%arg0: memref<480x384xf32, #tpu.memory_space<vmem>>, %arg1: memref<384x32xf32, #tpu.memory_space<vmem>>, %arg2: memref<1x32xf32, #tpu.memory_space<vmem>>, %arg3: memref<1x32xf32, #tpu.memory_space<vmem>>, %arg4: memref<1x32xf32, #tpu.memory_space<vmem>>, %arg5: memref<480x32xf32, #tpu.memory_space<vmem>>) attributes {dimension_semantics = [], scalar_prefetch = 0 : i64, scratch_operands = 0 : i64, tpu.core_type = #tpu.core_type<tc>} {
    %c0 = arith.constant 0 : index
    %c0_0 = arith.constant 0 : index
    %0 = vector.load %arg0[%c0, %c0_0] : memref<480x384xf32, #tpu.memory_space<vmem>>, vector<480x384xf32>
    %c0_1 = arith.constant 0 : index
    %c0_2 = arith.constant 0 : index
    %1 = vector.load %arg1[%c0_1, %c0_2] : memref<384x32xf32, #tpu.memory_space<vmem>>, vector<384x32xf32>
    %cst = arith.constant dense<0.000000e+00> : vector<480x32xf32>
    %2 = tpu.matmul %0, %1, %cst {dimension_numbers = #tpu.dot_dimension_numbers<[1], [0], [0], [1], [0, 0, 1, 1], [], []>} : vector<480x384xf32>, vector<384x32xf32>, vector<480x32xf32> -> vector<480x32xf32>
    %c0_3 = arith.constant 0 : index
    %c0_4 = arith.constant 0 : index
    %3 = vector.load %arg2[%c0_3, %c0_4] : memref<1x32xf32, #tpu.memory_space<vmem>>, vector<1x32xf32>
    %4 = vector.broadcast %3 : vector<1x32xf32> to vector<480x32xf32>
    %5 = arith.addf %2, %4 : vector<480x32xf32>
    %cst_5 = arith.constant 1.000000e-01 : f32
    %6 = vector.broadcast %cst_5 : f32 to vector<480x32xf32>
    %7 = arith.mulf %6, %5 : vector<480x32xf32>
    %8 = arith.maximumf %5, %7 : vector<480x32xf32>
    %cst_6 = arith.constant dense<0.000000e+00> : vector<32xf32>
    %9 = vector.multi_reduction <add>, %8, %cst_6 [0] : vector<480x32xf32> to vector<32xf32>
    %10 = vector.shape_cast %9 : vector<32xf32> to vector<1x32xf32>
    %cst_7 = arith.constant 0.00208333344 : f32
    %11 = vector.broadcast %cst_7 : f32 to vector<1x32xf32>
    %12 = arith.mulf %10, %11 : vector<1x32xf32>
    %13 = arith.mulf %8, %8 : vector<480x32xf32>
    %cst_8 = arith.constant dense<0.000000e+00> : vector<32xf32>
    %14 = vector.multi_reduction <add>, %13, %cst_8 [0] : vector<480x32xf32> to vector<32xf32>
    %15 = vector.shape_cast %14 : vector<32xf32> to vector<1x32xf32>
    %cst_9 = arith.constant 0.00208333344 : f32
    %16 = vector.broadcast %cst_9 : f32 to vector<1x32xf32>
    %17 = arith.mulf %15, %16 : vector<1x32xf32>
    %18 = arith.mulf %12, %12 : vector<1x32xf32>
    %19 = arith.subf %17, %18 : vector<1x32xf32>
    %cst_10 = arith.constant 9.99999974E-6 : f32
    %20 = vector.broadcast %cst_10 : f32 to vector<1x32xf32>
    %21 = arith.addf %19, %20 : vector<1x32xf32>
    %22 = math.rsqrt %21 : vector<1x32xf32>
    %23 = vector.broadcast %12 : vector<1x32xf32> to vector<480x32xf32>
    %24 = arith.subf %8, %23 : vector<480x32xf32>
    %c0_11 = arith.constant 0 : index
    %c0_12 = arith.constant 0 : index
    %25 = vector.load %arg3[%c0_11, %c0_12] : memref<1x32xf32, #tpu.memory_space<vmem>>, vector<1x32xf32>
    %26 = arith.mulf %22, %25 : vector<1x32xf32>
    %27 = vector.broadcast %26 : vector<1x32xf32> to vector<480x32xf32>
    %28 = arith.mulf %24, %27 : vector<480x32xf32>
    %c0_13 = arith.constant 0 : index
    %c0_14 = arith.constant 0 : index
    %29 = vector.load %arg4[%c0_13, %c0_14] : memref<1x32xf32, #tpu.memory_space<vmem>>, vector<1x32xf32>
    %30 = vector.broadcast %29 : vector<1x32xf32> to vector<480x32xf32>
    %31 = arith.addf %28, %30 : vector<480x32xf32>
    %c0_15 = arith.constant 0 : index
    %c0_16 = arith.constant 0 : index
    %32 = vector.load %arg5[%c0_15, %c0_16] : memref<480x32xf32, #tpu.memory_space<vmem>>, vector<480x32xf32>
    tpu.vector_store %arg5[%c0_15, %c0_16], %31 {strides = array<i32>} : memref<480x32xf32, #tpu.memory_space<vmem>>, vector<480x32xf32>,
    return
  }
}

module attributes {stable_mosaic.version = 11 : i64} {
  func.func @conv_bn_kernel(%arg0: memref<98x384xf32, #tpu.memory_space<vmem>>, %arg1: memref<384x64xf32, #tpu.memory_space<vmem>>, %arg2: memref<1x64xf32, #tpu.memory_space<vmem>>, %arg3: memref<1x64xf32, #tpu.memory_space<vmem>>, %arg4: memref<1x64xf32, #tpu.memory_space<vmem>>, %arg5: memref<98x64xf32, #tpu.memory_space<vmem>>) attributes {dimension_semantics = [], scalar_prefetch = 0 : i64, scratch_operands = 0 : i64, tpu.core_type = #tpu.core_type<tc>} {
    %c0 = arith.constant 0 : index
    %c0_0 = arith.constant 0 : index
    %0 = vector.load %arg0[%c0, %c0_0] : memref<98x384xf32, #tpu.memory_space<vmem>>, vector<98x384xf32>
    %c0_1 = arith.constant 0 : index
    %c0_2 = arith.constant 0 : index
    %1 = vector.load %arg1[%c0_1, %c0_2] : memref<384x64xf32, #tpu.memory_space<vmem>>, vector<384x64xf32>
    %cst = arith.constant dense<0.000000e+00> : vector<98x64xf32>
    %2 = tpu.matmul %0, %1, %cst {dimension_numbers = #tpu.dot_dimension_numbers<[1], [0], [0], [1], [0, 0, 1, 1], [], []>} : vector<98x384xf32>, vector<384x64xf32>, vector<98x64xf32> -> vector<98x64xf32>
    %c0_3 = arith.constant 0 : index
    %c0_4 = arith.constant 0 : index
    %3 = vector.load %arg2[%c0_3, %c0_4] : memref<1x64xf32, #tpu.memory_space<vmem>>, vector<1x64xf32>
    %4 = vector.broadcast %3 : vector<1x64xf32> to vector<98x64xf32>
    %5 = arith.addf %2, %4 : vector<98x64xf32>
    %cst_5 = arith.constant 1.000000e-01 : f32
    %6 = vector.broadcast %cst_5 : f32 to vector<98x64xf32>
    %7 = arith.mulf %6, %5 : vector<98x64xf32>
    %8 = arith.maximumf %5, %7 : vector<98x64xf32>
    %cst_6 = arith.constant dense<0.000000e+00> : vector<64xf32>
    %9 = vector.multi_reduction <add>, %8, %cst_6 [0] : vector<98x64xf32> to vector<64xf32>
    %10 = vector.shape_cast %9 : vector<64xf32> to vector<1x64xf32>
    %cst_7 = arith.constant 0.0102040814 : f32
    %11 = vector.broadcast %cst_7 : f32 to vector<1x64xf32>
    %12 = arith.mulf %10, %11 : vector<1x64xf32>
    %13 = arith.mulf %8, %8 : vector<98x64xf32>
    %cst_8 = arith.constant dense<0.000000e+00> : vector<64xf32>
    %14 = vector.multi_reduction <add>, %13, %cst_8 [0] : vector<98x64xf32> to vector<64xf32>
    %15 = vector.shape_cast %14 : vector<64xf32> to vector<1x64xf32>
    %cst_9 = arith.constant 0.0102040814 : f32
    %16 = vector.broadcast %cst_9 : f32 to vector<1x64xf32>
    %17 = arith.mulf %15, %16 : vector<1x64xf32>
    %18 = arith.mulf %12, %12 : vector<1x64xf32>
    %19 = arith.subf %17, %18 : vector<1x64xf32>
    %cst_10 = arith.constant 9.99999974E-6 : f32
    %20 = vector.broadcast %cst_10 : f32 to vector<1x64xf32>
    %21 = arith.addf %19, %20 : vector<1x64xf32>
    %22 = math.rsqrt %21 : vector<1x64xf32>
    %23 = vector.broadcast %12 : vector<1x64xf32> to vector<98x64xf32>
    %24 = arith.subf %8, %23 : vector<98x64xf32>
    %c0_11 = arith.constant 0 : index
    %c0_12 = arith.constant 0 : index
    %25 = vector.load %arg3[%c0_11, %c0_12] : memref<1x64xf32, #tpu.memory_space<vmem>>, vector<1x64xf32>
    %26 = arith.mulf %22, %25 : vector<1x64xf32>
    %27 = vector.broadcast %26 : vector<1x64xf32> to vector<98x64xf32>
    %28 = arith.mulf %24, %27 : vector<98x64xf32>
    %c0_13 = arith.constant 0 : index
    %c0_14 = arith.constant 0 : index
    %29 = vector.load %arg4[%c0_13, %c0_14] : memref<1x64xf32, #tpu.memory_space<vmem>>, vector<1x64xf32>
    %30 = vector.broadcast %29 : vector<1x64xf32> to vector<98x64xf32>
    %31 = arith.addf %28, %30 : vector<98x64xf32>
    %c0_15 = arith.constant 0 : index
    %c0_16 = arith.constant 0 : index
    %32 = vector.load %arg5[%c0_15, %c0_16] : memref<98x64xf32, #tpu.memory_space<vmem>>, vector<98x64xf32>
    tpu.vector_store %arg5[%c0_15, %c0_16], %31 {strides = array<i32>} : memref<98x64xf32, #tpu.memory_space<vmem>>, vector<98x64xf32>,
    return
  }
}

module attributes {stable_mosaic.version = 11 : i64} {
  func.func @conv_bn_kernel(%arg0: memref<18x1024xf32, #tpu.memory_space<vmem>>, %arg1: memref<1024x128xf32, #tpu.memory_space<vmem>>, %arg2: memref<1x128xf32, #tpu.memory_space<vmem>>, %arg3: memref<1x128xf32, #tpu.memory_space<vmem>>, %arg4: memref<1x128xf32, #tpu.memory_space<vmem>>, %arg5: memref<18x128xf32, #tpu.memory_space<vmem>>) attributes {dimension_semantics = [], scalar_prefetch = 0 : i64, scratch_operands = 0 : i64, tpu.core_type = #tpu.core_type<tc>} {
    %c0 = arith.constant 0 : index
    %c0_0 = arith.constant 0 : index
    %0 = vector.load %arg0[%c0, %c0_0] : memref<18x1024xf32, #tpu.memory_space<vmem>>, vector<18x1024xf32>
    %c0_1 = arith.constant 0 : index
    %c0_2 = arith.constant 0 : index
    %1 = vector.load %arg1[%c0_1, %c0_2] : memref<1024x128xf32, #tpu.memory_space<vmem>>, vector<1024x128xf32>
    %cst = arith.constant dense<0.000000e+00> : vector<18x128xf32>
    %2 = tpu.matmul %0, %1, %cst {dimension_numbers = #tpu.dot_dimension_numbers<[1], [0], [0], [1], [0, 0, 1, 1], [], []>} : vector<18x1024xf32>, vector<1024x128xf32>, vector<18x128xf32> -> vector<18x128xf32>
    %c0_3 = arith.constant 0 : index
    %c0_4 = arith.constant 0 : index
    %3 = vector.load %arg2[%c0_3, %c0_4] : memref<1x128xf32, #tpu.memory_space<vmem>>, vector<1x128xf32>
    %4 = vector.broadcast %3 : vector<1x128xf32> to vector<18x128xf32>
    %5 = arith.addf %2, %4 : vector<18x128xf32>
    %cst_5 = arith.constant 1.000000e-01 : f32
    %6 = vector.broadcast %cst_5 : f32 to vector<18x128xf32>
    %7 = arith.mulf %6, %5 : vector<18x128xf32>
    %8 = arith.maximumf %5, %7 : vector<18x128xf32>
    %cst_6 = arith.constant dense<0.000000e+00> : vector<128xf32>
    %9 = vector.multi_reduction <add>, %8, %cst_6 [0] : vector<18x128xf32> to vector<128xf32>
    %10 = vector.shape_cast %9 : vector<128xf32> to vector<1x128xf32>
    %cst_7 = arith.constant 0.055555556 : f32
    %11 = vector.broadcast %cst_7 : f32 to vector<1x128xf32>
    %12 = arith.mulf %10, %11 : vector<1x128xf32>
    %13 = arith.mulf %8, %8 : vector<18x128xf32>
    %cst_8 = arith.constant dense<0.000000e+00> : vector<128xf32>
    %14 = vector.multi_reduction <add>, %13, %cst_8 [0] : vector<18x128xf32> to vector<128xf32>
    %15 = vector.shape_cast %14 : vector<128xf32> to vector<1x128xf32>
    %cst_9 = arith.constant 0.055555556 : f32
    %16 = vector.broadcast %cst_9 : f32 to vector<1x128xf32>
    %17 = arith.mulf %15, %16 : vector<1x128xf32>
    %18 = arith.mulf %12, %12 : vector<1x128xf32>
    %19 = arith.subf %17, %18 : vector<1x128xf32>
    %cst_10 = arith.constant 9.99999974E-6 : f32
    %20 = vector.broadcast %cst_10 : f32 to vector<1x128xf32>
    %21 = arith.addf %19, %20 : vector<1x128xf32>
    %22 = math.rsqrt %21 : vector<1x128xf32>
    %23 = vector.broadcast %12 : vector<1x128xf32> to vector<18x128xf32>
    %24 = arith.subf %8, %23 : vector<18x128xf32>
    %c0_11 = arith.constant 0 : index
    %c0_12 = arith.constant 0 : index
    %25 = vector.load %arg3[%c0_11, %c0_12] : memref<1x128xf32, #tpu.memory_space<vmem>>, vector<1x128xf32>
    %26 = arith.mulf %22, %25 : vector<1x128xf32>
    %27 = vector.broadcast %26 : vector<1x128xf32> to vector<18x128xf32>
    %28 = arith.mulf %24, %27 : vector<18x128xf32>
    %c0_13 = arith.constant 0 : index
    %c0_14 = arith.constant 0 : index
    %29 = vector.load %arg4[%c0_13, %c0_14] : memref<1x128xf32, #tpu.memory_space<vmem>>, vector<1x128xf32>
    %30 = vector.broadcast %29 : vector<1x128xf32> to vector<18x128xf32>
    %31 = arith.addf %28, %30 : vector<18x128xf32>
    %c0_15 = arith.constant 0 : index
    %c0_16 = arith.constant 0 : index
    %32 = vector.load %arg5[%c0_15, %c0_16] : memref<18x128xf32, #tpu.memory_space<vmem>>, vector<18x128xf32>
    tpu.vector_store %arg5[%c0_15, %c0_16], %31 {strides = array<i32>} : memref<18x128xf32, #tpu.memory_space<vmem>>, vector<18x128xf32>,
    return
  }
}

module attributes {stable_mosaic.version = 11 : i64} {
  func.func @conv_heads_kernel(%arg0: memref<2x2048xf32, #tpu.memory_space<vmem>>, %arg1: memref<2048x128xf32, #tpu.memory_space<vmem>>, %arg2: memref<1x128xf32, #tpu.memory_space<vmem>>, %arg3: memref<128x32xf32, #tpu.memory_space<vmem>>, %arg4: memref<1x32xf32, #tpu.memory_space<vmem>>, %arg5: memref<2x32xf32, #tpu.memory_space<vmem>>) attributes {dimension_semantics = [], scalar_prefetch = 0 : i64, scratch_operands = 0 : i64, tpu.core_type = #tpu.core_type<tc>} {
    %c0 = arith.constant 0 : index
    %c0_0 = arith.constant 0 : index
    %0 = vector.load %arg0[%c0, %c0_0] : memref<2x2048xf32, #tpu.memory_space<vmem>>, vector<2x2048xf32>
    %c0_1 = arith.constant 0 : index
    %c0_2 = arith.constant 0 : index
    %1 = vector.load %arg1[%c0_1, %c0_2] : memref<2048x128xf32, #tpu.memory_space<vmem>>, vector<2048x128xf32>
    %cst = arith.constant dense<0.000000e+00> : vector<2x128xf32>
    %2 = tpu.matmul %0, %1, %cst {dimension_numbers = #tpu.dot_dimension_numbers<[1], [0], [0], [1], [0, 0, 1, 1], [], []>} : vector<2x2048xf32>, vector<2048x128xf32>, vector<2x128xf32> -> vector<2x128xf32>
    %c0_3 = arith.constant 0 : index
    %c0_4 = arith.constant 0 : index
    %3 = vector.load %arg2[%c0_3, %c0_4] : memref<1x128xf32, #tpu.memory_space<vmem>>, vector<1x128xf32>
    %4 = vector.broadcast %3 : vector<1x128xf32> to vector<2x128xf32>
    %5 = arith.addf %2, %4 : vector<2x128xf32>
    %cst_5 = arith.constant 1.000000e-01 : f32
    %6 = vector.broadcast %cst_5 : f32 to vector<2x128xf32>
    %7 = arith.mulf %6, %5 : vector<2x128xf32>
    %8 = arith.maximumf %5, %7 : vector<2x128xf32>
    %c0_6 = arith.constant 0 : index
    %c0_7 = arith.constant 0 : index
    %9 = vector.load %arg3[%c0_6, %c0_7] : memref<128x32xf32, #tpu.memory_space<vmem>>, vector<128x32xf32>
    %cst_8 = arith.constant dense<0.000000e+00> : vector<2x32xf32>
    %10 = tpu.matmul %8, %9, %cst_8 {dimension_numbers = #tpu.dot_dimension_numbers<[1], [0], [0], [1], [0, 0, 1, 1], [], []>} : vector<2x128xf32>, vector<128x32xf32>, vector<2x32xf32> -> vector<2x32xf32>
    %c0_9 = arith.constant 0 : index
    %c0_10 = arith.constant 0 : index
    %11 = vector.load %arg4[%c0_9, %c0_10] : memref<1x32xf32, #tpu.memory_space<vmem>>, vector<1x32xf32>
    %12 = vector.broadcast %11 : vector<1x32xf32> to vector<2x32xf32>
    %13 = arith.addf %10, %12 : vector<2x32xf32>
    %c0_11 = arith.constant 0 : index
    %c0_12 = arith.constant 0 : index
    %14 = vector.load %arg5[%c0_11, %c0_12] : memref<2x32xf32, #tpu.memory_space<vmem>>, vector<2x32xf32>
    tpu.vector_store %arg5[%c0_11, %c0_12], %13 {strides = array<i32>} : memref<2x32xf32, #tpu.memory_space<vmem>>, vector<2x32xf32>,
    return
  }
}

</mosaic_0001>

<llo_original>
// kernel: encoder_forward.5
$region0: #{encoder_forward.5}
  #allocation0 [shape = 'u32[]', space=smem, size = 0x4, offset = 0x4, fixed_abs, tag = 'smem constant byte address 0x4 - core index']
  #allocation1 [shape = 'u32[144,128]{1,0:T(1,128)}', space=vmem, size = 0x12000, scoped, tag = 'internal scratch']
  %s0 = inlined_call_operand.vmem [shape: f32[1922,9], index: 0, kind: input, shape index: {}]
  %s1 = inlined_call_operand.vmem [shape: f32[9,32], index: 1, kind: input, shape index: {}]
  %s2 = inlined_call_operand.hbm [shape: f32[1,32], index: 2, kind: input, shape index: {}]
  %s3 = inlined_call_operand.hbm [shape: f32[1,32], index: 3, kind: input, shape index: {}]
  %s4 = inlined_call_operand.hbm [shape: f32[1,32], index: 4, kind: input, shape index: {}]
  %s5 = inlined_call_operand.vmem [shape: f32[1922,32], index: 5, kind: output, shape index: {}]
  %s6 = sld [smem:[#allocation0]]
  $region42: #{encoder_forward.5} parent=0
    _
  %s8 = ssub.s32 1, %s6
  %s9 = scalar_select 0, %s8, %s6
  $region1: #{encoder_forward.5} parent=0
    #allocation2 [shape = 'u8[512]{0}', space=vmem, size = 0x400, scoped, tag = 'input window, operand 2, single buffered']
    #allocation3 [shape = 's32[1]{0}', space=sflag, size = 0x4, scoped, tag = 'scoped memory for encoder_forward.5']
    #allocation4 [shape = 'u8[512]{0}', space=vmem, size = 0x400, scoped, tag = 'input window, operand 3, single buffered']
    #allocation5 [shape = 's32[1]{0}', space=sflag, size = 0x4, scoped, tag = 'scoped memory for encoder_forward.5']
    #allocation6 [shape = 'u8[512]{0}', space=vmem, size = 0x400, scoped, tag = 'input window, operand 4, single buffered']
    %10 = vsyncpa [#allocation3], 0
    %11 = vsyncpa [#allocation5], 0
    // Predicated region
    $region2: #{encoder_forward.5} parent=1 // pred_check
      _
    $region3: #{encoder_forward.5} parent=1 // pred_check_branch
      %13 = sbr.rel (0) target = $region5
    $region4: #{encoder_forward.5} parent=1 // pred_region
      _
    $region5: #{encoder_forward.5} parent=1 // pred_fallthru
      _
    // Predicated region
    $region6: #{encoder_forward.5} parent=1 // pred_check
      _
    $region7: #{encoder_forward.5} parent=1 // pred_check_branch
      %15 = sbr.rel (0) target = $region9
    $region8: #{encoder_forward.5} parent=1 // pred_region
      _
    $region9: #{encoder_forward.5} parent=1 // pred_fallthru
      _
    // Predicated region
    $region10: #{encoder_forward.5} parent=1 // pred_check
      _
    $region11: #{encoder_forward.5} parent=1 // pred_check_branch
      %17 = sbr.rel (0) target = $region13
    $region12: #{encoder_forward.5} parent=1 // pred_region
      %s19 = ssub.s32 16, 16
      %20 = vsyncadd [#allocation3], %s19
      %s22 = sshll.u32 [#allocation2], 4
      %s23 = int_to_ptr.vmem [resolvable:$true] %s22
      %25 = dma.hbm_to_vmem [thread:$0]  %s2, 16, %s23, [#allocation3]
    $region13: #{encoder_forward.5} parent=1 // pred_fallthru
      _
    // Predicated region
    $region14: #{encoder_forward.5} parent=1 // pred_check
      _
    $region15: #{encoder_forward.5} parent=1 // pred_check_branch
      %27 = sbr.rel (0) target = $region17
    $region16: #{encoder_forward.5} parent=1 // pred_region
      %s29 = ssub.s32 16, 16
      %30 = vsyncadd [#allocation5], %s29
      %s32 = sshll.u32 [#allocation4], 4
      %s33 = int_to_ptr.vmem [resolvable:$true] %s32
      %35 = dma.hbm_to_vmem [thread:$0]  %s3, 16, %s33, [#allocation5]
    $region17: #{encoder_forward.5} parent=1 // pred_fallthru
      _
    // Predicated region
    $region18: #{encoder_forward.5} parent=1 // pred_check
      _
    $region19: #{encoder_forward.5} parent=1 // pred_check_branch
      %37 = sbr.rel (0) target = $region21
    $region20: #{encoder_forward.5} parent=1 // pred_region
      %s39 = ssub.s32 16, 16
      %40 = vsyncadd [#allocation5], %s39
      %s42 = sshll.u32 [#allocation6], 4
      %s43 = int_to_ptr.vmem [resolvable:$true] %s42
      %45 = dma.hbm_to_vmem [thread:$0]  %s4, 16, %s43, [#allocation5]
    $region21: #{encoder_forward.5} parent=1 // pred_fallthru
      _
    // Predicated region
    $region22: #{encoder_forward.5} parent=1 // pred_check
      _
    $region23: #{encoder_forward.5} parent=1 // pred_check_branch
      %47 = sbr.rel (0) target = $region25
    $region24: #{encoder_forward.5} parent=1 // pred_region
      %48 = dma.done [#allocation3], 16
    $region25: #{encoder_forward.5} parent=1 // pred_fallthru
      _
    // Predicated region
    $region26: #{encoder_forward.5} parent=1 // pred_check
      _
    $region27: #{encoder_forward.5} parent=1 // pred_check_branch
      %50 = sbr.rel (0) target = $region29
    $region28: #{encoder_forward.5} parent=1 // pred_region
      %51 = dma.done [#allocation5], 16
    $region29: #{encoder_forward.5} parent=1 // pred_fallthru
      _
    // Predicated region
    $region30: #{encoder_forward.5} parent=1 // pred_check
      _
    $region31: #{encoder_forward.5} parent=1 // pred_check_branch
      %53 = sbr.rel (0) target = $region33
    $region32: #{encoder_forward.5} parent=1 // pred_region
      %54 = dma.done [#allocation5], 16
    $region33: #{encoder_forward.5} parent=1 // pred_fallthru
      _
    %v55 = vld [vmem:[%s0] sm:$0xff]
    %v56 = vld [vmem:[%s0 + $0x8] sm:$0xff]
    %v57 = vld [vmem:[%s0 + $0x10] sm:$0xff]
    %v58 = vld [vmem:[%s0 + $0x18] sm:$0xff]
    %v59 = vld [vmem:[%s0 + $0x20] sm:$0xff]
    %v60 = vld [vmem:[%s0 + $0x28] sm:$0xff]
    %v61 = vld [vmem:[%s0 + $0x30] sm:$0xff]
    %v62 = vld [vmem:[%s0 + $0x38] sm:$0xff]
    %v63 = vld [vmem:[%s0 + $0x40] sm:$0xff]
    %v64 = vld [vmem:[%s0 + $0x48] sm:$0xff]
    %v65 = vld [vmem:[%s0 + $0x50] sm:$0xff]
    %v66 = vld [vmem:[%s0 + $0x58] sm:$0xff]
    %v67 = vld [vmem:[%s0 + $0x60] sm:$0xff]
    %v68 = vld [vmem:[%s0 + $0x68] sm:$0xff]
    %v69 = vld [vmem:[%s0 + $0x70] sm:$0xff]
    %v70 = vld [vmem:[%s0 + $0x78] sm:$0xff]
    %v71 = vld [vmem:[%s0 + $0x80] sm:$0xff]
    %v72 = vld [vmem:[%s0 + $0x88] sm:$0xff]
    %v73 = vld [vmem:[%s0 + $0x90] sm:$0xff]
    %v74 = vld [vmem:[%s0 + $0x98] sm:$0xff]
    %v75 = vld [vmem:[%s0 + $0xa0] sm:$0xff]
    %v76 = vld [vmem:[%s0 + $0xa8] sm:$0xff]
    %v77 = vld [vmem:[%s0 + $0xb0] sm:$0xff]
    %v78 = vld [vmem:[%s0 + $0xb8] sm:$0xff]
    %v79 = vld [vmem:[%s0 + $0xc0] sm:$0xff]
    %v80 = vld [vmem:[%s0 + $0xc8] sm:$0xff]
    %v81 = vld [vmem:[%s0 + $0xd0] sm:$0xff]
    %v82 = vld [vmem:[%s0 + $0xd8] sm:$0xff]
    %v83 = vld [vmem:[%s0 + $0xe0] sm:$0xff]
    %v84 = vld [vmem:[%s0 + $0xe8] sm:$0xff]
    %v85 = vld [vmem:[%s0 + $0xf0] sm:$0xff]
    %v86 = vld [vmem:[%s0 + $0xf8] sm:$0xff]
    %v87 = vld [vmem:[%s0 + $0x100] sm:$0xff]
    %v88 = vld [vmem:[%s0 + $0x108] sm:$0xff]
    %v89 = vld [vmem:[%s0 + $0x110] sm:$0xff]
    %v90 = vld [vmem:[%s0 + $0x118] sm:$0xff]
    %v91 = vld [vmem:[%s0 + $0x120] sm:$0xff]
    %v92 = vld [vmem:[%s0 + $0x128] sm:$0xff]
    %v93 = vld [vmem:[%s0 + $0x130] sm:$0xff]
    %v94 = vld [vmem:[%s0 + $0x138] sm:$0xff]
    %v95 = vld [vmem:[%s0 + $0x140] sm:$0xff]
    %v96 = vld [vmem:[%s0 + $0x148] sm:$0xff]
    %v97 = vld [vmem:[%s0 + $0x150] sm:$0xff]
    %v98 = vld [vmem:[%s0 + $0x158] sm:$0xff]
    %v99 = vld [vmem:[%s0 + $0x160] sm:$0xff]
    %v100 = vld [vmem:[%s0 + $0x168] sm:$0xff]
    %v101 = vld [vmem:[%s0 + $0x170] sm:$0xff]
    %v102 = vld [vmem:[%s0 + $0x178] sm:$0xff]
    %v103 = vld [vmem:[%s0 + $0x180] sm:$0xff]
    %v104 = vld [vmem:[%s0 + $0x188] sm:$0xff]
    %v105 = vld [vmem:[%s0 + $0x190] sm:$0xff]
    %v106 = vld [vmem:[%s0 + $0x198] sm:$0xff]
    %v107 = vld [vmem:[%s0 + $0x1a0] sm:$0xff]
    %v108 = vld [vmem:[%s0 + $0x1a8] sm:$0xff]
    %v109 = vld [vmem:[%s0 + $0x1b0] sm:$0xff]
    %v110 = vld [vmem:[%s0 + $0x1b8] sm:$0xff]
    %v111 = vld [vmem:[%s0 + $0x1c0] sm:$0xff]
    %v112 = vld [vmem:[%s0 + $0x1c8] sm:$0xff]
    %v113 = vld [vmem:[%s0 + $0x1d0] sm:$0xff]
    %v114 = vld [vmem:[%s0 + $0x1d8] sm:$0xff]
    %v115 = vld [vmem:[%s0 + $0x1e0] sm:$0xff]
    %v116 = vld [vmem:[%s0 + $0x1e8] sm:$0xff]
    %v117 = vld [vmem:[%s0 + $0x1f0] sm:$0xff]
    %v118 = vld [vmem:[%s0 + $0x1f8] sm:$0xff]
    %v119 = vld [vmem:[%s0 + $0x200] sm:$0xff]
    %v120 = vld [vmem:[%s0 + $0x208] sm:$0xff]
    %v121 = vld [vmem:[%s0 + $0x210] sm:$0xff]
    %v122 = vld [vmem:[%s0 + $0x218] sm:$0xff]
    %v123 = vld [vmem:[%s0 + $0x220] sm:$0xff]
    %v124 = vld [vmem:[%s0 + $0x228] sm:$0xff]
    %v125 = vld [vmem:[%s0 + $0x230] sm:$0xff]
    %v126 = vld [vmem:[%s0 + $0x238] sm:$0xff]
    %v127 = vld [vmem:[%s0 + $0x240] sm:$0xff]
    %v128 = vld [vmem:[%s0 + $0x248] sm:$0xff]
    %v129 = vld [vmem:[%s0 + $0x250] sm:$0xff]
    %v130 = vld [vmem:[%s0 + $0x258] sm:$0xff]
    %v131 = vld [vmem:[%s0 + $0x260] sm:$0xff]
    %v132 = vld [vmem:[%s0 + $0x268] sm:$0xff]
    %v133 = vld [vmem:[%s0 + $0x270] sm:$0xff]
    %v134 = vld [vmem:[%s0 + $0x278] sm:$0xff]
    %v135 = vld [vmem:[%s0 + $0x280] sm:$0xff]
    %v136 = vld [vmem:[%s0 + $0x288] sm:$0xff]
    %v137 = vld [vmem:[%s0 + $0x290] sm:$0xff]
    %v138 = vld [vmem:[%s0 + $0x298] sm:$0xff]
    %v139 = vld [vmem:[%s0 + $0x2a0] sm:$0xff]
    %v140 = vld [vmem:[%s0 + $0x2a8] sm:$0xff]
    %v141 = vld [vmem:[%s0 + $0x2b0] sm:$0xff]
    %v142 = vld [vmem:[%s0 + $0x2b8] sm:$0xff]
    %v143 = vld [vmem:[%s0 + $0x2c0] sm:$0xff]
    %v144 = vld [vmem:[%s0 + $0x2c8] sm:$0xff]
    %v145 = vld [vmem:[%s0 + $0x2d0] sm:$0xff]
    %v146 = vld [vmem:[%s0 + $0x2d8] sm:$0xff]
    %v147 = vld [vmem:[%s0 + $0x2e0] sm:$0xff]
    %v148 = vld [vmem:[%s0 + $0x2e8] sm:$0xff]
    %v149 = vld [vmem:[%s0 + $0x2f0] sm:$0xff]
    %v150 = vld [vmem:[%s0 + $0x2f8] sm:$0xff]
    %v151 = vld [vmem:[%s0 + $0x300] sm:$0xff]
    %v152 = vld [vmem:[%s0 + $0x308] sm:$0xff]
    %v153 = vld [vmem:[%s0 + $0x310] sm:$0xff]
    %v154 = vld [vmem:[%s0 + $0x318] sm:$0xff]
    %v155 = vld [vmem:[%s0 + $0x320] sm:$0xff]
    %v156 = vld [vmem:[%s0 + $0x328] sm:$0xff]
    %v157 = vld [vmem:[%s0 + $0x330] sm:$0xff]
    %v158 = vld [vmem:[%s0 + $0x338] sm:$0xff]
    %v159 = vld [vmem:[%s0 + $0x340] sm:$0xff]
    %v160 = vld [vmem:[%s0 + $0x348] sm:$0xff]
    %v161 = vld [vmem:[%s0 + $0x350] sm:$0xff]
    %v162 = vld [vmem:[%s0 + $0x358] sm:$0xff]
    %v163 = vld [vmem:[%s0 + $0x360] sm:$0xff]
    %v164 = vld [vmem:[%s0 + $0x368] sm:$0xff]
    %v165 = vld [vmem:[%s0 + $0x370] sm:$0xff]
    %v166 = vld [vmem:[%s0 + $0x378] sm:$0xff]
    %v167 = vld [vmem:[%s0 + $0x380] sm:$0xff]
    %v168 = vld [vmem:[%s0 + $0x388] sm:$0xff]
    %v169 = vld [vmem:[%s0 + $0x390] sm:$0xff]
    %v170 = vld [vmem:[%s0 + $0x398] sm:$0xff]
    %v171 = vld [vmem:[%s0 + $0x3a0] sm:$0xff]
    %v172 = vld [vmem:[%s0 + $0x3a8] sm:$0xff]
    %v173 = vld [vmem:[%s0 + $0x3b0] sm:$0xff]
    %v174 = vld [vmem:[%s0 + $0x3b8] sm:$0xff]
    %v175 = vld [vmem:[%s0 + $0x3c0] sm:$0xff]
    %v176 = vld [vmem:[%s0 + $0x3c8] sm:$0xff]
    %v177 = vld [vmem:[%s0 + $0x3d0] sm:$0xff]
    %v178 = vld [vmem:[%s0 + $0x3d8] sm:$0xff]
    %v179 = vld [vmem:[%s0 + $0x3e0] sm:$0xff]
    %v180 = vld [vmem:[%s0 + $0x3e8] sm:$0xff]
    %v181 = vld [vmem:[%s0 + $0x3f0] sm:$0xff]
    %v182 = vld [vmem:[%s0 + $0x3f8] sm:$0xff]
    %v183 = vld [vmem:[%s0 + $0x400] sm:$0xff]
    %v184 = vld [vmem:[%s0 + $0x408] sm:$0xff]
    %v185 = vld [vmem:[%s0 + $0x410] sm:$0xff]
    %v186 = vld [vmem:[%s0 + $0x418] sm:$0xff]
    %v187 = vld [vmem:[%s0 + $0x420] sm:$0xff]
    %v188 = vld [vmem:[%s0 + $0x428] sm:$0xff]
    %v189 = vld [vmem:[%s0 + $0x430] sm:$0xff]
    %v190 = vld [vmem:[%s0 + $0x438] sm:$0xff]
    %v191 = vld [vmem:[%s0 + $0x440] sm:$0xff]
    %v192 = vld [vmem:[%s0 + $0x448] sm:$0xff]
    %v193 = vld [vmem:[%s0 + $0x450] sm:$0xff]
    %v194 = vld [vmem:[%s0 + $0x458] sm:$0xff]
    %v195 = vld [vmem:[%s0 + $0x460] sm:$0xff]
    %v196 = vld [vmem:[%s0 + $0x468] sm:$0xff]
    %v197 = vld [vmem:[%s0 + $0x470] sm:$0xff]
    %v198 = vld [vmem:[%s0 + $0x478] sm:$0xff]
    %v199 = vld [vmem:[%s0 + $0x480] sm:$0xff]
    %v200 = vld [vmem:[%s0 + $0x488] sm:$0xff]
    %v201 = vld [vmem:[%s0 + $0x490] sm:$0xff]
    %v202 = vld [vmem:[%s0 + $0x498] sm:$0xff]
    %v203 = vld [vmem:[%s0 + $0x4a0] sm:$0xff]
    %v204 = vld [vmem:[%s0 + $0x4a8] sm:$0xff]
    %v205 = vld [vmem:[%s0 + $0x4b0] sm:$0xff]
    %v206 = vld [vmem:[%s0 + $0x4b8] sm:$0xff]
    %v207 = vld [vmem:[%s0 + $0x4c0] sm:$0xff]
    %v208 = vld [vmem:[%s0 + $0x4c8] sm:$0xff]
    %v209 = vld [vmem:[%s0 + $0x4d0] sm:$0xff]
    %v210 = vld [vmem:[%s0 + $0x4d8] sm:$0xff]
    %v211 = vld [vmem:[%s0 + $0x4e0] sm:$0xff]
    %v212 = vld [vmem:[%s0 + $0x4e8] sm:$0xff]
    %v213 = vld [vmem:[%s0 + $0x4f0] sm:$0xff]
    %v214 = vld [vmem:[%s0 + $0x4f8] sm:$0xff]
    %v215 = vld [vmem:[%s0 + $0x500] sm:$0xff]
    %v216 = vld [vmem:[%s0 + $0x508] sm:$0xff]
    %v217 = vld [vmem:[%s0 + $0x510] sm:$0xff]
    %v218 = vld [vmem:[%s0 + $0x518] sm:$0xff]
    %v219 = vld [vmem:[%s0 + $0x520] sm:$0xff]
    %v220 = vld [vmem:[%s0 + $0x528] sm:$0xff]
    %v221 = vld [vmem:[%s0 + $0x530] sm:$0xff]
    %v222 = vld [vmem:[%s0 + $0x538] sm:$0xff]
    %v223 = vld [vmem:[%s0 + $0x540] sm:$0xff]
    %v224 = vld [vmem:[%s0 + $0x548] sm:$0xff]
    %v225 = vld [vmem:[%s0 + $0x550] sm:$0xff]
    %v226 = vld [vmem:[%s0 + $0x558] sm:$0xff]
    %v227 = vld [vmem:[%s0 + $0x560] sm:$0xff]
    %v228 = vld [vmem:[%s0 + $0x568] sm:$0xff]
    %v229 = vld [vmem:[%s0 + $0x570] sm:$0xff]
    %v230 = vld [vmem:[%s0 + $0x578] sm:$0xff]
    %v231 = vld [vmem:[%s0 + $0x580] sm:$0xff]
    %v232 = vld [vmem:[%s0 + $0x588] sm:$0xff]
    %v233 = vld [vmem:[%s0 + $0x590] sm:$0xff]
    %v234 = vld [vmem:[%s0 + $0x598] sm:$0xff]
    %v235 = vld [vmem:[%s0 + $0x5a0] sm:$0xff]
    %v236 = vld [vmem:[%s0 + $0x5a8] sm:$0xff]
    %v237 = vld [vmem:[%s0 + $0x5b0] sm:$0xff]
    %v238 = vld [vmem:[%s0 + $0x5b8] sm:$0xff]
    %v239 = vld [vmem:[%s0 + $0x5c0] sm:$0xff]
    %v240 = vld [vmem:[%s0 + $0x5c8] sm:$0xff]
    %v241 = vld [vmem:[%s0 + $0x5d0] sm:$0xff]
    %v242 = vld [vmem:[%s0 + $0x5d8] sm:$0xff]
    %v243 = vld [vmem:[%s0 + $0x5e0] sm:$0xff]
    %v244 = vld [vmem:[%s0 + $0x5e8] sm:$0xff]
    %v245 = vld [vmem:[%s0 + $0x5f0] sm:$0xff]
    %v246 = vld [vmem:[%s0 + $0x5f8] sm:$0xff]
    %v247 = vld [vmem:[%s0 + $0x600] sm:$0xff]
    %v248 = vld [vmem:[%s0 + $0x608] sm:$0xff]
    %v249 = vld [vmem:[%s0 + $0x610] sm:$0xff]
    %v250 = vld [vmem:[%s0 + $0x618] sm:$0xff]
    %v251 = vld [vmem:[%s0 + $0x620] sm:$0xff]
    %v252 = vld [vmem:[%s0 + $0x628] sm:$0xff]
    %v253 = vld [vmem:[%s0 + $0x630] sm:$0xff]
    %v254 = vld [vmem:[%s0 + $0x638] sm:$0xff]
    %v255 = vld [vmem:[%s0 + $0x640] sm:$0xff]
    %v256 = vld [vmem:[%s0 + $0x648] sm:$0xff]
    %v257 = vld [vmem:[%s0 + $0x650] sm:$0xff]
    %v258 = vld [vmem:[%s0 + $0x658] sm:$0xff]
    %v259 = vld [vmem:[%s0 + $0x660] sm:$0xff]
    %v260 = vld [vmem:[%s0 + $0x668] sm:$0xff]
    %v261 = vld [vmem:[%s0 + $0x670] sm:$0xff]
    %v262 = vld [vmem:[%s0 + $0x678] sm:$0xff]
    %v263 = vld [vmem:[%s0 + $0x680] sm:$0xff]
    %v264 = vld [vmem:[%s0 + $0x688] sm:$0xff]
    %v265 = vld [vmem:[%s0 + $0x690] sm:$0xff]
    %v266 = vld [vmem:[%s0 + $0x698] sm:$0xff]
    %v267 = vld [vmem:[%s0 + $0x6a0] sm:$0xff]
    %v268 = vld [vmem:[%s0 + $0x6a8] sm:$0xff]
    %v269 = vld [vmem:[%s0 + $0x6b0] sm:$0xff]
    %v270 = vld [vmem:[%s0 + $0x6b8] sm:$0xff]
    %v271 = vld [vmem:[%s0 + $0x6c0] sm:$0xff]
    %v272 = vld [vmem:[%s0 + $0x6c8] sm:$0xff]
    %v273 = vld [vmem:[%s0 + $0x6d0] sm:$0xff]
    %v274 = vld [vmem:[%s0 + $0x6d8] sm:$0xff]
    %v275 = vld [vmem:[%s0 + $0x6e0] sm:$0xff]
    %v276 = vld [vmem:[%s0 + $0x6e8] sm:$0xff]
    %v277 = vld [vmem:[%s0 + $0x6f0] sm:$0xff]
    %v278 = vld [vmem:[%s0 + $0x6f8] sm:$0xff]
    %v279 = vld [vmem:[%s0 + $0x700] sm:$0xff]
    %v280 = vld [vmem:[%s0 + $0x708] sm:$0xff]
    %v281 = vld [vmem:[%s0 + $0x710] sm:$0xff]
    %v282 = vld [vmem:[%s0 + $0x718] sm:$0xff]
    %v283 = vld [vmem:[%s0 + $0x720] sm:$0xff]
    %v284 = vld [vmem:[%s0 + $0x728] sm:$0xff]
    %v285 = vld [vmem:[%s0 + $0x730] sm:$0xff]
    %v286 = vld [vmem:[%s0 + $0x738] sm:$0xff]
    %v287 = vld [vmem:[%s0 + $0x740] sm:$0xff]
    %v288 = vld [vmem:[%s0 + $0x748] sm:$0xff]
    %v289 = vld [vmem:[%s0 + $0x750] sm:$0xff]
    %v290 = vld [vmem:[%s0 + $0x758] sm:$0xff]
    %v291 = vld [vmem:[%s0 + $0x760] sm:$0xff]
    %v292 = vld [vmem:[%s0 + $0x768] sm:$0xff]
    %v293 = vld [vmem:[%s0 + $0x770] sm:$0xff]
    %v294 = vld [vmem:[%s0 + $0x778] sm:$0xff]
    %v295 = vld [vmem:[%s0 + $0x780] sm:$0x3]
    %v296 = vld [vmem:[%s1] sm:$0xff]
    %v297 = vld [vmem:[%s1 + $0x8] sm:$0x1]
    %v298 = vld [vmem:[#allocation2] sm:$0x1]
    %v300 = vlaneseq
    %v301 = vshrl.u32 %v300, 7
    %v302 = vsub.s32 0, %v301
    %v303 = vrot.slane %v298, %v302
    %vm305 = vcmask 72704
    %v307 = vsel %vm305, %v55, 0
    %v310 = vsel %vm305, %v56, 0
    %v313 = vsel %vm305, %v57, 0
    %v316 = vsel %vm305, %v58, 0
    %v319 = vsel %vm305, %v59, 0
    %v322 = vsel %vm305, %v60, 0
    %v325 = vsel %vm305, %v61, 0
    %v328 = vsel %vm305, %v62, 0
    %v331 = vsel %vm305, %v63, 0
    %v334 = vsel %vm305, %v64, 0
    %v337 = vsel %vm305, %v65, 0
    %v340 = vsel %vm305, %v66, 0
    %v343 = vsel %vm305, %v67, 0
    %v346 = vsel %vm305, %v68, 0
    %v349 = vsel %vm305, %v69, 0
    %v352 = vsel %vm305, %v70, 0
    %v355 = vsel %vm305, %v71, 0
    %v358 = vsel %vm305, %v72, 0
    %v361 = vsel %vm305, %v73, 0
    %v364 = vsel %vm305, %v74, 0
    %v367 = vsel %vm305, %v75, 0
    %v370 = vsel %vm305, %v76, 0
    %v373 = vsel %vm305, %v77, 0
    %v376 = vsel %vm305, %v78, 0
    %v379 = vsel %vm305, %v79, 0
    %v382 = vsel %vm305, %v80, 0
    %v385 = vsel %vm305, %v81, 0
    %v388 = vsel %vm305, %v82, 0
    %v391 = vsel %vm305, %v83, 0
    %v394 = vsel %vm305, %v84, 0
    %v397 = vsel %vm305, %v85, 0
    %v400 = vsel %vm305, %v86, 0
    %v403 = vsel %vm305, %v87, 0
    %v406 = vsel %vm305, %v88, 0
    %v409 = vsel %vm305, %v89, 0
    %v412 = vsel %vm305, %v90, 0
    %v415 = vsel %vm305, %v91, 0
    %v418 = vsel %vm305, %v92, 0
    %v421 = vsel %vm305, %v93, 0
    %v424 = vsel %vm305, %v94, 0
    %v427 = vsel %vm305, %v95, 0
    %v430 = vsel %vm305, %v96, 0
    %v433 = vsel %vm305, %v97, 0
    %v436 = vsel %vm305, %v98, 0
    %v439 = vsel %vm305, %v99, 0
    %v442 = vsel %vm305, %v100, 0
    %v445 = vsel %vm305, %v101, 0
    %v448 = vsel %vm305, %v102, 0
    %v451 = vsel %vm305, %v103, 0
    %v454 = vsel %vm305, %v104, 0
    %v457 = vsel %vm305, %v105, 0
    %v460 = vsel %vm305, %v106, 0
    %v463 = vsel %vm305, %v107, 0
    %v466 = vsel %vm305, %v108, 0
    %v469 = vsel %vm305, %v109, 0
    %v472 = vsel %vm305, %v110, 0
    %v475 = vsel %vm305, %v111, 0
    %v478 = vsel %vm305, %v112, 0
    %v481 = vsel %vm305, %v113, 0
    %v484 = vsel %vm305, %v114, 0
    %v487 = vsel %vm305, %v115, 0
    %v490 = vsel %vm305, %v116, 0
    %v493 = vsel %vm305, %v117, 0
    %v496 = vsel %vm305, %v118, 0
    %v499 = vsel %vm305, %v119, 0
    %v502 = vsel %vm305, %v120, 0
    %v505 = vsel %vm305, %v121, 0
    %v508 = vsel %vm305, %v122, 0
    %v511 = vsel %vm305, %v123, 0
    %v514 = vsel %vm305, %v124, 0
    %v517 = vsel %vm305, %v125, 0
    %v520 = vsel %vm305, %v126, 0
    %v523 = vsel %vm305, %v127, 0
    %v526 = vsel %vm305, %v128, 0
    %v529 = vsel %vm305, %v129, 0
    %v532 = vsel %vm305, %v130, 0
    %v535 = vsel %vm305, %v131, 0
    %v538 = vsel %vm305, %v132, 0
    %v541 = vsel %vm305, %v133, 0
    %v544 = vsel %vm305, %v134, 0
    %v547 = vsel %vm305, %v135, 0
    %v550 = vsel %vm305, %v136, 0
    %v553 = vsel %vm305, %v137, 0
    %v556 = vsel %vm305, %v138, 0
    %v559 = vsel %vm305, %v139, 0
    %v562 = vsel %vm305, %v140, 0
    %v565 = vsel %vm305, %v141, 0
    %v568 = vsel %vm305, %v142, 0
    %v571 = vsel %vm305, %v143, 0
    %v574 = vsel %vm305, %v144, 0
    %v577 = vsel %vm305, %v145, 0
    %v580 = vsel %vm305, %v146, 0
    %v583 = vsel %vm305, %v147, 0
    %v586 = vsel %vm305, %v148, 0
    %v589 = vsel %vm305, %v149, 0
    %v592 = vsel %vm305, %v150, 0
    %v595 = vsel %vm305, %v151, 0
    %v598 = vsel %vm305, %v152, 0
    %v601 = vsel %vm305, %v153, 0
    %v604 = vsel %vm305, %v154, 0
    %v607 = vsel %vm305, %v155, 0
    %v610 = vsel %vm305, %v156, 0
    %v613 = vsel %vm305, %v157, 0
    %v616 = vsel %vm305, %v158, 0
    %v619 = vsel %vm305, %v159, 0
    %v622 = vsel %vm305, %v160, 0
    %v625 = vsel %vm305, %v161, 0
    %v628 = vsel %vm305, %v162, 0
    %v631 = vsel %vm305, %v163, 0
    %v634 = vsel %vm305, %v164, 0
    %v637 = vsel %vm305, %v165, 0
    %v640 = vsel %vm305, %v166, 0
    %v643 = vsel %vm305, %v167, 0
    %v646 = vsel %vm305, %v168, 0
    %v649 = vsel %vm305, %v169, 0
    %v652 = vsel %vm305, %v170, 0
    %v655 = vsel %vm305, %v171, 0
    %v658 = vsel %vm305, %v172, 0
    %v661 = vsel %vm305, %v173, 0
    %v664 = vsel %vm305, %v174, 0
    %v667 = vsel %vm305, %v175, 0
    %v670 = vsel %vm305, %v176, 0
    %v673 = vsel %vm305, %v177, 0
    %v676 = vsel %vm305, %v178, 0
    %v679 = vsel %vm305, %v179, 0
    %v682 = vsel %vm305, %v180, 0
    %v685 = vsel %vm305, %v181, 0
    %v688 = vsel %vm305, %v182, 0
    %v691 = vsel %vm305, %v183, 0
    %v694 = vsel %vm305, %v184, 0
    %v697 = vsel %vm305, %v185, 0
    %v700 = vsel %vm305, %v186, 0
    %v703 = vsel %vm305, %v187, 0
    %v706 = vsel %vm305, %v188, 0
    %v709 = vsel %vm305, %v189, 0
    %v712 = vsel %vm305, %v190, 0
    %v715 = vsel %vm305, %v191, 0
    %v718 = vsel %vm305, %v192, 0
    %v721 = vsel %vm305, %v193, 0
    %v724 = vsel %vm305, %v194, 0
    %v727 = vsel %vm305, %v195, 0
    %v730 = vsel %vm305, %v196, 0
    %v733 = vsel %vm305, %v197, 0
    %v736 = vsel %vm305, %v198, 0
    %v739 = vsel %vm305, %v199, 0
    %v742 = vsel %vm305, %v200, 0
    %v745 = vsel %vm305, %v201, 0
    %v748 = vsel %vm305, %v202, 0
    %v751 = vsel %vm305, %v203, 0
    %v754 = vsel %vm305, %v204, 0
    %v757 = vsel %vm305, %v205, 0
    %v760 = vsel %vm305, %v206, 0
    %v763 = vsel %vm305, %v207, 0
    %v766 = vsel %vm305, %v208, 0
    %v769 = vsel %vm305, %v209, 0
    %v772 = vsel %vm305, %v210, 0
    %v775 = vsel %vm305, %v211, 0
    %v778 = vsel %vm305, %v212, 0
    %v781 = vsel %vm305, %v213, 0
    %v784 = vsel %vm305, %v214, 0
    %v787 = vsel %vm305, %v215, 0
    %v790 = vsel %vm305, %v216, 0
    %v793 = vsel %vm305, %v217, 0
    %v796 = vsel %vm305, %v218, 0
    %v799 = vsel %vm305, %v219, 0
    %v802 = vsel %vm305, %v220, 0
    %v805 = vsel %vm305, %v221, 0
    %v808 = vsel %vm305, %v222, 0
    %v811 = vsel %vm305, %v223, 0
    %v814 = vsel %vm305, %v224, 0
    %v817 = vsel %vm305, %v225, 0
    %v820 = vsel %vm305, %v226, 0
    %v823 = vsel %vm305, %v227, 0
    %v826 = vsel %vm305, %v228, 0
    %v829 = vsel %vm305, %v229, 0
    %v832 = vsel %vm305, %v230, 0
    %v835 = vsel %vm305, %v231, 0
    %v838 = vsel %vm305, %v232, 0
    %v841 = vsel %vm305, %v233, 0
    %v844 = vsel %vm305, %v234, 0
    %v847 = vsel %vm305, %v235, 0
    %v850 = vsel %vm305, %v236, 0
    %v853 = vsel %vm305, %v237, 0
    %v856 = vsel %vm305, %v238, 0
    %v859 = vsel %vm305, %v239, 0
    %v862 = vsel %vm305, %v240, 0
    %v865 = vsel %vm305, %v241, 0
    %v868 = vsel %vm305, %v242, 0
    %v871 = vsel %vm305, %v243, 0
    %v874 = vsel %vm305, %v244, 0
    %v877 = vsel %vm305, %v245, 0
    %v880 = vsel %vm305, %v246, 0
    %v883 = vsel %vm305, %v247, 0
    %v886 = vsel %vm305, %v248, 0
    %v889 = vsel %vm305, %v249, 0
    %v892 = vsel %vm305, %v250, 0
    %v895 = vsel %vm305, %v251, 0
    %v898 = vsel %vm305, %v252, 0
    %v901 = vsel %vm305, %v253, 0
    %v904 = vsel %vm305, %v254, 0
    %v907 = vsel %vm305, %v255, 0
    %v910 = vsel %vm305, %v256, 0
    %v913 = vsel %vm305, %v257, 0
    %v916 = vsel %vm305, %v258, 0
    %v919 = vsel %vm305, %v259, 0
    %v922 = vsel %vm305, %v260, 0
    %v925 = vsel %vm305, %v261, 0
    %v928 = vsel %vm305, %v262, 0
    %v931 = vsel %vm305, %v263, 0
    %v934 = vsel %vm305, %v264, 0
    %v937 = vsel %vm305, %v265, 0
    %v940 = vsel %vm305, %v266, 0
    %v943 = vsel %vm305, %v267, 0
    %v946 = vsel %vm305, %v268, 0
    %v949 = vsel %vm305, %v269, 0
    %v952 = vsel %vm305, %v270, 0
    %v955 = vsel %vm305, %v271, 0
    %v958 = vsel %vm305, %v272, 0
    %v961 = vsel %vm305, %v273, 0
    %v964 = vsel %vm305, %v274, 0
    %v967 = vsel %vm305, %v275, 0
    %v970 = vsel %vm305, %v276, 0
    %v973 = vsel %vm305, %v277, 0
    %v976 = vsel %vm305, %v278, 0
    %v979 = vsel %vm305, %v279, 0
    %v982 = vsel %vm305, %v280, 0
    %v985 = vsel %vm305, %v281, 0
    %v988 = vsel %vm305, %v282, 0
    %v991 = vsel %vm305, %v283, 0
    %v994 = vsel %vm305, %v284, 0
    %v997 = vsel %vm305, %v285, 0
    %v1000 = vsel %vm305, %v286, 0
    %v1003 = vsel %vm305, %v287, 0
    %v1006 = vsel %vm305, %v288, 0
    %v1009 = vsel %vm305, %v289, 0
    %v1012 = vsel %vm305, %v290, 0
    %v1015 = vsel %vm305, %v291, 0
    %v1018 = vsel %vm305, %v292, 0
    %v1021 = vsel %vm305, %v293, 0
    %v1024 = vsel %vm305, %v294, 0
    %v1027 = vsel %vm305, %v295, 0
    %vm1029 = vcmask 1040384
    %v1031 = vsel %vm1029, %v297, 0
    %1033 = vmatprep.subr.mxu0 0.0
    %1034 = vmatpush1.msra.mxu0 %v296
    %1035 = vmatprep.subr.mxu0 0.0
    %1036 = vmatpush1.msra.mxu0 %v1031
    %1037 = vmatprep.subr.mxu0 0.0
    %1038 = vmatpush1.msra.mxu0 0.0
    %1039 = vmatprep.subr.mxu0 0.0
    %1040 = vmatpush1.msra.mxu0 0.0
    %1041 = vmatprep.subr.mxu0 0.0
    %1042 = vmatpush1.msra.mxu0 0.0
    %1043 = vmatprep.subr.mxu0 0.0
    %1044 = vmatpush1.msra.mxu0 0.0
    %1045 = vmatprep.subr.mxu0 0.0
    %1046 = vmatpush1.msra.mxu0 0.0
    %1047 = vmatprep.subr.mxu0 0.0
    %1048 = vmatpush1.msra.mxu0 0.0
    %1049 = vmatprep.subr.mxu0 0.0
    %1050 = vmatpush1.msra.mxu0 0.0
    %1051 = vmatprep.subr.mxu0 0.0
    %1052 = vmatpush1.msra.mxu0 0.0
    %1053 = vmatprep.subr.mxu0 0.0
    %1054 = vmatpush1.msra.mxu0 0.0
    %1055 = vmatprep.subr.mxu0 0.0
    %1056 = vmatpush1.msra.mxu0 0.0
    %1057 = vmatprep.subr.mxu0 0.0
    %1058 = vmatpush1.msra.mxu0 0.0
    %1059 = vmatprep.subr.mxu0 0.0
    %1060 = vmatpush1.msra.mxu0 0.0
    %1061 = vmatprep.subr.mxu0 0.0
    %1062 = vmatpush1.msra.mxu0 0.0
    %1063 = vmatprep.subr.mxu0 0.0
    %1064 = vmatpush1.msra.mxu0 0.0
    %1065 = vmatprep.subr.mxu0 0.0
    %1066 = vmatpush1.msra.mxu0 0.0
    %1067 = vmatprep.subr.mxu0 0.0
    %1068 = vmatpush1.msra.mxu0 0.0
    %1069 = vmatprep.subr.mxu0 0.0
    %1070 = vmatpush1.msra.mxu0 0.0
    %1071 = vmatprep.subr.mxu0 0.0
    %1072 = vmatpush1.msra.mxu0 0.0
    %1073 = vmatprep.subr.mxu0 0.0
    %1074 = vmatpush1.msra.mxu0 0.0
    %1075 = vmatprep.subr.mxu0 0.0
    %1076 = vmatpush1.msra.mxu0 0.0
    %1077 = vmatprep.subr.mxu0 0.0
    %1078 = vmatpush1.msra.mxu0 0.0
    %1079 = vmatprep.subr.mxu0 0.0
    %1080 = vmatpush1.msra.mxu0 0.0
    %1081 = vmatprep.subr.mxu0 0.0
    %1082 = vmatpush1.msra.mxu0 0.0
    %1083 = vmatprep.subr.mxu0 0.0
    %1084 = vmatpush1.msra.mxu0 0.0
    %1085 = vmatprep.subr.mxu0 0.0
    %1086 = vmatpush1.msra.mxu0 0.0
    %1087 = vmatprep.subr.mxu0 0.0
    %1088 = vmatpush1.msra.mxu0 0.0
    %1089 = vmatprep.subr.mxu0 0.0
    %1090 = vmatpush1.msra.mxu0 0.0
    %1091 = vmatprep.subr.mxu0 0.0
    %1092 = vmatpush1.msra.mxu0 0.0
    %1093 = vmatprep.subr.mxu0 0.0
    %1094 = vmatpush1.msra.mxu0 0.0
    %1095 = vmatprep.subr.mxu0 0.0
    %1096 = vmatpush1.msra.mxu0 0.0
    %1097 = vmatprep.mubr.f32.mxu0 0.0
    %1098 = vmatmul.mubr.f32.gmra.mrb[0].mxu0 %v307
    %v1099 = vpop.f32.mrb[0].mxu0
    %v1100 = vadd.f32 %v303, %v1099
    %v1101 = vpop.f32.mrb[0].mxu0
    %1102 = vmatprep.mubr.f32.mxu0 0.0
    %1103 = vmatmul.mubr.f32.gmra.mrb[0].mxu0 %v310
    %v1104 = vpop.f32.mrb[0].mxu0
    %v1105 = vadd.f32 %v303, %v1104
    %v1106 = vpop.f32.mrb[0].mxu0
    %1107 = vmatprep.mubr.f32.mxu0 0.0
    %1108 = vmatmul.mubr.f32.gmra.mrb[0].mxu0 %v313
    %v1109 = vpop.f32.mrb[0].mxu0
    %v1110 = vadd.f32 %v303, %v1109
    %v1111 = vpop.f32.mrb[0].mxu0
    %1112 = vmatprep.mubr.f32.mxu0 0.0
    %1113 = vmatmul.mubr.f32.gmra.mrb[0].mxu0 %v316
    %v1114 = vpop.f32.mrb[0].mxu0
    %v1115 = vadd.f32 %v303, %v1114
    %v1116 = vpop.f32.mrb[0].mxu0
    %1117 = vmatprep.mubr.f32.mxu0 0.0
    %1118 = vmatmul.mubr.f32.gmra.mrb[0].mxu0 %v319
    %v1119 = vpop.f32.mrb[0].mxu0
    %v1120 = vadd.f32 %v303, %v1119
    %v1121 = vpop.f32.mrb[0].mxu0
    %1122 = vmatprep.mubr.f32.mxu0 0.0
    %1123 = vmatmul.mubr.f32.gmra.mrb[0].mxu0 %v322
    %v1124 = vpop.f32.mrb[0].mxu0
    %v1125 = vadd.f32 %v303, %v1124
    %v1126 = vpop.f32.mrb[0].mxu0
    %1127 = vmatprep.mubr.f32.mxu0 0.0
    %1128 = vmatmul.mubr.f32.gmra.mrb[0].mxu0 %v325
    %v1129 = vpop.f32.mrb[0].mxu0
    %v1130 = vadd.f32 %v303, %v1129
    %v1131 = vpop.f32.mrb[0].mxu0
    %1132 = vmatprep.mubr.f32.mxu0 0.0
    %1133 = vmatmul.mubr.f32.gmra.mrb[0].mxu0 %v328
    %v1134 = vpop.f32.mrb[0].mxu0
    %v1135 = vadd.f32 %v303, %v1134
    %v1136 = vpop.f32.mrb[0].mxu0
    %1137 = vmatprep.mubr.f32.mxu0 0.0
    %1138 = vmatmul.mubr.f32.gmra.mrb[0].mxu0 %v331
    %v1139 = vpop.f32.mrb[0].mxu0
    %v1140 = vadd.f32 %v303, %v1139
    %v1141 = vpop.f32.mrb[0].mxu0
    %1142 = vmatprep.mubr.f32.mxu0 0.0
    %1143 = vmatmul.mubr.f32.gmra.mrb[0].mxu0 %v334
    %v1144 = vpop.f32.mrb[0].mxu0
    %v1145 = vadd.f32 %v303, %v1144
    %v1146 = vpop.f32.mrb[0].mxu0
    %1147 = vmatprep.mubr.f32.mxu0 0.0
    %1148 = vmatmul.mubr.f32.gmra.mrb[0].mxu0 %v337
    %v1149 = vpop.f32.mrb[0].mxu0
    %v1150 = vadd.f32 %v303, %v1149
    %v1151 = vpop.f32.mrb[0].mxu0
    %1152 = vmatprep.mubr.f32.mxu0 0.0
    %1153 = vmatmul.mubr.f32.gmra.mrb[0].mxu0 %v340
    %v1154 = vpop.f32.mrb[0].mxu0
    %v1155 = vadd.f32 %v303, %v1154
    %v1156 = vpop.f32.mrb[0].mxu0
    %1157 = vmatprep.mubr.f32.mxu0 0.0
    %1158 = vmatmul.mubr.f32.gmra.mrb[0].mxu0 %v343
    %v1159 = vpop.f32.mrb[0].mxu0
    %v1160 = vadd.f32 %v303, %v1159
    %v1161 = vpop.f32.mrb[0].mxu0
    %1162 = vmatprep.mubr.f32.mxu0 0.0
    %1163 = vmatmul.mubr.f32.gmra.mrb[0].mxu0 %v346
    %v1164 = vpop.f32.mrb[0].mxu0
    %v1165 = vadd.f32 %v303, %v1164
    %v1166 = vpop.f32.mrb[0].mxu0
    %1167 = vmatprep.mubr.f32.mxu0 0.0
    %1168 = vmatmul.mubr.f32.gmra.mrb[0].mxu0 %v349
    %v1169 = vpop.f32.mrb[0].mxu0
    %v1170 = vadd.f32 %v303, %v1169
    %v1171 = vpop.f32.mrb[0].mxu0
    %1172 = vmatprep.mubr.f32.mxu0 0.0
    %1173 = vmatmul.mubr.f32.gmra.mrb[0].mxu0 %v352
    %v1174 = vpop.f32.mrb[0].mxu0
    %v1175 = vadd.f32 %v303, %v1174
    %v1176 = vpop.f32.mrb[0].mxu0
    %1177 = vmatprep.mubr.f32.mxu0 0.0
    %1178 = vmatmul.mubr.f32.gmra.mrb[0].mxu0 %v355
    %v1179 = vpop.f32.mrb[0].mxu0
    %v1180 = vadd.f32 %v303, %v1179
    %v1181 = vpop.f32.mrb[0].mxu0
    %1182 = vmatprep.mubr.f32.mxu0 0.0
    %1183 = vmatmul.mubr.f32.gmra.mrb[0].mxu0 %v358
    %v1184 = vpop.f32.mrb[0].mxu0
    %v1185 = vadd.f32 %v303, %v1184
    %v1186 = vpop.f32.mrb[0].mxu0
    %1187 = vmatprep.mubr.f32.mxu0 0.0
    %1188 = vmatmul.mubr.f32.gmra.mrb[0].mxu0 %v361
    %v1189 = vpop.f32.mrb[0].mxu0
    %v1190 = vadd.f32 %v303, %v1189
    %v1191 = vpop.f32.mrb[0].mxu0
    %1192 = vmatprep.mubr.f32.mxu0 0.0
    %1193 = vmatmul.mubr.f32.gmra.mrb[0].mxu0 %v364
    %v1194 = vpop.f32.mrb[0].mxu0
    %v1195 = vadd.f32 %v303, %v1194
    %v1196 = vpop.f32.mrb[0].mxu0
    %1197 = vmatprep.mubr.f32.mxu0 0.0
    %1198 = vmatmul.mubr.f32.gmra.mrb[0].mxu0 %v367
    %v1199 = vpop.f32.mrb[0].mxu0
    %v1200 = vadd.f32 %v303, %v1199
    %v1201 = vpop.f32.mrb[0].mxu0
    %1202 = vmatprep.mubr.f32.mxu0 0.0
    %1203 = vmatmul.mubr.f32.gmra.mrb[0].mxu0 %v370
    %v1204 = vpop.f32.mrb[0].mxu0
    %v1205 = vadd.f32 %v303, %v1204
    %v1206 = vpop.f32.mrb[0].mxu0
    %1207 = vmatprep.mubr.f32.mxu0 0.0
    %1208 = vmatmul.mubr.f32.gmra.mrb[0].mxu0 %v373
    %v1209 = vpop.f32.mrb[0].mxu0
    %v1210 = vadd.f32 %v303, %v1209
    %v1211 = vpop.f32.mrb[0].mxu0
    %1212 = vmatprep.mubr.f32.mxu0 0.0
    %1213 = vmatmul.mubr.f32.gmra.mrb[0].mxu0 %v376
    %v1214 = vpop.f32.mrb[0].mxu0
    %v1215 = vadd.f32 %v303, %v1214
    %v1216 = vpop.f32.mrb[0].mxu0
    %1217 = vmatprep.mubr.f32.mxu0 0.0
    %1218 = vmatmul.mubr.f32.gmra.mrb[0].mxu0 %v379
    %v1219 = vpop.f32.mrb[0].mxu0
    %v1220 = vadd.f32 %v303, %v1219
    %v1221 = vpop.f32.mrb[0].mxu0
    %1222 = vmatprep.mubr.f32.mxu0 0.0
    %1223 = vmatmul.mubr.f32.gmra.mrb[0].mxu0 %v382
    %v1224 = vpop.f32.mrb[0].mxu0
    %v1225 = vadd.f32 %v303, %v1224
    %v1226 = vpop.f32.mrb[0].mxu0
    %1227 = vmatprep.mubr.f32.mxu0 0.0
    %1228 = vmatmul.mubr.f32.gmra.mrb[0].mxu0 %v385
    %v1229 = vpop.f32.mrb[0].mxu0
    %v1230 = vadd.f32 %v303, %v1229
    %v1231 = vpop.f32.mrb[0].mxu0
    %1232 = vmatprep.mubr.f32.mxu0 0.0
    %1233 = vmatmul.mubr.f32.gmra.mrb[0].mxu0 %v388
    %v1234 = vpop.f32.mrb[0].mxu0
    %v1235 = vadd.f32 %v303, %v1234
    %v1236 = vpop.f32.mrb[0].mxu0
    %1237 = vmatprep.mubr.f32.mxu0 0.0
    %1238 = vmatmul.mubr.f32.gmra.mrb[0].mxu0 %v391
    %v1239 = vpop.f32.mrb[0].mxu0
    %v1240 = vadd.f32 %v303, %v1239
    %v1241 = vpop.f32.mrb[0].mxu0
    %1242 = vmatprep.mubr.f32.mxu0 0.0
    %1243 = vmatmul.mubr.f32.gmra.mrb[0].mxu0 %v394
    %v1244 = vpop.f32.mrb[0].mxu0
    %v1245 = vadd.f32 %v303, %v1244
    %v1246 = vpop.f32.mrb[0].mxu0
    %1247 = vmatprep.mubr.f32.mxu0 0.0
    %1248 = vmatmul.mubr.f32.gmra.mrb[0].mxu0 %v397
    %v1249 = vpop.f32.mrb[0].mxu0
    %v1250 = vadd.f32 %v303, %v1249
    %v1251 = vpop.f32.mrb[0].mxu0
    %1252 = vmatprep.mubr.f32.mxu0 0.0
    %1253 = vmatmul.mubr.f32.gmra.mrb[0].mxu0 %v400
    %v1254 = vpop.f32.mrb[0].mxu0
    %v1255 = vadd.f32 %v303, %v1254
    %v1256 = vpop.f32.mrb[0].mxu0
    %1257 = vmatprep.mubr.f32.mxu0 0.0
    %1258 = vmatmul.mubr.f32.gmra.mrb[0].mxu0 %v403
    %v1259 = vpop.f32.mrb[0].mxu0
    %v1260 = vadd.f32 %v303, %v1259
    %v1261 = vpop.f32.mrb[0].mxu0
    %1262 = vmatprep.mubr.f32.mxu0 0.0
    %1263 = vmatmul.mubr.f32.gmra.mrb[0].mxu0 %v406
    %v1264 = vpop.f32.mrb[0].mxu0
    %v1265 = vadd.f32 %v303, %v1264
    %v1266 = vpop.f32.mrb[0].mxu0
    %1267 = vmatprep.mubr.f32.mxu0 0.0
    %1268 = vmatmul.mubr.f32.gmra.mrb[0].mxu0 %v409
    %v1269 = vpop.f32.mrb[0].mxu0
    %v1270 = vadd.f32 %v303, %v1269
    %v1271 = vpop.f32.mrb[0].mxu0
    %1272 = vmatprep.mubr.f32.mxu0 0.0
    %1273 = vmatmul.mubr.f32.gmra.mrb[0].mxu0 %v412
    %v1274 = vpop.f32.mrb[0].mxu0
    %v1275 = vadd.f32 %v303, %v1274
    %v1276 = vpop.f32.mrb[0].mxu0
    %1277 = vmatprep.mubr.f32.mxu0 0.0
    %1278 = vmatmul.mubr.f32.gmra.mrb[0].mxu0 %v415
    %v1279 = vpop.f32.mrb[0].mxu0
    %v1280 = vadd.f32 %v303, %v1279
    %v1281 = vpop.f32.mrb[0].mxu0
    %1282 = vmatprep.mubr.f32.mxu0 0.0
    %1283 = vmatmul.mubr.f32.gmra.mrb[0].mxu0 %v418
    %v1284 = vpop.f32.mrb[0].mxu0
    %v1285 = vadd.f32 %v303, %v1284
    %v1286 = vpop.f32.mrb[0].mxu0
    %1287 = vmatprep.mubr.f32.mxu0 0.0
    %1288 = vmatmul.mubr.f32.gmra.mrb[0].mxu0 %v421
    %v1289 = vpop.f32.mrb[0].mxu0
    %v1290 = vadd.f32 %v303, %v1289
    %v1291 = vpop.f32.mrb[0].mxu0
    %1292 = vmatprep.mubr.f32.mxu0 0.0
    %1293 = vmatmul.mubr.f32.gmra.mrb[0].mxu0 %v424
    %v1294 = vpop.f32.mrb[0].mxu0
    %v1295 = vadd.f32 %v303, %v1294
    %v1296 = vpop.f32.mrb[0].mxu0
    %1297 = vmatprep.mubr.f32.mxu0 0.0
    %1298 = vmatmul.mubr.f32.gmra.mrb[0].mxu0 %v427
    %v1299 = vpop.f32.mrb[0].mxu0
    %v1300 = vadd.f32 %v303, %v1299
    %v1301 = vpop.f32.mrb[0].mxu0
    %1302 = vmatprep.mubr.f32.mxu0 0.0
    %1303 = vmatmul.mubr.f32.gmra.mrb[0].mxu0 %v430
    %v1304 = vpop.f32.mrb[0].mxu0
    %v1305 = vadd.f32 %v303, %v1304
    %v1306 = vpop.f32.mrb[0].mxu0
    %1307 = vmatprep.mubr.f32.mxu0 0.0
    %1308 = vmatmul.mubr.f32.gmra.mrb[0].mxu0 %v433
    %v1309 = vpop.f32.mrb[0].mxu0
    %v1310 = vadd.f32 %v303, %v1309
    %v1311 = vpop.f32.mrb[0].mxu0
    %1312 = vmatprep.mubr.f32.mxu0 0.0
    %1313 = vmatmul.mubr.f32.gmra.mrb[0].mxu0 %v436
    %v1314 = vpop.f32.mrb[0].mxu0
    %v1315 = vadd.f32 %v303, %v1314
    %v1316 = vpop.f32.mrb[0].mxu0
    %1317 = vmatprep.mubr.f32.mxu0 0.0
    %1318 = vmatmul.mubr.f32.gmra.mrb[0].mxu0 %v439
    %v1319 = vpop.f32.mrb[0].mxu0
    %v1320 = vadd.f32 %v303, %v1319
    %v1321 = vpop.f32.mrb[0].mxu0
    %1322 = vmatprep.mubr.f32.mxu0 0.0
    %1323 = vmatmul.mubr.f32.gmra.mrb[0].mxu0 %v442
    %v1324 = vpop.f32.mrb[0].mxu0
    %v1325 = vadd.f32 %v303, %v1324
    %v1326 = vpop.f32.mrb[0].mxu0
    %1327 = vmatprep.mubr.f32.mxu0 0.0
    %1328 = vmatmul.mubr.f32.gmra.mrb[0].mxu0 %v445
    %v1329 = vpop.f32.mrb[0].mxu0
    %v1330 = vadd.f32 %v303, %v1329
    %v1331 = vpop.f32.mrb[0].mxu0
    %1332 = vmatprep.mubr.f32.mxu0 0.0
    %1333 = vmatmul.mubr.f32.gmra.mrb[0].mxu0 %v448
    %v1334 = vpop.f32.mrb[0].mxu0
    %v1335 = vadd.f32 %v303, %v1334
    %v1336 = vpop.f32.mrb[0].mxu0
    %1337 = vmatprep.mubr.f32.mxu0 0.0
    %1338 = vmatmul.mubr.f32.gmra.mrb[0].mxu0 %v451
    %v1339 = vpop.f32.mrb[0].mxu0
    %v1340 = vadd.f32 %v303, %v1339
    %v1341 = vpop.f32.mrb[0].mxu0
    %1342 = vmatprep.mubr.f32.mxu0 0.0
    %1343 = vmatmul.mubr.f32.gmra.mrb[0].mxu0 %v454
    %v1344 = vpop.f32.mrb[0].mxu0
    %v1345 = vadd.f32 %v303, %v1344
    %v1346 = vpop.f32.mrb[0].mxu0
    %1347 = vmatprep.mubr.f32.mxu0 0.0
    %1348 = vmatmul.mubr.f32.gmra.mrb[0].mxu0 %v457
    %v1349 = vpop.f32.mrb[0].mxu0
    %v1350 = vadd.f32 %v303, %v1349
    %v1351 = vpop.f32.mrb[0].mxu0
    %1352 = vmatprep.mubr.f32.mxu0 0.0
    %1353 = vmatmul.mubr.f32.gmra.mrb[0].mxu0 %v460
    %v1354 = vpop.f32.mrb[0].mxu0
    %v1355 = vadd.f32 %v303, %v1354
    %v1356 = vpop.f32.mrb[0].mxu0
    %1357 = vmatprep.mubr.f32.mxu0 0.0
    %1358 = vmatmul.mubr.f32.gmra.mrb[0].mxu0 %v463
    %v1359 = vpop.f32.mrb[0].mxu0
    %v1360 = vadd.f32 %v303, %v1359
    %v1361 = vpop.f32.mrb[0].mxu0
    %1362 = vmatprep.mubr.f32.mxu0 0.0
    %1363 = vmatmul.mubr.f32.gmra.mrb[0].mxu0 %v466
    %v1364 = vpop.f32.mrb[0].mxu0
    %v1365 = vadd.f32 %v303, %v1364
    %v1366 = vpop.f32.mrb[0].mxu0
    %1367 = vmatprep.mubr.f32.mxu0 0.0
    %1368 = vmatmul.mubr.f32.gmra.mrb[0].mxu0 %v469
    %v1369 = vpop.f32.mrb[0].mxu0
    %v1370 = vadd.f32 %v303, %v1369
    %v1371 = vpop.f32.mrb[0].mxu0
    %1372 = vmatprep.mubr.f32.mxu0 0.0
    %1373 = vmatmul.mubr.f32.gmra.mrb[0].mxu0 %v472
    %v1374 = vpop.f32.mrb[0].mxu0
    %v1375 = vadd.f32 %v303, %v1374
    %v1376 = vpop.f32.mrb[0].mxu0
    %1377 = vmatprep.mubr.f32.mxu0 0.0
    %1378 = vmatmul.mubr.f32.gmra.mrb[0].mxu0 %v475
    %v1379 = vpop.f32.mrb[0].mxu0
    %v1380 = vadd.f32 %v303, %v1379
    %v1381 = vpop.f32.mrb[0].mxu0
    %1382 = vmatprep.mubr.f32.mxu0 0.0
    %1383 = vmatmul.mubr.f32.gmra.mrb[0].mxu0 %v478
    %v1384 = vpop.f32.mrb[0].mxu0
    %v1385 = vadd.f32 %v303, %v1384
    %v1386 = vpop.f32.mrb[0].mxu0
    %1387 = vmatprep.mubr.f32.mxu0 0.0
    %1388 = vmatmul.mubr.f32.gmra.mrb[0].mxu0 %v481
    %v1389 = vpop.f32.mrb[0].mxu0
    %v1390 = vadd.f32 %v303, %v1389
    %v1391 = vpop.f32.mrb[0].mxu0
    %1392 = vmatprep.mubr.f32.mxu0 0.0
    %1393 = vmatmul.mubr.f32.gmra.mrb[0].mxu0 %v484
    %v1394 = vpop.f32.mrb[0].mxu0
    %v1395 = vadd.f32 %v303, %v1394
    %v1396 = vpop.f32.mrb[0].mxu0
    %1397 = vmatprep.mubr.f32.mxu0 0.0
    %1398 = vmatmul.mubr.f32.gmra.mrb[0].mxu0 %v487
    %v1399 = vpop.f32.mrb[0].mxu0
    %v1400 = vadd.f32 %v303, %v1399
    %v1401 = vpop.f32.mrb[0].mxu0
    %1402 = vmatprep.mubr.f32.mxu0 0.0
    %1403 = vmatmul.mubr.f32.gmra.mrb[0].mxu0 %v490
    %v1404 = vpop.f32.mrb[0].mxu0
    %v1405 = vadd.f32 %v303, %v1404
    %v1406 = vpop.f32.mrb[0].mxu0
    %1407 = vmatprep.mubr.f32.mxu0 0.0
    %1408 = vmatmul.mubr.f32.gmra.mrb[0].mxu0 %v493
    %v1409 = vpop.f32.mrb[0].mxu0
    %v1410 = vadd.f32 %v303, %v1409
    %v1411 = vpop.f32.mrb[0].mxu0
    %1412 = vmatprep.mubr.f32.mxu0 0.0
    %1413 = vmatmul.mubr.f32.gmra.mrb[0].mxu0 %v496
    %v1414 = vpop.f32.mrb[0].mxu0
    %v1415 = vadd.f32 %v303, %v1414
    %v1416 = vpop.f32.mrb[0].mxu0
    %1417 = vmatprep.mubr.f32.mxu0 0.0
    %1418 = vmatmul.mubr.f32.gmra.mrb[0].mxu0 %v499
    %v1419 = vpop.f32.mrb[0].mxu0
    %v1420 = vadd.f32 %v303, %v1419
    %v1421 = vpop.f32.mrb[0].mxu0
    %1422 = vmatprep.mubr.f32.mxu0 0.0
    %1423 = vmatmul.mubr.f32.gmra.mrb[0].mxu0 %v502
    %v1424 = vpop.f32.mrb[0].mxu0
    %v1425 = vadd.f32 %v303, %v1424
    %v1426 = vpop.f32.mrb[0].mxu0
    %1427 = vmatprep.mubr.f32.mxu0 0.0
    %1428 = vmatmul.mubr.f32.gmra.mrb[0].mxu0 %v505
    %v1429 = vpop.f32.mrb[0].mxu0
    %v1430 = vadd.f32 %v303, %v1429
    %v1431 = vpop.f32.mrb[0].mxu0
    %1432 = vmatprep.mubr.f32.mxu0 0.0
    %1433 = vmatmul.mubr.f32.gmra.mrb[0].mxu0 %v508
    %v1434 = vpop.f32.mrb[0].mxu0
    %v1435 = vadd.f32 %v303, %v1434
    %v1436 = vpop.f32.mrb[0].mxu0
    %1437 = vmatprep.mubr.f32.mxu0 0.0
    %1438 = vmatmul.mubr.f32.gmra.mrb[0].mxu0 %v511
    %v1439 = vpop.f32.mrb[0].mxu0
    %v1440 = vadd.f32 %v303, %v1439
    %v1441 = vpop.f32.mrb[0].mxu0
    %1442 = vmatprep.mubr.f32.mxu0 0.0
    %1443 = vmatmul.mubr.f32.gmra.mrb[0].mxu0 %v514
    %v1444 = vpop.f32.mrb[0].mxu0
    %v1445 = vadd.f32 %v303, %v1444
    %v1446 = vpop.f32.mrb[0].mxu0
    %1447 = vmatprep.mubr.f32.mxu0 0.0
    %1448 = vmatmul.mubr.f32.gmra.mrb[0].mxu0 %v517
    %v1449 = vpop.f32.mrb[0].mxu0
    %v1450 = vadd.f32 %v303, %v1449
    %v1451 = vpop.f32.mrb[0].mxu0
    %1452 = vmatprep.mubr.f32.mxu0 0.0
    %1453 = vmatmul.mubr.f32.gmra.mrb[0].mxu0 %v520
    %v1454 = vpop.f32.mrb[0].mxu0
    %v1455 = vadd.f32 %v303, %v1454
    %v1456 = vpop.f32.mrb[0].mxu0
    %1457 = vmatprep.mubr.f32.mxu0 0.0
    %1458 = vmatmul.mubr.f32.gmra.mrb[0].mxu0 %v523
    %v1459 = vpop.f32.mrb[0].mxu0
    %v1460 = vadd.f32 %v303, %v1459
    %v1461 = vpop.f32.mrb[0].mxu0
    %1462 = vmatprep.mubr.f32.mxu0 0.0
    %1463 = vmatmul.mubr.f32.gmra.mrb[0].mxu0 %v526
    %v1464 = vpop.f32.mrb[0].mxu0
    %v1465 = vadd.f32 %v303, %v1464
    %v1466 = vpop.f32.mrb[0].mxu0
    %1467 = vmatprep.mubr.f32.mxu0 0.0
    %1468 = vmatmul.mubr.f32.gmra.mrb[0].mxu0 %v529
    %v1469 = vpop.f32.mrb[0].mxu0
    %v1470 = vadd.f32 %v303, %v1469
    %v1471 = vpop.f32.mrb[0].mxu0
    %1472 = vmatprep.mubr.f32.mxu0 0.0
    %1473 = vmatmul.mubr.f32.gmra.mrb[0].mxu0 %v532
    %v1474 = vpop.f32.mrb[0].mxu0
    %v1475 = vadd.f32 %v303, %v1474
    %v1476 = vpop.f32.mrb[0].mxu0
    %1477 = vmatprep.mubr.f32.mxu0 0.0
    %1478 = vmatmul.mubr.f32.gmra.mrb[0].mxu0 %v535
    %v1479 = vpop.f32.mrb[0].mxu0
    %v1480 = vadd.f32 %v303, %v1479
    %v1481 = vpop.f32.mrb[0].mxu0
    %1482 = vmatprep.mubr.f32.mxu0 0.0
    %1483 = vmatmul.mubr.f32.gmra.mrb[0].mxu0 %v538
    %v1484 = vpop.f32.mrb[0].mxu0
    %v1485 = vadd.f32 %v303, %v1484
    %v1486 = vpop.f32.mrb[0].mxu0
    %1487 = vmatprep.mubr.f32.mxu0 0.0
    %1488 = vmatmul.mubr.f32.gmra.mrb[0].mxu0 %v541
    %v1489 = vpop.f32.mrb[0].mxu0
    %v1490 = vadd.f32 %v303, %v1489
    %v1491 = vpop.f32.mrb[0].mxu0
    %1492 = vmatprep.mubr.f32.mxu0 0.0
    %1493 = vmatmul.mubr.f32.gmra.mrb[0].mxu0 %v544
    %v1494 = vpop.f32.mrb[0].mxu0
    %v1495 = vadd.f32 %v303, %v1494
    %v1496 = vpop.f32.mrb[0].mxu0
    %1497 = vmatprep.mubr.f32.mxu0 0.0
    %1498 = vmatmul.mubr.f32.gmra.mrb[0].mxu0 %v547
    %v1499 = vpop.f32.mrb[0].mxu0
    %v1500 = vadd.f32 %v303, %v1499
    %v1501 = vpop.f32.mrb[0].mxu0
    %1502 = vmatprep.mubr.f32.mxu0 0.0
    %1503 = vmatmul.mubr.f32.gmra.mrb[0].mxu0 %v550
    %v1504 = vpop.f32.mrb[0].mxu0
    %v1505 = vadd.f32 %v303, %v1504
    %v1506 = vpop.f32.mrb[0].mxu0
    %1507 = vmatprep.mubr.f32.mxu0 0.0
    %1508 = vmatmul.mubr.f32.gmra.mrb[0].mxu0 %v553
    %v1509 = vpop.f32.mrb[0].mxu0
    %v1510 = vadd.f32 %v303, %v1509
    %v1511 = vpop.f32.mrb[0].mxu0
    %1512 = vmatprep.mubr.f32.mxu0 0.0
    %1513 = vmatmul.mubr.f32.gmra.mrb[0].mxu0 %v556
    %v1514 = vpop.f32.mrb[0].mxu0
    %v1515 = vadd.f32 %v303, %v1514
    %v1516 = vpop.f32.mrb[0].mxu0
    %1517 = vmatprep.mubr.f32.mxu0 0.0
    %1518 = vmatmul.mubr.f32.gmra.mrb[0].mxu0 %v559
    %v1519 = vpop.f32.mrb[0].mxu0
    %v1520 = vadd.f32 %v303, %v1519
    %v1521 = vpop.f32.mrb[0].mxu0
    %1522 = vmatprep.mubr.f32.mxu0 0.0
    %1523 = vmatmul.mubr.f32.gmra.mrb[0].mxu0 %v562
    %v1524 = vpop.f32.mrb[0].mxu0
    %v1525 = vadd.f32 %v303, %v1524
    %v1526 = vpop.f32.mrb[0].mxu0
    %1527 = vmatprep.mubr.f32.mxu0 0.0
    %1528 = vmatmul.mubr.f32.gmra.mrb[0].mxu0 %v565
    %v1529 = vpop.f32.mrb[0].mxu0
    %v1530 = vadd.f32 %v303, %v1529
    %v1531 = vpop.f32.mrb[0].mxu0
    %1532 = vmatprep.mubr.f32.mxu0 0.0
    %1533 = vmatmul.mubr.f32.gmra.mrb[0].mxu0 %v568
    %v1534 = vpop.f32.mrb[0].mxu0
    %v1535 = vadd.f32 %v303, %v1534
    %v1536 = vpop.f32.mrb[0].mxu0
    %1537 = vmatprep.mubr.f32.mxu0 0.0
    %1538 = vmatmul.mubr.f32.gmra.mrb[0].mxu0 %v571
    %v1539 = vpop.f32.mrb[0].mxu0
    %v1540 = vadd.f32 %v303, %v1539
    %v1541 = vpop.f32.mrb[0].mxu0
    %1542 = vmatprep.mubr.f32.mxu0 0.0
    %1543 = vmatmul.mubr.f32.gmra.mrb[0].mxu0 %v574
    %v1544 = vpop.f32.mrb[0].mxu0
    %v1545 = vadd.f32 %v303, %v1544
    %v1546 = vpop.f32.mrb[0].mxu0
    %1547 = vmatprep.mubr.f32.mxu0 0.0
    %1548 = vmatmul.mubr.f32.gmra.mrb[0].mxu0 %v577
    %v1549 = vpop.f32.mrb[0].mxu0
    %v1550 = vadd.f32 %v303, %v1549
    %v1551 = vpop.f32.mrb[0].mxu0
    %1552 = vmatprep.mubr.f32.mxu0 0.0
    %1553 = vmatmul.mubr.f32.gmra.mrb[0].mxu0 %v580
    %v1554 = vpop.f32.mrb[0].mxu0
    %v1555 = vadd.f32 %v303, %v1554
    %v1556 = vpop.f32.mrb[0].mxu0
    %1557 = vmatprep.mubr.f32.mxu0 0.0
    %1558 = vmatmul.mubr.f32.gmra.mrb[0].mxu0 %v583
    %v1559 = vpop.f32.mrb[0].mxu0
    %v1560 = vadd.f32 %v303, %v1559
    %v1561 = vpop.f32.mrb[0].mxu0
    %1562 = vmatprep.mubr.f32.mxu0 0.0
    %1563 = vmatmul.mubr.f32.gmra.mrb[0].mxu0 %v586
    %v1564 = vpop.f32.mrb[0].mxu0
    %v1565 = vadd.f32 %v303, %v1564
    %v1566 = vpop.f32.mrb[0].mxu0
    %1567 = vmatprep.mubr.f32.mxu0 0.0
    %1568 = vmatmul.mubr.f32.gmra.mrb[0].mxu0 %v589
    %v1569 = vpop.f32.mrb[0].mxu0
    %v1570 = vadd.f32 %v303, %v1569
    %v1571 = vpop.f32.mrb[0].mxu0
    %1572 = vmatprep.mubr.f32.mxu0 0.0
    %1573 = vmatmul.mubr.f32.gmra.mrb[0].mxu0 %v592
    %v1574 = vpop.f32.mrb[0].mxu0
    %v1575 = vadd.f32 %v303, %v1574
    %v1576 = vpop.f32.mrb[0].mxu0
    %1577 = vmatprep.mubr.f32.mxu0 0.0
    %1578 = vmatmul.mubr.f32.gmra.mrb[0].mxu0 %v595
    %v1579 = vpop.f32.mrb[0].mxu0
    %v1580 = vadd.f32 %v303, %v1579
    %v1581 = vpop.f32.mrb[0].mxu0
    %1582 = vmatprep.mubr.f32.mxu0 0.0
    %1583 = vmatmul.mubr.f32.gmra.mrb[0].mxu0 %v598
    %v1584 = vpop.f32.mrb[0].mxu0
    %v1585 = vadd.f32 %v303, %v1584
    %v1586 = vpop.f32.mrb[0].mxu0
    %1587 = vmatprep.mubr.f32.mxu0 0.0
    %1588 = vmatmul.mubr.f32.gmra.mrb[0].mxu0 %v601
    %v1589 = vpop.f32.mrb[0].mxu0
    %v1590 = vadd.f32 %v303, %v1589
    %v1591 = vpop.f32.mrb[0].mxu0
    %1592 = vmatprep.mubr.f32.mxu0 0.0
    %1593 = vmatmul.mubr.f32.gmra.mrb[0].mxu0 %v604
    %v1594 = vpop.f32.mrb[0].mxu0
    %v1595 = vadd.f32 %v303, %v1594
    %v1596 = vpop.f32.mrb[0].mxu0
    %1597 = vmatprep.mubr.f32.mxu0 0.0
    %1598 = vmatmul.mubr.f32.gmra.mrb[0].mxu0 %v607
    %v1599 = vpop.f32.mrb[0].mxu0
    %v1600 = vadd.f32 %v303, %v1599
    %v1601 = vpop.f32.mrb[0].mxu0
    %1602 = vmatprep.mubr.f32.mxu0 0.0
    %1603 = vmatmul.mubr.f32.gmra.mrb[0].mxu0 %v610
    %v1604 = vpop.f32.mrb[0].mxu0
    %v1605 = vadd.f32 %v303, %v1604
    %v1606 = vpop.f32.mrb[0].mxu0
    %1607 = vmatprep.mubr.f32.mxu0 0.0
    %1608 = vmatmul.mubr.f32.gmra.mrb[0].mxu0 %v613
    %v1609 = vpop.f32.mrb[0].mxu0
    %v1610 = vadd.f32 %v303, %v1609
    %v1611 = vpop.f32.mrb[0].mxu0
    %1612 = vmatprep.mubr.f32.mxu0 0.0
    %1613 = vmatmul.mubr.f32.gmra.mrb[0].mxu0 %v616
    %v1614 = vpop.f32.mrb[0].mxu0
    %v1615 = vadd.f32 %v303, %v1614
    %v1616 = vpop.f32.mrb[0].mxu0
    %1617 = vmatprep.mubr.f32.mxu0 0.0
    %1618 = vmatmul.mubr.f32.gmra.mrb[0].mxu0 %v619
    %v1619 = vpop.f32.mrb[0].mxu0
    %v1620 = vadd.f32 %v303, %v1619
    %v1621 = vpop.f32.mrb[0].mxu0
    %1622 = vmatprep.mubr.f32.mxu0 0.0
    %1623 = vmatmul.mubr.f32.gmra.mrb[0].mxu0 %v622
    %v1624 = vpop.f32.mrb[0].mxu0
    %v1625 = vadd.f32 %v303, %v1624
    %v1626 = vpop.f32.mrb[0].mxu0
    %1627 = vmatprep.mubr.f32.mxu0 0.0
    %1628 = vmatmul.mubr.f32.gmra.mrb[0].mxu0 %v625
    %v1629 = vpop.f32.mrb[0].mxu0
    %v1630 = vadd.f32 %v303, %v1629
    %v1631 = vpop.f32.mrb[0].mxu0
    %1632 = vmatprep.mubr.f32.mxu0 0.0
    %1633 = vmatmul.mubr.f32.gmra.mrb[0].mxu0 %v628
    %v1634 = vpop.f32.mrb[0].mxu0
    %v1635 = vadd.f32 %v303, %v1634
    %v1636 = vpop.f32.mrb[0].mxu0
    %1637 = vmatprep.mubr.f32.mxu0 0.0
    %1638 = vmatmul.mubr.f32.gmra.mrb[0].mxu0 %v631
    %v1639 = vpop.f32.mrb[0].mxu0
    %v1640 = vadd.f32 %v303, %v1639
    %v1641 = vpop.f32.mrb[0].mxu0
    %1642 = vmatprep.mubr.f32.mxu0 0.0
    %1643 = vmatmul.mubr.f32.gmra.mrb[0].mxu0 %v634
    %v1644 = vpop.f32.mrb[0].mxu0
    %v1645 = vadd.f32 %v303, %v1644
    %v1646 = vpop.f32.mrb[0].mxu0
    %1647 = vmatprep.mubr.f32.mxu0 0.0
    %1648 = vmatmul.mubr.f32.gmra.mrb[0].mxu0 %v637
    %v1649 = vpop.f32.mrb[0].mxu0
    %v1650 = vadd.f32 %v303, %v1649
    %v1651 = vpop.f32.mrb[0].mxu0
    %1652 = vmatprep.mubr.f32.mxu0 0.0
    %1653 = vmatmul.mubr.f32.gmra.mrb[0].mxu0 %v640
    %v1654 = vpop.f32.mrb[0].mxu0
    %v1655 = vadd.f32 %v303, %v1654
    %v1656 = vpop.f32.mrb[0].mxu0
    %1657 = vmatprep.mubr.f32.mxu0 0.0
    %1658 = vmatmul.mubr.f32.gmra.mrb[0].mxu0 %v643
    %v1659 = vpop.f32.mrb[0].mxu0
    %v1660 = vadd.f32 %v303, %v1659
    %v1661 = vpop.f32.mrb[0].mxu0
    %1662 = vmatprep.mubr.f32.mxu0 0.0
    %1663 = vmatmul.mubr.f32.gmra.mrb[0].mxu0 %v646
    %v1664 = vpop.f32.mrb[0].mxu0
    %v1665 = vadd.f32 %v303, %v1664
    %v1666 = vpop.f32.mrb[0].mxu0
    %1667 = vmatprep.mubr.f32.mxu0 0.0
    %1668 = vmatmul.mubr.f32.gmra.mrb[0].mxu0 %v649
    %v1669 = vpop.f32.mrb[0].mxu0
    %v1670 = vadd.f32 %v303, %v1669
    %v1671 = vpop.f32.mrb[0].mxu0
    %1672 = vmatprep.mubr.f32.mxu0 0.0
    %1673 = vmatmul.mubr.f32.gmra.mrb[0].mxu0 %v652
    %v1674 = vpop.f32.mrb[0].mxu0
    %v1675 = vadd.f32 %v303, %v1674
    %v1676 = vpop.f32.mrb[0].mxu0
    %1677 = vmatprep.mubr.f32.mxu0 0.0
    %1678 = vmatmul.mubr.f32.gmra.mrb[0].mxu0 %v655
    %v1679 = vpop.f32.mrb[0].mxu0
    %v1680 = vadd.f32 %v303, %v1679
    %v1681 = vpop.f32.mrb[0].mxu0
    %1682 = vmatprep.mubr.f32.mxu0 0.0
    %1683 = vmatmul.mubr.f32.gmra.mrb[0].mxu0 %v658
    %v1684 = vpop.f32.mrb[0].mxu0
    %v1685 = vadd.f32 %v303, %v1684
    %v1686 = vpop.f32.mrb[0].mxu0
    %1687 = vmatprep.mubr.f32.mxu0 0.0
    %1688 = vmatmul.mubr.f32.gmra.mrb[0].mxu0 %v661
    %v1689 = vpop.f32.mrb[0].mxu0
    %v1690 = vadd.f32 %v303, %v1689
    %v1691 = vpop.f32.mrb[0].mxu0
    %1692 = vmatprep.mubr.f32.mxu0 0.0
    %1693 = vmatmul.mubr.f32.gmra.mrb[0].mxu0 %v664
    %v1694 = vpop.f32.mrb[0].mxu0
    %v1695 = vadd.f32 %v303, %v1694
    %v1696 = vpop.f32.mrb[0].mxu0
    %1697 = vmatprep.mubr.f32.mxu0 0.0
    %1698 = vmatmul.mubr.f32.gmra.mrb[0].mxu0 %v667
    %v1699 = vpop.f32.mrb[0].mxu0
    %v1700 = vadd.f32 %v303, %v1699
    %v1701 = vpop.f32.mrb[0].mxu0
    %1702 = vmatprep.mubr.f32.mxu0 0.0
    %1703 = vmatmul.mubr.f32.gmra.mrb[0].mxu0 %v670
    %v1704 = vpop.f32.mrb[0].mxu0
    %v1705 = vadd.f32 %v303, %v1704
    %v1706 = vpop.f32.mrb[0].mxu0
    %1707 = vmatprep.mubr.f32.mxu0 0.0
    %1708 = vmatmul.mubr.f32.gmra.mrb[0].mxu0 %v673
    %v1709 = vpop.f32.mrb[0].mxu0
    %v1710 = vadd.f32 %v303, %v1709
    %v1711 = vpop.f32.mrb[0].mxu0
    %1712 = vmatprep.mubr.f32.mxu0 0.0
    %1713 = vmatmul.mubr.f32.gmra.mrb[0].mxu0 %v676
    %v1714 = vpop.f32.mrb[0].mxu0
    %v1715 = vadd.f32 %v303, %v1714
    %v1716 = vpop.f32.mrb[0].mxu0
    %1717 = vmatprep.mubr.f32.mxu0 0.0
    %1718 = vmatmul.mubr.f32.gmra.mrb[0].mxu0 %v679
    %v1719 = vpop.f32.mrb[0].mxu0
    %v1720 = vadd.f32 %v303, %v1719
    %v1721 = vpop.f32.mrb[0].mxu0
    %1722 = vmatprep.mubr.f32.mxu0 0.0
    %1723 = vmatmul.mubr.f32.gmra.mrb[0].mxu0 %v682
    %v1724 = vpop.f32.mrb[0].mxu0
    %v1725 = vadd.f32 %v303, %v1724
    %v1726 = vpop.f32.mrb[0].mxu0
    %1727 = vmatprep.mubr.f32.mxu0 0.0
    %1728 = vmatmul.mubr.f32.gmra.mrb[0].mxu0 %v685
    %v1729 = vpop.f32.mrb[0].mxu0
    %v1730 = vadd.f32 %v303, %v1729
    %v1731 = vpop.f32.mrb[0].mxu0
    %1732 = vmatprep.mubr.f32.mxu0 0.0
    %1733 = vmatmul.mubr.f32.gmra.mrb[0].mxu0 %v688
    %v1734 = vpop.f32.mrb[0].mxu0
    %v1735 = vadd.f32 %v303, %v1734
    %v1736 = vpop.f32.mrb[0].mxu0
    %1737 = vmatprep.mubr.f32.mxu0 0.0
    %1738 = vmatmul.mubr.f32.gmra.mrb[0].mxu0 %v691
    %v1739 = vpop.f32.mrb[0].mxu0
    %v1740 = vadd.f32 %v303, %v1739
    %v1741 = vpop.f32.mrb[0].mxu0
    %1742 = vmatprep.mubr.f32.mxu0 0.0
    %1743 = vmatmul.mubr.f32.gmra.mrb[0].mxu0 %v694
    %v1744 = vpop.f32.mrb[0].mxu0
    %v1745 = vadd.f32 %v303, %v1744
    %v1746 = vpop.f32.mrb[0].mxu0
    %1747 = vmatprep.mubr.f32.mxu0 0.0
    %1748 = vmatmul.mubr.f32.gmra.mrb[0].mxu0 %v697
    %v1749 = vpop.f32.mrb[0].mxu0
    %v1750 = vadd.f32 %v303, %v1749
    %v1751 = vpop.f32.mrb[0].mxu0
    %1752 = vmatprep.mubr.f32.mxu0 0.0
    %1753 = vmatmul.mubr.f32.gmra.mrb[0].mxu0 %v700
    %v1754 = vpop.f32.mrb[0].mxu0
    %v1755 = vadd.f32 %v303, %v1754
    %v1756 = vpop.f32.mrb[0].mxu0
    %1757 = vmatprep.mubr.f32.mxu0 0.0
    %1758 = vmatmul.mubr.f32.gmra.mrb[0].mxu0 %v703
    %v1759 = vpop.f32.mrb[0].mxu0
    %v1760 = vadd.f32 %v303, %v1759
    %v1761 = vpop.f32.mrb[0].mxu0
    %1762 = vmatprep.mubr.f32.mxu0 0.0
    %1763 = vmatmul.mubr.f32.gmra.mrb[0].mxu0 %v706
    %v1764 = vpop.f32.mrb[0].mxu0
    %v1765 = vadd.f32 %v303, %v1764
    %v1766 = vpop.f32.mrb[0].mxu0
    %1767 = vmatprep.mubr.f32.mxu0 0.0
    %1768 = vmatmul.mubr.f32.gmra.mrb[0].mxu0 %v709
    %v1769 = vpop.f32.mrb[0].mxu0
    %v1770 = vadd.f32 %v303, %v1769
    %v1771 = vpop.f32.mrb[0].mxu0
    %1772 = vmatprep.mubr.f32.mxu0 0.0
    %1773 = vmatmul.mubr.f32.gmra.mrb[0].mxu0 %v712
    %v1774 = vpop.f32.mrb[0].mxu0
    %v1775 = vadd.f32 %v303, %v1774
    %v1776 = vpop.f32.mrb[0].mxu0
    %1777 = vmatprep.mubr.f32.mxu0 0.0
    %1778 = vmatmul.mubr.f32.gmra.mrb[0].mxu0 %v715
    %v1779 = vpop.f32.mrb[0].mxu0
    %v1780 = vadd.f32 %v303, %v1779
    %v1781 = vpop.f32.mrb[0].mxu0
    %1782 = vmatprep.mubr.f32.mxu0 0.0
    %1783 = vmatmul.mubr.f32.gmra.mrb[0].mxu0 %v718
    %v1784 = vpop.f32.mrb[0].mxu0
    %v1785 = vadd.f32 %v303, %v1784
    %v1786 = vpop.f32.mrb[0].mxu0
    %1787 = vmatprep.mubr.f32.mxu0 0.0
    %1788 = vmatmul.mubr.f32.gmra.mrb[0].mxu0 %v721
    %v1789 = vpop.f32.mrb[0].mxu0
    %v1790 = vadd.f32 %v303, %v1789
    %v1791 = vpop.f32.mrb[0].mxu0
    %1792 = vmatprep.mubr.f32.mxu0 0.0
    %1793 = vmatmul.mubr.f32.gmra.mrb[0].mxu0 %v724
    %v1794 = vpop.f32.mrb[0].mxu0
    %v1795 = vadd.f32 %v303, %v1794
    %v1796 = vpop.f32.mrb[0].mxu0
    %1797 = vmatprep.mubr.f32.mxu0 0.0
    %1798 = vmatmul.mubr.f32.gmra.mrb[0].mxu0 %v727
    %v1799 = vpop.f32.mrb[0].mxu0
    %v1800 = vadd.f32 %v303, %v1799
    %v1801 = vpop.f32.mrb[0].mxu0
    %1802 = vmatprep.mubr.f32.mxu0 0.0
    %1803 = vmatmul.mubr.f32.gmra.mrb[0].mxu0 %v730
    %v1804 = vpop.f32.mrb[0].mxu0
    %v1805 = vadd.f32 %v303, %v1804
    %v1806 = vpop.f32.mrb[0].mxu0
    %1807 = vmatprep.mubr.f32.mxu0 0.0
    %1808 = vmatmul.mubr.f32.gmra.mrb[0].mxu0 %v733
    %v1809 = vpop.f32.mrb[0].mxu0
    %v1810 = vadd.f32 %v303, %v1809
    %v1811 = vpop.f32.mrb[0].mxu0
    %1812 = vmatprep.mubr.f32.mxu0 0.0
    %1813 = vmatmul.mubr.f32.gmra.mrb[0].mxu0 %v736
    %v1814 = vpop.f32.mrb[0].mxu0
    %v1815 = vadd.f32 %v303, %v1814
    %v1816 = vpop.f32.mrb[0].mxu0
    %1817 = vmatprep.mubr.f32.mxu0 0.0
    %1818 = vmatmul.mubr.f32.gmra.mrb[0].mxu0 %v739
    %v1819 = vpop.f32.mrb[0].mxu0
    %v1820 = vadd.f32 %v303, %v1819
    %v1821 = vpop.f32.mrb[0].mxu0
    %1822 = vmatprep.mubr.f32.mxu0 0.0
    %1823 = vmatmul.mubr.f32.gmra.mrb[0].mxu0 %v742
    %v1824 = vpop.f32.mrb[0].mxu0
    %v1825 = vadd.f32 %v303, %v1824
    %v1826 = vpop.f32.mrb[0].mxu0
    %1827 = vmatprep.mubr.f32.mxu0 0.0
    %1828 = vmatmul.mubr.f32.gmra.mrb[0].mxu0 %v745
    %v1829 = vpop.f32.mrb[0].mxu0
    %v1830 = vadd.f32 %v303, %v1829
    %v1831 = vpop.f32.mrb[0].mxu0
    %1832 = vmatprep.mubr.f32.mxu0 0.0
    %1833 = vmatmul.mubr.f32.gmra.mrb[0].mxu0 %v748
    %v1834 = vpop.f32.mrb[0].mxu0
    %v1835 = vadd.f32 %v303, %v1834
    %v1836 = vpop.f32.mrb[0].mxu0
    %1837 = vmatprep.mubr.f32.mxu0 0.0
    %1838 = vmatmul.mubr.f32.gmra.mrb[0].mxu0 %v751
    %v1839 = vpop.f32.mrb[0].mxu0
    %v1840 = vadd.f32 %v303, %v1839
    %v1841 = vpop.f32.mrb[0].mxu0
    %1842 = vmatprep.mubr.f32.mxu0 0.0
    %1843 = vmatmul.mubr.f32.gmra.mrb[0].mxu0 %v754
    %v1844 = vpop.f32.mrb[0].mxu0
    %v1845 = vadd.f32 %v303, %v1844
    %v1846 = vpop.f32.mrb[0].mxu0
    %1847 = vmatprep.mubr.f32.mxu0 0.0
    %1848 = vmatmul.mubr.f32.gmra.mrb[0].mxu0 %v757
    %v1849 = vpop.f32.mrb[0].mxu0
    %v1850 = vadd.f32 %v303, %v1849
    %v1851 = vpop.f32.mrb[0].mxu0
    %1852 = vmatprep.mubr.f32.mxu0 0.0
    %1853 = vmatmul.mubr.f32.gmra.mrb[0].mxu0 %v760
    %v1854 = vpop.f32.mrb[0].mxu0
    %v1855 = vadd.f32 %v303, %v1854
    %v1856 = vpop.f32.mrb[0].mxu0
    %1857 = vmatprep.mubr.f32.mxu0 0.0
    %1858 = vmatmul.mubr.f32.gmra.mrb[0].mxu0 %v763
    %v1859 = vpop.f32.mrb[0].mxu0
    %v1860 = vadd.f32 %v303, %v1859
    %v1861 = vpop.f32.mrb[0].mxu0
    %1862 = vmatprep.mubr.f32.mxu0 0.0
    %1863 = vmatmul.mubr.f32.gmra.mrb[0].mxu0 %v766
    %v1864 = vpop.f32.mrb[0].mxu0
    %v1865 = vadd.f32 %v303, %v1864
    %v1866 = vpop.f32.mrb[0].mxu0
    %1867 = vmatprep.mubr.f32.mxu0 0.0
    %1868 = vmatmul.mubr.f32.gmra.mrb[0].mxu0 %v769
    %v1869 = vpop.f32.mrb[0].mxu0
    %v1870 = vadd.f32 %v303, %v1869
    %v1871 = vpop.f32.mrb[0].mxu0
    %1872 = vmatprep.mubr.f32.mxu0 0.0
    %1873 = vmatmul.mubr.f32.gmra.mrb[0].mxu0 %v772
    %v1874 = vpop.f32.mrb[0].mxu0
    %v1875 = vadd.f32 %v303, %v1874
    %v1876 = vpop.f32.mrb[0].mxu0
    %1877 = vmatprep.mubr.f32.mxu0 0.0
    %1878 = vmatmul.mubr.f32.gmra.mrb[0].mxu0 %v775
    %v1879 = vpop.f32.mrb[0].mxu0
    %v1880 = vadd.f32 %v303, %v1879
    %v1881 = vpop.f32.mrb[0].mxu0
    %1882 = vmatprep.mubr.f32.mxu0 0.0
    %1883 = vmatmul.mubr.f32.gmra.mrb[0].mxu0 %v778
    %v1884 = vpop.f32.mrb[0].mxu0
    %v1885 = vadd.f32 %v303, %v1884
    %v1886 = vpop.f32.mrb[0].mxu0
    %1887 = vmatprep.mubr.f32.mxu0 0.0
    %1888 = vmatmul.mubr.f32.gmra.mrb[0].mxu0 %v781
    %v1889 = vpop.f32.mrb[0].mxu0
    %v1890 = vadd.f32 %v303, %v1889
    %v1891 = vpop.f32.mrb[0].mxu0
    %1892 = vmatprep.mubr.f32.mxu0 0.0
    %1893 = vmatmul.mubr.f32.gmra.mrb[0].mxu0 %v784
    %v1894 = vpop.f32.mrb[0].mxu0
    %v1895 = vadd.f32 %v303, %v1894
    %v1896 = vpop.f32.mrb[0].mxu0
    %1897 = vmatprep.mubr.f32.mxu0 0.0
    %1898 = vmatmul.mubr.f32.gmra.mrb[0].mxu0 %v787
    %v1899 = vpop.f32.mrb[0].mxu0
    %v1900 = vadd.f32 %v303, %v1899
    %v1901 = vpop.f32.mrb[0].mxu0
    %1902 = vmatprep.mubr.f32.mxu0 0.0
    %1903 = vmatmul.mubr.f32.gmra.mrb[0].mxu0 %v790
    %v1904 = vpop.f32.mrb[0].mxu0
    %v1905 = vadd.f32 %v303, %v1904
    %v1906 = vpop.f32.mrb[0].mxu0
    %1907 = vmatprep.mubr.f32.mxu0 0.0
    %1908 = vmatmul.mubr.f32.gmra.mrb[0].mxu0 %v793
    %v1909 = vpop.f32.mrb[0].mxu0
    %v1910 = vadd.f32 %v303, %v1909
    %v1911 = vpop.f32.mrb[0].mxu0
    %1912 = vmatprep.mubr.f32.mxu0 0.0
    %1913 = vmatmul.mubr.f32.gmra.mrb[0].mxu0 %v796
    %v1914 = vpop.f32.mrb[0].mxu0
    %v1915 = vadd.f32 %v303, %v1914
    %v1916 = vpop.f32.mrb[0].mxu0
    %1917 = vmatprep.mubr.f32.mxu0 0.0
    %1918 = vmatmul.mubr.f32.gmra.mrb[0].mxu0 %v799
    %v1919 = vpop.f32.mrb[0].mxu0
    %v1920 = vadd.f32 %v303, %v1919
    %v1921 = vpop.f32.mrb[0].mxu0
    %1922 = vmatprep.mubr.f32.mxu0 0.0
    %1923 = vmatmul.mubr.f32.gmra.mrb[0].mxu0 %v802
    %v1924 = vpop.f32.mrb[0].mxu0
    %v1925 = vadd.f32 %v303, %v1924
    %v1926 = vpop.f32.mrb[0].mxu0
    %1927 = vmatprep.mubr.f32.mxu0 0.0
    %1928 = vmatmul.mubr.f32.gmra.mrb[0].mxu0 %v805
    %v1929 = vpop.f32.mrb[0].mxu0
    %v1930 = vadd.f32 %v303, %v1929
    %v1931 = vpop.f32.mrb[0].mxu0
    %1932 = vmatprep.mubr.f32.mxu0 0.0
    %1933 = vmatmul.mubr.f32.gmra.mrb[0].mxu0 %v808
    %v1934 = vpop.f32.mrb[0].mxu0
    %v1935 = vadd.f32 %v303, %v1934
    %v1936 = vpop.f32.mrb[0].mxu0
    %1937 = vmatprep.mubr.f32.mxu0 0.0
    %1938 = vmatmul.mubr.f32.gmra.mrb[0].mxu0 %v811
    %v1939 = vpop.f32.mrb[0].mxu0
    %v1940 = vadd.f32 %v303, %v1939
    %v1941 = vpop.f32.mrb[0].mxu0
    %1942 = vmatprep.mubr.f32.mxu0 0.0
    %1943 = vmatmul.mubr.f32.gmra.mrb[0].mxu0 %v814
    %v1944 = vpop.f32.mrb[0].mxu0
    %v1945 = vadd.f32 %v303, %v1944
    %v1946 = vpop.f32.mrb[0].mxu0
    %1947 = vmatprep.mubr.f32.mxu0 0.0
    %1948 = vmatmul.mubr.f32.gmra.mrb[0].mxu0 %v817
    %v1949 = vpop.f32.mrb[0].mxu0
    %v1950 = vadd.f32 %v303, %v1949
    %v1951 = vpop.f32.mrb[0].mxu0
    %1952 = vmatprep.mubr.f32.mxu0 0.0
    %1953 = vmatmul.mubr.f32.gmra.mrb[0].mxu0 %v820
    %v1954 = vpop.f32.mrb[0].mxu0
    %v1955 = vadd.f32 %v303, %v1954
    %v1956 = vpop.f32.mrb[0].mxu0
    %1957 = vmatprep.mubr.f32.mxu0 0.0
    %1958 = vmatmul.mubr.f32.gmra.mrb[0].mxu0 %v823
    %v1959 = vpop.f32.mrb[0].mxu0
    %v1960 = vadd.f32 %v303, %v1959
    %v1961 = vpop.f32.mrb[0].mxu0
    %1962 = vmatprep.mubr.f32.mxu0 0.0
    %1963 = vmatmul.mubr.f32.gmra.mrb[0].mxu0 %v826
    %v1964 = vpop.f32.mrb[0].mxu0
    %v1965 = vadd.f32 %v303, %v1964
    %v1966 = vpop.f32.mrb[0].mxu0
    %1967 = vmatprep.mubr.f32.mxu0 0.0
    %1968 = vmatmul.mubr.f32.gmra.mrb[0].mxu0 %v829
    %v1969 = vpop.f32.mrb[0].mxu0
    %v1970 = vadd.f32 %v303, %v1969
    %v1971 = vpop.f32.mrb[0].mxu0
    %1972 = vmatprep.mubr.f32.mxu0 0.0
    %1973 = vmatmul.mubr.f32.gmra.mrb[0].mxu0 %v832
    %v1974 = vpop.f32.mrb[0].mxu0
    %v1975 = vadd.f32 %v303, %v1974
    %v1976 = vpop.f32.mrb[0].mxu0
    %1977 = vmatprep.mubr.f32.mxu0 0.0
    %1978 = vmatmul.mubr.f32.gmra.mrb[0].mxu0 %v835
    %v1979 = vpop.f32.mrb[0].mxu0
    %v1980 = vadd.f32 %v303, %v1979
    %v1981 = vpop.f32.mrb[0].mxu0
    %1982 = vmatprep.mubr.f32.mxu0 0.0
    %1983 = vmatmul.mubr.f32.gmra.mrb[0].mxu0 %v838
    %v1984 = vpop.f32.mrb[0].mxu0
    %v1985 = vadd.f32 %v303, %v1984
    %v1986 = vpop.f32.mrb[0].mxu0
    %1987 = vmatprep.mubr.f32.mxu0 0.0
    %1988 = vmatmul.mubr.f32.gmra.mrb[0].mxu0 %v841
    %v1989 = vpop.f32.mrb[0].mxu0
    %v1990 = vadd.f32 %v303, %v1989
    %v1991 = vpop.f32.mrb[0].mxu0
    %1992 = vmatprep.mubr.f32.mxu0 0.0
    %1993 = vmatmul.mubr.f32.gmra.mrb[0].mxu0 %v844
    %v1994 = vpop.f32.mrb[0].mxu0
    %v1995 = vadd.f32 %v303, %v1994
    %v1996 = vpop.f32.mrb[0].mxu0
    %1997 = vmatprep.mubr.f32.mxu0 0.0
    %1998 = vmatmul.mubr.f32.gmra.mrb[0].mxu0 %v847
    %v1999 = vpop.f32.mrb[0].mxu0
    %v2000 = vadd.f32 %v303, %v1999
    %v2001 = vpop.f32.mrb[0].mxu0
    %2002 = vmatprep.mubr.f32.mxu0 0.0
    %2003 = vmatmul.mubr.f32.gmra.mrb[0].mxu0 %v850
    %v2004 = vpop.f32.mrb[0].mxu0
    %v2005 = vadd.f32 %v303, %v2004
    %v2006 = vpop.f32.mrb[0].mxu0
    %2007 = vmatprep.mubr.f32.mxu0 0.0
    %2008 = vmatmul.mubr.f32.gmra.mrb[0].mxu0 %v853
    %v2009 = vpop.f32.mrb[0].mxu0
    %v2010 = vadd.f32 %v303, %v2009
    %v2011 = vpop.f32.mrb[0].mxu0
    %2012 = vmatprep.mubr.f32.mxu0 0.0
    %2013 = vmatmul.mubr.f32.gmra.mrb[0].mxu0 %v856
    %v2014 = vpop.f32.mrb[0].mxu0
    %v2015 = vadd.f32 %v303, %v2014
    %v2016 = vpop.f32.mrb[0].mxu0
    %2017 = vmatprep.mubr.f32.mxu0 0.0
    %2018 = vmatmul.mubr.f32.gmra.mrb[0].mxu0 %v859
    %v2019 = vpop.f32.mrb[0].mxu0
    %v2020 = vadd.f32 %v303, %v2019
    %v2021 = vpop.f32.mrb[0].mxu0
    %2022 = vmatprep.mubr.f32.mxu0 0.0
    %2023 = vmatmul.mubr.f32.gmra.mrb[0].mxu0 %v862
    %v2024 = vpop.f32.mrb[0].mxu0
    %v2025 = vadd.f32 %v303, %v2024
    %v2026 = vpop.f32.mrb[0].mxu0
    %2027 = vmatprep.mubr.f32.mxu0 0.0
    %2028 = vmatmul.mubr.f32.gmra.mrb[0].mxu0 %v865
    %v2029 = vpop.f32.mrb[0].mxu0
    %v2030 = vadd.f32 %v303, %v2029
    %v2031 = vpop.f32.mrb[0].mxu0
    %2032 = vmatprep.mubr.f32.mxu0 0.0
    %2033 = vmatmul.mubr.f32.gmra.mrb[0].mxu0 %v868
    %v2034 = vpop.f32.mrb[0].mxu0
    %v2035 = vadd.f32 %v303, %v2034
    %v2036 = vpop.f32.mrb[0].mxu0
    %2037 = vmatprep.mubr.f32.mxu0 0.0
    %2038 = vmatmul.mubr.f32.gmra.mrb[0].mxu0 %v871
    %v2039 = vpop.f32.mrb[0].mxu0
    %v2040 = vadd.f32 %v303, %v2039
    %v2041 = vpop.f32.mrb[0].mxu0
    %2042 = vmatprep.mubr.f32.mxu0 0.0
    %2043 = vmatmul.mubr.f32.gmra.mrb[0].mxu0 %v874
    %v2044 = vpop.f32.mrb[0].mxu0
    %v2045 = vadd.f32 %v303, %v2044
    %v2046 = vpop.f32.mrb[0].mxu0
    %2047 = vmatprep.mubr.f32.mxu0 0.0
    %2048 = vmatmul.mubr.f32.gmra.mrb[0].mxu0 %v877
    %v2049 = vpop.f32.mrb[0].mxu0
    %v2050 = vadd.f32 %v303, %v2049
    %v2051 = vpop.f32.mrb[0].mxu0
    %2052 = vmatprep.mubr.f32.mxu0 0.0
    %2053 = vmatmul.mubr.f32.gmra.mrb[0].mxu0 %v880
    %v2054 = vpop.f32.mrb[0].mxu0
    %v2055 = vadd.f32 %v303, %v2054
    %v2056 = vpop.f32.mrb[0].mxu0
    %2057 = vmatprep.mubr.f32.mxu0 0.0
    %2058 = vmatmul.mubr.f32.gmra.mrb[0].mxu0 %v883
    %v2059 = vpop.f32.mrb[0].mxu0
    %v2060 = vadd.f32 %v303, %v2059
    %v2061 = vpop.f32.mrb[0].mxu0
    %2062 = vmatprep.mubr.f32.mxu0 0.0
    %2063 = vmatmul.mubr.f32.gmra.mrb[0].mxu0 %v886
    %v2064 = vpop.f32.mrb[0].mxu0
    %v2065 = vadd.f32 %v303, %v2064
    %v2066 = vpop.f32.mrb[0].mxu0
    %2067 = vmatprep.mubr.f32.mxu0 0.0
    %2068 = vmatmul.mubr.f32.gmra.mrb[0].mxu0 %v889
    %v2069 = vpop.f32.mrb[0].mxu0
    %v2070 = vadd.f32 %v303, %v2069
    %v2071 = vpop.f32.mrb[0].mxu0
    %2072 = vmatprep.mubr.f32.mxu0 0.0
    %2073 = vmatmul.mubr.f32.gmra.mrb[0].mxu0 %v892
    %v2074 = vpop.f32.mrb[0].mxu0
    %v2075 = vadd.f32 %v303, %v2074
    %v2076 = vpop.f32.mrb[0].mxu0
    %2077 = vmatprep.mubr.f32.mxu0 0.0
    %2078 = vmatmul.mubr.f32.gmra.mrb[0].mxu0 %v895
    %v2079 = vpop.f32.mrb[0].mxu0
    %v2080 = vadd.f32 %v303, %v2079
    %v2081 = vpop.f32.mrb[0].mxu0
    %2082 = vmatprep.mubr.f32.mxu0 0.0
    %2083 = vmatmul.mubr.f32.gmra.mrb[0].mxu0 %v898
    %v2084 = vpop.f32.mrb[0].mxu0
    %v2085 = vadd.f32 %v303, %v2084
    %v2086 = vpop.f32.mrb[0].mxu0
    %2087 = vmatprep.mubr.f32.mxu0 0.0
    %2088 = vmatmul.mubr.f32.gmra.mrb[0].mxu0 %v901
    %v2089 = vpop.f32.mrb[0].mxu0
    %v2090 = vadd.f32 %v303, %v2089
    %v2091 = vpop.f32.mrb[0].mxu0
    %2092 = vmatprep.mubr.f32.mxu0 0.0
    %2093 = vmatmul.mubr.f32.gmra.mrb[0].mxu0 %v904
    %v2094 = vpop.f32.mrb[0].mxu0
    %v2095 = vadd.f32 %v303, %v2094
    %v2096 = vpop.f32.mrb[0].mxu0
    %2097 = vmatprep.mubr.f32.mxu0 0.0
    %2098 = vmatmul.mubr.f32.gmra.mrb[0].mxu0 %v907
    %v2099 = vpop.f32.mrb[0].mxu0
    %v2100 = vadd.f32 %v303, %v2099
    %v2101 = vpop.f32.mrb[0].mxu0
    %2102 = vmatprep.mubr.f32.mxu0 0.0
    %2103 = vmatmul.mubr.f32.gmra.mrb[0].mxu0 %v910
    %v2104 = vpop.f32.mrb[0].mxu0
    %v2105 = vadd.f32 %v303, %v2104
    %v2106 = vpop.f32.mrb[0].mxu0
    %2107 = vmatprep.mubr.f32.mxu0 0.0
    %2108 = vmatmul.mubr.f32.gmra.mrb[0].mxu0 %v913
    %v2109 = vpop.f32.mrb[0].mxu0
    %v2110 = vadd.f32 %v303, %v2109
    %v2111 = vpop.f32.mrb[0].mxu0
    %2112 = vmatprep.mubr.f32.mxu0 0.0
    %2113 = vmatmul.mubr.f32.gmra.mrb[0].mxu0 %v916
    %v2114 = vpop.f32.mrb[0].mxu0
    %v2115 = vadd.f32 %v303, %v2114
    %v2116 = vpop.f32.mrb[0].mxu0
    %2117 = vmatprep.mubr.f32.mxu0 0.0
    %2118 = vmatmul.mubr.f32.gmra.mrb[0].mxu0 %v919
    %v2119 = vpop.f32.mrb[0].mxu0
    %v2120 = vadd.f32 %v303, %v2119
    %v2121 = vpop.f32.mrb[0].mxu0
    %2122 = vmatprep.mubr.f32.mxu0 0.0
    %2123 = vmatmul.mubr.f32.gmra.mrb[0].mxu0 %v922
    %v2124 = vpop.f32.mrb[0].mxu0
    %v2125 = vadd.f32 %v303, %v2124
    %v2126 = vpop.f32.mrb[0].mxu0
    %2127 = vmatprep.mubr.f32.mxu0 0.0
    %2128 = vmatmul.mubr.f32.gmra.mrb[0].mxu0 %v925
    %v2129 = vpop.f32.mrb[0].mxu0
    %v2130 = vadd.f32 %v303, %v2129
    %v2131 = vpop.f32.mrb[0].mxu0
    %2132 = vmatprep.mubr.f32.mxu0 0.0
    %2133 = vmatmul.mubr.f32.gmra.mrb[0].mxu0 %v928
    %v2134 = vpop.f32.mrb[0].mxu0
    %v2135 = vadd.f32 %v303, %v2134
    %v2136 = vpop.f32.mrb[0].mxu0
    %2137 = vmatprep.mubr.f32.mxu0 0.0
    %2138 = vmatmul.mubr.f32.gmra.mrb[0].mxu0 %v931
    %v2139 = vpop.f32.mrb[0].mxu0
    %v2140 = vadd.f32 %v303, %v2139
    %v2141 = vpop.f32.mrb[0].mxu0
    %2142 = vmatprep.mubr.f32.mxu0 0.0
    %2143 = vmatmul.mubr.f32.gmra.mrb[0].mxu0 %v934
    %v2144 = vpop.f32.mrb[0].mxu0
    %v2145 = vadd.f32 %v303, %v2144
    %v2146 = vpop.f32.mrb[0].mxu0
    %2147 = vmatprep.mubr.f32.mxu0 0.0
    %2148 = vmatmul.mubr.f32.gmra.mrb[0].mxu0 %v937
    %v2149 = vpop.f32.mrb[0].mxu0
    %v2150 = vadd.f32 %v303, %v2149
    %v2151 = vpop.f32.mrb[0].mxu0
    %2152 = vmatprep.mubr.f32.mxu0 0.0
    %2153 = vmatmul.mubr.f32.gmra.mrb[0].mxu0 %v940
    %v2154 = vpop.f32.mrb[0].mxu0
    %v2155 = vadd.f32 %v303, %v2154
    %v2156 = vpop.f32.mrb[0].mxu0
    %2157 = vmatprep.mubr.f32.mxu0 0.0
    %2158 = vmatmul.mubr.f32.gmra.mrb[0].mxu0 %v943
    %v2159 = vpop.f32.mrb[0].mxu0
    %v2160 = vadd.f32 %v303, %v2159
    %v2161 = vpop.f32.mrb[0].mxu0
    %2162 = vmatprep.mubr.f32.mxu0 0.0
    %2163 = vmatmul.mubr.f32.gmra.mrb[0].mxu0 %v946
    %v2164 = vpop.f32.mrb[0].mxu0
    %v2165 = vadd.f32 %v303, %v2164
    %v2166 = vpop.f32.mrb[0].mxu0
    %2167 = vmatprep.mubr.f32.mxu0 0.0
    %2168 = vmatmul.mubr.f32.gmra.mrb[0].mxu0 %v949
    %v2169 = vpop.f32.mrb[0].mxu0
    %v2170 = vadd.f32 %v303, %v2169
    %v2171 = vpop.f32.mrb[0].mxu0
    %2172 = vmatprep.mubr.f32.mxu0 0.0
    %2173 = vmatmul.mubr.f32.gmra.mrb[0].mxu0 %v952
    %v2174 = vpop.f32.mrb[0].mxu0
    %v2175 = vadd.f32 %v303, %v2174
    %v2176 = vpop.f32.mrb[0].mxu0
    %2177 = vmatprep.mubr.f32.mxu0 0.0
    %2178 = vmatmul.mubr.f32.gmra.mrb[0].mxu0 %v955
    %v2179 = vpop.f32.mrb[0].mxu0
    %v2180 = vadd.f32 %v303, %v2179
    %v2181 = vpop.f32.mrb[0].mxu0
    %2182 = vmatprep.mubr.f32.mxu0 0.0
    %2183 = vmatmul.mubr.f32.gmra.mrb[0].mxu0 %v958
    %v2184 = vpop.f32.mrb[0].mxu0
    %v2185 = vadd.f32 %v303, %v2184
    %v2186 = vpop.f32.mrb[0].mxu0
    %2187 = vmatprep.mubr.f32.mxu0 0.0
    %2188 = vmatmul.mubr.f32.gmra.mrb[0].mxu0 %v961
    %v2189 = vpop.f32.mrb[0].mxu0
    %v2190 = vadd.f32 %v303, %v2189
    %v2191 = vpop.f32.mrb[0].mxu0
    %2192 = vmatprep.mubr.f32.mxu0 0.0
    %2193 = vmatmul.mubr.f32.gmra.mrb[0].mxu0 %v964
    %v2194 = vpop.f32.mrb[0].mxu0
    %v2195 = vadd.f32 %v303, %v2194
    %v2196 = vpop.f32.mrb[0].mxu0
    %2197 = vmatprep.mubr.f32.mxu0 0.0
    %2198 = vmatmul.mubr.f32.gmra.mrb[0].mxu0 %v967
    %v2199 = vpop.f32.mrb[0].mxu0
    %v2200 = vadd.f32 %v303, %v2199
    %v2201 = vpop.f32.mrb[0].mxu0
    %2202 = vmatprep.mubr.f32.mxu0 0.0
    %2203 = vmatmul.mubr.f32.gmra.mrb[0].mxu0 %v970
    %v2204 = vpop.f32.mrb[0].mxu0
    %v2205 = vadd.f32 %v303, %v2204
    %v2206 = vpop.f32.mrb[0].mxu0
    %2207 = vmatprep.mubr.f32.mxu0 0.0
    %2208 = vmatmul.mubr.f32.gmra.mrb[0].mxu0 %v973
    %v2209 = vpop.f32.mrb[0].mxu0
    %v2210 = vadd.f32 %v303, %v2209
    %v2211 = vpop.f32.mrb[0].mxu0
    %2212 = vmatprep.mubr.f32.mxu0 0.0
    %2213 = vmatmul.mubr.f32.gmra.mrb[0].mxu0 %v976
    %v2214 = vpop.f32.mrb[0].mxu0
    %v2215 = vadd.f32 %v303, %v2214
    %v2216 = vpop.f32.mrb[0].mxu0
    %2217 = vmatprep.mubr.f32.mxu0 0.0
    %2218 = vmatmul.mubr.f32.gmra.mrb[0].mxu0 %v979
    %v2219 = vpop.f32.mrb[0].mxu0
    %v2220 = vadd.f32 %v303, %v2219
    %v2221 = vpop.f32.mrb[0].mxu0
    %2222 = vmatprep.mubr.f32.mxu0 0.0
    %2223 = vmatmul.mubr.f32.gmra.mrb[0].mxu0 %v982
    %v2224 = vpop.f32.mrb[0].mxu0
    %v2225 = vadd.f32 %v303, %v2224
    %v2226 = vpop.f32.mrb[0].mxu0
    %2227 = vmatprep.mubr.f32.mxu0 0.0
    %2228 = vmatmul.mubr.f32.gmra.mrb[0].mxu0 %v985
    %v2229 = vpop.f32.mrb[0].mxu0
    %v2230 = vadd.f32 %v303, %v2229
    %v2231 = vpop.f32.mrb[0].mxu0
    %2232 = vmatprep.mubr.f32.mxu0 0.0
    %2233 = vmatmul.mubr.f32.gmra.mrb[0].mxu0 %v988
    %v2234 = vpop.f32.mrb[0].mxu0
    %v2235 = vadd.f32 %v303, %v2234
    %v2236 = vpop.f32.mrb[0].mxu0
    %2237 = vmatprep.mubr.f32.mxu0 0.0
    %2238 = vmatmul.mubr.f32.gmra.mrb[0].mxu0 %v991
    %v2239 = vpop.f32.mrb[0].mxu0
    %v2240 = vadd.f32 %v303, %v2239
    %v2241 = vpop.f32.mrb[0].mxu0
    %2242 = vmatprep.mubr.f32.mxu0 0.0
    %2243 = vmatmul.mubr.f32.gmra.mrb[0].mxu0 %v994
    %v2244 = vpop.f32.mrb[0].mxu0
    %v2245 = vadd.f32 %v303, %v2244
    %v2246 = vpop.f32.mrb[0].mxu0
    %2247 = vmatprep.mubr.f32.mxu0 0.0
    %2248 = vmatmul.mubr.f32.gmra.mrb[0].mxu0 %v997
    %v2249 = vpop.f32.mrb[0].mxu0
    %v2250 = vadd.f32 %v303, %v2249
    %v2251 = vpop.f32.mrb[0].mxu0
    %2252 = vmatprep.mubr.f32.mxu0 0.0
    %2253 = vmatmul.mubr.f32.gmra.mrb[0].mxu0 %v1000
    %v2254 = vpop.f32.mrb[0].mxu0
    %v2255 = vadd.f32 %v303, %v2254
    %v2256 = vpop.f32.mrb[0].mxu0
    %2257 = vmatprep.mubr.f32.mxu0 0.0
    %2258 = vmatmul.mubr.f32.gmra.mrb[0].mxu0 %v1003
    %v2259 = vpop.f32.mrb[0].mxu0
    %v2260 = vadd.f32 %v303, %v2259
    %v2261 = vpop.f32.mrb[0].mxu0
    %2262 = vmatprep.mubr.f32.mxu0 0.0
    %2263 = vmatmul.mubr.f32.gmra.mrb[0].mxu0 %v1006
    %v2264 = vpop.f32.mrb[0].mxu0
    %v2265 = vadd.f32 %v303, %v2264
    %v2266 = vpop.f32.mrb[0].mxu0
    %2267 = vmatprep.mubr.f32.mxu0 0.0
    %2268 = vmatmul.mubr.f32.gmra.mrb[0].mxu0 %v1009
    %v2269 = vpop.f32.mrb[0].mxu0
    %v2270 = vadd.f32 %v303, %v2269
    %v2271 = vpop.f32.mrb[0].mxu0
    %2272 = vmatprep.mubr.f32.mxu0 0.0
    %2273 = vmatmul.mubr.f32.gmra.mrb[0].mxu0 %v1012
    %v2274 = vpop.f32.mrb[0].mxu0
    %v2275 = vadd.f32 %v303, %v2274
    %v2276 = vpop.f32.mrb[0].mxu0
    %2277 = vmatprep.mubr.f32.mxu0 0.0
    %2278 = vmatmul.mubr.f32.gmra.mrb[0].mxu0 %v1015
    %v2279 = vpop.f32.mrb[0].mxu0
    %v2280 = vadd.f32 %v303, %v2279
    %v2281 = vpop.f32.mrb[0].mxu0
    %2282 = vmatprep.mubr.f32.mxu0 0.0
    %2283 = vmatmul.mubr.f32.gmra.mrb[0].mxu0 %v1018
    %v2284 = vpop.f32.mrb[0].mxu0
    %v2285 = vadd.f32 %v303, %v2284
    %v2286 = vpop.f32.mrb[0].mxu0
    %2287 = vmatprep.mubr.f32.mxu0 0.0
    %2288 = vmatmul.mubr.f32.gmra.mrb[0].mxu0 %v1021
    %v2289 = vpop.f32.mrb[0].mxu0
    %v2290 = vadd.f32 %v303, %v2289
    %v2291 = vpop.f32.mrb[0].mxu0
    %2292 = vmatprep.mubr.f32.mxu0 0.0
    %2293 = vmatmul.mubr.f32.gmra.mrb[0].mxu0 %v1024
    %v2294 = vpop.f32.mrb[0].mxu0
    %v2295 = vadd.f32 %v303, %v2294
    %v2296 = vpop.f32.mrb[0].mxu0
    %2297 = vmatprep.mubr.f32.mxu0 0.0
    %2298 = vmatmul.mubr.f32.gmra.mrb[0].mxu0 %v1027
    %v2299 = vpop.f32.mrb[0].mxu0
    %v2300 = vadd.f32 %v303, %v2299
    %v2301 = vpop.f32.mrb[0].mxu0
    %2302 = vdwg.mxu0
    %v2303 = vmul.f32 %v1100, 0.1
    %v2304 = vmul.f32 %v1105, 0.1
    %v2305 = vmul.f32 %v1110, 0.1
    %v2306 = vmul.f32 %v1115, 0.1
    %v2307 = vmul.f32 %v1120, 0.1
    %v2308 = vmul.f32 %v1125, 0.1
    %v2309 = vmul.f32 %v1130, 0.1
    %v2310 = vmul.f32 %v1135, 0.1
    %v2311 = vmul.f32 %v1140, 0.1
    %v2312 = vmul.f32 %v1145, 0.1
    %v2313 = vmul.f32 %v1150, 0.1
    %v2314 = vmul.f32 %v1155, 0.1
    %v2315 = vmul.f32 %v1160, 0.1
    %v2316 = vmul.f32 %v1165, 0.1
    %v2317 = vmul.f32 %v1170, 0.1
    %v2318 = vmul.f32 %v1175, 0.1
    %v2319 = vmul.f32 %v1180, 0.1
    %v2320 = vmul.f32 %v1185, 0.1
    %v2321 = vmul.f32 %v1190, 0.1
    %v2322 = vmul.f32 %v1195, 0.1
    %v2323 = vmul.f32 %v1200, 0.1
    %v2324 = vmul.f32 %v1205, 0.1
    %v2325 = vmul.f32 %v1210, 0.1
    %v2326 = vmul.f32 %v1215, 0.1
    %v2327 = vmul.f32 %v1220, 0.1
    %v2328 = vmul.f32 %v1225, 0.1
    %v2329 = vmul.f32 %v1230, 0.1
    %v2330 = vmul.f32 %v1235, 0.1
    %v2331 = vmul.f32 %v1240, 0.1
    %v2332 = vmul.f32 %v1245, 0.1
    %v2333 = vmul.f32 %v1250, 0.1
    %v2334 = vmul.f32 %v1255, 0.1
    %v2335 = vmul.f32 %v1260, 0.1
    %v2336 = vmul.f32 %v1265, 0.1
    %v2337 = vmul.f32 %v1270, 0.1
    %v2338 = vmul.f32 %v1275, 0.1
    %v2339 = vmul.f32 %v1280, 0.1
    %v2340 = vmul.f32 %v1285, 0.1
    %v2341 = vmul.f32 %v1290, 0.1
    %v2342 = vmul.f32 %v1295, 0.1
    %v2343 = vmul.f32 %v1300, 0.1
    %v2344 = vmul.f32 %v1305, 0.1
    %v2345 = vmul.f32 %v1310, 0.1
    %v2346 = vmul.f32 %v1315, 0.1
    %v2347 = vmul.f32 %v1320, 0.1
    %v2348 = vmul.f32 %v1325, 0.1
    %v2349 = vmul.f32 %v1330, 0.1
    %v2350 = vmul.f32 %v1335, 0.1
    %v2351 = vmul.f32 %v1340, 0.1
    %v2352 = vmul.f32 %v1345, 0.1
    %v2353 = vmul.f32 %v1350, 0.1
    %v2354 = vmul.f32 %v1355, 0.1
    %v2355 = vmul.f32 %v1360, 0.1
    %v2356 = vmul.f32 %v1365, 0.1
    %v2357 = vmul.f32 %v1370, 0.1
    %v2358 = vmul.f32 %v1375, 0.1
    %v2359 = vmul.f32 %v1380, 0.1
    %v2360 = vmul.f32 %v1385, 0.1
    %v2361 = vmul.f32 %v1390, 0.1
    %v2362 = vmul.f32 %v1395, 0.1
    %v2363 = vmul.f32 %v1400, 0.1
    %v2364 = vmul.f32 %v1405, 0.1
    %v2365 = vmul.f32 %v1410, 0.1
    %v2366 = vmul.f32 %v1415, 0.1
    %v2367 = vmul.f32 %v1420, 0.1
    %v2368 = vmul.f32 %v1425, 0.1
    %v2369 = vmul.f32 %v1430, 0.1
    %v2370 = vmul.f32 %v1435, 0.1
    %v2371 = vmul.f32 %v1440, 0.1
    %v2372 = vmul.f32 %v1445, 0.1
    %v2373 = vmul.f32 %v1450, 0.1
    %v2374 = vmul.f32 %v1455, 0.1
    %v2375 = vmul.f32 %v1460, 0.1
    %v2376 = vmul.f32 %v1465, 0.1
    %v2377 = vmul.f32 %v1470, 0.1
    %v2378 = vmul.f32 %v1475, 0.1
    %v2379 = vmul.f32 %v1480, 0.1
    %v2380 = vmul.f32 %v1485, 0.1
    %v2381 = vmul.f32 %v1490, 0.1
    %v2382 = vmul.f32 %v1495, 0.1
    %v2383 = vmul.f32 %v1500, 0.1
    %v2384 = vmul.f32 %v1505, 0.1
    %v2385 = vmul.f32 %v1510, 0.1
    %v2386 = vmul.f32 %v1515, 0.1
    %v2387 = vmul.f32 %v1520, 0.1
    %v2388 = vmul.f32 %v1525, 0.1
    %v2389 = vmul.f32 %v1530, 0.1
    %v2390 = vmul.f32 %v1535, 0.1
    %v2391 = vmul.f32 %v1540, 0.1
    %v2392 = vmul.f32 %v1545, 0.1
    %v2393 = vmul.f32 %v1550, 0.1
    %v2394 = vmul.f32 %v1555, 0.1
    %v2395 = vmul.f32 %v1560, 0.1
    %v2396 = vmul.f32 %v1565, 0.1
    %v2397 = vmul.f32 %v1570, 0.1
    %v2398 = vmul.f32 %v1575, 0.1
    %v2399 = vmul.f32 %v1580, 0.1
    %v2400 = vmul.f32 %v1585, 0.1
    %v2401 = vmul.f32 %v1590, 0.1
    %v2402 = vmul.f32 %v1595, 0.1
    %v2403 = vmul.f32 %v1600, 0.1
    %v2404 = vmul.f32 %v1605, 0.1
    %v2405 = vmul.f32 %v1610, 0.1
    %v2406 = vmul.f32 %v1615, 0.1
    %v2407 = vmul.f32 %v1620, 0.1
    %v2408 = vmul.f32 %v1625, 0.1
    %v2409 = vmul.f32 %v1630, 0.1
    %v2410 = vmul.f32 %v1635, 0.1
    %v2411 = vmul.f32 %v1640, 0.1
    %v2412 = vmul.f32 %v1645, 0.1
    %v2413 = vmul.f32 %v1650, 0.1
    %v2414 = vmul.f32 %v1655, 0.1
    %v2415 = vmul.f32 %v1660, 0.1
    %v2416 = vmul.f32 %v1665, 0.1
    %v2417 = vmul.f32 %v1670, 0.1
    %v2418 = vmul.f32 %v1675, 0.1
    %v2419 = vmul.f32 %v1680, 0.1
    %v2420 = vmul.f32 %v1685, 0.1
    %v2421 = vmul.f32 %v1690, 0.1
    %v2422 = vmul.f32 %v1695, 0.1
    %v2423 = vmul.f32 %v1700, 0.1
    %v2424 = vmul.f32 %v1705, 0.1
    %v2425 = vmul.f32 %v1710, 0.1
    %v2426 = vmul.f32 %v1715, 0.1
    %v2427 = vmul.f32 %v1720, 0.1
    %v2428 = vmul.f32 %v1725, 0.1
    %v2429 = vmul.f32 %v1730, 0.1
    %v2430 = vmul.f32 %v1735, 0.1
    %v2431 = vmul.f32 %v1740, 0.1
    %v2432 = vmul.f32 %v1745, 0.1
    %v2433 = vmul.f32 %v1750, 0.1
    %v2434 = vmul.f32 %v1755, 0.1
    %v2435 = vmul.f32 %v1760, 0.1
    %v2436 = vmul.f32 %v1765, 0.1
    %v2437 = vmul.f32 %v1770, 0.1
    %v2438 = vmul.f32 %v1775, 0.1
    %v2439 = vmul.f32 %v1780, 0.1
    %v2440 = vmul.f32 %v1785, 0.1
    %v2441 = vmul.f32 %v1790, 0.1
    %v2442 = vmul.f32 %v1795, 0.1
    %v2443 = vmul.f32 %v1800, 0.1
    %v2444 = vmul.f32 %v1805, 0.1
    %v2445 = vmul.f32 %v1810, 0.1
    %v2446 = vmul.f32 %v1815, 0.1
    %v2447 = vmul.f32 %v1820, 0.1
    %v2448 = vmul.f32 %v1825, 0.1
    %v2449 = vmul.f32 %v1830, 0.1
    %v2450 = vmul.f32 %v1835, 0.1
    %v2451 = vmul.f32 %v1840, 0.1
    %v2452 = vmul.f32 %v1845, 0.1
    %v2453 = vmul.f32 %v1850, 0.1
    %v2454 = vmul.f32 %v1855, 0.1
    %v2455 = vmul.f32 %v1860, 0.1
    %v2456 = vmul.f32 %v1865, 0.1
    %v2457 = vmul.f32 %v1870, 0.1
    %v2458 = vmul.f32 %v1875, 0.1
    %v2459 = vmul.f32 %v1880, 0.1
    %v2460 = vmul.f32 %v1885, 0.1
    %v2461 = vmul.f32 %v1890, 0.1
    %v2462 = vmul.f32 %v1895, 0.1
    %v2463 = vmul.f32 %v1900, 0.1
    %v2464 = vmul.f32 %v1905, 0.1
    %v2465 = vmul.f32 %v1910, 0.1
    %v2466 = vmul.f32 %v1915, 0.1
    %v2467 = vmul.f32 %v1920, 0.1
    %v2468 = vmul.f32 %v1925, 0.1
    %v2469 = vmul.f32 %v1930, 0.1
    %v2470 = vmul.f32 %v1935, 0.1
    %v2471 = vmul.f32 %v1940, 0.1
    %v2472 = vmul.f32 %v1945, 0.1
    %v2473 = vmul.f32 %v1950, 0.1
    %v2474 = vmul.f32 %v1955, 0.1
    %v2475 = vmul.f32 %v1960, 0.1
    %v2476 = vmul.f32 %v1965, 0.1
    %v2477 = vmul.f32 %v1970, 0.1
    %v2478 = vmul.f32 %v1975, 0.1
    %v2479 = vmul.f32 %v1980, 0.1
    %v2480 = vmul.f32 %v1985, 0.1
    %v2481 = vmul.f32 %v1990, 0.1
    %v2482 = vmul.f32 %v1995, 0.1
    %v2483 = vmul.f32 %v2000, 0.1
    %v2484 = vmul.f32 %v2005, 0.1
    %v2485 = vmul.f32 %v2010, 0.1
    %v2486 = vmul.f32 %v2015, 0.1
    %v2487 = vmul.f32 %v2020, 0.1
    %v2488 = vmul.f32 %v2025, 0.1
    %v2489 = vmul.f32 %v2030, 0.1
    %v2490 = vmul.f32 %v2035, 0.1
    %v2491 = vmul.f32 %v2040, 0.1
    %v2492 = vmul.f32 %v2045, 0.1
    %v2493 = vmul.f32 %v2050, 0.1
    %v2494 = vmul.f32 %v2055, 0.1
    %v2495 = vmul.f32 %v2060, 0.1
    %v2496 = vmul.f32 %v2065, 0.1
    %v2497 = vmul.f32 %v2070, 0.1
    %v2498 = vmul.f32 %v2075, 0.1
    %v2499 = vmul.f32 %v2080, 0.1
    %v2500 = vmul.f32 %v2085, 0.1
    %v2501 = vmul.f32 %v2090, 0.1
    %v2502 = vmul.f32 %v2095, 0.1
    %v2503 = vmul.f32 %v2100, 0.1
    %v2504 = vmul.f32 %v2105, 0.1
    %v2505 = vmul.f32 %v2110, 0.1
    %v2506 = vmul.f32 %v2115, 0.1
    %v2507 = vmul.f32 %v2120, 0.1
    %v2508 = vmul.f32 %v2125, 0.1
    %v2509 = vmul.f32 %v2130, 0.1
    %v2510 = vmul.f32 %v2135, 0.1
    %v2511 = vmul.f32 %v2140, 0.1
    %v2512 = vmul.f32 %v2145, 0.1
    %v2513 = vmul.f32 %v2150, 0.1
    %v2514 = vmul.f32 %v2155, 0.1
    %v2515 = vmul.f32 %v2160, 0.1
    %v2516 = vmul.f32 %v2165, 0.1
    %v2517 = vmul.f32 %v2170, 0.1
    %v2518 = vmul.f32 %v2175, 0.1
    %v2519 = vmul.f32 %v2180, 0.1
    %v2520 = vmul.f32 %v2185, 0.1
    %v2521 = vmul.f32 %v2190, 0.1
    %v2522 = vmul.f32 %v2195, 0.1
    %v2523 = vmul.f32 %v2200, 0.1
    %v2524 = vmul.f32 %v2205, 0.1
    %v2525 = vmul.f32 %v2210, 0.1
    %v2526 = vmul.f32 %v2215, 0.1
    %v2527 = vmul.f32 %v2220, 0.1
    %v2528 = vmul.f32 %v2225, 0.1
    %v2529 = vmul.f32 %v2230, 0.1
    %v2530 = vmul.f32 %v2235, 0.1
    %v2531 = vmul.f32 %v2240, 0.1
    %v2532 = vmul.f32 %v2245, 0.1
    %v2533 = vmul.f32 %v2250, 0.1
    %v2534 = vmul.f32 %v2255, 0.1
    %v2535 = vmul.f32 %v2260, 0.1
    %v2536 = vmul.f32 %v2265, 0.1
    %v2537 = vmul.f32 %v2270, 0.1
    %v2538 = vmul.f32 %v2275, 0.1
    %v2539 = vmul.f32 %v2280, 0.1
    %v2540 = vmul.f32 %v2285, 0.1
    %v2541 = vmul.f32 %v2290, 0.1
    %v2542 = vmul.f32 %v2295, 0.1
    %v2543 = vmul.f32 %v2300, 0.1
    %v2544 = vmax.f32 %v1100, %v2303
    %v2545 = vmax.f32 %v1105, %v2304
    %v2546 = vmax.f32 %v1110, %v2305
    %v2547 = vmax.f32 %v1115, %v2306
    %v2548 = vmax.f32 %v1120, %v2307
    %v2549 = vmax.f32 %v1125, %v2308
    %v2550 = vmax.f32 %v1130, %v2309
    %v2551 = vmax.f32 %v1135, %v2310
    %v2552 = vmax.f32 %v1140, %v2311
    %v2553 = vmax.f32 %v1145, %v2312
    %v2554 = vmax.f32 %v1150, %v2313
    %v2555 = vmax.f32 %v1155, %v2314
    %v2556 = vmax.f32 %v1160, %v2315
    %v2557 = vmax.f32 %v1165, %v2316
    %v2558 = vmax.f32 %v1170, %v2317
    %v2559 = vmax.f32 %v1175, %v2318
    %v2560 = vmax.f32 %v1180, %v2319
    %v2561 = vmax.f32 %v1185, %v2320
    %v2562 = vmax.f32 %v1190, %v2321
    %v2563 = vmax.f32 %v1195, %v2322
    %v2564 = vmax.f32 %v1200, %v2323
    %v2565 = vmax.f32 %v1205, %v2324
    %v2566 = vmax.f32 %v1210, %v2325
    %v2567 = vmax.f32 %v1215, %v2326
    %v2568 = vmax.f32 %v1220, %v2327
    %v2569 = vmax.f32 %v1225, %v2328
    %v2570 = vmax.f32 %v1230, %v2329
    %v2571 = vmax.f32 %v1235, %v2330
    %v2572 = vmax.f32 %v1240, %v2331
    %v2573 = vmax.f32 %v1245, %v2332
    %v2574 = vmax.f32 %v1250, %v2333
    %v2575 = vmax.f32 %v1255, %v2334
    %v2576 = vmax.f32 %v1260, %v2335
    %v2577 = vmax.f32 %v1265, %v2336
    %v2578 = vmax.f32 %v1270, %v2337
    %v2579 = vmax.f32 %v1275, %v2338
    %v2580 = vmax.f32 %v1280, %v2339
    %v2581 = vmax.f32 %v1285, %v2340
    %v2582 = vmax.f32 %v1290, %v2341
    %v2583 = vmax.f32 %v1295, %v2342
    %v2584 = vmax.f32 %v1300, %v2343
    %v2585 = vmax.f32 %v1305, %v2344
    %v2586 = vmax.f32 %v1310, %v2345
    %v2587 = vmax.f32 %v1315, %v2346
    %v2588 = vmax.f32 %v1320, %v2347
    %v2589 = vmax.f32 %v1325, %v2348
    %v2590 = vmax.f32 %v1330, %v2349
    %v2591 = vmax.f32 %v1335, %v2350
    %v2592 = vmax.f32 %v1340, %v2351
    %v2593 = vmax.f32 %v1345, %v2352
    %v2594 = vmax.f32 %v1350, %v2353
    %v2595 = vmax.f32 %v1355, %v2354
    %v2596 = vmax.f32 %v1360, %v2355
    %v2597 = vmax.f32 %v1365, %v2356
    %v2598 = vmax.f32 %v1370, %v2357
    %v2599 = vmax.f32 %v1375, %v2358
    %v2600 = vmax.f32 %v1380, %v2359
    %v2601 = vmax.f32 %v1385, %v2360
    %v2602 = vmax.f32 %v1390, %v2361
    %v2603 = vmax.f32 %v1395, %v2362
    %v2604 = vmax.f32 %v1400, %v2363
    %v2605 = vmax.f32 %v1405, %v2364
    %v2606 = vmax.f32 %v1410, %v2365
    %v2607 = vmax.f32 %v1415, %v2366
    %v2608 = vmax.f32 %v1420, %v2367
    %v2609 = vmax.f32 %v1425, %v2368
    %v2610 = vmax.f32 %v1430, %v2369
    %v2611 = vmax.f32 %v1435, %v2370
    %v2612 = vmax.f32 %v1440, %v2371
    %v2613 = vmax.f32 %v1445, %v2372
    %v2614 = vmax.f32 %v1450, %v2373
    %v2615 = vmax.f32 %v1455, %v2374
    %v2616 = vmax.f32 %v1460, %v2375
    %v2617 = vmax.f32 %v1465, %v2376
    %v2618 = vmax.f32 %v1470, %v2377
    %v2619 = vmax.f32 %v1475, %v2378
    %v2620 = vmax.f32 %v1480, %v2379
    %v2621 = vmax.f32 %v1485, %v2380
    %v2622 = vmax.f32 %v1490, %v2381
    %v2623 = vmax.f32 %v1495, %v2382
    %v2624 = vmax.f32 %v1500, %v2383
    %v2625 = vmax.f32 %v1505, %v2384
    %v2626 = vmax.f32 %v1510, %v2385
    %v2627 = vmax.f32 %v1515, %v2386
    %v2628 = vmax.f32 %v1520, %v2387
    %v2629 = vmax.f32 %v1525, %v2388
    %v2630 = vmax.f32 %v1530, %v2389
    %v2631 = vmax.f32 %v1535, %v2390
    %v2632 = vmax.f32 %v1540, %v2391
    %v2633 = vmax.f32 %v1545, %v2392
    %v2634 = vmax.f32 %v1550, %v2393
    %v2635 = vmax.f32 %v1555, %v2394
    %v2636 = vmax.f32 %v1560, %v2395
    %v2637 = vmax.f32 %v1565, %v2396
    %v2638 = vmax.f32 %v1570, %v2397
    %v2639 = vmax.f32 %v1575, %v2398
    %v2640 = vmax.f32 %v1580, %v2399
    %v2641 = vmax.f32 %v1585, %v2400
    %v2642 = vmax.f32 %v1590, %v2401
    %v2643 = vmax.f32 %v1595, %v2402
    %v2644 = vmax.f32 %v1600, %v2403
    %v2645 = vmax.f32 %v1605, %v2404
    %v2646 = vmax.f32 %v1610, %v2405
    %v2647 = vmax.f32 %v1615, %v2406
    %v2648 = vmax.f32 %v1620, %v2407
    %v2649 = vmax.f32 %v1625, %v2408
    %v2650 = vmax.f32 %v1630, %v2409
    %v2651 = vmax.f32 %v1635, %v2410
    %v2652 = vmax.f32 %v1640, %v2411
    %v2653 = vmax.f32 %v1645, %v2412
    %v2654 = vmax.f32 %v1650, %v2413
    %v2655 = vmax.f32 %v1655, %v2414
    %v2656 = vmax.f32 %v1660, %v2415
    %v2657 = vmax.f32 %v1665, %v2416
    %v2658 = vmax.f32 %v1670, %v2417
    %v2659 = vmax.f32 %v1675, %v2418
    %v2660 = vmax.f32 %v1680, %v2419
    %v2661 = vmax.f32 %v1685, %v2420
    %v2662 = vmax.f32 %v1690, %v2421
    %v2663 = vmax.f32 %v1695, %v2422
    %v2664 = vmax.f32 %v1700, %v2423
    %v2665 = vmax.f32 %v1705, %v2424
    %v2666 = vmax.f32 %v1710, %v2425
    %v2667 = vmax.f32 %v1715, %v2426
    %v2668 = vmax.f32 %v1720, %v2427
    %v2669 = vmax.f32 %v1725, %v2428
    %v2670 = vmax.f32 %v1730, %v2429
    %v2671 = vmax.f32 %v1735, %v2430
    %v2672 = vmax.f32 %v1740, %v2431
    %v2673 = vmax.f32 %v1745, %v2432
    %v2674 = vmax.f32 %v1750, %v2433
    %v2675 = vmax.f32 %v1755, %v2434
    %v2676 = vmax.f32 %v1760, %v2435
    %v2677 = vmax.f32 %v1765, %v2436
    %v2678 = vmax.f32 %v1770, %v2437
    %v2679 = vmax.f32 %v1775, %v2438
    %v2680 = vmax.f32 %v1780, %v2439
    %v2681 = vmax.f32 %v1785, %v2440
    %v2682 = vmax.f32 %v1790, %v2441
    %v2683 = vmax.f32 %v1795, %v2442
    %v2684 = vmax.f32 %v1800, %v2443
    %v2685 = vmax.f32 %v1805, %v2444
    %v2686 = vmax.f32 %v1810, %v2445
    %v2687 = vmax.f32 %v1815, %v2446
    %v2688 = vmax.f32 %v1820, %v2447
    %v2689 = vmax.f32 %v1825, %v2448
    %v2690 = vmax.f32 %v1830, %v2449
    %v2691 = vmax.f32 %v1835, %v2450
    %v2692 = vmax.f32 %v1840, %v2451
    %v2693 = vmax.f32 %v1845, %v2452
    %v2694 = vmax.f32 %v1850, %v2453
    %v2695 = vmax.f32 %v1855, %v2454
    %v2696 = vmax.f32 %v1860, %v2455
    %v2697 = vmax.f32 %v1865, %v2456
    %v2698 = vmax.f32 %v1870, %v2457
    %v2699 = vmax.f32 %v1875, %v2458
    %v2700 = vmax.f32 %v1880, %v2459
    %v2701 = vmax.f32 %v1885, %v2460
    %v2702 = vmax.f32 %v1890, %v2461
    %v2703 = vmax.f32 %v1895, %v2462
    %v2704 = vmax.f32 %v1900, %v2463
    %v2705 = vmax.f32 %v1905, %v2464
    %v2706 = vmax.f32 %v1910, %v2465
    %v2707 = vmax.f32 %v1915, %v2466
    %v2708 = vmax.f32 %v1920, %v2467
    %v2709 = vmax.f32 %v1925, %v2468
    %v2710 = vmax.f32 %v1930, %v2469
    %v2711 = vmax.f32 %v1935, %v2470
    %v2712 = vmax.f32 %v1940, %v2471
    %v2713 = vmax.f32 %v1945, %v2472
    %v2714 = vmax.f32 %v1950, %v2473
    %v2715 = vmax.f32 %v1955, %v2474
    %v2716 = vmax.f32 %v1960, %v2475
    %v2717 = vmax.f32 %v1965, %v2476
    %v2718 = vmax.f32 %v1970, %v2477
    %v2719 = vmax.f32 %v1975, %v2478
    %v2720 = vmax.f32 %v1980, %v2479
    %v2721 = vmax.f32 %v1985, %v2480
    %v2722 = vmax.f32 %v1990, %v2481
    %v2723 = vmax.f32 %v1995, %v2482
    %v2724 = vmax.f32 %v2000, %v2483
    %v2725 = vmax.f32 %v2005, %v2484
    %v2726 = vmax.f32 %v2010, %v2485
    %v2727 = vmax.f32 %v2015, %v2486
    %v2728 = vmax.f32 %v2020, %v2487
    %v2729 = vmax.f32 %v2025, %v2488
    %v2730 = vmax.f32 %v2030, %v2489
    %v2731 = vmax.f32 %v2035, %v2490
    %v2732 = vmax.f32 %v2040, %v2491
    %v2733 = vmax.f32 %v2045, %v2492
    %v2734 = vmax.f32 %v2050, %v2493
    %v2735 = vmax.f32 %v2055, %v2494
    %v2736 = vmax.f32 %v2060, %v2495
    %v2737 = vmax.f32 %v2065, %v2496
    %v2738 = vmax.f32 %v2070, %v2497
    %v2739 = vmax.f32 %v2075, %v2498
    %v2740 = vmax.f32 %v2080, %v2499
    %v2741 = vmax.f32 %v2085, %v2500
    %v2742 = vmax.f32 %v2090, %v2501
    %v2743 = vmax.f32 %v2095, %v2502
    %v2744 = vmax.f32 %v2100, %v2503
    %v2745 = vmax.f32 %v2105, %v2504
    %v2746 = vmax.f32 %v2110, %v2505
    %v2747 = vmax.f32 %v2115, %v2506
    %v2748 = vmax.f32 %v2120, %v2507
    %v2749 = vmax.f32 %v2125, %v2508
    %v2750 = vmax.f32 %v2130, %v2509
    %v2751 = vmax.f32 %v2135, %v2510
    %v2752 = vmax.f32 %v2140, %v2511
    %v2753 = vmax.f32 %v2145, %v2512
    %v2754 = vmax.f32 %v2150, %v2513
    %v2755 = vmax.f32 %v2155, %v2514
    %v2756 = vmax.f32 %v2160, %v2515
    %v2757 = vmax.f32 %v2165, %v2516
    %v2758 = vmax.f32 %v2170, %v2517
    %v2759 = vmax.f32 %v2175, %v2518
    %v2760 = vmax.f32 %v2180, %v2519
    %v2761 = vmax.f32 %v2185, %v2520
    %v2762 = vmax.f32 %v2190, %v2521
    %v2763 = vmax.f32 %v2195, %v2522
    %v2764 = vmax.f32 %v2200, %v2523
    %v2765 = vmax.f32 %v2205, %v2524
    %v2766 = vmax.f32 %v2210, %v2525
    %v2767 = vmax.f32 %v2215, %v2526
    %v2768 = vmax.f32 %v2220, %v2527
    %v2769 = vmax.f32 %v2225, %v2528
    %v2770 = vmax.f32 %v2230, %v2529
    %v2771 = vmax.f32 %v2235, %v2530
    %v2772 = vmax.f32 %v2240, %v2531
    %v2773 = vmax.f32 %v2245, %v2532
    %v2774 = vmax.f32 %v2250, %v2533
    %v2775 = vmax.f32 %v2255, %v2534
    %v2776 = vmax.f32 %v2260, %v2535
    %v2777 = vmax.f32 %v2265, %v2536
    %v2778 = vmax.f32 %v2270, %v2537
    %v2779 = vmax.f32 %v2275, %v2538
    %v2780 = vmax.f32 %v2280, %v2539
    %v2781 = vmax.f32 %v2285, %v2540
    %v2782 = vmax.f32 %v2290, %v2541
    %v2783 = vmax.f32 %v2295, %v2542
    %v2784 = vmax.f32 %v2300, %v2543
    %vm2785 = vcmask 261120
    %v2786 = vsel %vm2785, %v2544, 0.0
    %v2787 = vsel %vm2785, %v2545, 0.0
    %v2788 = vadd.f32 %v2786, %v2787
    %v2789 = vsel %vm2785, %v2546, 0.0
    %v2790 = vadd.f32 %v2788, %v2789
    %v2791 = vsel %vm2785, %v2547, 0.0
    %v2792 = vadd.f32 %v2790, %v2791
    %v2793 = vsel %vm2785, %v2548, 0.0
    %v2794 = vadd.f32 %v2792, %v2793
    %v2795 = vsel %vm2785, %v2549, 0.0
    %v2796 = vadd.f32 %v2794, %v2795
    %v2797 = vsel %vm2785, %v2550, 0.0
    %v2798 = vadd.f32 %v2796, %v2797
    %v2799 = vsel %vm2785, %v2551, 0.0
    %v2800 = vadd.f32 %v2798, %v2799
    %v2801 = vsel %vm2785, %v2552, 0.0
    %v2802 = vadd.f32 %v2800, %v2801
    %v2803 = vsel %vm2785, %v2553, 0.0
    %v2804 = vadd.f32 %v2802, %v2803
    %v2805 = vsel %vm2785, %v2554, 0.0
    %v2806 = vadd.f32 %v2804, %v2805
    %v2807 = vsel %vm2785, %v2555, 0.0
    %v2808 = vadd.f32 %v2806, %v2807
    %v2809 = vsel %vm2785, %v2556, 0.0
    %v2810 = vadd.f32 %v2808, %v2809
    %v2811 = vsel %vm2785, %v2557, 0.0
    %v2812 = vadd.f32 %v2810, %v2811
    %v2813 = vsel %vm2785, %v2558, 0.0
    %v2814 = vadd.f32 %v2812, %v2813
    %v2815 = vsel %vm2785, %v2559, 0.0
    %v2816 = vadd.f32 %v2814, %v2815
    %v2817 = vsel %vm2785, %v2560, 0.0
    %v2818 = vadd.f32 %v2816, %v2817
    %v2819 = vsel %vm2785, %v2561, 0.0
    %v2820 = vadd.f32 %v2818, %v2819
    %v2821 = vsel %vm2785, %v2562, 0.0
    %v2822 = vadd.f32 %v2820, %v2821
    %v2823 = vsel %vm2785, %v2563, 0.0
    %v2824 = vadd.f32 %v2822, %v2823
    %v2825 = vsel %vm2785, %v2564, 0.0
    %v2826 = vadd.f32 %v2824, %v2825
    %v2827 = vsel %vm2785, %v2565, 0.0
    %v2828 = vadd.f32 %v2826, %v2827
    %v2829 = vsel %vm2785, %v2566, 0.0
    %v2830 = vadd.f32 %v2828, %v2829
    %v2831 = vsel %vm2785, %v2567, 0.0
    %v2832 = vadd.f32 %v2830, %v2831
    %v2833 = vsel %vm2785, %v2568, 0.0
    %v2834 = vadd.f32 %v2832, %v2833
    %v2835 = vsel %vm2785, %v2569, 0.0
    %v2836 = vadd.f32 %v2834, %v2835
    %v2837 = vsel %vm2785, %v2570, 0.0
    %v2838 = vadd.f32 %v2836, %v2837
    %v2839 = vsel %vm2785, %v2571, 0.0
    %v2840 = vadd.f32 %v2838, %v2839
    %v2841 = vsel %vm2785, %v2572, 0.0
    %v2842 = vadd.f32 %v2840, %v2841
    %v2843 = vsel %vm2785, %v2573, 0.0
    %v2844 = vadd.f32 %v2842, %v2843
    %v2845 = vsel %vm2785, %v2574, 0.0
    %v2846 = vadd.f32 %v2844, %v2845
    %v2847 = vsel %vm2785, %v2575, 0.0
    %v2848 = vadd.f32 %v2846, %v2847
    %v2849 = vsel %vm2785, %v2576, 0.0
    %v2850 = vadd.f32 %v2848, %v2849
    %v2851 = vsel %vm2785, %v2577, 0.0
    %v2852 = vadd.f32 %v2850, %v2851
    %v2853 = vsel %vm2785, %v2578, 0.0
    %v2854 = vadd.f32 %v2852, %v2853
    %v2855 = vsel %vm2785, %v2579, 0.0
    %v2856 = vadd.f32 %v2854, %v2855
    %v2857 = vsel %vm2785, %v2580, 0.0
    %v2858 = vadd.f32 %v2856, %v2857
    %v2859 = vsel %vm2785, %v2581, 0.0
    %v2860 = vadd.f32 %v2858, %v2859
    %v2861 = vsel %vm2785, %v2582, 0.0
    %v2862 = vadd.f32 %v2860, %v2861
    %v2863 = vsel %vm2785, %v2583, 0.0
    %v2864 = vadd.f32 %v2862, %v2863
    %v2865 = vsel %vm2785, %v2584, 0.0
    %v2866 = vadd.f32 %v2864, %v2865
    %v2867 = vsel %vm2785, %v2585, 0.0
    %v2868 = vadd.f32 %v2866, %v2867
    %v2869 = vsel %vm2785, %v2586, 0.0
    %v2870 = vadd.f32 %v2868, %v2869
    %v2871 = vsel %vm2785, %v2587, 0.0
    %v2872 = vadd.f32 %v2870, %v2871
    %v2873 = vsel %vm2785, %v2588, 0.0
    %v2874 = vadd.f32 %v2872, %v2873
    %v2875 = vsel %vm2785, %v2589, 0.0
    %v2876 = vadd.f32 %v2874, %v2875
    %v2877 = vsel %vm2785, %v2590, 0.0
    %v2878 = vadd.f32 %v2876, %v2877
    %v2879 = vsel %vm2785, %v2591, 0.0
    %v2880 = vadd.f32 %v2878, %v2879
    %v2881 = vsel %vm2785, %v2592, 0.0
    %v2882 = vadd.f32 %v2880, %v2881
    %v2883 = vsel %vm2785, %v2593, 0.0
    %v2884 = vadd.f32 %v2882, %v2883
    %v2885 = vsel %vm2785, %v2594, 0.0
    %v2886 = vadd.f32 %v2884, %v2885
    %v2887 = vsel %vm2785, %v2595, 0.0
    %v2888 = vadd.f32 %v2886, %v2887
    %v2889 = vsel %vm2785, %v2596, 0.0
    %v2890 = vadd.f32 %v2888, %v2889
    %v2891 = vsel %vm2785, %v2597, 0.0
    %v2892 = vadd.f32 %v2890, %v2891
    %v2893 = vsel %vm2785, %v2598, 0.0
    %v2894 = vadd.f32 %v2892, %v2893
    %v2895 = vsel %vm2785, %v2599, 0.0
    %v2896 = vadd.f32 %v2894, %v2895
    %v2897 = vsel %vm2785, %v2600, 0.0
    %v2898 = vadd.f32 %v2896, %v2897
    %v2899 = vsel %vm2785, %v2601, 0.0
    %v2900 = vadd.f32 %v2898, %v2899
    %v2901 = vsel %vm2785, %v2602, 0.0
    %v2902 = vadd.f32 %v2900, %v2901
    %v2903 = vsel %vm2785, %v2603, 0.0
    %v2904 = vadd.f32 %v2902, %v2903
    %v2905 = vsel %vm2785, %v2604, 0.0
    %v2906 = vadd.f32 %v2904, %v2905
    %v2907 = vsel %vm2785, %v2605, 0.0
    %v2908 = vadd.f32 %v2906, %v2907
    %v2909 = vsel %vm2785, %v2606, 0.0
    %v2910 = vadd.f32 %v2908, %v2909
    %v2911 = vsel %vm2785, %v2607, 0.0
    %v2912 = vadd.f32 %v2910, %v2911
    %v2913 = vsel %vm2785, %v2608, 0.0
    %v2914 = vadd.f32 %v2912, %v2913
    %v2915 = vsel %vm2785, %v2609, 0.0
    %v2916 = vadd.f32 %v2914, %v2915
    %v2917 = vsel %vm2785, %v2610, 0.0
    %v2918 = vadd.f32 %v2916, %v2917
    %v2919 = vsel %vm2785, %v2611, 0.0
    %v2920 = vadd.f32 %v2918, %v2919
    %v2921 = vsel %vm2785, %v2612, 0.0
    %v2922 = vadd.f32 %v2920, %v2921
    %v2923 = vsel %vm2785, %v2613, 0.0
    %v2924 = vadd.f32 %v2922, %v2923
    %v2925 = vsel %vm2785, %v2614, 0.0
    %v2926 = vadd.f32 %v2924, %v2925
    %v2927 = vsel %vm2785, %v2615, 0.0
    %v2928 = vadd.f32 %v2926, %v2927
    %v2929 = vsel %vm2785, %v2616, 0.0
    %v2930 = vadd.f32 %v2928, %v2929
    %v2931 = vsel %vm2785, %v2617, 0.0
    %v2932 = vadd.f32 %v2930, %v2931
    %v2933 = vsel %vm2785, %v2618, 0.0
    %v2934 = vadd.f32 %v2932, %v2933
    %v2935 = vsel %vm2785, %v2619, 0.0
    %v2936 = vadd.f32 %v2934, %v2935
    %v2937 = vsel %vm2785, %v2620, 0.0
    %v2938 = vadd.f32 %v2936, %v2937
    %v2939 = vsel %vm2785, %v2621, 0.0
    %v2940 = vadd.f32 %v2938, %v2939
    %v2941 = vsel %vm2785, %v2622, 0.0
    %v2942 = vadd.f32 %v2940, %v2941
    %v2943 = vsel %vm2785, %v2623, 0.0
    %v2944 = vadd.f32 %v2942, %v2943
    %v2945 = vsel %vm2785, %v2624, 0.0
    %v2946 = vadd.f32 %v2944, %v2945
    %v2947 = vsel %vm2785, %v2625, 0.0
    %v2948 = vadd.f32 %v2946, %v2947
    %v2949 = vsel %vm2785, %v2626, 0.0
    %v2950 = vadd.f32 %v2948, %v2949
    %v2951 = vsel %vm2785, %v2627, 0.0
    %v2952 = vadd.f32 %v2950, %v2951
    %v2953 = vsel %vm2785, %v2628, 0.0
    %v2954 = vadd.f32 %v2952, %v2953
    %v2955 = vsel %vm2785, %v2629, 0.0
    %v2956 = vadd.f32 %v2954, %v2955
    %v2957 = vsel %vm2785, %v2630, 0.0
    %v2958 = vadd.f32 %v2956, %v2957
    %v2959 = vsel %vm2785, %v2631, 0.0
    %v2960 = vadd.f32 %v2958, %v2959
    %v2961 = vsel %vm2785, %v2632, 0.0
    %v2962 = vadd.f32 %v2960, %v2961
    %v2963 = vsel %vm2785, %v2633, 0.0
    %v2964 = vadd.f32 %v2962, %v2963
    %v2965 = vsel %vm2785, %v2634, 0.0
    %v2966 = vadd.f32 %v2964, %v2965
    %v2967 = vsel %vm2785, %v2635, 0.0
    %v2968 = vadd.f32 %v2966, %v2967
    %v2969 = vsel %vm2785, %v2636, 0.0
    %v2970 = vadd.f32 %v2968, %v2969
    %v2971 = vsel %vm2785, %v2637, 0.0
    %v2972 = vadd.f32 %v2970, %v2971
    %v2973 = vsel %vm2785, %v2638, 0.0
    %v2974 = vadd.f32 %v2972, %v2973
    %v2975 = vsel %vm2785, %v2639, 0.0
    %v2976 = vadd.f32 %v2974, %v2975
    %v2977 = vsel %vm2785, %v2640, 0.0
    %v2978 = vadd.f32 %v2976, %v2977
    %v2979 = vsel %vm2785, %v2641, 0.0
    %v2980 = vadd.f32 %v2978, %v2979
    %v2981 = vsel %vm2785, %v2642, 0.0
    %v2982 = vadd.f32 %v2980, %v2981
    %v2983 = vsel %vm2785, %v2643, 0.0
    %v2984 = vadd.f32 %v2982, %v2983
    %v2985 = vsel %vm2785, %v2644, 0.0
    %v2986 = vadd.f32 %v2984, %v2985
    %v2987 = vsel %vm2785, %v2645, 0.0
    %v2988 = vadd.f32 %v2986, %v2987
    %v2989 = vsel %vm2785, %v2646, 0.0
    %v2990 = vadd.f32 %v2988, %v2989
    %v2991 = vsel %vm2785, %v2647, 0.0
    %v2992 = vadd.f32 %v2990, %v2991
    %v2993 = vsel %vm2785, %v2648, 0.0
    %v2994 = vadd.f32 %v2992, %v2993
    %v2995 = vsel %vm2785, %v2649, 0.0
    %v2996 = vadd.f32 %v2994, %v2995
    %v2997 = vsel %vm2785, %v2650, 0.0
    %v2998 = vadd.f32 %v2996, %v2997
    %v2999 = vsel %vm2785, %v2651, 0.0
    %v3000 = vadd.f32 %v2998, %v2999
    %v3001 = vsel %vm2785, %v2652, 0.0
    %v3002 = vadd.f32 %v3000, %v3001
    %v3003 = vsel %vm2785, %v2653, 0.0
    %v3004 = vadd.f32 %v3002, %v3003
    %v3005 = vsel %vm2785, %v2654, 0.0
    %v3006 = vadd.f32 %v3004, %v3005
    %v3007 = vsel %vm2785, %v2655, 0.0
    %v3008 = vadd.f32 %v3006, %v3007
    %v3009 = vsel %vm2785, %v2656, 0.0
    %v3010 = vadd.f32 %v3008, %v3009
    %v3011 = vsel %vm2785, %v2657, 0.0
    %v3012 = vadd.f32 %v3010, %v3011
    %v3013 = vsel %vm2785, %v2658, 0.0
    %v3014 = vadd.f32 %v3012, %v3013
    %v3015 = vsel %vm2785, %v2659, 0.0
    %v3016 = vadd.f32 %v3014, %v3015
    %v3017 = vsel %vm2785, %v2660, 0.0
    %v3018 = vadd.f32 %v3016, %v3017
    %v3019 = vsel %vm2785, %v2661, 0.0
    %v3020 = vadd.f32 %v3018, %v3019
    %v3021 = vsel %vm2785, %v2662, 0.0
    %v3022 = vadd.f32 %v3020, %v3021
    %v3023 = vsel %vm2785, %v2663, 0.0
    %v3024 = vadd.f32 %v3022, %v3023
    %v3025 = vsel %vm2785, %v2664, 0.0
    %v3026 = vadd.f32 %v3024, %v3025
    %v3027 = vsel %vm2785, %v2665, 0.0
    %v3028 = vadd.f32 %v3026, %v3027
    %v3029 = vsel %vm2785, %v2666, 0.0
    %v3030 = vadd.f32 %v3028, %v3029
    %v3031 = vsel %vm2785, %v2667, 0.0
    %v3032 = vadd.f32 %v3030, %v3031
    %v3033 = vsel %vm2785, %v2668, 0.0
    %v3034 = vadd.f32 %v3032, %v3033
    %v3035 = vsel %vm2785, %v2669, 0.0
    %v3036 = vadd.f32 %v3034, %v3035
    %v3037 = vsel %vm2785, %v2670, 0.0
    %v3038 = vadd.f32 %v3036, %v3037
    %v3039 = vsel %vm2785, %v2671, 0.0
    %v3040 = vadd.f32 %v3038, %v3039
    %v3041 = vsel %vm2785, %v2672, 0.0
    %v3042 = vadd.f32 %v3040, %v3041
    %v3043 = vsel %vm2785, %v2673, 0.0
    %v3044 = vadd.f32 %v3042, %v3043
    %v3045 = vsel %vm2785, %v2674, 0.0
    %v3046 = vadd.f32 %v3044, %v3045
    %v3047 = vsel %vm2785, %v2675, 0.0
    %v3048 = vadd.f32 %v3046, %v3047
    %v3049 = vsel %vm2785, %v2676, 0.0
    %v3050 = vadd.f32 %v3048, %v3049
    %v3051 = vsel %vm2785, %v2677, 0.0
    %v3052 = vadd.f32 %v3050, %v3051
    %v3053 = vsel %vm2785, %v2678, 0.0
    %v3054 = vadd.f32 %v3052, %v3053
    %v3055 = vsel %vm2785, %v2679, 0.0
    %v3056 = vadd.f32 %v3054, %v3055
    %v3057 = vsel %vm2785, %v2680, 0.0
    %v3058 = vadd.f32 %v3056, %v3057
    %v3059 = vsel %vm2785, %v2681, 0.0
    %v3060 = vadd.f32 %v3058, %v3059
    %v3061 = vsel %vm2785, %v2682, 0.0
    %v3062 = vadd.f32 %v3060, %v3061
    %v3063 = vsel %vm2785, %v2683, 0.0
    %v3064 = vadd.f32 %v3062, %v3063
    %v3065 = vsel %vm2785, %v2684, 0.0
    %v3066 = vadd.f32 %v3064, %v3065
    %v3067 = vsel %vm2785, %v2685, 0.0
    %v3068 = vadd.f32 %v3066, %v3067
    %v3069 = vsel %vm2785, %v2686, 0.0
    %v3070 = vadd.f32 %v3068, %v3069
    %v3071 = vsel %vm2785, %v2687, 0.0
    %v3072 = vadd.f32 %v3070, %v3071
    %v3073 = vsel %vm2785, %v2688, 0.0
    %v3074 = vadd.f32 %v3072, %v3073
    %v3075 = vsel %vm2785, %v2689, 0.0
    %v3076 = vadd.f32 %v3074, %v3075
    %v3077 = vsel %vm2785, %v2690, 0.0
    %v3078 = vadd.f32 %v3076, %v3077
    %v3079 = vsel %vm2785, %v2691, 0.0
    %v3080 = vadd.f32 %v3078, %v3079
    %v3081 = vsel %vm2785, %v2692, 0.0
    %v3082 = vadd.f32 %v3080, %v3081
    %v3083 = vsel %vm2785, %v2693, 0.0
    %v3084 = vadd.f32 %v3082, %v3083
    %v3085 = vsel %vm2785, %v2694, 0.0
    %v3086 = vadd.f32 %v3084, %v3085
    %v3087 = vsel %vm2785, %v2695, 0.0
    %v3088 = vadd.f32 %v3086, %v3087
    %v3089 = vsel %vm2785, %v2696, 0.0
    %v3090 = vadd.f32 %v3088, %v3089
    %v3091 = vsel %vm2785, %v2697, 0.0
    %v3092 = vadd.f32 %v3090, %v3091
    %v3093 = vsel %vm2785, %v2698, 0.0
    %v3094 = vadd.f32 %v3092, %v3093
    %v3095 = vsel %vm2785, %v2699, 0.0
    %v3096 = vadd.f32 %v3094, %v3095
    %v3097 = vsel %vm2785, %v2700, 0.0
    %v3098 = vadd.f32 %v3096, %v3097
    %v3099 = vsel %vm2785, %v2701, 0.0
    %v3100 = vadd.f32 %v3098, %v3099
    %v3101 = vsel %vm2785, %v2702, 0.0
    %v3102 = vadd.f32 %v3100, %v3101
    %v3103 = vsel %vm2785, %v2703, 0.0
    %v3104 = vadd.f32 %v3102, %v3103
    %v3105 = vsel %vm2785, %v2704, 0.0
    %v3106 = vadd.f32 %v3104, %v3105
    %v3107 = vsel %vm2785, %v2705, 0.0
    %v3108 = vadd.f32 %v3106, %v3107
    %v3109 = vsel %vm2785, %v2706, 0.0
    %v3110 = vadd.f32 %v3108, %v3109
    %v3111 = vsel %vm2785, %v2707, 0.0
    %v3112 = vadd.f32 %v3110, %v3111
    %v3113 = vsel %vm2785, %v2708, 0.0
    %v3114 = vadd.f32 %v3112, %v3113
    %v3115 = vsel %vm2785, %v2709, 0.0
    %v3116 = vadd.f32 %v3114, %v3115
    %v3117 = vsel %vm2785, %v2710, 0.0
    %v3118 = vadd.f32 %v3116, %v3117
    %v3119 = vsel %vm2785, %v2711, 0.0
    %v3120 = vadd.f32 %v3118, %v3119
    %v3121 = vsel %vm2785, %v2712, 0.0
    %v3122 = vadd.f32 %v3120, %v3121
    %v3123 = vsel %vm2785, %v2713, 0.0
    %v3124 = vadd.f32 %v3122, %v3123
    %v3125 = vsel %vm2785, %v2714, 0.0
    %v3126 = vadd.f32 %v3124, %v3125
    %v3127 = vsel %vm2785, %v2715, 0.0
    %v3128 = vadd.f32 %v3126, %v3127
    %v3129 = vsel %vm2785, %v2716, 0.0
    %v3130 = vadd.f32 %v3128, %v3129
    %v3131 = vsel %vm2785, %v2717, 0.0
    %v3132 = vadd.f32 %v3130, %v3131
    %v3133 = vsel %vm2785, %v2718, 0.0
    %v3134 = vadd.f32 %v3132, %v3133
    %v3135 = vsel %vm2785, %v2719, 0.0
    %v3136 = vadd.f32 %v3134, %v3135
    %v3137 = vsel %vm2785, %v2720, 0.0
    %v3138 = vadd.f32 %v3136, %v3137
    %v3139 = vsel %vm2785, %v2721, 0.0
    %v3140 = vadd.f32 %v3138, %v3139
    %v3141 = vsel %vm2785, %v2722, 0.0
    %v3142 = vadd.f32 %v3140, %v3141
    %v3143 = vsel %vm2785, %v2723, 0.0
    %v3144 = vadd.f32 %v3142, %v3143
    %v3145 = vsel %vm2785, %v2724, 0.0
    %v3146 = vadd.f32 %v3144, %v3145
    %v3147 = vsel %vm2785, %v2725, 0.0
    %v3148 = vadd.f32 %v3146, %v3147
    %v3149 = vsel %vm2785, %v2726, 0.0
    %v3150 = vadd.f32 %v3148, %v3149
    %v3151 = vsel %vm2785, %v2727, 0.0
    %v3152 = vadd.f32 %v3150, %v3151
    %v3153 = vsel %vm2785, %v2728, 0.0
    %v3154 = vadd.f32 %v3152, %v3153
    %v3155 = vsel %vm2785, %v2729, 0.0
    %v3156 = vadd.f32 %v3154, %v3155
    %v3157 = vsel %vm2785, %v2730, 0.0
    %v3158 = vadd.f32 %v3156, %v3157
    %v3159 = vsel %vm2785, %v2731, 0.0
    %v3160 = vadd.f32 %v3158, %v3159
    %v3161 = vsel %vm2785, %v2732, 0.0
    %v3162 = vadd.f32 %v3160, %v3161
    %v3163 = vsel %vm2785, %v2733, 0.0
    %v3164 = vadd.f32 %v3162, %v3163
    %v3165 = vsel %vm2785, %v2734, 0.0
    %v3166 = vadd.f32 %v3164, %v3165
    %v3167 = vsel %vm2785, %v2735, 0.0
    %v3168 = vadd.f32 %v3166, %v3167
    %v3169 = vsel %vm2785, %v2736, 0.0
    %v3170 = vadd.f32 %v3168, %v3169
    %v3171 = vsel %vm2785, %v2737, 0.0
    %v3172 = vadd.f32 %v3170, %v3171
    %v3173 = vsel %vm2785, %v2738, 0.0
    %v3174 = vadd.f32 %v3172, %v3173
    %v3175 = vsel %vm2785, %v2739, 0.0
    %v3176 = vadd.f32 %v3174, %v3175
    %v3177 = vsel %vm2785, %v2740, 0.0
    %v3178 = vadd.f32 %v3176, %v3177
    %v3179 = vsel %vm2785, %v2741, 0.0
    %v3180 = vadd.f32 %v3178, %v3179
    %v3181 = vsel %vm2785, %v2742, 0.0
    %v3182 = vadd.f32 %v3180, %v3181
    %v3183 = vsel %vm2785, %v2743, 0.0
    %v3184 = vadd.f32 %v3182, %v3183
    %v3185 = vsel %vm2785, %v2744, 0.0
    %v3186 = vadd.f32 %v3184, %v3185
    %v3187 = vsel %vm2785, %v2745, 0.0
    %v3188 = vadd.f32 %v3186, %v3187
    %v3189 = vsel %vm2785, %v2746, 0.0
    %v3190 = vadd.f32 %v3188, %v3189
    %v3191 = vsel %vm2785, %v2747, 0.0
    %v3192 = vadd.f32 %v3190, %v3191
    %v3193 = vsel %vm2785, %v2748, 0.0
    %v3194 = vadd.f32 %v3192, %v3193
    %v3195 = vsel %vm2785, %v2749, 0.0
    %v3196 = vadd.f32 %v3194, %v3195
    %v3197 = vsel %vm2785, %v2750, 0.0
    %v3198 = vadd.f32 %v3196, %v3197
    %v3199 = vsel %vm2785, %v2751, 0.0
    %v3200 = vadd.f32 %v3198, %v3199
    %v3201 = vsel %vm2785, %v2752, 0.0
    %v3202 = vadd.f32 %v3200, %v3201
    %v3203 = vsel %vm2785, %v2753, 0.0
    %v3204 = vadd.f32 %v3202, %v3203
    %v3205 = vsel %vm2785, %v2754, 0.0
    %v3206 = vadd.f32 %v3204, %v3205
    %v3207 = vsel %vm2785, %v2755, 0.0
    %v3208 = vadd.f32 %v3206, %v3207
    %v3209 = vsel %vm2785, %v2756, 0.0
    %v3210 = vadd.f32 %v3208, %v3209
    %v3211 = vsel %vm2785, %v2757, 0.0
    %v3212 = vadd.f32 %v3210, %v3211
    %v3213 = vsel %vm2785, %v2758, 0.0
    %v3214 = vadd.f32 %v3212, %v3213
    %v3215 = vsel %vm2785, %v2759, 0.0
    %v3216 = vadd.f32 %v3214, %v3215
    %v3217 = vsel %vm2785, %v2760, 0.0
    %v3218 = vadd.f32 %v3216, %v3217
    %v3219 = vsel %vm2785, %v2761, 0.0
    %v3220 = vadd.f32 %v3218, %v3219
    %v3221 = vsel %vm2785, %v2762, 0.0
    %v3222 = vadd.f32 %v3220, %v3221
    %v3223 = vsel %vm2785, %v2763, 0.0
    %v3224 = vadd.f32 %v3222, %v3223
    %v3225 = vsel %vm2785, %v2764, 0.0
    %v3226 = vadd.f32 %v3224, %v3225
    %v3227 = vsel %vm2785, %v2765, 0.0
    %v3228 = vadd.f32 %v3226, %v3227
    %v3229 = vsel %vm2785, %v2766, 0.0
    %v3230 = vadd.f32 %v3228, %v3229
    %v3231 = vsel %vm2785, %v2767, 0.0
    %v3232 = vadd.f32 %v3230, %v3231
    %v3233 = vsel %vm2785, %v2768, 0.0
    %v3234 = vadd.f32 %v3232, %v3233
    %v3235 = vsel %vm2785, %v2769, 0.0
    %v3236 = vadd.f32 %v3234, %v3235
    %v3237 = vsel %vm2785, %v2770, 0.0
    %v3238 = vadd.f32 %v3236, %v3237
    %v3239 = vsel %vm2785, %v2771, 0.0
    %v3240 = vadd.f32 %v3238, %v3239
    %v3241 = vsel %vm2785, %v2772, 0.0
    %v3242 = vadd.f32 %v3240, %v3241
    %v3243 = vsel %vm2785, %v2773, 0.0
    %v3244 = vadd.f32 %v3242, %v3243
    %v3245 = vsel %vm2785, %v2774, 0.0
    %v3246 = vadd.f32 %v3244, %v3245
    %v3247 = vsel %vm2785, %v2775, 0.0
    %v3248 = vadd.f32 %v3246, %v3247
    %v3249 = vsel %vm2785, %v2776, 0.0
    %v3250 = vadd.f32 %v3248, %v3249
    %v3251 = vsel %vm2785, %v2777, 0.0
    %v3252 = vadd.f32 %v3250, %v3251
    %v3253 = vsel %vm2785, %v2778, 0.0
    %v3254 = vadd.f32 %v3252, %v3253
    %v3255 = vsel %vm2785, %v2779, 0.0
    %v3256 = vadd.f32 %v3254, %v3255
    %v3257 = vsel %vm2785, %v2780, 0.0
    %v3258 = vadd.f32 %v3256, %v3257
    %v3259 = vsel %vm2785, %v2781, 0.0
    %v3260 = vadd.f32 %v3258, %v3259
    %v3261 = vsel %vm2785, %v2782, 0.0
    %v3262 = vadd.f32 %v3260, %v3261
    %v3263 = vsel %vm2785, %v2783, 0.0
    %v3264 = vadd.f32 %v3262, %v3263
    %vm3265 = vcmask 254976
    %v3266 = vsel %vm3265, %v2784, 0.0
    %v3267 = vadd.f32 %v3264, %v3266
    %v3268 = vrot.slane %v3267, 4
    %v3269 = vadd.f32 %v3267, %v3268
    %v3270 = vrot.slane %v3269, 2
    %v3271 = vadd.f32 %v3269, %v3270
    %v3272 = vrot.slane %v3271, 1
    %v3273 = vadd.f32 %v3271, %v3272
    %v3274 = vmul.f32 %v3273, 0.0005202914
    %v3275 = vmul.f32 %v2544, %v2544
    %v3276 = vmul.f32 %v2545, %v2545
    %v3277 = vmul.f32 %v2546, %v2546
    %v3278 = vmul.f32 %v2547, %v2547
    %v3279 = vmul.f32 %v2548, %v2548
    %v3280 = vmul.f32 %v2549, %v2549
    %v3281 = vmul.f32 %v2550, %v2550
    %v3282 = vmul.f32 %v2551, %v2551
    %v3283 = vmul.f32 %v2552, %v2552
    %v3284 = vmul.f32 %v2553, %v2553
    %v3285 = vmul.f32 %v2554, %v2554
    %v3286 = vmul.f32 %v2555, %v2555
    %v3287 = vmul.f32 %v2556, %v2556
    %v3288 = vmul.f32 %v2557, %v2557
    %v3289 = vmul.f32 %v2558, %v2558
    %v3290 = vmul.f32 %v2559, %v2559
    %v3291 = vmul.f32 %v2560, %v2560
    %v3292 = vmul.f32 %v2561, %v2561
    %v3293 = vmul.f32 %v2562, %v2562
    %v3294 = vmul.f32 %v2563, %v2563
    %v3295 = vmul.f32 %v2564, %v2564
    %v3296 = vmul.f32 %v2565, %v2565
    %v3297 = vmul.f32 %v2566, %v2566
    %v3298 = vmul.f32 %v2567, %v2567
    %v3299 = vmul.f32 %v2568, %v2568
    %v3300 = vmul.f32 %v2569, %v2569
    %v3301 = vmul.f32 %v2570, %v2570
    %v3302 = vmul.f32 %v2571, %v2571
    %v3303 = vmul.f32 %v2572, %v2572
    %v3304 = vmul.f32 %v2573, %v2573
    %v3305 = vmul.f32 %v2574, %v2574
    %v3306 = vmul.f32 %v2575, %v2575
    %v3307 = vmul.f32 %v2576, %v2576
    %v3308 = vmul.f32 %v2577, %v2577
    %v3309 = vmul.f32 %v2578, %v2578
    %v3310 = vmul.f32 %v2579, %v2579
    %v3311 = vmul.f32 %v2580, %v2580
    %v3312 = vmul.f32 %v2581, %v2581
    %v3313 = vmul.f32 %v2582, %v2582
    %v3314 = vmul.f32 %v2583, %v2583
    %v3315 = vmul.f32 %v2584, %v2584
    %v3316 = vmul.f32 %v2585, %v2585
    %v3317 = vmul.f32 %v2586, %v2586
    %v3318 = vmul.f32 %v2587, %v2587
    %v3319 = vmul.f32 %v2588, %v2588
    %v3320 = vmul.f32 %v2589, %v2589
    %v3321 = vmul.f32 %v2590, %v2590
    %v3322 = vmul.f32 %v2591, %v2591
    %v3323 = vmul.f32 %v2592, %v2592
    %v3324 = vmul.f32 %v2593, %v2593
    %v3325 = vmul.f32 %v2594, %v2594
    %v3326 = vmul.f32 %v2595, %v2595
    %v3327 = vmul.f32 %v2596, %v2596
    %v3328 = vmul.f32 %v2597, %v2597
    %v3329 = vmul.f32 %v2598, %v2598
    %v3330 = vmul.f32 %v2599, %v2599
    %v3331 = vmul.f32 %v2600, %v2600
    %v3332 = vmul.f32 %v2601, %v2601
    %v3333 = vmul.f32 %v2602, %v2602
    %v3334 = vmul.f32 %v2603, %v2603
    %v3335 = vmul.f32 %v2604, %v2604
    %v3336 = vmul.f32 %v2605, %v2605
    %v3337 = vmul.f32 %v2606, %v2606
    %v3338 = vmul.f32 %v2607, %v2607
    %v3339 = vmul.f32 %v2608, %v2608
    %v3340 = vmul.f32 %v2609, %v2609
    %v3341 = vmul.f32 %v2610, %v2610
    %v3342 = vmul.f32 %v2611, %v2611
    %v3343 = vmul.f32 %v2612, %v2612
    %v3344 = vmul.f32 %v2613, %v2613
    %v3345 = vmul.f32 %v2614, %v2614
    %v3346 = vmul.f32 %v2615, %v2615
    %v3347 = vmul.f32 %v2616, %v2616
    %v3348 = vmul.f32 %v2617, %v2617
    %v3349 = vmul.f32 %v2618, %v2618
    %v3350 = vmul.f32 %v2619, %v2619
    %v3351 = vmul.f32 %v2620, %v2620
    %v3352 = vmul.f32 %v2621, %v2621
    %v3353 = vmul.f32 %v2622, %v2622
    %v3354 = vmul.f32 %v2623, %v2623
    %v3355 = vmul.f32 %v2624, %v2624
    %v3356 = vmul.f32 %v2625, %v2625
    %v3357 = vmul.f32 %v2626, %v2626
    %v3358 = vmul.f32 %v2627, %v2627
    %v3359 = vmul.f32 %v2628, %v2628
    %v3360 = vmul.f32 %v2629, %v2629
    %v3361 = vmul.f32 %v2630, %v2630
    %v3362 = vmul.f32 %v2631, %v2631
    %v3363 = vmul.f32 %v2632, %v2632
    %v3364 = vmul.f32 %v2633, %v2633
    %v3365 = vmul.f32 %v2634, %v2634
    %v3366 = vmul.f32 %v2635, %v2635
    %v3367 = vmul.f32 %v2636, %v2636
    %v3368 = vmul.f32 %v2637, %v2637
    %v3369 = vmul.f32 %v2638, %v2638
    %v3370 = vmul.f32 %v2639, %v2639
    %v3371 = vmul.f32 %v2640, %v2640
    %v3372 = vmul.f32 %v2641, %v2641
    %v3373 = vmul.f32 %v2642, %v2642
    %v3374 = vmul.f32 %v2643, %v2643
    %v3375 = vmul.f32 %v2644, %v2644
    %v3376 = vmul.f32 %v2645, %v2645
    %v3377 = vmul.f32 %v2646, %v2646
    %v3378 = vmul.f32 %v2647, %v2647
    %v3379 = vmul.f32 %v2648, %v2648
    %v3380 = vmul.f32 %v2649, %v2649
    %v3381 = vmul.f32 %v2650, %v2650
    %v3382 = vmul.f32 %v2651, %v2651
    %v3383 = vmul.f32 %v2652, %v2652
    %v3384 = vmul.f32 %v2653, %v2653
    %v3385 = vmul.f32 %v2654, %v2654
    %v3386 = vmul.f32 %v2655, %v2655
    %v3387 = vmul.f32 %v2656, %v2656
    %v3388 = vmul.f32 %v2657, %v2657
    %v3389 = vmul.f32 %v2658, %v2658
    %v3390 = vmul.f32 %v2659, %v2659
    %v3391 = vmul.f32 %v2660, %v2660
    %v3392 = vmul.f32 %v2661, %v2661
    %v3393 = vmul.f32 %v2662, %v2662
    %v3394 = vmul.f32 %v2663, %v2663
    %v3395 = vmul.f32 %v2664, %v2664
    %v3396 = vmul.f32 %v2665, %v2665
    %v3397 = vmul.f32 %v2666, %v2666
    %v3398 = vmul.f32 %v2667, %v2667
    %v3399 = vmul.f32 %v2668, %v2668
    %v3400 = vmul.f32 %v2669, %v2669
    %v3401 = vmul.f32 %v2670, %v2670
    %v3402 = vmul.f32 %v2671, %v2671
    %v3403 = vmul.f32 %v2672, %v2672
    %v3404 = vmul.f32 %v2673, %v2673
    %v3405 = vmul.f32 %v2674, %v2674
    %v3406 = vmul.f32 %v2675, %v2675
    %v3407 = vmul.f32 %v2676, %v2676
    %v3408 = vmul.f32 %v2677, %v2677
    %v3409 = vmul.f32 %v2678, %v2678
    %v3410 = vmul.f32 %v2679, %v2679
    %v3411 = vmul.f32 %v2680, %v2680
    %v3412 = vmul.f32 %v2681, %v2681
    %v3413 = vmul.f32 %v2682, %v2682
    %v3414 = vmul.f32 %v2683, %v2683
    %v3415 = vmul.f32 %v2684, %v2684
    %v3416 = vmul.f32 %v2685, %v2685
    %v3417 = vmul.f32 %v2686, %v2686
    %v3418 = vmul.f32 %v2687, %v2687
    %v3419 = vmul.f32 %v2688, %v2688
    %v3420 = vmul.f32 %v2689, %v2689
    %v3421 = vmul.f32 %v2690, %v2690
    %v3422 = vmul.f32 %v2691, %v2691
    %v3423 = vmul.f32 %v2692, %v2692
    %v3424 = vmul.f32 %v2693, %v2693
    %v3425 = vmul.f32 %v2694, %v2694
    %v3426 = vmul.f32 %v2695, %v2695
    %v3427 = vmul.f32 %v2696, %v2696
    %v3428 = vmul.f32 %v2697, %v2697
    %v3429 = vmul.f32 %v2698, %v2698
    %v3430 = vmul.f32 %v2699, %v2699
    %v3431 = vmul.f32 %v2700, %v2700
    %v3432 = vmul.f32 %v2701, %v2701
    %v3433 = vmul.f32 %v2702, %v2702
    %v3434 = vmul.f32 %v2703, %v2703
    %v3435 = vmul.f32 %v2704, %v2704
    %v3436 = vmul.f32 %v2705, %v2705
    %v3437 = vmul.f32 %v2706, %v2706
    %v3438 = vmul.f32 %v2707, %v2707
    %v3439 = vmul.f32 %v2708, %v2708
    %v3440 = vmul.f32 %v2709, %v2709
    %v3441 = vmul.f32 %v2710, %v2710
    %v3442 = vmul.f32 %v2711, %v2711
    %v3443 = vmul.f32 %v2712, %v2712
    %v3444 = vmul.f32 %v2713, %v2713
    %v3445 = vmul.f32 %v2714, %v2714
    %v3446 = vmul.f32 %v2715, %v2715
    %v3447 = vmul.f32 %v2716, %v2716
    %v3448 = vmul.f32 %v2717, %v2717
    %v3449 = vmul.f32 %v2718, %v2718
    %v3450 = vmul.f32 %v2719, %v2719
    %v3451 = vmul.f32 %v2720, %v2720
    %v3452 = vmul.f32 %v2721, %v2721
    %v3453 = vmul.f32 %v2722, %v2722
    %v3454 = vmul.f32 %v2723, %v2723
    %v3455 = vmul.f32 %v2724, %v2724
    %v3456 = vmul.f32 %v2725, %v2725
    %v3457 = vmul.f32 %v2726, %v2726
    %v3458 = vmul.f32 %v2727, %v2727
    %v3459 = vmul.f32 %v2728, %v2728
    %v3460 = vmul.f32 %v2729, %v2729
    %v3461 = vmul.f32 %v2730, %v2730
    %v3462 = vmul.f32 %v2731, %v2731
    %v3463 = vmul.f32 %v2732, %v2732
    %v3464 = vmul.f32 %v2733, %v2733
    %v3465 = vmul.f32 %v2734, %v2734
    %v3466 = vmul.f32 %v2735, %v2735
    %v3467 = vmul.f32 %v2736, %v2736
    %v3468 = vmul.f32 %v2737, %v2737
    %v3469 = vmul.f32 %v2738, %v2738
    %v3470 = vmul.f32 %v2739, %v2739
    %v3471 = vmul.f32 %v2740, %v2740
    %v3472 = vmul.f32 %v2741, %v2741
    %v3473 = vmul.f32 %v2742, %v2742
    %v3474 = vmul.f32 %v2743, %v2743
    %v3475 = vmul.f32 %v2744, %v2744
    %v3476 = vmul.f32 %v2745, %v2745
    %v3477 = vmul.f32 %v2746, %v2746
    %v3478 = vmul.f32 %v2747, %v2747
    %v3479 = vmul.f32 %v2748, %v2748
    %v3480 = vmul.f32 %v2749, %v2749
    %v3481 = vmul.f32 %v2750, %v2750
    %v3482 = vmul.f32 %v2751, %v2751
    %v3483 = vmul.f32 %v2752, %v2752
    %v3484 = vmul.f32 %v2753, %v2753
    %v3485 = vmul.f32 %v2754, %v2754
    %v3486 = vmul.f32 %v2755, %v2755
    %v3487 = vmul.f32 %v2756, %v2756
    %v3488 = vmul.f32 %v2757, %v2757
    %v3489 = vmul.f32 %v2758, %v2758
    %v3490 = vmul.f32 %v2759, %v2759
    %v3491 = vmul.f32 %v2760, %v2760
    %v3492 = vmul.f32 %v2761, %v2761
    %v3493 = vmul.f32 %v2762, %v2762
    %v3494 = vmul.f32 %v2763, %v2763
    %v3495 = vmul.f32 %v2764, %v2764
    %v3496 = vmul.f32 %v2765, %v2765
    %v3497 = vmul.f32 %v2766, %v2766
    %v3498 = vmul.f32 %v2767, %v2767
    %v3499 = vmul.f32 %v2768, %v2768
    %v3500 = vmul.f32 %v2769, %v2769
    %v3501 = vmul.f32 %v2770, %v2770
    %v3502 = vmul.f32 %v2771, %v2771
    %v3503 = vmul.f32 %v2772, %v2772
    %v3504 = vmul.f32 %v2773, %v2773
    %v3505 = vmul.f32 %v2774, %v2774
    %v3506 = vmul.f32 %v2775, %v2775
    %v3507 = vmul.f32 %v2776, %v2776
    %v3508 = vmul.f32 %v2777, %v2777
    %v3509 = vmul.f32 %v2778, %v2778
    %v3510 = vmul.f32 %v2779, %v2779
    %v3511 = vmul.f32 %v2780, %v2780
    %v3512 = vmul.f32 %v2781, %v2781
    %v3513 = vmul.f32 %v2782, %v2782
    %v3514 = vmul.f32 %v2783, %v2783
    %v3515 = vmul.f32 %v2784, %v2784
    %v3516 = vsel %vm2785, %v3275, 0.0
    %v3517 = vsel %vm2785, %v3276, 0.0
    %v3518 = vadd.f32 %v3516, %v3517
    %v3519 = vsel %vm2785, %v3277, 0.0
    %v3520 = vadd.f32 %v3518, %v3519
    %v3521 = vsel %vm2785, %v3278, 0.0
    %v3522 = vadd.f32 %v3520, %v3521
    %v3523 = vsel %vm2785, %v3279, 0.0
    %v3524 = vadd.f32 %v3522, %v3523
    %v3525 = vsel %vm2785, %v3280, 0.0
    %v3526 = vadd.f32 %v3524, %v3525
    %v3527 = vsel %vm2785, %v3281, 0.0
    %v3528 = vadd.f32 %v3526, %v3527
    %v3529 = vsel %vm2785, %v3282, 0.0
    %v3530 = vadd.f32 %v3528, %v3529
    %v3531 = vsel %vm2785, %v3283, 0.0
    %v3532 = vadd.f32 %v3530, %v3531
    %v3533 = vsel %vm2785, %v3284, 0.0
    %v3534 = vadd.f32 %v3532, %v3533
    %v3535 = vsel %vm2785, %v3285, 0.0
    %v3536 = vadd.f32 %v3534, %v3535
    %v3537 = vsel %vm2785, %v3286, 0.0
    %v3538 = vadd.f32 %v3536, %v3537
    %v3539 = vsel %vm2785, %v3287, 0.0
    %v3540 = vadd.f32 %v3538, %v3539
    %v3541 = vsel %vm2785, %v3288, 0.0
    %v3542 = vadd.f32 %v3540, %v3541
    %v3543 = vsel %vm2785, %v3289, 0.0
    %v3544 = vadd.f32 %v3542, %v3543
    %v3545 = vsel %vm2785, %v3290, 0.0
    %v3546 = vadd.f32 %v3544, %v3545
    %v3547 = vsel %vm2785, %v3291, 0.0
    %v3548 = vadd.f32 %v3546, %v3547
    %v3549 = vsel %vm2785, %v3292, 0.0
    %v3550 = vadd.f32 %v3548, %v3549
    %v3551 = vsel %vm2785, %v3293, 0.0
    %v3552 = vadd.f32 %v3550, %v3551
    %v3553 = vsel %vm2785, %v3294, 0.0
    %v3554 = vadd.f32 %v3552, %v3553
    %v3555 = vsel %vm2785, %v3295, 0.0
    %v3556 = vadd.f32 %v3554, %v3555
    %v3557 = vsel %vm2785, %v3296, 0.0
    %v3558 = vadd.f32 %v3556, %v3557
    %v3559 = vsel %vm2785, %v3297, 0.0
    %v3560 = vadd.f32 %v3558, %v3559
    %v3561 = vsel %vm2785, %v3298, 0.0
    %v3562 = vadd.f32 %v3560, %v3561
    %v3563 = vsel %vm2785, %v3299, 0.0
    %v3564 = vadd.f32 %v3562, %v3563
    %v3565 = vsel %vm2785, %v3300, 0.0
    %v3566 = vadd.f32 %v3564, %v3565
    %v3567 = vsel %vm2785, %v3301, 0.0
    %v3568 = vadd.f32 %v3566, %v3567
    %v3569 = vsel %vm2785, %v3302, 0.0
    %v3570 = vadd.f32 %v3568, %v3569
    %v3571 = vsel %vm2785, %v3303, 0.0
    %v3572 = vadd.f32 %v3570, %v3571
    %v3573 = vsel %vm2785, %v3304, 0.0
    %v3574 = vadd.f32 %v3572, %v3573
    %v3575 = vsel %vm2785, %v3305, 0.0
    %v3576 = vadd.f32 %v3574, %v3575
    %v3577 = vsel %vm2785, %v3306, 0.0
    %v3578 = vadd.f32 %v3576, %v3577
    %v3579 = vsel %vm2785, %v3307, 0.0
    %v3580 = vadd.f32 %v3578, %v3579
    %v3581 = vsel %vm2785, %v3308, 0.0
    %v3582 = vadd.f32 %v3580, %v3581
    %v3583 = vsel %vm2785, %v3309, 0.0
    %v3584 = vadd.f32 %v3582, %v3583
    %v3585 = vsel %vm2785, %v3310, 0.0
    %v3586 = vadd.f32 %v3584, %v3585
    %v3587 = vsel %vm2785, %v3311, 0.0
    %v3588 = vadd.f32 %v3586, %v3587
    %v3589 = vsel %vm2785, %v3312, 0.0
    %v3590 = vadd.f32 %v3588, %v3589
    %v3591 = vsel %vm2785, %v3313, 0.0
    %v3592 = vadd.f32 %v3590, %v3591
    %v3593 = vsel %vm2785, %v3314, 0.0
    %v3594 = vadd.f32 %v3592, %v3593
    %v3595 = vsel %vm2785, %v3315, 0.0
    %v3596 = vadd.f32 %v3594, %v3595
    %v3597 = vsel %vm2785, %v3316, 0.0
    %v3598 = vadd.f32 %v3596, %v3597
    %v3599 = vsel %vm2785, %v3317, 0.0
    %v3600 = vadd.f32 %v3598, %v3599
    %v3601 = vsel %vm2785, %v3318, 0.0
    %v3602 = vadd.f32 %v3600, %v3601
    %v3603 = vsel %vm2785, %v3319, 0.0
    %v3604 = vadd.f32 %v3602, %v3603
    %v3605 = vsel %vm2785, %v3320, 0.0
    %v3606 = vadd.f32 %v3604, %v3605
    %v3607 = vsel %vm2785, %v3321, 0.0
    %v3608 = vadd.f32 %v3606, %v3607
    %v3609 = vsel %vm2785, %v3322, 0.0
    %v3610 = vadd.f32 %v3608, %v3609
    %v3611 = vsel %vm2785, %v3323, 0.0
    %v3612 = vadd.f32 %v3610, %v3611
    %v3613 = vsel %vm2785, %v3324, 0.0
    %v3614 = vadd.f32 %v3612, %v3613
    %v3615 = vsel %vm2785, %v3325, 0.0
    %v3616 = vadd.f32 %v3614, %v3615
    %v3617 = vsel %vm2785, %v3326, 0.0
    %v3618 = vadd.f32 %v3616, %v3617
    %v3619 = vsel %vm2785, %v3327, 0.0
    %v3620 = vadd.f32 %v3618, %v3619
    %v3621 = vsel %vm2785, %v3328, 0.0
    %v3622 = vadd.f32 %v3620, %v3621
    %v3623 = vsel %vm2785, %v3329, 0.0
    %v3624 = vadd.f32 %v3622, %v3623
    %v3625 = vsel %vm2785, %v3330, 0.0
    %v3626 = vadd.f32 %v3624, %v3625
    %v3627 = vsel %vm2785, %v3331, 0.0
    %v3628 = vadd.f32 %v3626, %v3627
    %v3629 = vsel %vm2785, %v3332, 0.0
    %v3630 = vadd.f32 %v3628, %v3629
    %v3631 = vsel %vm2785, %v3333, 0.0
    %v3632 = vadd.f32 %v3630, %v3631
    %v3633 = vsel %vm2785, %v3334, 0.0
    %v3634 = vadd.f32 %v3632, %v3633
    %v3635 = vsel %vm2785, %v3335, 0.0
    %v3636 = vadd.f32 %v3634, %v3635
    %v3637 = vsel %vm2785, %v3336, 0.0
    %v3638 = vadd.f32 %v3636, %v3637
    %v3639 = vsel %vm2785, %v3337, 0.0
    %v3640 = vadd.f32 %v3638, %v3639
    %v3641 = vsel %vm2785, %v3338, 0.0
    %v3642 = vadd.f32 %v3640, %v3641
    %v3643 = vsel %vm2785, %v3339, 0.0
    %v3644 = vadd.f32 %v3642, %v3643
    %v3645 = vsel %vm2785, %v3340, 0.0
    %v3646 = vadd.f32 %v3644, %v3645
    %v3647 = vsel %vm2785, %v3341, 0.0
    %v3648 = vadd.f32 %v3646, %v3647
    %v3649 = vsel %vm2785, %v3342, 0.0
    %v3650 = vadd.f32 %v3648, %v3649
    %v3651 = vsel %vm2785, %v3343, 0.0
    %v3652 = vadd.f32 %v3650, %v3651
    %v3653 = vsel %vm2785, %v3344, 0.0
    %v3654 = vadd.f32 %v3652, %v3653
    %v3655 = vsel %vm2785, %v3345, 0.0
    %v3656 = vadd.f32 %v3654, %v3655
    %v3657 = vsel %vm2785, %v3346, 0.0
    %v3658 = vadd.f32 %v3656, %v3657
    %v3659 = vsel %vm2785, %v3347, 0.0
    %v3660 = vadd.f32 %v3658, %v3659
    %v3661 = vsel %vm2785, %v3348, 0.0
    %v3662 = vadd.f32 %v3660, %v3661
    %v3663 = vsel %vm2785, %v3349, 0.0
    %v3664 = vadd.f32 %v3662, %v3663
    %v3665 = vsel %vm2785, %v3350, 0.0
    %v3666 = vadd.f32 %v3664, %v3665
    %v3667 = vsel %vm2785, %v3351, 0.0
    %v3668 = vadd.f32 %v3666, %v3667
    %v3669 = vsel %vm2785, %v3352, 0.0
    %v3670 = vadd.f32 %v3668, %v3669
    %v3671 = vsel %vm2785, %v3353, 0.0
    %v3672 = vadd.f32 %v3670, %v3671
    %v3673 = vsel %vm2785, %v3354, 0.0
    %v3674 = vadd.f32 %v3672, %v3673
    %v3675 = vsel %vm2785, %v3355, 0.0
    %v3676 = vadd.f32 %v3674, %v3675
    %v3677 = vsel %vm2785, %v3356, 0.0
    %v3678 = vadd.f32 %v3676, %v3677
    %v3679 = vsel %vm2785, %v3357, 0.0
    %v3680 = vadd.f32 %v3678, %v3679
    %v3681 = vsel %vm2785, %v3358, 0.0
    %v3682 = vadd.f32 %v3680, %v3681
    %v3683 = vsel %vm2785, %v3359, 0.0
    %v3684 = vadd.f32 %v3682, %v3683
    %v3685 = vsel %vm2785, %v3360, 0.0
    %v3686 = vadd.f32 %v3684, %v3685
    %v3687 = vsel %vm2785, %v3361, 0.0
    %v3688 = vadd.f32 %v3686, %v3687
    %v3689 = vsel %vm2785, %v3362, 0.0
    %v3690 = vadd.f32 %v3688, %v3689
    %v3691 = vsel %vm2785, %v3363, 0.0
    %v3692 = vadd.f32 %v3690, %v3691
    %v3693 = vsel %vm2785, %v3364, 0.0
    %v3694 = vadd.f32 %v3692, %v3693
    %v3695 = vsel %vm2785, %v3365, 0.0
    %v3696 = vadd.f32 %v3694, %v3695
    %v3697 = vsel %vm2785, %v3366, 0.0
    %v3698 = vadd.f32 %v3696, %v3697
    %v3699 = vsel %vm2785, %v3367, 0.0
    %v3700 = vadd.f32 %v3698, %v3699
    %v3701 = vsel %vm2785, %v3368, 0.0
    %v3702 = vadd.f32 %v3700, %v3701
    %v3703 = vsel %vm2785, %v3369, 0.0
    %v3704 = vadd.f32 %v3702, %v3703
    %v3705 = vsel %vm2785, %v3370, 0.0
    %v3706 = vadd.f32 %v3704, %v3705
    %v3707 = vsel %vm2785, %v3371, 0.0
    %v3708 = vadd.f32 %v3706, %v3707
    %v3709 = vsel %vm2785, %v3372, 0.0
    %v3710 = vadd.f32 %v3708, %v3709
    %v3711 = vsel %vm2785, %v3373, 0.0
    %v3712 = vadd.f32 %v3710, %v3711
    %v3713 = vsel %vm2785, %v3374, 0.0
    %v3714 = vadd.f32 %v3712, %v3713
    %v3715 = vsel %vm2785, %v3375, 0.0
    %v3716 = vadd.f32 %v3714, %v3715
    %v3717 = vsel %vm2785, %v3376, 0.0
    %v3718 = vadd.f32 %v3716, %v3717
    %v3719 = vsel %vm2785, %v3377, 0.0
    %v3720 = vadd.f32 %v3718, %v3719
    %v3721 = vsel %vm2785, %v3378, 0.0
    %v3722 = vadd.f32 %v3720, %v3721
    %v3723 = vsel %vm2785, %v3379, 0.0
    %v3724 = vadd.f32 %v3722, %v3723
    %v3725 = vsel %vm2785, %v3380, 0.0
    %v3726 = vadd.f32 %v3724, %v3725
    %v3727 = vsel %vm2785, %v3381, 0.0
    %v3728 = vadd.f32 %v3726, %v3727
    %v3729 = vsel %vm2785, %v3382, 0.0
    %v3730 = vadd.f32 %v3728, %v3729
    %v3731 = vsel %vm2785, %v3383, 0.0
    %v3732 = vadd.f32 %v3730, %v3731
    %v3733 = vsel %vm2785, %v3384, 0.0
    %v3734 = vadd.f32 %v3732, %v3733
    %v3735 = vsel %vm2785, %v3385, 0.0
    %v3736 = vadd.f32 %v3734, %v3735
    %v3737 = vsel %vm2785, %v3386, 0.0
    %v3738 = vadd.f32 %v3736, %v3737
    %v3739 = vsel %vm2785, %v3387, 0.0
    %v3740 = vadd.f32 %v3738, %v3739
    %v3741 = vsel %vm2785, %v3388, 0.0
    %v3742 = vadd.f32 %v3740, %v3741
    %v3743 = vsel %vm2785, %v3389, 0.0
    %v3744 = vadd.f32 %v3742, %v3743
    %v3745 = vsel %vm2785, %v3390, 0.0
    %v3746 = vadd.f32 %v3744, %v3745
    %v3747 = vsel %vm2785, %v3391, 0.0
    %v3748 = vadd.f32 %v3746, %v3747
    %v3749 = vsel %vm2785, %v3392, 0.0
    %v3750 = vadd.f32 %v3748, %v3749
    %v3751 = vsel %vm2785, %v3393, 0.0
    %v3752 = vadd.f32 %v3750, %v3751
    %v3753 = vsel %vm2785, %v3394, 0.0
    %v3754 = vadd.f32 %v3752, %v3753
    %v3755 = vsel %vm2785, %v3395, 0.0
    %v3756 = vadd.f32 %v3754, %v3755
    %v3757 = vsel %vm2785, %v3396, 0.0
    %v3758 = vadd.f32 %v3756, %v3757
    %v3759 = vsel %vm2785, %v3397, 0.0
    %v3760 = vadd.f32 %v3758, %v3759
    %v3761 = vsel %vm2785, %v3398, 0.0
    %v3762 = vadd.f32 %v3760, %v3761
    %v3763 = vsel %vm2785, %v3399, 0.0
    %v3764 = vadd.f32 %v3762, %v3763
    %v3765 = vsel %vm2785, %v3400, 0.0
    %v3766 = vadd.f32 %v3764, %v3765
    %v3767 = vsel %vm2785, %v3401, 0.0
    %v3768 = vadd.f32 %v3766, %v3767
    %v3769 = vsel %vm2785, %v3402, 0.0
    %v3770 = vadd.f32 %v3768, %v3769
    %v3771 = vsel %vm2785, %v3403, 0.0
    %v3772 = vadd.f32 %v3770, %v3771
    %v3773 = vsel %vm2785, %v3404, 0.0
    %v3774 = vadd.f32 %v3772, %v3773
    %v3775 = vsel %vm2785, %v3405, 0.0
    %v3776 = vadd.f32 %v3774, %v3775
    %v3777 = vsel %vm2785, %v3406, 0.0
    %v3778 = vadd.f32 %v3776, %v3777
    %v3779 = vsel %vm2785, %v3407, 0.0
    %v3780 = vadd.f32 %v3778, %v3779
    %v3781 = vsel %vm2785, %v3408, 0.0
    %v3782 = vadd.f32 %v3780, %v3781
    %v3783 = vsel %vm2785, %v3409, 0.0
    %v3784 = vadd.f32 %v3782, %v3783
    %v3785 = vsel %vm2785, %v3410, 0.0
    %v3786 = vadd.f32 %v3784, %v3785
    %v3787 = vsel %vm2785, %v3411, 0.0
    %v3788 = vadd.f32 %v3786, %v3787
    %v3789 = vsel %vm2785, %v3412, 0.0
    %v3790 = vadd.f32 %v3788, %v3789
    %v3791 = vsel %vm2785, %v3413, 0.0
    %v3792 = vadd.f32 %v3790, %v3791
    %v3793 = vsel %vm2785, %v3414, 0.0
    %v3794 = vadd.f32 %v3792, %v3793
    %v3795 = vsel %vm2785, %v3415, 0.0
    %v3796 = vadd.f32 %v3794, %v3795
    %v3797 = vsel %vm2785, %v3416, 0.0
    %v3798 = vadd.f32 %v3796, %v3797
    %v3799 = vsel %vm2785, %v3417, 0.0
    %v3800 = vadd.f32 %v3798, %v3799
    %v3801 = vsel %vm2785, %v3418, 0.0
    %v3802 = vadd.f32 %v3800, %v3801
    %v3803 = vsel %vm2785, %v3419, 0.0
    %v3804 = vadd.f32 %v3802, %v3803
    %v3805 = vsel %vm2785, %v3420, 0.0
    %v3806 = vadd.f32 %v3804, %v3805
    %v3807 = vsel %vm2785, %v3421, 0.0
    %v3808 = vadd.f32 %v3806, %v3807
    %v3809 = vsel %vm2785, %v3422, 0.0
    %v3810 = vadd.f32 %v3808, %v3809
    %v3811 = vsel %vm2785, %v3423, 0.0
    %v3812 = vadd.f32 %v3810, %v3811
    %v3813 = vsel %vm2785, %v3424, 0.0
    %v3814 = vadd.f32 %v3812, %v3813
    %v3815 = vsel %vm2785, %v3425, 0.0
    %v3816 = vadd.f32 %v3814, %v3815
    %v3817 = vsel %vm2785, %v3426, 0.0
    %v3818 = vadd.f32 %v3816, %v3817
    %v3819 = vsel %vm2785, %v3427, 0.0
    %v3820 = vadd.f32 %v3818, %v3819
    %v3821 = vsel %vm2785, %v3428, 0.0
    %v3822 = vadd.f32 %v3820, %v3821
    %v3823 = vsel %vm2785, %v3429, 0.0
    %v3824 = vadd.f32 %v3822, %v3823
    %v3825 = vsel %vm2785, %v3430, 0.0
    %v3826 = vadd.f32 %v3824, %v3825
    %v3827 = vsel %vm2785, %v3431, 0.0
    %v3828 = vadd.f32 %v3826, %v3827
    %v3829 = vsel %vm2785, %v3432, 0.0
    %v3830 = vadd.f32 %v3828, %v3829
    %v3831 = vsel %vm2785, %v3433, 0.0
    %v3832 = vadd.f32 %v3830, %v3831
    %v3833 = vsel %vm2785, %v3434, 0.0
    %v3834 = vadd.f32 %v3832, %v3833
    %v3835 = vsel %vm2785, %v3435, 0.0
    %v3836 = vadd.f32 %v3834, %v3835
    %v3837 = vsel %vm2785, %v3436, 0.0
    %v3838 = vadd.f32 %v3836, %v3837
    %v3839 = vsel %vm2785, %v3437, 0.0
    %v3840 = vadd.f32 %v3838, %v3839
    %v3841 = vsel %vm2785, %v3438, 0.0
    %v3842 = vadd.f32 %v3840, %v3841
    %v3843 = vsel %vm2785, %v3439, 0.0
    %v3844 = vadd.f32 %v3842, %v3843
    %v3845 = vsel %vm2785, %v3440, 0.0
    %v3846 = vadd.f32 %v3844, %v3845
    %v3847 = vsel %vm2785, %v3441, 0.0
    %v3848 = vadd.f32 %v3846, %v3847
    %v3849 = vsel %vm2785, %v3442, 0.0
    %v3850 = vadd.f32 %v3848, %v3849
    %v3851 = vsel %vm2785, %v3443, 0.0
    %v3852 = vadd.f32 %v3850, %v3851
    %v3853 = vsel %vm2785, %v3444, 0.0
    %v3854 = vadd.f32 %v3852, %v3853
    %v3855 = vsel %vm2785, %v3445, 0.0
    %v3856 = vadd.f32 %v3854, %v3855
    %v3857 = vsel %vm2785, %v3446, 0.0
    %v3858 = vadd.f32 %v3856, %v3857
    %v3859 = vsel %vm2785, %v3447, 0.0
    %v3860 = vadd.f32 %v3858, %v3859
    %v3861 = vsel %vm2785, %v3448, 0.0
    %v3862 = vadd.f32 %v3860, %v3861
    %v3863 = vsel %vm2785, %v3449, 0.0
    %v3864 = vadd.f32 %v3862, %v3863
    %v3865 = vsel %vm2785, %v3450, 0.0
    %v3866 = vadd.f32 %v3864, %v3865
    %v3867 = vsel %vm2785, %v3451, 0.0
    %v3868 = vadd.f32 %v3866, %v3867
    %v3869 = vsel %vm2785, %v3452, 0.0
    %v3870 = vadd.f32 %v3868, %v3869
    %v3871 = vsel %vm2785, %v3453, 0.0
    %v3872 = vadd.f32 %v3870, %v3871
    %v3873 = vsel %vm2785, %v3454, 0.0
    %v3874 = vadd.f32 %v3872, %v3873
    %v3875 = vsel %vm2785, %v3455, 0.0
    %v3876 = vadd.f32 %v3874, %v3875
    %v3877 = vsel %vm2785, %v3456, 0.0
    %v3878 = vadd.f32 %v3876, %v3877
    %v3879 = vsel %vm2785, %v3457, 0.0
    %v3880 = vadd.f32 %v3878, %v3879
    %v3881 = vsel %vm2785, %v3458, 0.0
    %v3882 = vadd.f32 %v3880, %v3881
    %v3883 = vsel %vm2785, %v3459, 0.0
    %v3884 = vadd.f32 %v3882, %v3883
    %v3885 = vsel %vm2785, %v3460, 0.0
    %v3886 = vadd.f32 %v3884, %v3885
    %v3887 = vsel %vm2785, %v3461, 0.0
    %v3888 = vadd.f32 %v3886, %v3887
    %v3889 = vsel %vm2785, %v3462, 0.0
    %v3890 = vadd.f32 %v3888, %v3889
    %v3891 = vsel %vm2785, %v3463, 0.0
    %v3892 = vadd.f32 %v3890, %v3891
    %v3893 = vsel %vm2785, %v3464, 0.0
    %v3894 = vadd.f32 %v3892, %v3893
    %v3895 = vsel %vm2785, %v3465, 0.0
    %v3896 = vadd.f32 %v3894, %v3895
    %v3897 = vsel %vm2785, %v3466, 0.0
    %v3898 = vadd.f32 %v3896, %v3897
    %v3899 = vsel %vm2785, %v3467, 0.0
    %v3900 = vadd.f32 %v3898, %v3899
    %v3901 = vsel %vm2785, %v3468, 0.0
    %v3902 = vadd.f32 %v3900, %v3901
    %v3903 = vsel %vm2785, %v3469, 0.0
    %v3904 = vadd.f32 %v3902, %v3903
    %v3905 = vsel %vm2785, %v3470, 0.0
    %v3906 = vadd.f32 %v3904, %v3905
    %v3907 = vsel %vm2785, %v3471, 0.0
    %v3908 = vadd.f32 %v3906, %v3907
    %v3909 = vsel %vm2785, %v3472, 0.0
    %v3910 = vadd.f32 %v3908, %v3909
    %v3911 = vsel %vm2785, %v3473, 0.0
    %v3912 = vadd.f32 %v3910, %v3911
    %v3913 = vsel %vm2785, %v3474, 0.0
    %v3914 = vadd.f32 %v3912, %v3913
    %v3915 = vsel %vm2785, %v3475, 0.0
    %v3916 = vadd.f32 %v3914, %v3915
    %v3917 = vsel %vm2785, %v3476, 0.0
    %v3918 = vadd.f32 %v3916, %v3917
    %v3919 = vsel %vm2785, %v3477, 0.0
    %v3920 = vadd.f32 %v3918, %v3919
    %v3921 = vsel %vm2785, %v3478, 0.0
    %v3922 = vadd.f32 %v3920, %v3921
    %v3923 = vsel %vm2785, %v3479, 0.0
    %v3924 = vadd.f32 %v3922, %v3923
    %v3925 = vsel %vm2785, %v3480, 0.0
    %v3926 = vadd.f32 %v3924, %v3925
    %v3927 = vsel %vm2785, %v3481, 0.0
    %v3928 = vadd.f32 %v3926, %v3927
    %v3929 = vsel %vm2785, %v3482, 0.0
    %v3930 = vadd.f32 %v3928, %v3929
    %v3931 = vsel %vm2785, %v3483, 0.0
    %v3932 = vadd.f32 %v3930, %v3931
    %v3933 = vsel %vm2785, %v3484, 0.0
    %v3934 = vadd.f32 %v3932, %v3933
    %v3935 = vsel %vm2785, %v3485, 0.0
    %v3936 = vadd.f32 %v3934, %v3935
    %v3937 = vsel %vm2785, %v3486, 0.0
    %v3938 = vadd.f32 %v3936, %v3937
    %v3939 = vsel %vm2785, %v3487, 0.0
    %v3940 = vadd.f32 %v3938, %v3939
    %v3941 = vsel %vm2785, %v3488, 0.0
    %v3942 = vadd.f32 %v3940, %v3941
    %v3943 = vsel %vm2785, %v3489, 0.0
    %v3944 = vadd.f32 %v3942, %v3943
    %v3945 = vsel %vm2785, %v3490, 0.0
    %v3946 = vadd.f32 %v3944, %v3945
    %v3947 = vsel %vm2785, %v3491, 0.0
    %v3948 = vadd.f32 %v3946, %v3947
    %v3949 = vsel %vm2785, %v3492, 0.0
    %v3950 = vadd.f32 %v3948, %v3949
    %v3951 = vsel %vm2785, %v3493, 0.0
    %v3952 = vadd.f32 %v3950, %v3951
    %v3953 = vsel %vm2785, %v3494, 0.0
    %v3954 = vadd.f32 %v3952, %v3953
    %v3955 = vsel %vm2785, %v3495, 0.0
    %v3956 = vadd.f32 %v3954, %v3955
    %v3957 = vsel %vm2785, %v3496, 0.0
    %v3958 = vadd.f32 %v3956, %v3957
    %v3959 = vsel %vm2785, %v3497, 0.0
    %v3960 = vadd.f32 %v3958, %v3959
    %v3961 = vsel %vm2785, %v3498, 0.0
    %v3962 = vadd.f32 %v3960, %v3961
    %v3963 = vsel %vm2785, %v3499, 0.0
    %v3964 = vadd.f32 %v3962, %v3963
    %v3965 = vsel %vm2785, %v3500, 0.0
    %v3966 = vadd.f32 %v3964, %v3965
    %v3967 = vsel %vm2785, %v3501, 0.0
    %v3968 = vadd.f32 %v3966, %v3967
    %v3969 = vsel %vm2785, %v3502, 0.0
    %v3970 = vadd.f32 %v3968, %v3969
    %v3971 = vsel %vm2785, %v3503, 0.0
    %v3972 = vadd.f32 %v3970, %v3971
    %v3973 = vsel %vm2785, %v3504, 0.0
    %v3974 = vadd.f32 %v3972, %v3973
    %v3975 = vsel %vm2785, %v3505, 0.0
    %v3976 = vadd.f32 %v3974, %v3975
    %v3977 = vsel %vm2785, %v3506, 0.0
    %v3978 = vadd.f32 %v3976, %v3977
    %v3979 = vsel %vm2785, %v3507, 0.0
    %v3980 = vadd.f32 %v3978, %v3979
    %v3981 = vsel %vm2785, %v3508, 0.0
    %v3982 = vadd.f32 %v3980, %v3981
    %v3983 = vsel %vm2785, %v3509, 0.0
    %v3984 = vadd.f32 %v3982, %v3983
    %v3985 = vsel %vm2785, %v3510, 0.0
    %v3986 = vadd.f32 %v3984, %v3985
    %v3987 = vsel %vm2785, %v3511, 0.0
    %v3988 = vadd.f32 %v3986, %v3987
    %v3989 = vsel %vm2785, %v3512, 0.0
    %v3990 = vadd.f32 %v3988, %v3989
    %v3991 = vsel %vm2785, %v3513, 0.0
    %v3992 = vadd.f32 %v3990, %v3991
    %v3993 = vsel %vm2785, %v3514, 0.0
    %v3994 = vadd.f32 %v3992, %v3993
    %v3995 = vsel %vm3265, %v3515, 0.0
    %v3996 = vadd.f32 %v3994, %v3995
    %v3997 = vrot.slane %v3996, 4
    %v3998 = vadd.f32 %v3996, %v3997
    %v3999 = vrot.slane %v3998, 2
    %v4000 = vadd.f32 %v3998, %v3999
    %v4001 = vrot.slane %v4000, 1
    %v4002 = vadd.f32 %v4000, %v4001
    %v4003 = vmul.f32 %v4002, 0.0005202914
    %v4004 = vmul.f32 %v3274, %v3274
    %v4005 = vsub.f32 %v4003, %v4004
    %v4006 = vadd.f32 %v4005, 1e-05
    %v4007 = vrsqrt.pop %v4006
    %v4008 = vsub.f32 %v2544, %v3274
    %v4009 = vsub.f32 %v2545, %v3274
    %v4010 = vsub.f32 %v2546, %v3274
    %v4011 = vsub.f32 %v2547, %v3274
    %v4012 = vsub.f32 %v2548, %v3274
    %v4013 = vsub.f32 %v2549, %v3274
    %v4014 = vsub.f32 %v2550, %v3274
    %v4015 = vsub.f32 %v2551, %v3274
    %v4016 = vsub.f32 %v2552, %v3274
    %v4017 = vsub.f32 %v2553, %v3274
    %v4018 = vsub.f32 %v2554, %v3274
    %v4019 = vsub.f32 %v2555, %v3274
    %v4020 = vsub.f32 %v2556, %v3274
    %v4021 = vsub.f32 %v2557, %v3274
    %v4022 = vsub.f32 %v2558, %v3274
    %v4023 = vsub.f32 %v2559, %v3274
    %v4024 = vsub.f32 %v2560, %v3274
    %v4025 = vsub.f32 %v2561, %v3274
    %v4026 = vsub.f32 %v2562, %v3274
    %v4027 = vsub.f32 %v2563, %v3274
    %v4028 = vsub.f32 %v2564, %v3274
    %v4029 = vsub.f32 %v2565, %v3274
    %v4030 = vsub.f32 %v2566, %v3274
    %v4031 = vsub.f32 %v2567, %v3274
    %v4032 = vsub.f32 %v2568, %v3274
    %v4033 = vsub.f32 %v2569, %v3274
    %v4034 = vsub.f32 %v2570, %v3274
    %v4035 = vsub.f32 %v2571, %v3274
    %v4036 = vsub.f32 %v2572, %v3274
    %v4037 = vsub.f32 %v2573, %v3274
    %v4038 = vsub.f32 %v2574, %v3274
    %v4039 = vsub.f32 %v2575, %v3274
    %v4040 = vsub.f32 %v2576, %v3274
    %v4041 = vsub.f32 %v2577, %v3274
    %v4042 = vsub.f32 %v2578, %v3274
    %v4043 = vsub.f32 %v2579, %v3274
    %v4044 = vsub.f32 %v2580, %v3274
    %v4045 = vsub.f32 %v2581, %v3274
    %v4046 = vsub.f32 %v2582, %v3274
    %v4047 = vsub.f32 %v2583, %v3274
    %v4048 = vsub.f32 %v2584, %v3274
    %v4049 = vsub.f32 %v2585, %v3274
    %v4050 = vsub.f32 %v2586, %v3274
    %v4051 = vsub.f32 %v2587, %v3274
    %v4052 = vsub.f32 %v2588, %v3274
    %v4053 = vsub.f32 %v2589, %v3274
    %v4054 = vsub.f32 %v2590, %v3274
    %v4055 = vsub.f32 %v2591, %v3274
    %v4056 = vsub.f32 %v2592, %v3274
    %v4057 = vsub.f32 %v2593, %v3274
    %v4058 = vsub.f32 %v2594, %v3274
    %v4059 = vsub.f32 %v2595, %v3274
    %v4060 = vsub.f32 %v2596, %v3274
    %v4061 = vsub.f32 %v2597, %v3274
    %v4062 = vsub.f32 %v2598, %v3274
    %v4063 = vsub.f32 %v2599, %v3274
    %v4064 = vsub.f32 %v2600, %v3274
    %v4065 = vsub.f32 %v2601, %v3274
    %v4066 = vsub.f32 %v2602, %v3274
    %v4067 = vsub.f32 %v2603, %v3274
    %v4068 = vsub.f32 %v2604, %v3274
    %v4069 = vsub.f32 %v2605, %v3274
    %v4070 = vsub.f32 %v2606, %v3274
    %v4071 = vsub.f32 %v2607, %v3274
    %v4072 = vsub.f32 %v2608, %v3274
    %v4073 = vsub.f32 %v2609, %v3274
    %v4074 = vsub.f32 %v2610, %v3274
    %v4075 = vsub.f32 %v2611, %v3274
    %v4076 = vsub.f32 %v2612, %v3274
    %v4077 = vsub.f32 %v2613, %v3274
    %v4078 = vsub.f32 %v2614, %v3274
    %v4079 = vsub.f32 %v2615, %v3274
    %v4080 = vsub.f32 %v2616, %v3274
    %v4081 = vsub.f32 %v2617, %v3274
    %v4082 = vsub.f32 %v2618, %v3274
    %v4083 = vsub.f32 %v2619, %v3274
    %v4084 = vsub.f32 %v2620, %v3274
    %v4085 = vsub.f32 %v2621, %v3274
    %v4086 = vsub.f32 %v2622, %v3274
    %v4087 = vsub.f32 %v2623, %v3274
    %v4088 = vsub.f32 %v2624, %v3274
    %v4089 = vsub.f32 %v2625, %v3274
    %v4090 = vsub.f32 %v2626, %v3274
    %v4091 = vsub.f32 %v2627, %v3274
    %v4092 = vsub.f32 %v2628, %v3274
    %v4093 = vsub.f32 %v2629, %v3274
    %v4094 = vsub.f32 %v2630, %v3274
    %v4095 = vsub.f32 %v2631, %v3274
    %v4096 = vsub.f32 %v2632, %v3274
    %v4097 = vsub.f32 %v2633, %v3274
    %v4098 = vsub.f32 %v2634, %v3274
    %v4099 = vsub.f32 %v2635, %v3274
    %v4100 = vsub.f32 %v2636, %v3274
    %v4101 = vsub.f32 %v2637, %v3274
    %v4102 = vsub.f32 %v2638, %v3274
    %v4103 = vsub.f32 %v2639, %v3274
    %v4104 = vsub.f32 %v2640, %v3274
    %v4105 = vsub.f32 %v2641, %v3274
    %v4106 = vsub.f32 %v2642, %v3274
    %v4107 = vsub.f32 %v2643, %v3274
    %v4108 = vsub.f32 %v2644, %v3274
    %v4109 = vsub.f32 %v2645, %v3274
    %v4110 = vsub.f32 %v2646, %v3274
    %v4111 = vsub.f32 %v2647, %v3274
    %v4112 = vsub.f32 %v2648, %v3274
    %v4113 = vsub.f32 %v2649, %v3274
    %v4114 = vsub.f32 %v2650, %v3274
    %v4115 = vsub.f32 %v2651, %v3274
    %v4116 = vsub.f32 %v2652, %v3274
    %v4117 = vsub.f32 %v2653, %v3274
    %v4118 = vsub.f32 %v2654, %v3274
    %v4119 = vsub.f32 %v2655, %v3274
    %v4120 = vsub.f32 %v2656, %v3274
    %v4121 = vsub.f32 %v2657, %v3274
    %v4122 = vsub.f32 %v2658, %v3274
    %v4123 = vsub.f32 %v2659, %v3274
    %v4124 = vsub.f32 %v2660, %v3274
    %v4125 = vsub.f32 %v2661, %v3274
    %v4126 = vsub.f32 %v2662, %v3274
    %v4127 = vsub.f32 %v2663, %v3274
    %v4128 = vsub.f32 %v2664, %v3274
    %v4129 = vsub.f32 %v2665, %v3274
    %v4130 = vsub.f32 %v2666, %v3274
    %v4131 = vsub.f32 %v2667, %v3274
    %v4132 = vsub.f32 %v2668, %v3274
    %v4133 = vsub.f32 %v2669, %v3274
    %v4134 = vsub.f32 %v2670, %v3274
    %v4135 = vsub.f32 %v2671, %v3274
    %v4136 = vsub.f32 %v2672, %v3274
    %v4137 = vsub.f32 %v2673, %v3274
    %v4138 = vsub.f32 %v2674, %v3274
    %v4139 = vsub.f32 %v2675, %v3274
    %v4140 = vsub.f32 %v2676, %v3274
    %v4141 = vsub.f32 %v2677, %v3274
    %v4142 = vsub.f32 %v2678, %v3274
    %v4143 = vsub.f32 %v2679, %v3274
    %v4144 = vsub.f32 %v2680, %v3274
    %v4145 = vsub.f32 %v2681, %v3274
    %v4146 = vsub.f32 %v2682, %v3274
    %v4147 = vsub.f32 %v2683, %v3274
    %v4148 = vsub.f32 %v2684, %v3274
    %v4149 = vsub.f32 %v2685, %v3274
    %v4150 = vsub.f32 %v2686, %v3274
    %v4151 = vsub.f32 %v2687, %v3274
    %v4152 = vsub.f32 %v2688, %v3274
    %v4153 = vsub.f32 %v2689, %v3274
    %v4154 = vsub.f32 %v2690, %v3274
    %v4155 = vsub.f32 %v2691, %v3274
    %v4156 = vsub.f32 %v2692, %v3274
    %v4157 = vsub.f32 %v2693, %v3274
    %v4158 = vsub.f32 %v2694, %v3274
    %v4159 = vsub.f32 %v2695, %v3274
    %v4160 = vsub.f32 %v2696, %v3274
    %v4161 = vsub.f32 %v2697, %v3274
    %v4162 = vsub.f32 %v2698, %v3274
    %v4163 = vsub.f32 %v2699, %v3274
    %v4164 = vsub.f32 %v2700, %v3274
    %v4165 = vsub.f32 %v2701, %v3274
    %v4166 = vsub.f32 %v2702, %v3274
    %v4167 = vsub.f32 %v2703, %v3274
    %v4168 = vsub.f32 %v2704, %v3274
    %v4169 = vsub.f32 %v2705, %v3274
    %v4170 = vsub.f32 %v2706, %v3274
    %v4171 = vsub.f32 %v2707, %v3274
    %v4172 = vsub.f32 %v2708, %v3274
    %v4173 = vsub.f32 %v2709, %v3274
    %v4174 = vsub.f32 %v2710, %v3274
    %v4175 = vsub.f32 %v2711, %v3274
    %v4176 = vsub.f32 %v2712, %v3274
    %v4177 = vsub.f32 %v2713, %v3274
    %v4178 = vsub.f32 %v2714, %v3274
    %v4179 = vsub.f32 %v2715, %v3274
    %v4180 = vsub.f32 %v2716, %v3274
    %v4181 = vsub.f32 %v2717, %v3274
    %v4182 = vsub.f32 %v2718, %v3274
    %v4183 = vsub.f32 %v2719, %v3274
    %v4184 = vsub.f32 %v2720, %v3274
    %v4185 = vsub.f32 %v2721, %v3274
    %v4186 = vsub.f32 %v2722, %v3274
    %v4187 = vsub.f32 %v2723, %v3274
    %v4188 = vsub.f32 %v2724, %v3274
    %v4189 = vsub.f32 %v2725, %v3274
    %v4190 = vsub.f32 %v2726, %v3274
    %v4191 = vsub.f32 %v2727, %v3274
    %v4192 = vsub.f32 %v2728, %v3274
    %v4193 = vsub.f32 %v2729, %v3274
    %v4194 = vsub.f32 %v2730, %v3274
    %v4195 = vsub.f32 %v2731, %v3274
    %v4196 = vsub.f32 %v2732, %v3274
    %v4197 = vsub.f32 %v2733, %v3274
    %v4198 = vsub.f32 %v2734, %v3274
    %v4199 = vsub.f32 %v2735, %v3274
    %v4200 = vsub.f32 %v2736, %v3274
    %v4201 = vsub.f32 %v2737, %v3274
    %v4202 = vsub.f32 %v2738, %v3274
    %v4203 = vsub.f32 %v2739, %v3274
    %v4204 = vsub.f32 %v2740, %v3274
    %v4205 = vsub.f32 %v2741, %v3274
    %v4206 = vsub.f32 %v2742, %v3274
    %v4207 = vsub.f32 %v2743, %v3274
    %v4208 = vsub.f32 %v2744, %v3274
    %v4209 = vsub.f32 %v2745, %v3274
    %v4210 = vsub.f32 %v2746, %v3274
    %v4211 = vsub.f32 %v2747, %v3274
    %v4212 = vsub.f32 %v2748, %v3274
    %v4213 = vsub.f32 %v2749, %v3274
    %v4214 = vsub.f32 %v2750, %v3274
    %v4215 = vsub.f32 %v2751, %v3274
    %v4216 = vsub.f32 %v2752, %v3274
    %v4217 = vsub.f32 %v2753, %v3274
    %v4218 = vsub.f32 %v2754, %v3274
    %v4219 = vsub.f32 %v2755, %v3274
    %v4220 = vsub.f32 %v2756, %v3274
    %v4221 = vsub.f32 %v2757, %v3274
    %v4222 = vsub.f32 %v2758, %v3274
    %v4223 = vsub.f32 %v2759, %v3274
    %v4224 = vsub.f32 %v2760, %v3274
    %v4225 = vsub.f32 %v2761, %v3274
    %v4226 = vsub.f32 %v2762, %v3274
    %v4227 = vsub.f32 %v2763, %v3274
    %v4228 = vsub.f32 %v2764, %v3274
    %v4229 = vsub.f32 %v2765, %v3274
    %v4230 = vsub.f32 %v2766, %v3274
    %v4231 = vsub.f32 %v2767, %v3274
    %v4232 = vsub.f32 %v2768, %v3274
    %v4233 = vsub.f32 %v2769, %v3274
    %v4234 = vsub.f32 %v2770, %v3274
    %v4235 = vsub.f32 %v2771, %v3274
    %v4236 = vsub.f32 %v2772, %v3274
    %v4237 = vsub.f32 %v2773, %v3274
    %v4238 = vsub.f32 %v2774, %v3274
    %v4239 = vsub.f32 %v2775, %v3274
    %v4240 = vsub.f32 %v2776, %v3274
    %v4241 = vsub.f32 %v2777, %v3274
    %v4242 = vsub.f32 %v2778, %v3274
    %v4243 = vsub.f32 %v2779, %v3274
    %v4244 = vsub.f32 %v2780, %v3274
    %v4245 = vsub.f32 %v2781, %v3274
    %v4246 = vsub.f32 %v2782, %v3274
    %v4247 = vsub.f32 %v2783, %v3274
    %v4248 = vsub.f32 %v2784, %v3274
    %v4249 = vld [vmem:[#allocation4] sm:$0x1]
    %v4250 = vmul.f32 %v4007, %v4249
    %v4251 = vlaneseq
    %v4252 = vshrl.u32 %v4251, 7
    %v4253 = vsub.s32 0, %v4252
    %v4254 = vrot.slane %v4250, %v4253
    %v4255 = vmul.f32 %v4008, %v4254
    %v4256 = vmul.f32 %v4009, %v4254
    %v4257 = vmul.f32 %v4010, %v4254
    %v4258 = vmul.f32 %v4011, %v4254
    %v4259 = vmul.f32 %v4012, %v4254
    %v4260 = vmul.f32 %v4013, %v4254
    %v4261 = vmul.f32 %v4014, %v4254
    %v4262 = vmul.f32 %v4015, %v4254
    %v4263 = vmul.f32 %v4016, %v4254
    %v4264 = vmul.f32 %v4017, %v4254
    %v4265 = vmul.f32 %v4018, %v4254
    %v4266 = vmul.f32 %v4019, %v4254
    %v4267 = vmul.f32 %v4020, %v4254
    %v4268 = vmul.f32 %v4021, %v4254
    %v4269 = vmul.f32 %v4022, %v4254
    %v4270 = vmul.f32 %v4023, %v4254
    %v4271 = vmul.f32 %v4024, %v4254
    %v4272 = vmul.f32 %v4025, %v4254
    %v4273 = vmul.f32 %v4026, %v4254
    %v4274 = vmul.f32 %v4027, %v4254
    %v4275 = vmul.f32 %v4028, %v4254
    %v4276 = vmul.f32 %v4029, %v4254
    %v4277 = vmul.f32 %v4030, %v4254
    %v4278 = vmul.f32 %v4031, %v4254
    %v4279 = vmul.f32 %v4032, %v4254
    %v4280 = vmul.f32 %v4033, %v4254
    %v4281 = vmul.f32 %v4034, %v4254
    %v4282 = vmul.f32 %v4035, %v4254
    %v4283 = vmul.f32 %v4036, %v4254
    %v4284 = vmul.f32 %v4037, %v4254
    %v4285 = vmul.f32 %v4038, %v4254
    %v4286 = vmul.f32 %v4039, %v4254
    %v4287 = vmul.f32 %v4040, %v4254
    %v4288 = vmul.f32 %v4041, %v4254
    %v4289 = vmul.f32 %v4042, %v4254
    %v4290 = vmul.f32 %v4043, %v4254
    %v4291 = vmul.f32 %v4044, %v4254
    %v4292 = vmul.f32 %v4045, %v4254
    %v4293 = vmul.f32 %v4046, %v4254
    %v4294 = vmul.f32 %v4047, %v4254
    %v4295 = vmul.f32 %v4048, %v4254
    %v4296 = vmul.f32 %v4049, %v4254
    %v4297 = vmul.f32 %v4050, %v4254
    %v4298 = vmul.f32 %v4051, %v4254
    %v4299 = vmul.f32 %v4052, %v4254
    %v4300 = vmul.f32 %v4053, %v4254
    %v4301 = vmul.f32 %v4054, %v4254
    %v4302 = vmul.f32 %v4055, %v4254
    %v4303 = vmul.f32 %v4056, %v4254
    %v4304 = vmul.f32 %v4057, %v4254
    %v4305 = vmul.f32 %v4058, %v4254
    %v4306 = vmul.f32 %v4059, %v4254
    %v4307 = vmul.f32 %v4060, %v4254
    %v4308 = vmul.f32 %v4061, %v4254
    %v4309 = vmul.f32 %v4062, %v4254
    %v4310 = vmul.f32 %v4063, %v4254
    %v4311 = vmul.f32 %v4064, %v4254
    %v4312 = vmul.f32 %v4065, %v4254
    %v4313 = vmul.f32 %v4066, %v4254
    %v4314 = vmul.f32 %v4067, %v4254
    %v4315 = vmul.f32 %v4068, %v4254
    %v4316 = vmul.f32 %v4069, %v4254
    %v4317 = vmul.f32 %v4070, %v4254
    %v4318 = vmul.f32 %v4071, %v4254
    %v4319 = vmul.f32 %v4072, %v4254
    %v4320 = vmul.f32 %v4073, %v4254
    %v4321 = vmul.f32 %v4074, %v4254
    %v4322 = vmul.f32 %v4075, %v4254
    %v4323 = vmul.f32 %v4076, %v4254
    %v4324 = vmul.f32 %v4077, %v4254
    %v4325 = vmul.f32 %v4078, %v4254
    %v4326 = vmul.f32 %v4079, %v4254
    %v4327 = vmul.f32 %v4080, %v4254
    %v4328 = vmul.f32 %v4081, %v4254
    %v4329 = vmul.f32 %v4082, %v4254
    %v4330 = vmul.f32 %v4083, %v4254
    %v4331 = vmul.f32 %v4084, %v4254
    %v4332 = vmul.f32 %v4085, %v4254
    %v4333 = vmul.f32 %v4086, %v4254
    %v4334 = vmul.f32 %v4087, %v4254
    %v4335 = vmul.f32 %v4088, %v4254
    %v4336 = vmul.f32 %v4089, %v4254
    %v4337 = vmul.f32 %v4090, %v4254
    %v4338 = vmul.f32 %v4091, %v4254
    %v4339 = vmul.f32 %v4092, %v4254
    %v4340 = vmul.f32 %v4093, %v4254
    %v4341 = vmul.f32 %v4094, %v4254
    %v4342 = vmul.f32 %v4095, %v4254
    %v4343 = vmul.f32 %v4096, %v4254
    %v4344 = vmul.f32 %v4097, %v4254
    %v4345 = vmul.f32 %v4098, %v4254
    %v4346 = vmul.f32 %v4099, %v4254
    %v4347 = vmul.f32 %v4100, %v4254
    %v4348 = vmul.f32 %v4101, %v4254
    %v4349 = vmul.f32 %v4102, %v4254
    %v4350 = vmul.f32 %v4103, %v4254
    %v4351 = vmul.f32 %v4104, %v4254
    %v4352 = vmul.f32 %v4105, %v4254
    %v4353 = vmul.f32 %v4106, %v4254
    %v4354 = vmul.f32 %v4107, %v4254
    %v4355 = vmul.f32 %v4108, %v4254
    %v4356 = vmul.f32 %v4109, %v4254
    %v4357 = vmul.f32 %v4110, %v4254
    %v4358 = vmul.f32 %v4111, %v4254
    %v4359 = vmul.f32 %v4112, %v4254
    %v4360 = vmul.f32 %v4113, %v4254
    %v4361 = vmul.f32 %v4114, %v4254
    %v4362 = vmul.f32 %v4115, %v4254
    %v4363 = vmul.f32 %v4116, %v4254
    %v4364 = vmul.f32 %v4117, %v4254
    %v4365 = vmul.f32 %v4118, %v4254
    %v4366 = vmul.f32 %v4119, %v4254
    %v4367 = vmul.f32 %v4120, %v4254
    %v4368 = vmul.f32 %v4121, %v4254
    %v4369 = vmul.f32 %v4122, %v4254
    %v4370 = vmul.f32 %v4123, %v4254
    %v4371 = vmul.f32 %v4124, %v4254
    %v4372 = vmul.f32 %v4125, %v4254
    %v4373 = vmul.f32 %v4126, %v4254
    %v4374 = vmul.f32 %v4127, %v4254
    %v4375 = vmul.f32 %v4128, %v4254
    %v4376 = vmul.f32 %v4129, %v4254
    %v4377 = vmul.f32 %v4130, %v4254
    %v4378 = vmul.f32 %v4131, %v4254
    %v4379 = vmul.f32 %v4132, %v4254
    %v4380 = vmul.f32 %v4133, %v4254
    %v4381 = vmul.f32 %v4134, %v4254
    %v4382 = vmul.f32 %v4135, %v4254
    %v4383 = vmul.f32 %v4136, %v4254
    %v4384 = vmul.f32 %v4137, %v4254
    %v4385 = vmul.f32 %v4138, %v4254
    %v4386 = vmul.f32 %v4139, %v4254
    %v4387 = vmul.f32 %v4140, %v4254
    %v4388 = vmul.f32 %v4141, %v4254
    %v4389 = vmul.f32 %v4142, %v4254
    %v4390 = vmul.f32 %v4143, %v4254
    %v4391 = vmul.f32 %v4144, %v4254
    %v4392 = vmul.f32 %v4145, %v4254
    %v4393 = vmul.f32 %v4146, %v4254
    %v4394 = vmul.f32 %v4147, %v4254
    %v4395 = vmul.f32 %v4148, %v4254
    %v4396 = vmul.f32 %v4149, %v4254
    %v4397 = vmul.f32 %v4150, %v4254
    %v4398 = vmul.f32 %v4151, %v4254
    %v4399 = vmul.f32 %v4152, %v4254
    %v4400 = vmul.f32 %v4153, %v4254
    %v4401 = vmul.f32 %v4154, %v4254
    %v4402 = vmul.f32 %v4155, %v4254
    %v4403 = vmul.f32 %v4156, %v4254
    %v4404 = vmul.f32 %v4157, %v4254
    %v4405 = vmul.f32 %v4158, %v4254
    %v4406 = vmul.f32 %v4159, %v4254
    %v4407 = vmul.f32 %v4160, %v4254
    %v4408 = vmul.f32 %v4161, %v4254
    %v4409 = vmul.f32 %v4162, %v4254
    %v4410 = vmul.f32 %v4163, %v4254
    %v4411 = vmul.f32 %v4164, %v4254
    %v4412 = vmul.f32 %v4165, %v4254
    %v4413 = vmul.f32 %v4166, %v4254
    %v4414 = vmul.f32 %v4167, %v4254
    %v4415 = vmul.f32 %v4168, %v4254
    %v4416 = vmul.f32 %v4169, %v4254
    %v4417 = vmul.f32 %v4170, %v4254
    %v4418 = vmul.f32 %v4171, %v4254
    %v4419 = vmul.f32 %v4172, %v4254
    %v4420 = vmul.f32 %v4173, %v4254
    %v4421 = vmul.f32 %v4174, %v4254
    %v4422 = vmul.f32 %v4175, %v4254
    %v4423 = vmul.f32 %v4176, %v4254
    %v4424 = vmul.f32 %v4177, %v4254
    %v4425 = vmul.f32 %v4178, %v4254
    %v4426 = vmul.f32 %v4179, %v4254
    %v4427 = vmul.f32 %v4180, %v4254
    %v4428 = vmul.f32 %v4181, %v4254
    %v4429 = vmul.f32 %v4182, %v4254
    %v4430 = vmul.f32 %v4183, %v4254
    %v4431 = vmul.f32 %v4184, %v4254
    %v4432 = vmul.f32 %v4185, %v4254
    %v4433 = vmul.f32 %v4186, %v4254
    %v4434 = vmul.f32 %v4187, %v4254
    %v4435 = vmul.f32 %v4188, %v4254
    %v4436 = vmul.f32 %v4189, %v4254
    %v4437 = vmul.f32 %v4190, %v4254
    %v4438 = vmul.f32 %v4191, %v4254
    %v4439 = vmul.f32 %v4192, %v4254
    %v4440 = vmul.f32 %v4193, %v4254
    %v4441 = vmul.f32 %v4194, %v4254
    %v4442 = vmul.f32 %v4195, %v4254
    %v4443 = vmul.f32 %v4196, %v4254
    %v4444 = vmul.f32 %v4197, %v4254
    %v4445 = vmul.f32 %v4198, %v4254
    %v4446 = vmul.f32 %v4199, %v4254
    %v4447 = vmul.f32 %v4200, %v4254
    %v4448 = vmul.f32 %v4201, %v4254
    %v4449 = vmul.f32 %v4202, %v4254
    %v4450 = vmul.f32 %v4203, %v4254
    %v4451 = vmul.f32 %v4204, %v4254
    %v4452 = vmul.f32 %v4205, %v4254
    %v4453 = vmul.f32 %v4206, %v4254
    %v4454 = vmul.f32 %v4207, %v4254
    %v4455 = vmul.f32 %v4208, %v4254
    %v4456 = vmul.f32 %v4209, %v4254
    %v4457 = vmul.f32 %v4210, %v4254
    %v4458 = vmul.f32 %v4211, %v4254
    %v4459 = vmul.f32 %v4212, %v4254
    %v4460 = vmul.f32 %v4213, %v4254
    %v4461 = vmul.f32 %v4214, %v4254
    %v4462 = vmul.f32 %v4215, %v4254
    %v4463 = vmul.f32 %v4216, %v4254
    %v4464 = vmul.f32 %v4217, %v4254
    %v4465 = vmul.f32 %v4218, %v4254
    %v4466 = vmul.f32 %v4219, %v4254
    %v4467 = vmul.f32 %v4220, %v4254
    %v4468 = vmul.f32 %v4221, %v4254
    %v4469 = vmul.f32 %v4222, %v4254
    %v4470 = vmul.f32 %v4223, %v4254
    %v4471 = vmul.f32 %v4224, %v4254
    %v4472 = vmul.f32 %v4225, %v4254
    %v4473 = vmul.f32 %v4226, %v4254
    %v4474 = vmul.f32 %v4227, %v4254
    %v4475 = vmul.f32 %v4228, %v4254
    %v4476 = vmul.f32 %v4229, %v4254
    %v4477 = vmul.f32 %v4230, %v4254
    %v4478 = vmul.f32 %v4231, %v4254
    %v4479 = vmul.f32 %v4232, %v4254
    %v4480 = vmul.f32 %v4233, %v4254
    %v4481 = vmul.f32 %v4234, %v4254
    %v4482 = vmul.f32 %v4235, %v4254
    %v4483 = vmul.f32 %v4236, %v4254
    %v4484 = vmul.f32 %v4237, %v4254
    %v4485 = vmul.f32 %v4238, %v4254
    %v4486 = vmul.f32 %v4239, %v4254
    %v4487 = vmul.f32 %v4240, %v4254
    %v4488 = vmul.f32 %v4241, %v4254
    %v4489 = vmul.f32 %v4242, %v4254
    %v4490 = vmul.f32 %v4243, %v4254
    %v4491 = vmul.f32 %v4244, %v4254
    %v4492 = vmul.f32 %v4245, %v4254
    %v4493 = vmul.f32 %v4246, %v4254
    %v4494 = vmul.f32 %v4247, %v4254
    %v4495 = vmul.f32 %v4248, %v4254
    %v4496 = vld [vmem:[#allocation6] sm:$0x1]
    %v4498 = vlaneseq
    %v4499 = vshrl.u32 %v4498, 7
    %v4500 = vsub.s32 0, %v4499
    %v4501 = vrot.slane %v4496, %v4500
    %v4503 = vadd.f32 %v4255, %v4501
    %v4504 = vadd.f32 %v4256, %v4501
    %v4505 = vadd.f32 %v4257, %v4501
    %v4506 = vadd.f32 %v4258, %v4501
    %v4507 = vadd.f32 %v4259, %v4501
    %v4508 = vadd.f32 %v4260, %v4501
    %v4509 = vadd.f32 %v4261, %v4501
    %v4510 = vadd.f32 %v4262, %v4501
    %v4511 = vadd.f32 %v4263, %v4501
    %v4512 = vadd.f32 %v4264, %v4501
    %v4513 = vadd.f32 %v4265, %v4501
    %v4514 = vadd.f32 %v4266, %v4501
    %v4515 = vadd.f32 %v4267, %v4501
    %v4516 = vadd.f32 %v4268, %v4501
    %v4517 = vadd.f32 %v4269, %v4501
    %v4518 = vadd.f32 %v4270, %v4501
    %v4519 = vadd.f32 %v4271, %v4501
    %v4520 = vadd.f32 %v4272, %v4501
    %v4521 = vadd.f32 %v4273, %v4501
    %v4522 = vadd.f32 %v4274, %v4501
    %v4523 = vadd.f32 %v4275, %v4501
    %v4524 = vadd.f32 %v4276, %v4501
    %v4525 = vadd.f32 %v4277, %v4501
    %v4526 = vadd.f32 %v4278, %v4501
    %v4527 = vadd.f32 %v4279, %v4501
    %v4528 = vadd.f32 %v4280, %v4501
    %v4529 = vadd.f32 %v4281, %v4501
    %v4530 = vadd.f32 %v4282, %v4501
    %v4531 = vadd.f32 %v4283, %v4501
    %v4532 = vadd.f32 %v4284, %v4501
    %v4533 = vadd.f32 %v4285, %v4501
    %v4534 = vadd.f32 %v4286, %v4501
    %v4535 = vadd.f32 %v4287, %v4501
    %v4536 = vadd.f32 %v4288, %v4501
    %v4537 = vadd.f32 %v4289, %v4501
    %v4538 = vadd.f32 %v4290, %v4501
    %v4539 = vadd.f32 %v4291, %v4501
    %v4540 = vadd.f32 %v4292, %v4501
    %v4541 = vadd.f32 %v4293, %v4501
    %v4542 = vadd.f32 %v4294, %v4501
    %v4543 = vadd.f32 %v4295, %v4501
    %v4544 = vadd.f32 %v4296, %v4501
    %v4545 = vadd.f32 %v4297, %v4501
    %v4546 = vadd.f32 %v4298, %v4501
    %v4547 = vadd.f32 %v4299, %v4501
    %v4548 = vadd.f32 %v4300, %v4501
    %v4549 = vadd.f32 %v4301, %v4501
    %v4550 = vadd.f32 %v4302, %v4501
    %v4551 = vadd.f32 %v4303, %v4501
    %v4552 = vadd.f32 %v4304, %v4501
    %v4553 = vadd.f32 %v4305, %v4501
    %v4554 = vadd.f32 %v4306, %v4501
    %v4555 = vadd.f32 %v4307, %v4501
    %v4556 = vadd.f32 %v4308, %v4501
    %v4557 = vadd.f32 %v4309, %v4501
    %v4558 = vadd.f32 %v4310, %v4501
    %v4559 = vadd.f32 %v4311, %v4501
    %v4560 = vadd.f32 %v4312, %v4501
    %v4561 = vadd.f32 %v4313, %v4501
    %v4562 = vadd.f32 %v4314, %v4501
    %v4563 = vadd.f32 %v4315, %v4501
    %v4564 = vadd.f32 %v4316, %v4501
    %v4565 = vadd.f32 %v4317, %v4501
    %v4566 = vadd.f32 %v4318, %v4501
    %v4567 = vadd.f32 %v4319, %v4501
    %v4568 = vadd.f32 %v4320, %v4501
    %v4569 = vadd.f32 %v4321, %v4501
    %v4570 = vadd.f32 %v4322, %v4501
    %v4571 = vadd.f32 %v4323, %v4501
    %v4572 = vadd.f32 %v4324, %v4501
    %v4573 = vadd.f32 %v4325, %v4501
    %v4574 = vadd.f32 %v4326, %v4501
    %v4575 = vadd.f32 %v4327, %v4501
    %v4576 = vadd.f32 %v4328, %v4501
    %v4577 = vadd.f32 %v4329, %v4501
    %v4578 = vadd.f32 %v4330, %v4501
    %v4579 = vadd.f32 %v4331, %v4501
    %v4580 = vadd.f32 %v4332, %v4501
    %v4581 = vadd.f32 %v4333, %v4501
    %v4582 = vadd.f32 %v4334, %v4501
    %v4583 = vadd.f32 %v4335, %v4501
    %v4584 = vadd.f32 %v4336, %v4501
    %v4585 = vadd.f32 %v4337, %v4501
    %v4586 = vadd.f32 %v4338, %v4501
    %v4587 = vadd.f32 %v4339, %v4501
    %v4588 = vadd.f32 %v4340, %v4501
    %v4589 = vadd.f32 %v4341, %v4501
    %v4590 = vadd.f32 %v4342, %v4501
    %v4591 = vadd.f32 %v4343, %v4501
    %v4592 = vadd.f32 %v4344, %v4501
    %v4593 = vadd.f32 %v4345, %v4501
    %v4594 = vadd.f32 %v4346, %v4501
    %v4595 = vadd.f32 %v4347, %v4501
    %v4596 = vadd.f32 %v4348, %v4501
    %v4597 = vadd.f32 %v4349, %v4501
    %v4598 = vadd.f32 %v4350, %v4501
    %v4599 = vadd.f32 %v4351, %v4501
    %v4600 = vadd.f32 %v4352, %v4501
    %v4601 = vadd.f32 %v4353, %v4501
    %v4602 = vadd.f32 %v4354, %v4501
    %v4603 = vadd.f32 %v4355, %v4501
    %v4604 = vadd.f32 %v4356, %v4501
    %v4605 = vadd.f32 %v4357, %v4501
    %v4606 = vadd.f32 %v4358, %v4501
    %v4607 = vadd.f32 %v4359, %v4501
    %v4608 = vadd.f32 %v4360, %v4501
    %v4609 = vadd.f32 %v4361, %v4501
    %v4610 = vadd.f32 %v4362, %v4501
    %v4611 = vadd.f32 %v4363, %v4501
    %v4612 = vadd.f32 %v4364, %v4501
    %v4613 = vadd.f32 %v4365, %v4501
    %v4614 = vadd.f32 %v4366, %v4501
    %v4615 = vadd.f32 %v4367, %v4501
    %v4616 = vadd.f32 %v4368, %v4501
    %v4617 = vadd.f32 %v4369, %v4501
    %v4618 = vadd.f32 %v4370, %v4501
    %v4619 = vadd.f32 %v4371, %v4501
    %v4620 = vadd.f32 %v4372, %v4501
    %v4621 = vadd.f32 %v4373, %v4501
    %v4622 = vadd.f32 %v4374, %v4501
    %v4623 = vadd.f32 %v4375, %v4501
    %v4624 = vadd.f32 %v4376, %v4501
    %v4625 = vadd.f32 %v4377, %v4501
    %v4626 = vadd.f32 %v4378, %v4501
    %v4627 = vadd.f32 %v4379, %v4501
    %v4628 = vadd.f32 %v4380, %v4501
    %v4629 = vadd.f32 %v4381, %v4501
    %v4630 = vadd.f32 %v4382, %v4501
    %v4631 = vadd.f32 %v4383, %v4501
    %v4632 = vadd.f32 %v4384, %v4501
    %v4633 = vadd.f32 %v4385, %v4501
    %v4634 = vadd.f32 %v4386, %v4501
    %v4635 = vadd.f32 %v4387, %v4501
    %v4636 = vadd.f32 %v4388, %v4501
    %v4637 = vadd.f32 %v4389, %v4501
    %v4638 = vadd.f32 %v4390, %v4501
    %v4639 = vadd.f32 %v4391, %v4501
    %v4640 = vadd.f32 %v4392, %v4501
    %v4641 = vadd.f32 %v4393, %v4501
    %v4642 = vadd.f32 %v4394, %v4501
    %v4643 = vadd.f32 %v4395, %v4501
    %v4644 = vadd.f32 %v4396, %v4501
    %v4645 = vadd.f32 %v4397, %v4501
    %v4646 = vadd.f32 %v4398, %v4501
    %v4647 = vadd.f32 %v4399, %v4501
    %v4648 = vadd.f32 %v4400, %v4501
    %v4649 = vadd.f32 %v4401, %v4501
    %v4650 = vadd.f32 %v4402, %v4501
    %v4651 = vadd.f32 %v4403, %v4501
    %v4652 = vadd.f32 %v4404, %v4501
    %v4653 = vadd.f32 %v4405, %v4501
    %v4654 = vadd.f32 %v4406, %v4501
    %v4655 = vadd.f32 %v4407, %v4501
    %v4656 = vadd.f32 %v4408, %v4501
    %v4657 = vadd.f32 %v4409, %v4501
    %v4658 = vadd.f32 %v4410, %v4501
    %v4659 = vadd.f32 %v4411, %v4501
    %v4660 = vadd.f32 %v4412, %v4501
    %v4661 = vadd.f32 %v4413, %v4501
    %v4662 = vadd.f32 %v4414, %v4501
    %v4663 = vadd.f32 %v4415, %v4501
    %v4664 = vadd.f32 %v4416, %v4501
    %v4665 = vadd.f32 %v4417, %v4501
    %v4666 = vadd.f32 %v4418, %v4501
    %v4667 = vadd.f32 %v4419, %v4501
    %v4668 = vadd.f32 %v4420, %v4501
    %v4669 = vadd.f32 %v4421, %v4501
    %v4670 = vadd.f32 %v4422, %v4501
    %v4671 = vadd.f32 %v4423, %v4501
    %v4672 = vadd.f32 %v4424, %v4501
    %v4673 = vadd.f32 %v4425, %v4501
    %v4674 = vadd.f32 %v4426, %v4501
    %v4675 = vadd.f32 %v4427, %v4501
    %v4676 = vadd.f32 %v4428, %v4501
    %v4677 = vadd.f32 %v4429, %v4501
    %v4678 = vadd.f32 %v4430, %v4501
    %v4679 = vadd.f32 %v4431, %v4501
    %v4680 = vadd.f32 %v4432, %v4501
    %v4681 = vadd.f32 %v4433, %v4501
    %v4682 = vadd.f32 %v4434, %v4501
    %v4683 = vadd.f32 %v4435, %v4501
    %v4684 = vadd.f32 %v4436, %v4501
    %v4685 = vadd.f32 %v4437, %v4501
    %v4686 = vadd.f32 %v4438, %v4501
    %v4687 = vadd.f32 %v4439, %v4501
    %v4688 = vadd.f32 %v4440, %v4501
    %v4689 = vadd.f32 %v4441, %v4501
    %v4690 = vadd.f32 %v4442, %v4501
    %v4691 = vadd.f32 %v4443, %v4501
    %v4692 = vadd.f32 %v4444, %v4501
    %v4693 = vadd.f32 %v4445, %v4501
    %v4694 = vadd.f32 %v4446, %v4501
    %v4695 = vadd.f32 %v4447, %v4501
    %v4696 = vadd.f32 %v4448, %v4501
    %v4697 = vadd.f32 %v4449, %v4501
    %v4698 = vadd.f32 %v4450, %v4501
    %v4699 = vadd.f32 %v4451, %v4501
    %v4700 = vadd.f32 %v4452, %v4501
    %v4701 = vadd.f32 %v4453, %v4501
    %v4702 = vadd.f32 %v4454, %v4501
    %v4703 = vadd.f32 %v4455, %v4501
    %v4704 = vadd.f32 %v4456, %v4501
    %v4705 = vadd.f32 %v4457, %v4501
    %v4706 = vadd.f32 %v4458, %v4501
    %v4707 = vadd.f32 %v4459, %v4501
    %v4708 = vadd.f32 %v4460, %v4501
    %v4709 = vadd.f32 %v4461, %v4501
    %v4710 = vadd.f32 %v4462, %v4501
    %v4711 = vadd.f32 %v4463, %v4501
    %v4712 = vadd.f32 %v4464, %v4501
    %v4713 = vadd.f32 %v4465, %v4501
    %v4714 = vadd.f32 %v4466, %v4501
    %v4715 = vadd.f32 %v4467, %v4501
    %v4716 = vadd.f32 %v4468, %v4501
    %v4717 = vadd.f32 %v4469, %v4501
    %v4718 = vadd.f32 %v4470, %v4501
    %v4719 = vadd.f32 %v4471, %v4501
    %v4720 = vadd.f32 %v4472, %v4501
    %v4721 = vadd.f32 %v4473, %v4501
    %v4722 = vadd.f32 %v4474, %v4501
    %v4723 = vadd.f32 %v4475, %v4501
    %v4724 = vadd.f32 %v4476, %v4501
    %v4725 = vadd.f32 %v4477, %v4501
    %v4726 = vadd.f32 %v4478, %v4501
    %v4727 = vadd.f32 %v4479, %v4501
    %v4728 = vadd.f32 %v4480, %v4501
    %v4729 = vadd.f32 %v4481, %v4501
    %v4730 = vadd.f32 %v4482, %v4501
    %v4731 = vadd.f32 %v4483, %v4501
    %v4732 = vadd.f32 %v4484, %v4501
    %v4733 = vadd.f32 %v4485, %v4501
    %v4734 = vadd.f32 %v4486, %v4501
    %v4735 = vadd.f32 %v4487, %v4501
    %v4736 = vadd.f32 %v4488, %v4501
    %v4737 = vadd.f32 %v4489, %v4501
    %v4738 = vadd.f32 %v4490, %v4501
    %v4739 = vadd.f32 %v4491, %v4501
    %v4740 = vadd.f32 %v4492, %v4501
    %v4741 = vadd.f32 %v4493, %v4501
    %v4742 = vadd.f32 %v4494, %v4501
    %v4743 = vadd.f32 %v4495, %v4501
    %4744 = vst.msk [vmem:[%s5] sm:$0xff] %vm2785, %v4503
    %4745 = vst.msk [vmem:[%s5 + $0x8] sm:$0xff] %vm2785, %v4504
    %4746 = vst.msk [vmem:[%s5 + $0x10] sm:$0xff] %vm2785, %v4505
    %4747 = vst.msk [vmem:[%s5 + $0x18] sm:$0xff] %vm2785, %v4506
    %4748 = vst.msk [vmem:[%s5 + $0x20] sm:$0xff] %vm2785, %v4507
    %4749 = vst.msk [vmem:[%s5 + $0x28] sm:$0xff] %vm2785, %v4508
    %4750 = vst.msk [vmem:[%s5 + $0x30] sm:$0xff] %vm2785, %v4509
    %4751 = vst.msk [vmem:[%s5 + $0x38] sm:$0xff] %vm2785, %v4510
    %4752 = vst.msk [vmem:[%s5 + $0x40] sm:$0xff] %vm2785, %v4511
    %4753 = vst.msk [vmem:[%s5 + $0x48] sm:$0xff] %vm2785, %v4512
    %4754 = vst.msk [vmem:[%s5 + $0x50] sm:$0xff] %vm2785, %v4513
    %4755 = vst.msk [vmem:[%s5 + $0x58] sm:$0xff] %vm2785, %v4514
    %4756 = vst.msk [vmem:[%s5 + $0x60] sm:$0xff] %vm2785, %v4515
    %4757 = vst.msk [vmem:[%s5 + $0x68] sm:$0xff] %vm2785, %v4516
    %4758 = vst.msk [vmem:[%s5 + $0x70] sm:$0xff] %vm2785, %v4517
    %4759 = vst.msk [vmem:[%s5 + $0x78] sm:$0xff] %vm2785, %v4518
    %4760 = vst.msk [vmem:[%s5 + $0x80] sm:$0xff] %vm2785, %v4519
    %4761 = vst.msk [vmem:[%s5 + $0x88] sm:$0xff] %vm2785, %v4520
    %4762 = vst.msk [vmem:[%s5 + $0x90] sm:$0xff] %vm2785, %v4521
    %4763 = vst.msk [vmem:[%s5 + $0x98] sm:$0xff] %vm2785, %v4522
    %4764 = vst.msk [vmem:[%s5 + $0xa0] sm:$0xff] %vm2785, %v4523
    %4765 = vst.msk [vmem:[%s5 + $0xa8] sm:$0xff] %vm2785, %v4524
    %4766 = vst.msk [vmem:[%s5 + $0xb0] sm:$0xff] %vm2785, %v4525
    %4767 = vst.msk [vmem:[%s5 + $0xb8] sm:$0xff] %vm2785, %v4526
    %4768 = vst.msk [vmem:[%s5 + $0xc0] sm:$0xff] %vm2785, %v4527
    %4769 = vst.msk [vmem:[%s5 + $0xc8] sm:$0xff] %vm2785, %v4528
    %4770 = vst.msk [vmem:[%s5 + $0xd0] sm:$0xff] %vm2785, %v4529
    %4771 = vst.msk [vmem:[%s5 + $0xd8] sm:$0xff] %vm2785, %v4530
    %4772 = vst.msk [vmem:[%s5 + $0xe0] sm:$0xff] %vm2785, %v4531
    %4773 = vst.msk [vmem:[%s5 + $0xe8] sm:$0xff] %vm2785, %v4532
    %4774 = vst.msk [vmem:[%s5 + $0xf0] sm:$0xff] %vm2785, %v4533
    %4775 = vst.msk [vmem:[%s5 + $0xf8] sm:$0xff] %vm2785, %v4534
    %4776 = vst.msk [vmem:[%s5 + $0x100] sm:$0xff] %vm2785, %v4535
    %4777 = vst.msk [vmem:[%s5 + $0x108] sm:$0xff] %vm2785, %v4536
    %4778 = vst.msk [vmem:[%s5 + $0x110] sm:$0xff] %vm2785, %v4537
    %4779 = vst.msk [vmem:[%s5 + $0x118] sm:$0xff] %vm2785, %v4538
    %4780 = vst.msk [vmem:[%s5 + $0x120] sm:$0xff] %vm2785, %v4539
    %4781 = vst.msk [vmem:[%s5 + $0x128] sm:$0xff] %vm2785, %v4540
    %4782 = vst.msk [vmem:[%s5 + $0x130] sm:$0xff] %vm2785, %v4541
    %4783 = vst.msk [vmem:[%s5 + $0x138] sm:$0xff] %vm2785, %v4542
    %4784 = vst.msk [vmem:[%s5 + $0x140] sm:$0xff] %vm2785, %v4543
    %4785 = vst.msk [vmem:[%s5 + $0x148] sm:$0xff] %vm2785, %v4544
    %4786 = vst.msk [vmem:[%s5 + $0x150] sm:$0xff] %vm2785, %v4545
    %4787 = vst.msk [vmem:[%s5 + $0x158] sm:$0xff] %vm2785, %v4546
    %4788 = vst.msk [vmem:[%s5 + $0x160] sm:$0xff] %vm2785, %v4547
    %4789 = vst.msk [vmem:[%s5 + $0x168] sm:$0xff] %vm2785, %v4548
    %4790 = vst.msk [vmem:[%s5 + $0x170] sm:$0xff] %vm2785, %v4549
    %4791 = vst.msk [vmem:[%s5 + $0x178] sm:$0xff] %vm2785, %v4550
    %4792 = vst.msk [vmem:[%s5 + $0x180] sm:$0xff] %vm2785, %v4551
    %4793 = vst.msk [vmem:[%s5 + $0x188] sm:$0xff] %vm2785, %v4552
    %4794 = vst.msk [vmem:[%s5 + $0x190] sm:$0xff] %vm2785, %v4553
    %4795 = vst.msk [vmem:[%s5 + $0x198] sm:$0xff] %vm2785, %v4554
    %4796 = vst.msk [vmem:[%s5 + $0x1a0] sm:$0xff] %vm2785, %v4555
    %4797 = vst.msk [vmem:[%s5 + $0x1a8] sm:$0xff] %vm2785, %v4556
    %4798 = vst.msk [vmem:[%s5 + $0x1b0] sm:$0xff] %vm2785, %v4557
    %4799 = vst.msk [vmem:[%s5 + $0x1b8] sm:$0xff] %vm2785, %v4558
    %4800 = vst.msk [vmem:[%s5 + $0x1c0] sm:$0xff] %vm2785, %v4559
    %4801 = vst.msk [vmem:[%s5 + $0x1c8] sm:$0xff] %vm2785, %v4560
    %4802 = vst.msk [vmem:[%s5 + $0x1d0] sm:$0xff] %vm2785, %v4561
    %4803 = vst.msk [vmem:[%s5 + $0x1d8] sm:$0xff] %vm2785, %v4562
    %4804 = vst.msk [vmem:[%s5 + $0x1e0] sm:$0xff] %vm2785, %v4563
    %4805 = vst.msk [vmem:[%s5 + $0x1e8] sm:$0xff] %vm2785, %v4564
    %4806 = vst.msk [vmem:[%s5 + $0x1f0] sm:$0xff] %vm2785, %v4565
    %4807 = vst.msk [vmem:[%s5 + $0x1f8] sm:$0xff] %vm2785, %v4566
    %4808 = vst.msk [vmem:[%s5 + $0x200] sm:$0xff] %vm2785, %v4567
    %4809 = vst.msk [vmem:[%s5 + $0x208] sm:$0xff] %vm2785, %v4568
    %4810 = vst.msk [vmem:[%s5 + $0x210] sm:$0xff] %vm2785, %v4569
    %4811 = vst.msk [vmem:[%s5 + $0x218] sm:$0xff] %vm2785, %v4570
    %4812 = vst.msk [vmem:[%s5 + $0x220] sm:$0xff] %vm2785, %v4571
    %4813 = vst.msk [vmem:[%s5 + $0x228] sm:$0xff] %vm2785, %v4572
    %4814 = vst.msk [vmem:[%s5 + $0x230] sm:$0xff] %vm2785, %v4573
    %4815 = vst.msk [vmem:[%s5 + $0x238] sm:$0xff] %vm2785, %v4574
    %4816 = vst.msk [vmem:[%s5 + $0x240] sm:$0xff] %vm2785, %v4575
    %4817 = vst.msk [vmem:[%s5 + $0x248] sm:$0xff] %vm2785, %v4576
    %4818 = vst.msk [vmem:[%s5 + $0x250] sm:$0xff] %vm2785, %v4577
    %4819 = vst.msk [vmem:[%s5 + $0x258] sm:$0xff] %vm2785, %v4578
    %4820 = vst.msk [vmem:[%s5 + $0x260] sm:$0xff] %vm2785, %v4579
    %4821 = vst.msk [vmem:[%s5 + $0x268] sm:$0xff] %vm2785, %v4580
    %4822 = vst.msk [vmem:[%s5 + $0x270] sm:$0xff] %vm2785, %v4581
    %4823 = vst.msk [vmem:[%s5 + $0x278] sm:$0xff] %vm2785, %v4582
    %4824 = vst.msk [vmem:[%s5 + $0x280] sm:$0xff] %vm2785, %v4583
    %4825 = vst.msk [vmem:[%s5 + $0x288] sm:$0xff] %vm2785, %v4584
    %4826 = vst.msk [vmem:[%s5 + $0x290] sm:$0xff] %vm2785, %v4585
    %4827 = vst.msk [vmem:[%s5 + $0x298] sm:$0xff] %vm2785, %v4586
    %4828 = vst.msk [vmem:[%s5 + $0x2a0] sm:$0xff] %vm2785, %v4587
    %4829 = vst.msk [vmem:[%s5 + $0x2a8] sm:$0xff] %vm2785, %v4588
    %4830 = vst.msk [vmem:[%s5 + $0x2b0] sm:$0xff] %vm2785, %v4589
    %4831 = vst.msk [vmem:[%s5 + $0x2b8] sm:$0xff] %vm2785, %v4590
    %4832 = vst.msk [vmem:[%s5 + $0x2c0] sm:$0xff] %vm2785, %v4591
    %4833 = vst.msk [vmem:[%s5 + $0x2c8] sm:$0xff] %vm2785, %v4592
    %4834 = vst.msk [vmem:[%s5 + $0x2d0] sm:$0xff] %vm2785, %v4593
    %4835 = vst.msk [vmem:[%s5 + $0x2d8] sm:$0xff] %vm2785, %v4594
    %4836 = vst.msk [vmem:[%s5 + $0x2e0] sm:$0xff] %vm2785, %v4595
    %4837 = vst.msk [vmem:[%s5 + $0x2e8] sm:$0xff] %vm2785, %v4596
    %4838 = vst.msk [vmem:[%s5 + $0x2f0] sm:$0xff] %vm2785, %v4597
    %4839 = vst.msk [vmem:[%s5 + $0x2f8] sm:$0xff] %vm2785, %v4598
    %4840 = vst.msk [vmem:[%s5 + $0x300] sm:$0xff] %vm2785, %v4599
    %4841 = vst.msk [vmem:[%s5 + $0x308] sm:$0xff] %vm2785, %v4600
    %4842 = vst.msk [vmem:[%s5 + $0x310] sm:$0xff] %vm2785, %v4601
    %4843 = vst.msk [vmem:[%s5 + $0x318] sm:$0xff] %vm2785, %v4602
    %4844 = vst.msk [vmem:[%s5 + $0x320] sm:$0xff] %vm2785, %v4603
    %4845 = vst.msk [vmem:[%s5 + $0x328] sm:$0xff] %vm2785, %v4604
    %4846 = vst.msk [vmem:[%s5 + $0x330] sm:$0xff] %vm2785, %v4605
    %4847 = vst.msk [vmem:[%s5 + $0x338] sm:$0xff] %vm2785, %v4606
    %4848 = vst.msk [vmem:[%s5 + $0x340] sm:$0xff] %vm2785, %v4607
    %4849 = vst.msk [vmem:[%s5 + $0x348] sm:$0xff] %vm2785, %v4608
    %4850 = vst.msk [vmem:[%s5 + $0x350] sm:$0xff] %vm2785, %v4609
    %4851 = vst.msk [vmem:[%s5 + $0x358] sm:$0xff] %vm2785, %v4610
    %4852 = vst.msk [vmem:[%s5 + $0x360] sm:$0xff] %vm2785, %v4611
    %4853 = vst.msk [vmem:[%s5 + $0x368] sm:$0xff] %vm2785, %v4612
    %4854 = vst.msk [vmem:[%s5 + $0x370] sm:$0xff] %vm2785, %v4613
    %4855 = vst.msk [vmem:[%s5 + $0x378] sm:$0xff] %vm2785, %v4614
    %4856 = vst.msk [vmem:[%s5 + $0x380] sm:$0xff] %vm2785, %v4615
    %4857 = vst.msk [vmem:[%s5 + $0x388] sm:$0xff] %vm2785, %v4616
    %4858 = vst.msk [vmem:[%s5 + $0x390] sm:$0xff] %vm2785, %v4617
    %4859 = vst.msk [vmem:[%s5 + $0x398] sm:$0xff] %vm2785, %v4618
    %4860 = vst.msk [vmem:[%s5 + $0x3a0] sm:$0xff] %vm2785, %v4619
    %4861 = vst.msk [vmem:[%s5 + $0x3a8] sm:$0xff] %vm2785, %v4620
    %4862 = vst.msk [vmem:[%s5 + $0x3b0] sm:$0xff] %vm2785, %v4621
    %4863 = vst.msk [vmem:[%s5 + $0x3b8] sm:$0xff] %vm2785, %v4622
    %4864 = vst.msk [vmem:[%s5 + $0x3c0] sm:$0xff] %vm2785, %v4623
    %4865 = vst.msk [vmem:[%s5 + $0x3c8] sm:$0xff] %vm2785, %v4624
    %4866 = vst.msk [vmem:[%s5 + $0x3d0] sm:$0xff] %vm2785, %v4625
    %4867 = vst.msk [vmem:[%s5 + $0x3d8] sm:$0xff] %vm2785, %v4626
    %4868 = vst.msk [vmem:[%s5 + $0x3e0] sm:$0xff] %vm2785, %v4627
    %4869 = vst.msk [vmem:[%s5 + $0x3e8] sm:$0xff] %vm2785, %v4628
    %4870 = vst.msk [vmem:[%s5 + $0x3f0] sm:$0xff] %vm2785, %v4629
    %4871 = vst.msk [vmem:[%s5 + $0x3f8] sm:$0xff] %vm2785, %v4630
    %4872 = vst.msk [vmem:[%s5 + $0x400] sm:$0xff] %vm2785, %v4631
    %4873 = vst.msk [vmem:[%s5 + $0x408] sm:$0xff] %vm2785, %v4632
    %4874 = vst.msk [vmem:[%s5 + $0x410] sm:$0xff] %vm2785, %v4633
    %4875 = vst.msk [vmem:[%s5 + $0x418] sm:$0xff] %vm2785, %v4634
    %4876 = vst.msk [vmem:[%s5 + $0x420] sm:$0xff] %vm2785, %v4635
    %4877 = vst.msk [vmem:[%s5 + $0x428] sm:$0xff] %vm2785, %v4636
    %4878 = vst.msk [vmem:[%s5 + $0x430] sm:$0xff] %vm2785, %v4637
    %4879 = vst.msk [vmem:[%s5 + $0x438] sm:$0xff] %vm2785, %v4638
    %4880 = vst.msk [vmem:[%s5 + $0x440] sm:$0xff] %vm2785, %v4639
    %4881 = vst.msk [vmem:[%s5 + $0x448] sm:$0xff] %vm2785, %v4640
    %4882 = vst.msk [vmem:[%s5 + $0x450] sm:$0xff] %vm2785, %v4641
    %4883 = vst.msk [vmem:[%s5 + $0x458] sm:$0xff] %vm2785, %v4642
    %4884 = vst.msk [vmem:[%s5 + $0x460] sm:$0xff] %vm2785, %v4643
    %4885 = vst.msk [vmem:[%s5 + $0x468] sm:$0xff] %vm2785, %v4644
    %4886 = vst.msk [vmem:[%s5 + $0x470] sm:$0xff] %vm2785, %v4645
    %4887 = vst.msk [vmem:[%s5 + $0x478] sm:$0xff] %vm2785, %v4646
    %4888 = vst.msk [vmem:[%s5 + $0x480] sm:$0xff] %vm2785, %v4647
    %4889 = vst.msk [vmem:[%s5 + $0x488] sm:$0xff] %vm2785, %v4648
    %4890 = vst.msk [vmem:[%s5 + $0x490] sm:$0xff] %vm2785, %v4649
    %4891 = vst.msk [vmem:[%s5 + $0x498] sm:$0xff] %vm2785, %v4650
    %4892 = vst.msk [vmem:[%s5 + $0x4a0] sm:$0xff] %vm2785, %v4651
    %4893 = vst.msk [vmem:[%s5 + $0x4a8] sm:$0xff] %vm2785, %v4652
    %4894 = vst.msk [vmem:[%s5 + $0x4b0] sm:$0xff] %vm2785, %v4653
    %4895 = vst.msk [vmem:[%s5 + $0x4b8] sm:$0xff] %vm2785, %v4654
    %4896 = vst.msk [vmem:[%s5 + $0x4c0] sm:$0xff] %vm2785, %v4655
    %4897 = vst.msk [vmem:[%s5 + $0x4c8] sm:$0xff] %vm2785, %v4656
    %4898 = vst.msk [vmem:[%s5 + $0x4d0] sm:$0xff] %vm2785, %v4657
    %4899 = vst.msk [vmem:[%s5 + $0x4d8] sm:$0xff] %vm2785, %v4658
    %4900 = vst.msk [vmem:[%s5 + $0x4e0] sm:$0xff] %vm2785, %v4659
    %4901 = vst.msk [vmem:[%s5 + $0x4e8] sm:$0xff] %vm2785, %v4660
    %4902 = vst.msk [vmem:[%s5 + $0x4f0] sm:$0xff] %vm2785, %v4661
    %4903 = vst.msk [vmem:[%s5 + $0x4f8] sm:$0xff] %vm2785, %v4662
    %4904 = vst.msk [vmem:[%s5 + $0x500] sm:$0xff] %vm2785, %v4663
    %4905 = vst.msk [vmem:[%s5 + $0x508] sm:$0xff] %vm2785, %v4664
    %4906 = vst.msk [vmem:[%s5 + $0x510] sm:$0xff] %vm2785, %v4665
    %4907 = vst.msk [vmem:[%s5 + $0x518] sm:$0xff] %vm2785, %v4666
    %4908 = vst.msk [vmem:[%s5 + $0x520] sm:$0xff] %vm2785, %v4667
    %4909 = vst.msk [vmem:[%s5 + $0x528] sm:$0xff] %vm2785, %v4668
    %4910 = vst.msk [vmem:[%s5 + $0x530] sm:$0xff] %vm2785, %v4669
    %4911 = vst.msk [vmem:[%s5 + $0x538] sm:$0xff] %vm2785, %v4670
    %4912 = vst.msk [vmem:[%s5 + $0x540] sm:$0xff] %vm2785, %v4671
    %4913 = vst.msk [vmem:[%s5 + $0x548] sm:$0xff] %vm2785, %v4672
    %4914 = vst.msk [vmem:[%s5 + $0x550] sm:$0xff] %vm2785, %v4673
    %4915 = vst.msk [vmem:[%s5 + $0x558] sm:$0xff] %vm2785, %v4674
    %4916 = vst.msk [vmem:[%s5 + $0x560] sm:$0xff] %vm2785, %v4675
    %4917 = vst.msk [vmem:[%s5 + $0x568] sm:$0xff] %vm2785, %v4676
    %4918 = vst.msk [vmem:[%s5 + $0x570] sm:$0xff] %vm2785, %v4677
    %4919 = vst.msk [vmem:[%s5 + $0x578] sm:$0xff] %vm2785, %v4678
    %4920 = vst.msk [vmem:[%s5 + $0x580] sm:$0xff] %vm2785, %v4679
    %4921 = vst.msk [vmem:[%s5 + $0x588] sm:$0xff] %vm2785, %v4680
    %4922 = vst.msk [vmem:[%s5 + $0x590] sm:$0xff] %vm2785, %v4681
    %4923 = vst.msk [vmem:[%s5 + $0x598] sm:$0xff] %vm2785, %v4682
    %4924 = vst.msk [vmem:[%s5 + $0x5a0] sm:$0xff] %vm2785, %v4683
    %4925 = vst.msk [vmem:[%s5 + $0x5a8] sm:$0xff] %vm2785, %v4684
    %4926 = vst.msk [vmem:[%s5 + $0x5b0] sm:$0xff] %vm2785, %v4685
    %4927 = vst.msk [vmem:[%s5 + $0x5b8] sm:$0xff] %vm2785, %v4686
    %4928 = vst.msk [vmem:[%s5 + $0x5c0] sm:$0xff] %vm2785, %v4687
    %4929 = vst.msk [vmem:[%s5 + $0x5c8] sm:$0xff] %vm2785, %v4688
    %4930 = vst.msk [vmem:[%s5 + $0x5d0] sm:$0xff] %vm2785, %v4689
    %4931 = vst.msk [vmem:[%s5 + $0x5d8] sm:$0xff] %vm2785, %v4690
    %4932 = vst.msk [vmem:[%s5 + $0x5e0] sm:$0xff] %vm2785, %v4691
    %4933 = vst.msk [vmem:[%s5 + $0x5e8] sm:$0xff] %vm2785, %v4692
    %4934 = vst.msk [vmem:[%s5 + $0x5f0] sm:$0xff] %vm2785, %v4693
    %4935 = vst.msk [vmem:[%s5 + $0x5f8] sm:$0xff] %vm2785, %v4694
    %4936 = vst.msk [vmem:[%s5 + $0x600] sm:$0xff] %vm2785, %v4695
    %4937 = vst.msk [vmem:[%s5 + $0x608] sm:$0xff] %vm2785, %v4696
    %4938 = vst.msk [vmem:[%s5 + $0x610] sm:$0xff] %vm2785, %v4697
    %4939 = vst.msk [vmem:[%s5 + $0x618] sm:$0xff] %vm2785, %v4698
    %4940 = vst.msk [vmem:[%s5 + $0x620] sm:$0xff] %vm2785, %v4699
    %4941 = vst.msk [vmem:[%s5 + $0x628] sm:$0xff] %vm2785, %v4700
    %4942 = vst.msk [vmem:[%s5 + $0x630] sm:$0xff] %vm2785, %v4701
    %4943 = vst.msk [vmem:[%s5 + $0x638] sm:$0xff] %vm2785, %v4702
    %4944 = vst.msk [vmem:[%s5 + $0x640] sm:$0xff] %vm2785, %v4703
    %4945 = vst.msk [vmem:[%s5 + $0x648] sm:$0xff] %vm2785, %v4704
    %4946 = vst.msk [vmem:[%s5 + $0x650] sm:$0xff] %vm2785, %v4705
    %4947 = vst.msk [vmem:[%s5 + $0x658] sm:$0xff] %vm2785, %v4706
    %4948 = vst.msk [vmem:[%s5 + $0x660] sm:$0xff] %vm2785, %v4707
    %4949 = vst.msk [vmem:[%s5 + $0x668] sm:$0xff] %vm2785, %v4708
    %4950 = vst.msk [vmem:[%s5 + $0x670] sm:$0xff] %vm2785, %v4709
    %4951 = vst.msk [vmem:[%s5 + $0x678] sm:$0xff] %vm2785, %v4710
    %4952 = vst.msk [vmem:[%s5 + $0x680] sm:$0xff] %vm2785, %v4711
    %4953 = vst.msk [vmem:[%s5 + $0x688] sm:$0xff] %vm2785, %v4712
    %4954 = vst.msk [vmem:[%s5 + $0x690] sm:$0xff] %vm2785, %v4713
    %4955 = vst.msk [vmem:[%s5 + $0x698] sm:$0xff] %vm2785, %v4714
    %4956 = vst.msk [vmem:[%s5 + $0x6a0] sm:$0xff] %vm2785, %v4715
    %4957 = vst.msk [vmem:[%s5 + $0x6a8] sm:$0xff] %vm2785, %v4716
    %4958 = vst.msk [vmem:[%s5 + $0x6b0] sm:$0xff] %vm2785, %v4717
    %4959 = vst.msk [vmem:[%s5 + $0x6b8] sm:$0xff] %vm2785, %v4718
    %4960 = vst.msk [vmem:[%s5 + $0x6c0] sm:$0xff] %vm2785, %v4719
    %4961 = vst.msk [vmem:[%s5 + $0x6c8] sm:$0xff] %vm2785, %v4720
    %4962 = vst.msk [vmem:[%s5 + $0x6d0] sm:$0xff] %vm2785, %v4721
    %4963 = vst.msk [vmem:[%s5 + $0x6d8] sm:$0xff] %vm2785, %v4722
    %4964 = vst.msk [vmem:[%s5 + $0x6e0] sm:$0xff] %vm2785, %v4723
    %4965 = vst.msk [vmem:[%s5 + $0x6e8] sm:$0xff] %vm2785, %v4724
    %4966 = vst.msk [vmem:[%s5 + $0x6f0] sm:$0xff] %vm2785, %v4725
    %4967 = vst.msk [vmem:[%s5 + $0x6f8] sm:$0xff] %vm2785, %v4726
    %4968 = vst.msk [vmem:[%s5 + $0x700] sm:$0xff] %vm2785, %v4727
    %4969 = vst.msk [vmem:[%s5 + $0x708] sm:$0xff] %vm2785, %v4728
    %4970 = vst.msk [vmem:[%s5 + $0x710] sm:$0xff] %vm2785, %v4729
    %4971 = vst.msk [vmem:[%s5 + $0x718] sm:$0xff] %vm2785, %v4730
    %4972 = vst.msk [vmem:[%s5 + $0x720] sm:$0xff] %vm2785, %v4731
    %4973 = vst.msk [vmem:[%s5 + $0x728] sm:$0xff] %vm2785, %v4732
    %4974 = vst.msk [vmem:[%s5 + $0x730] sm:$0xff] %vm2785, %v4733
    %4975 = vst.msk [vmem:[%s5 + $0x738] sm:$0xff] %vm2785, %v4734
    %4976 = vst.msk [vmem:[%s5 + $0x740] sm:$0xff] %vm2785, %v4735
    %4977 = vst.msk [vmem:[%s5 + $0x748] sm:$0xff] %vm2785, %v4736
    %4978 = vst.msk [vmem:[%s5 + $0x750] sm:$0xff] %vm2785, %v4737
    %4979 = vst.msk [vmem:[%s5 + $0x758] sm:$0xff] %vm2785, %v4738
    %4980 = vst.msk [vmem:[%s5 + $0x760] sm:$0xff] %vm2785, %v4739
    %4981 = vst.msk [vmem:[%s5 + $0x768] sm:$0xff] %vm2785, %v4740
    %4982 = vst.msk [vmem:[%s5 + $0x770] sm:$0xff] %vm2785, %v4741
    %4983 = vst.msk [vmem:[%s5 + $0x778] sm:$0xff] %vm2785, %v4742
    %4984 = vst.msk [vmem:[%s5 + $0x780] sm:$0x3] %vm3265, %v4743
    // Predicated region
    $region34: #{encoder_forward.5} parent=1 // pred_check
      _
    $region35: #{encoder_forward.5} parent=1 // pred_check_branch
      %4986 = sbr.rel (0) target = $region37
    $region36: #{encoder_forward.5} parent=1 // pred_region
      _
    $region37: #{encoder_forward.5} parent=1 // pred_fallthru
      _
    // Predicated region
    $region38: #{encoder_forward.5} parent=1 // pred_check
      _
    $region39: #{encoder_forward.5} parent=1 // pred_check_branch
      %4988 = sbr.rel (0) target = $region41
    $region40: #{encoder_forward.5} parent=1 // pred_region
      _
    $region41: #{encoder_forward.5} parent=1 // pred_fallthru
      _
    %4989 = vsyncpa [#allocation3], 1
    %4990 = vsyncpa [#allocation5], 1

// kernel: encoder_forward.6
$region0: #{encoder_forward.6}
  #allocation0 [shape = 'u32[]', space=smem, size = 0x4, offset = 0x4, fixed_abs, tag = 'smem constant byte address 0x4 - core index']
  #allocation1 [shape = 'u32[144,128]{1,0:T(1,128)}', space=vmem, size = 0x12000, scoped, tag = 'internal scratch']
  %s0 = inlined_call_operand.vmem [shape: f32[480,384], index: 0, kind: input, shape index: {}]
  %s1 = inlined_call_operand.vmem [shape: f32[384,32], index: 1, kind: input, shape index: {}]
  %s2 = inlined_call_operand.vmem [shape: f32[1,32], index: 2, kind: input, shape index: {}]
  %s3 = inlined_call_operand.vmem [shape: f32[1,32], index: 3, kind: input, shape index: {}]
  %s4 = inlined_call_operand.vmem [shape: f32[1,32], index: 4, kind: input, shape index: {}]
  %s5 = inlined_call_operand.vmem [shape: f32[480,32], index: 5, kind: output, shape index: {}]
  %s6 = sld [smem:[#allocation0]]
  $region30: #{encoder_forward.6} parent=0
    _
  %s8 = ssub.s32 1, %s6
  %s9 = scalar_select 0, %s8, %s6
  // Predicated region
  $region2: #{encoder_forward.6} parent=0 // pred_check
    _
  $region3: #{encoder_forward.6} parent=0 // pred_check_branch
    %11 = sbr.rel (0) target = $region5
  $region4: #{encoder_forward.6} parent=0 // pred_region
    _
  $region5: #{encoder_forward.6} parent=0 // pred_fallthru
    _
  // Predicated region
  $region6: #{encoder_forward.6} parent=0 // pred_check
    _
  $region7: #{encoder_forward.6} parent=0 // pred_check_branch
    %13 = sbr.rel (0) target = $region9
  $region8: #{encoder_forward.6} parent=0 // pred_region
    _
  $region9: #{encoder_forward.6} parent=0 // pred_fallthru
    _
  // Predicated region
  $region10: #{encoder_forward.6} parent=0 // pred_check
    _
  $region11: #{encoder_forward.6} parent=0 // pred_check_branch
    %15 = sbr.rel (0) target = $region13
  $region12: #{encoder_forward.6} parent=0 // pred_region
    _
  $region13: #{encoder_forward.6} parent=0 // pred_fallthru
    _
  // Predicated region
  $region14: #{encoder_forward.6} parent=0 // pred_check
    _
  $region15: #{encoder_forward.6} parent=0 // pred_check_branch
    %17 = sbr.rel (0) target = $region17
  $region16: #{encoder_forward.6} parent=0 // pred_region
    _
  $region17: #{encoder_forward.6} parent=0 // pred_fallthru
    _
  // Predicated region
  $region18: #{encoder_forward.6} parent=0 // pred_check
    _
  $region19: #{encoder_forward.6} parent=0 // pred_check_branch
    %19 = sbr.rel (0) target = $region21
  $region20: #{encoder_forward.6} parent=0 // pred_region
    _
  $region21: #{encoder_forward.6} parent=0 // pred_fallthru
    _
  %v20 = vld [vmem:[%s0] sm:$0xff]
  %v21 = vld [vmem:[%s0 + $0x8] sm:$0xff]
  %v22 = vld [vmem:[%s0 + $0x10] sm:$0xff]
  %v23 = vld [vmem:[%s0 + $0x18] sm:$0xff]
  %v24 = vld [vmem:[%s0 + $0x20] sm:$0xff]
  %v25 = vld [vmem:[%s0 + $0x28] sm:$0xff]
  %v26 = vld [vmem:[%s0 + $0x30] sm:$0xff]
  %v27 = vld [vmem:[%s0 + $0x38] sm:$0xff]
  %v28 = vld [vmem:[%s0 + $0x40] sm:$0xff]
  %v29 = vld [vmem:[%s0 + $0x48] sm:$0xff]
  %v30 = vld [vmem:[%s0 + $0x50] sm:$0xff]
  %v31 = vld [vmem:[%s0 + $0x58] sm:$0xff]
  %v32 = vld [vmem:[%s0 + $0x60] sm:$0xff]
  %v33 = vld [vmem:[%s0 + $0x68] sm:$0xff]
  %v34 = vld [vmem:[%s0 + $0x70] sm:$0xff]
  %v35 = vld [vmem:[%s0 + $0x78] sm:$0xff]
  %v36 = vld [vmem:[%s0 + $0x80] sm:$0xff]
  %v37 = vld [vmem:[%s0 + $0x88] sm:$0xff]
  %v38 = vld [vmem:[%s0 + $0x90] sm:$0xff]
  %v39 = vld [vmem:[%s0 + $0x98] sm:$0xff]
  %v40 = vld [vmem:[%s0 + $0xa0] sm:$0xff]
  %v41 = vld [vmem:[%s0 + $0xa8] sm:$0xff]
  %v42 = vld [vmem:[%s0 + $0xb0] sm:$0xff]
  %v43 = vld [vmem:[%s0 + $0xb8] sm:$0xff]
  %v44 = vld [vmem:[%s0 + $0xc0] sm:$0xff]
  %v45 = vld [vmem:[%s0 + $0xc8] sm:$0xff]
  %v46 = vld [vmem:[%s0 + $0xd0] sm:$0xff]
  %v47 = vld [vmem:[%s0 + $0xd8] sm:$0xff]
  %v48 = vld [vmem:[%s0 + $0xe0] sm:$0xff]
  %v49 = vld [vmem:[%s0 + $0xe8] sm:$0xff]
  %v50 = vld [vmem:[%s0 + $0xf0] sm:$0xff]
  %v51 = vld [vmem:[%s0 + $0xf8] sm:$0xff]
  %v52 = vld [vmem:[%s0 + $0x100] sm:$0xff]
  %v53 = vld [vmem:[%s0 + $0x108] sm:$0xff]
  %v54 = vld [vmem:[%s0 + $0x110] sm:$0xff]
  %v55 = vld [vmem:[%s0 + $0x118] sm:$0xff]
  %v56 = vld [vmem:[%s0 + $0x120] sm:$0xff]
  %v57 = vld [vmem:[%s0 + $0x128] sm:$0xff]
  %v58 = vld [vmem:[%s0 + $0x130] sm:$0xff]
  %v59 = vld [vmem:[%s0 + $0x138] sm:$0xff]
  %v60 = vld [vmem:[%s0 + $0x140] sm:$0xff]
  %v61 = vld [vmem:[%s0 + $0x148] sm:$0xff]
  %v62 = vld [vmem:[%s0 + $0x150] sm:$0xff]
  %v63 = vld [vmem:[%s0 + $0x158] sm:$0xff]
  %v64 = vld [vmem:[%s0 + $0x160] sm:$0xff]
  %v65 = vld [vmem:[%s0 + $0x168] sm:$0xff]
  %v66 = vld [vmem:[%s0 + $0x170] sm:$0xff]
  %v67 = vld [vmem:[%s0 + $0x178] sm:$0xff]
  %v68 = vld [vmem:[%s0 + $0x180] sm:$0xff]
  %v69 = vld [vmem:[%s0 + $0x188] sm:$0xff]
  %v70 = vld [vmem:[%s0 + $0x190] sm:$0xff]
  %v71 = vld [vmem:[%s0 + $0x198] sm:$0xff]
  %v72 = vld [vmem:[%s0 + $0x1a0] sm:$0xff]
  %v73 = vld [vmem:[%s0 + $0x1a8] sm:$0xff]
  %v74 = vld [vmem:[%s0 + $0x1b0] sm:$0xff]
  %v75 = vld [vmem:[%s0 + $0x1b8] sm:$0xff]
  %v76 = vld [vmem:[%s0 + $0x1c0] sm:$0xff]
  %v77 = vld [vmem:[%s0 + $0x1c8] sm:$0xff]
  %v78 = vld [vmem:[%s0 + $0x1d0] sm:$0xff]
  %v79 = vld [vmem:[%s0 + $0x1d8] sm:$0xff]
  %v80 = vld [vmem:[%s0 + $0x1e0] sm:$0xff]
  %v81 = vld [vmem:[%s0 + $0x1e8] sm:$0xff]
  %v82 = vld [vmem:[%s0 + $0x1f0] sm:$0xff]
  %v83 = vld [vmem:[%s0 + $0x1f8] sm:$0xff]
  %v84 = vld [vmem:[%s0 + $0x200] sm:$0xff]
  %v85 = vld [vmem:[%s0 + $0x208] sm:$0xff]
  %v86 = vld [vmem:[%s0 + $0x210] sm:$0xff]
  %v87 = vld [vmem:[%s0 + $0x218] sm:$0xff]
  %v88 = vld [vmem:[%s0 + $0x220] sm:$0xff]
  %v89 = vld [vmem:[%s0 + $0x228] sm:$0xff]
  %v90 = vld [vmem:[%s0 + $0x230] sm:$0xff]
  %v91 = vld [vmem:[%s0 + $0x238] sm:$0xff]
  %v92 = vld [vmem:[%s0 + $0x240] sm:$0xff]
  %v93 = vld [vmem:[%s0 + $0x248] sm:$0xff]
  %v94 = vld [vmem:[%s0 + $0x250] sm:$0xff]
  %v95 = vld [vmem:[%s0 + $0x258] sm:$0xff]
  %v96 = vld [vmem:[%s0 + $0x260] sm:$0xff]
  %v97 = vld [vmem:[%s0 + $0x268] sm:$0xff]
  %v98 = vld [vmem:[%s0 + $0x270] sm:$0xff]
  %v99 = vld [vmem:[%s0 + $0x278] sm:$0xff]
  %v100 = vld [vmem:[%s0 + $0x280] sm:$0xff]
  %v101 = vld [vmem:[%s0 + $0x288] sm:$0xff]
  %v102 = vld [vmem:[%s0 + $0x290] sm:$0xff]
  %v103 = vld [vmem:[%s0 + $0x298] sm:$0xff]
  %v104 = vld [vmem:[%s0 + $0x2a0] sm:$0xff]
  %v105 = vld [vmem:[%s0 + $0x2a8] sm:$0xff]
  %v106 = vld [vmem:[%s0 + $0x2b0] sm:$0xff]
  %v107 = vld [vmem:[%s0 + $0x2b8] sm:$0xff]
  %v108 = vld [vmem:[%s0 + $0x2c0] sm:$0xff]
  %v109 = vld [vmem:[%s0 + $0x2c8] sm:$0xff]
  %v110 = vld [vmem:[%s0 + $0x2d0] sm:$0xff]
  %v111 = vld [vmem:[%s0 + $0x2d8] sm:$0xff]
  %v112 = vld [vmem:[%s0 + $0x2e0] sm:$0xff]
  %v113 = vld [vmem:[%s0 + $0x2e8] sm:$0xff]
  %v114 = vld [vmem:[%s0 + $0x2f0] sm:$0xff]
  %v115 = vld [vmem:[%s0 + $0x2f8] sm:$0xff]
  %v116 = vld [vmem:[%s0 + $0x300] sm:$0xff]
  %v117 = vld [vmem:[%s0 + $0x308] sm:$0xff]
  %v118 = vld [vmem:[%s0 + $0x310] sm:$0xff]
  %v119 = vld [vmem:[%s0 + $0x318] sm:$0xff]
  %v120 = vld [vmem:[%s0 + $0x320] sm:$0xff]
  %v121 = vld [vmem:[%s0 + $0x328] sm:$0xff]
  %v122 = vld [vmem:[%s0 + $0x330] sm:$0xff]
  %v123 = vld [vmem:[%s0 + $0x338] sm:$0xff]
  %v124 = vld [vmem:[%s0 + $0x340] sm:$0xff]
  %v125 = vld [vmem:[%s0 + $0x348] sm:$0xff]
  %v126 = vld [vmem:[%s0 + $0x350] sm:$0xff]
  %v127 = vld [vmem:[%s0 + $0x358] sm:$0xff]
  %v128 = vld [vmem:[%s0 + $0x360] sm:$0xff]
  %v129 = vld [vmem:[%s0 + $0x368] sm:$0xff]
  %v130 = vld [vmem:[%s0 + $0x370] sm:$0xff]
  %v131 = vld [vmem:[%s0 + $0x378] sm:$0xff]
  %v132 = vld [vmem:[%s0 + $0x380] sm:$0xff]
  %v133 = vld [vmem:[%s0 + $0x388] sm:$0xff]
  %v134 = vld [vmem:[%s0 + $0x390] sm:$0xff]
  %v135 = vld [vmem:[%s0 + $0x398] sm:$0xff]
  %v136 = vld [vmem:[%s0 + $0x3a0] sm:$0xff]
  %v137 = vld [vmem:[%s0 + $0x3a8] sm:$0xff]
  %v138 = vld [vmem:[%s0 + $0x3b0] sm:$0xff]
  %v139 = vld [vmem:[%s0 + $0x3b8] sm:$0xff]
  %v140 = vld [vmem:[%s0 + $0x3c0] sm:$0xff]
  %v141 = vld [vmem:[%s0 + $0x3c8] sm:$0xff]
  %v142 = vld [vmem:[%s0 + $0x3d0] sm:$0xff]
  %v143 = vld [vmem:[%s0 + $0x3d8] sm:$0xff]
  %v144 = vld [vmem:[%s0 + $0x3e0] sm:$0xff]
  %v145 = vld [vmem:[%s0 + $0x3e8] sm:$0xff]
  %v146 = vld [vmem:[%s0 + $0x3f0] sm:$0xff]
  %v147 = vld [vmem:[%s0 + $0x3f8] sm:$0xff]
  %v148 = vld [vmem:[%s0 + $0x400] sm:$0xff]
  %v149 = vld [vmem:[%s0 + $0x408] sm:$0xff]
  %v150 = vld [vmem:[%s0 + $0x410] sm:$0xff]
  %v151 = vld [vmem:[%s0 + $0x418] sm:$0xff]
  %v152 = vld [vmem:[%s0 + $0x420] sm:$0xff]
  %v153 = vld [vmem:[%s0 + $0x428] sm:$0xff]
  %v154 = vld [vmem:[%s0 + $0x430] sm:$0xff]
  %v155 = vld [vmem:[%s0 + $0x438] sm:$0xff]
  %v156 = vld [vmem:[%s0 + $0x440] sm:$0xff]
  %v157 = vld [vmem:[%s0 + $0x448] sm:$0xff]
  %v158 = vld [vmem:[%s0 + $0x450] sm:$0xff]
  %v159 = vld [vmem:[%s0 + $0x458] sm:$0xff]
  %v160 = vld [vmem:[%s0 + $0x460] sm:$0xff]
  %v161 = vld [vmem:[%s0 + $0x468] sm:$0xff]
  %v162 = vld [vmem:[%s0 + $0x470] sm:$0xff]
  %v163 = vld [vmem:[%s0 + $0x478] sm:$0xff]
  %v164 = vld [vmem:[%s0 + $0x480] sm:$0xff]
  %v165 = vld [vmem:[%s0 + $0x488] sm:$0xff]
  %v166 = vld [vmem:[%s0 + $0x490] sm:$0xff]
  %v167 = vld [vmem:[%s0 + $0x498] sm:$0xff]
  %v168 = vld [vmem:[%s0 + $0x4a0] sm:$0xff]
  %v169 = vld [vmem:[%s0 + $0x4a8] sm:$0xff]
  %v170 = vld [vmem:[%s0 + $0x4b0] sm:$0xff]
  %v171 = vld [vmem:[%s0 + $0x4b8] sm:$0xff]
  %v172 = vld [vmem:[%s0 + $0x4c0] sm:$0xff]
  %v173 = vld [vmem:[%s0 + $0x4c8] sm:$0xff]
  %v174 = vld [vmem:[%s0 + $0x4d0] sm:$0xff]
  %v175 = vld [vmem:[%s0 + $0x4d8] sm:$0xff]
  %v176 = vld [vmem:[%s0 + $0x4e0] sm:$0xff]
  %v177 = vld [vmem:[%s0 + $0x4e8] sm:$0xff]
  %v178 = vld [vmem:[%s0 + $0x4f0] sm:$0xff]
  %v179 = vld [vmem:[%s0 + $0x4f8] sm:$0xff]
  %v180 = vld [vmem:[%s0 + $0x500] sm:$0xff]
  %v181 = vld [vmem:[%s0 + $0x508] sm:$0xff]
  %v182 = vld [vmem:[%s0 + $0x510] sm:$0xff]
  %v183 = vld [vmem:[%s0 + $0x518] sm:$0xff]
  %v184 = vld [vmem:[%s0 + $0x520] sm:$0xff]
  %v185 = vld [vmem:[%s0 + $0x528] sm:$0xff]
  %v186 = vld [vmem:[%s0 + $0x530] sm:$0xff]
  %v187 = vld [vmem:[%s0 + $0x538] sm:$0xff]
  %v188 = vld [vmem:[%s0 + $0x540] sm:$0xff]
  %v189 = vld [vmem:[%s0 + $0x548] sm:$0xff]
  %v190 = vld [vmem:[%s0 + $0x550] sm:$0xff]
  %v191 = vld [vmem:[%s0 + $0x558] sm:$0xff]
  %v192 = vld [vmem:[%s0 + $0x560] sm:$0xff]
  %v193 = vld [vmem:[%s0 + $0x568] sm:$0xff]
  %v194 = vld [vmem:[%s0 + $0x570] sm:$0xff]
  %v195 = vld [vmem:[%s0 + $0x578] sm:$0xff]
  %v196 = vld [vmem:[%s0 + $0x580] sm:$0xff]
  %v197 = vld [vmem:[%s0 + $0x588] sm:$0xff]
  %v198 = vld [vmem:[%s0 + $0x590] sm:$0xff]
  %v199 = vld [vmem:[%s0 + $0x598] sm:$0xff]
  %v200 = vld [vmem:[%s1] sm:$0xff]
  %v201 = vld [vmem:[%s1 + $0x8] sm:$0xff]
  %v202 = vld [vmem:[%s1 + $0x10] sm:$0xff]
  %v203 = vld [vmem:[%s1 + $0x18] sm:$0xff]
  %v204 = vld [vmem:[%s1 + $0x20] sm:$0xff]
  %v205 = vld [vmem:[%s1 + $0x28] sm:$0xff]
  %v206 = vld [vmem:[%s1 + $0x30] sm:$0xff]
  %v207 = vld [vmem:[%s1 + $0x38] sm:$0xff]
  %v208 = vld [vmem:[%s1 + $0x40] sm:$0xff]
  %v209 = vld [vmem:[%s1 + $0x48] sm:$0xff]
  %v210 = vld [vmem:[%s1 + $0x50] sm:$0xff]
  %v211 = vld [vmem:[%s1 + $0x58] sm:$0xff]
  %v212 = vld [vmem:[%s1 + $0x60] sm:$0xff]
  %v213 = vld [vmem:[%s1 + $0x68] sm:$0xff]
  %v214 = vld [vmem:[%s1 + $0x70] sm:$0xff]
  %v215 = vld [vmem:[%s1 + $0x78] sm:$0xff]
  %v216 = vld [vmem:[%s1 + $0x80] sm:$0xff]
  %v217 = vld [vmem:[%s1 + $0x88] sm:$0xff]
  %v218 = vld [vmem:[%s1 + $0x90] sm:$0xff]
  %v219 = vld [vmem:[%s1 + $0x98] sm:$0xff]
  %v220 = vld [vmem:[%s1 + $0xa0] sm:$0xff]
  %v221 = vld [vmem:[%s1 + $0xa8] sm:$0xff]
  %v222 = vld [vmem:[%s1 + $0xb0] sm:$0xff]
  %v223 = vld [vmem:[%s1 + $0xb8] sm:$0xff]
  %v224 = vld [vmem:[%s1 + $0xc0] sm:$0xff]
  %v225 = vld [vmem:[%s1 + $0xc8] sm:$0xff]
  %v226 = vld [vmem:[%s1 + $0xd0] sm:$0xff]
  %v227 = vld [vmem:[%s1 + $0xd8] sm:$0xff]
  %v228 = vld [vmem:[%s1 + $0xe0] sm:$0xff]
  %v229 = vld [vmem:[%s1 + $0xe8] sm:$0xff]
  %v230 = vld [vmem:[%s1 + $0xf0] sm:$0xff]
  %v231 = vld [vmem:[%s1 + $0xf8] sm:$0xff]
  %v232 = vld [vmem:[%s1 + $0x100] sm:$0xff]
  %v233 = vld [vmem:[%s1 + $0x108] sm:$0xff]
  %v234 = vld [vmem:[%s1 + $0x110] sm:$0xff]
  %v235 = vld [vmem:[%s1 + $0x118] sm:$0xff]
  %v236 = vld [vmem:[%s1 + $0x120] sm:$0xff]
  %v237 = vld [vmem:[%s1 + $0x128] sm:$0xff]
  %v238 = vld [vmem:[%s1 + $0x130] sm:$0xff]
  %v239 = vld [vmem:[%s1 + $0x138] sm:$0xff]
  %v240 = vld [vmem:[%s1 + $0x140] sm:$0xff]
  %v241 = vld [vmem:[%s1 + $0x148] sm:$0xff]
  %v242 = vld [vmem:[%s1 + $0x150] sm:$0xff]
  %v243 = vld [vmem:[%s1 + $0x158] sm:$0xff]
  %v244 = vld [vmem:[%s1 + $0x160] sm:$0xff]
  %v245 = vld [vmem:[%s1 + $0x168] sm:$0xff]
  %v246 = vld [vmem:[%s1 + $0x170] sm:$0xff]
  %v247 = vld [vmem:[%s1 + $0x178] sm:$0xff]
  %v248 = vld [vmem:[%s2] sm:$0x1]
  %v250 = vlaneseq
  %v251 = vshrl.u32 %v250, 7
  %v252 = vsub.s32 0, %v251
  %v253 = vrot.slane %v248, %v252
  %255 = vmatprep.subr.mxu0 0.0
  %256 = vmatpush1.msra.mxu0 %v200
  %257 = vmatprep.subr.mxu0 0.0
  %258 = vmatpush1.msra.mxu0 %v201
  %259 = vmatprep.subr.mxu0 0.0
  %260 = vmatpush1.msra.mxu0 %v202
  %261 = vmatprep.subr.mxu0 0.0
  %262 = vmatpush1.msra.mxu0 %v203
  %263 = vmatprep.subr.mxu0 0.0
  %264 = vmatpush1.msra.mxu0 %v204
  %265 = vmatprep.subr.mxu0 0.0
  %266 = vmatpush1.msra.mxu0 %v205
  %267 = vmatprep.subr.mxu0 0.0
  %268 = vmatpush1.msra.mxu0 %v206
  %269 = vmatprep.subr.mxu0 0.0
  %270 = vmatpush1.msra.mxu0 %v207
  %271 = vmatprep.subr.mxu0 0.0
  %272 = vmatpush1.msra.mxu0 %v208
  %273 = vmatprep.subr.mxu0 0.0
  %274 = vmatpush1.msra.mxu0 %v209
  %275 = vmatprep.subr.mxu0 0.0
  %276 = vmatpush1.msra.mxu0 %v210
  %277 = vmatprep.subr.mxu0 0.0
  %278 = vmatpush1.msra.mxu0 %v211
  %279 = vmatprep.subr.mxu0 0.0
  %280 = vmatpush1.msra.mxu0 %v212
  %281 = vmatprep.subr.mxu0 0.0
  %282 = vmatpush1.msra.mxu0 %v213
  %283 = vmatprep.subr.mxu0 0.0
  %284 = vmatpush1.msra.mxu0 %v214
  %285 = vmatprep.subr.mxu0 0.0
  %286 = vmatpush1.msra.mxu0 %v215
  %287 = vmatprep.subr.mxu0 0.0
  %288 = vmatpush1.msra.mxu0 %v216
  %289 = vmatprep.subr.mxu0 0.0
  %290 = vmatpush1.msra.mxu0 %v217
  %291 = vmatprep.subr.mxu0 0.0
  %292 = vmatpush1.msra.mxu0 %v218
  %293 = vmatprep.subr.mxu0 0.0
  %294 = vmatpush1.msra.mxu0 %v219
  %295 = vmatprep.subr.mxu0 0.0
  %296 = vmatpush1.msra.mxu0 %v220
  %297 = vmatprep.subr.mxu0 0.0
  %298 = vmatpush1.msra.mxu0 %v221
  %299 = vmatprep.subr.mxu0 0.0
  %300 = vmatpush1.msra.mxu0 %v222
  %301 = vmatprep.subr.mxu0 0.0
  %302 = vmatpush1.msra.mxu0 %v223
  %303 = vmatprep.subr.mxu0 0.0
  %304 = vmatpush1.msra.mxu0 %v224
  %305 = vmatprep.subr.mxu0 0.0
  %306 = vmatpush1.msra.mxu0 %v225
  %307 = vmatprep.subr.mxu0 0.0
  %308 = vmatpush1.msra.mxu0 %v226
  %309 = vmatprep.subr.mxu0 0.0
  %310 = vmatpush1.msra.mxu0 %v227
  %311 = vmatprep.subr.mxu0 0.0
  %312 = vmatpush1.msra.mxu0 %v228
  %313 = vmatprep.subr.mxu0 0.0
  %314 = vmatpush1.msra.mxu0 %v229
  %315 = vmatprep.subr.mxu0 0.0
  %316 = vmatpush1.msra.mxu0 %v230
  %317 = vmatprep.subr.mxu0 0.0
  %318 = vmatpush1.msra.mxu0 %v231
  %319 = vmatprep.mubr.f32.mxu0 %v21
  %320 = vmatmul.mubr.f32.gmra.mrb[0].mxu0 %v20
  %v321 = vpop.f32.mrb[0].mxu0
  %v322 = vadd.f32 %v253, %v321
  %v323 = vpop.f32.mrb[0].mxu0
  %324 = vmatprep.mubr.f32.mxu0 %v24
  %325 = vmatmul.mubr.f32.gmra.mrb[0].mxu0 %v23
  %v326 = vpop.f32.mrb[0].mxu0
  %v327 = vadd.f32 %v253, %v326
  %v328 = vpop.f32.mrb[0].mxu0
  %329 = vmatprep.mubr.f32.mxu0 %v27
  %330 = vmatmul.mubr.f32.gmra.mrb[0].mxu0 %v26
  %v331 = vpop.f32.mrb[0].mxu0
  %v332 = vadd.f32 %v253, %v331
  %v333 = vpop.f32.mrb[0].mxu0
  %334 = vmatprep.mubr.f32.mxu0 %v30
  %335 = vmatmul.mubr.f32.gmra.mrb[0].mxu0 %v29
  %v336 = vpop.f32.mrb[0].mxu0
  %v337 = vadd.f32 %v253, %v336
  %v338 = vpop.f32.mrb[0].mxu0
  %339 = vmatprep.mubr.f32.mxu0 %v33
  %340 = vmatmul.mubr.f32.gmra.mrb[0].mxu0 %v32
  %v341 = vpop.f32.mrb[0].mxu0
  %v342 = vadd.f32 %v253, %v341
  %v343 = vpop.f32.mrb[0].mxu0
  %344 = vmatprep.mubr.f32.mxu0 %v36
  %345 = vmatmul.mubr.f32.gmra.mrb[0].mxu0 %v35
  %v346 = vpop.f32.mrb[0].mxu0
  %v347 = vadd.f32 %v253, %v346
  %v348 = vpop.f32.mrb[0].mxu0
  %349 = vmatprep.mubr.f32.mxu0 %v39
  %350 = vmatmul.mubr.f32.gmra.mrb[0].mxu0 %v38
  %v351 = vpop.f32.mrb[0].mxu0
  %v352 = vadd.f32 %v253, %v351
  %v353 = vpop.f32.mrb[0].mxu0
  %354 = vmatprep.mubr.f32.mxu0 %v42
  %355 = vmatmul.mubr.f32.gmra.mrb[0].mxu0 %v41
  %v356 = vpop.f32.mrb[0].mxu0
  %v357 = vadd.f32 %v253, %v356
  %v358 = vpop.f32.mrb[0].mxu0
  %359 = vmatprep.mubr.f32.mxu0 %v45
  %360 = vmatmul.mubr.f32.gmra.mrb[0].mxu0 %v44
  %v361 = vpop.f32.mrb[0].mxu0
  %v362 = vadd.f32 %v253, %v361
  %v363 = vpop.f32.mrb[0].mxu0
  %364 = vmatprep.mubr.f32.mxu0 %v48
  %365 = vmatmul.mubr.f32.gmra.mrb[0].mxu0 %v47
  %v366 = vpop.f32.mrb[0].mxu0
  %v367 = vadd.f32 %v253, %v366
  %v368 = vpop.f32.mrb[0].mxu0
  %369 = vmatprep.mubr.f32.mxu0 %v51
  %370 = vmatmul.mubr.f32.gmra.mrb[0].mxu0 %v50
  %v371 = vpop.f32.mrb[0].mxu0
  %v372 = vadd.f32 %v253, %v371
  %v373 = vpop.f32.mrb[0].mxu0
  %374 = vmatprep.mubr.f32.mxu0 %v54
  %375 = vmatmul.mubr.f32.gmra.mrb[0].mxu0 %v53
  %v376 = vpop.f32.mrb[0].mxu0
  %v377 = vadd.f32 %v253, %v376
  %v378 = vpop.f32.mrb[0].mxu0
  %379 = vmatprep.mubr.f32.mxu0 %v57
  %380 = vmatmul.mubr.f32.gmra.mrb[0].mxu0 %v56
  %v381 = vpop.f32.mrb[0].mxu0
  %v382 = vadd.f32 %v253, %v381
  %v383 = vpop.f32.mrb[0].mxu0
  %384 = vmatprep.mubr.f32.mxu0 %v60
  %385 = vmatmul.mubr.f32.gmra.mrb[0].mxu0 %v59
  %v386 = vpop.f32.mrb[0].mxu0
  %v387 = vadd.f32 %v253, %v386
  %v388 = vpop.f32.mrb[0].mxu0
  %389 = vmatprep.mubr.f32.mxu0 %v63
  %390 = vmatmul.mubr.f32.gmra.mrb[0].mxu0 %v62
  %v391 = vpop.f32.mrb[0].mxu0
  %v392 = vadd.f32 %v253, %v391
  %v393 = vpop.f32.mrb[0].mxu0
  %394 = vmatprep.mubr.f32.mxu0 %v66
  %395 = vmatmul.mubr.f32.gmra.mrb[0].mxu0 %v65
  %v396 = vpop.f32.mrb[0].mxu0
  %v397 = vadd.f32 %v253, %v396
  %v398 = vpop.f32.mrb[0].mxu0
  %399 = vmatprep.mubr.f32.mxu0 %v69
  %400 = vmatmul.mubr.f32.gmra.mrb[0].mxu0 %v68
  %v401 = vpop.f32.mrb[0].mxu0
  %v402 = vadd.f32 %v253, %v401
  %v403 = vpop.f32.mrb[0].mxu0
  %404 = vmatprep.mubr.f32.mxu0 %v72
  %405 = vmatmul.mubr.f32.gmra.mrb[0].mxu0 %v71
  %v406 = vpop.f32.mrb[0].mxu0
  %v407 = vadd.f32 %v253, %v406
  %v408 = vpop.f32.mrb[0].mxu0
  %409 = vmatprep.mubr.f32.mxu0 %v75
  %410 = vmatmul.mubr.f32.gmra.mrb[0].mxu0 %v74
  %v411 = vpop.f32.mrb[0].mxu0
  %v412 = vadd.f32 %v253, %v411
  %v413 = vpop.f32.mrb[0].mxu0
  %414 = vmatprep.mubr.f32.mxu0 %v78
  %415 = vmatmul.mubr.f32.gmra.mrb[0].mxu0 %v77
  %v416 = vpop.f32.mrb[0].mxu0
  %v417 = vadd.f32 %v253, %v416
  %v418 = vpop.f32.mrb[0].mxu0
  %419 = vmatprep.mubr.f32.mxu0 %v81
  %420 = vmatmul.mubr.f32.gmra.mrb[0].mxu0 %v80
  %v421 = vpop.f32.mrb[0].mxu0
  %v422 = vadd.f32 %v253, %v421
  %v423 = vpop.f32.mrb[0].mxu0
  %424 = vmatprep.mubr.f32.mxu0 %v84
  %425 = vmatmul.mubr.f32.gmra.mrb[0].mxu0 %v83
  %v426 = vpop.f32.mrb[0].mxu0
  %v427 = vadd.f32 %v253, %v426
  %v428 = vpop.f32.mrb[0].mxu0
  %429 = vmatprep.mubr.f32.mxu0 %v87
  %430 = vmatmul.mubr.f32.gmra.mrb[0].mxu0 %v86
  %v431 = vpop.f32.mrb[0].mxu0
  %v432 = vadd.f32 %v253, %v431
  %v433 = vpop.f32.mrb[0].mxu0
  %434 = vmatprep.mubr.f32.mxu0 %v90
  %435 = vmatmul.mubr.f32.gmra.mrb[0].mxu0 %v89
  %v436 = vpop.f32.mrb[0].mxu0
  %v437 = vadd.f32 %v253, %v436
  %v438 = vpop.f32.mrb[0].mxu0
  %439 = vmatprep.mubr.f32.mxu0 %v93
  %440 = vmatmul.mubr.f32.gmra.mrb[0].mxu0 %v92
  %v441 = vpop.f32.mrb[0].mxu0
  %v442 = vadd.f32 %v253, %v441
  %v443 = vpop.f32.mrb[0].mxu0
  %444 = vmatprep.mubr.f32.mxu0 %v96
  %445 = vmatmul.mubr.f32.gmra.mrb[0].mxu0 %v95
  %v446 = vpop.f32.mrb[0].mxu0
  %v447 = vadd.f32 %v253, %v446
  %v448 = vpop.f32.mrb[0].mxu0
  %449 = vmatprep.mubr.f32.mxu0 %v99
  %450 = vmatmul.mubr.f32.gmra.mrb[0].mxu0 %v98
  %v451 = vpop.f32.mrb[0].mxu0
  %v452 = vadd.f32 %v253, %v451
  %v453 = vpop.f32.mrb[0].mxu0
  %454 = vmatprep.mubr.f32.mxu0 %v102
  %455 = vmatmul.mubr.f32.gmra.mrb[0].mxu0 %v101
  %v456 = vpop.f32.mrb[0].mxu0
  %v457 = vadd.f32 %v253, %v456
  %v458 = vpop.f32.mrb[0].mxu0
  %459 = vmatprep.mubr.f32.mxu0 %v105
  %460 = vmatmul.mubr.f32.gmra.mrb[0].mxu0 %v104
  %v461 = vpop.f32.mrb[0].mxu0
  %v462 = vadd.f32 %v253, %v461
  %v463 = vpop.f32.mrb[0].mxu0
  %464 = vmatprep.mubr.f32.mxu0 %v108
  %465 = vmatmul.mubr.f32.gmra.mrb[0].mxu0 %v107
  %v466 = vpop.f32.mrb[0].mxu0
  %v467 = vadd.f32 %v253, %v466
  %v468 = vpop.f32.mrb[0].mxu0
  %469 = vmatprep.mubr.f32.mxu0 %v111
  %470 = vmatmul.mubr.f32.gmra.mrb[0].mxu0 %v110
  %v471 = vpop.f32.mrb[0].mxu0
  %v472 = vadd.f32 %v253, %v471
  %v473 = vpop.f32.mrb[0].mxu0
  %474 = vmatprep.mubr.f32.mxu0 %v114
  %475 = vmatmul.mubr.f32.gmra.mrb[0].mxu0 %v113
  %v476 = vpop.f32.mrb[0].mxu0
  %v477 = vadd.f32 %v253, %v476
  %v478 = vpop.f32.mrb[0].mxu0
  %479 = vmatprep.mubr.f32.mxu0 %v117
  %480 = vmatmul.mubr.f32.gmra.mrb[0].mxu0 %v116
  %v481 = vpop.f32.mrb[0].mxu0
  %v482 = vadd.f32 %v253, %v481
  %v483 = vpop.f32.mrb[0].mxu0
  %484 = vmatprep.mubr.f32.mxu0 %v120
  %485 = vmatmul.mubr.f32.gmra.mrb[0].mxu0 %v119
  %v486 = vpop.f32.mrb[0].mxu0
  %v487 = vadd.f32 %v253, %v486
  %v488 = vpop.f32.mrb[0].mxu0
  %489 = vmatprep.mubr.f32.mxu0 %v123
  %490 = vmatmul.mubr.f32.gmra.mrb[0].mxu0 %v122
  %v491 = vpop.f32.mrb[0].mxu0
  %v492 = vadd.f32 %v253, %v491
  %v493 = vpop.f32.mrb[0].mxu0
  %494 = vmatprep.mubr.f32.mxu0 %v126
  %495 = vmatmul.mubr.f32.gmra.mrb[0].mxu0 %v125
  %v496 = vpop.f32.mrb[0].mxu0
  %v497 = vadd.f32 %v253, %v496
  %v498 = vpop.f32.mrb[0].mxu0
  %499 = vmatprep.mubr.f32.mxu0 %v129
  %500 = vmatmul.mubr.f32.gmra.mrb[0].mxu0 %v128
  %v501 = vpop.f32.mrb[0].mxu0
  %v502 = vadd.f32 %v253, %v501
  %v503 = vpop.f32.mrb[0].mxu0
  %504 = vmatprep.mubr.f32.mxu0 %v132
  %505 = vmatmul.mubr.f32.gmra.mrb[0].mxu0 %v131
  %v506 = vpop.f32.mrb[0].mxu0
  %v507 = vadd.f32 %v253, %v506
  %v508 = vpop.f32.mrb[0].mxu0
  %509 = vmatprep.mubr.f32.mxu0 %v135
  %510 = vmatmul.mubr.f32.gmra.mrb[0].mxu0 %v134
  %v511 = vpop.f32.mrb[0].mxu0
  %v512 = vadd.f32 %v253, %v511
  %v513 = vpop.f32.mrb[0].mxu0
  %514 = vmatprep.mubr.f32.mxu0 %v138
  %515 = vmatmul.mubr.f32.gmra.mrb[0].mxu0 %v137
  %v516 = vpop.f32.mrb[0].mxu0
  %v517 = vadd.f32 %v253, %v516
  %v518 = vpop.f32.mrb[0].mxu0
  %519 = vmatprep.mubr.f32.mxu0 %v141
  %520 = vmatmul.mubr.f32.gmra.mrb[0].mxu0 %v140
  %v521 = vpop.f32.mrb[0].mxu0
  %v522 = vadd.f32 %v253, %v521
  %v523 = vpop.f32.mrb[0].mxu0
  %524 = vmatprep.mubr.f32.mxu0 %v144
  %525 = vmatmul.mubr.f32.gmra.mrb[0].mxu0 %v143
  %v526 = vpop.f32.mrb[0].mxu0
  %v527 = vadd.f32 %v253, %v526
  %v528 = vpop.f32.mrb[0].mxu0
  %529 = vmatprep.mubr.f32.mxu0 %v147
  %530 = vmatmul.mubr.f32.gmra.mrb[0].mxu0 %v146
  %v531 = vpop.f32.mrb[0].mxu0
  %v532 = vadd.f32 %v253, %v531
  %v533 = vpop.f32.mrb[0].mxu0
  %534 = vmatprep.mubr.f32.mxu0 %v150
  %535 = vmatmul.mubr.f32.gmra.mrb[0].mxu0 %v149
  %v536 = vpop.f32.mrb[0].mxu0
  %v537 = vadd.f32 %v253, %v536
  %v538 = vpop.f32.mrb[0].mxu0
  %539 = vmatprep.mubr.f32.mxu0 %v153
  %540 = vmatmul.mubr.f32.gmra.mrb[0].mxu0 %v152
  %v541 = vpop.f32.mrb[0].mxu0
  %v542 = vadd.f32 %v253, %v541
  %v543 = vpop.f32.mrb[0].mxu0
  %544 = vmatprep.mubr.f32.mxu0 %v156
  %545 = vmatmul.mubr.f32.gmra.mrb[0].mxu0 %v155
  %v546 = vpop.f32.mrb[0].mxu0
  %v547 = vadd.f32 %v253, %v546
  %v548 = vpop.f32.mrb[0].mxu0
  %549 = vmatprep.mubr.f32.mxu0 %v159
  %550 = vmatmul.mubr.f32.gmra.mrb[0].mxu0 %v158
  %v551 = vpop.f32.mrb[0].mxu0
  %v552 = vadd.f32 %v253, %v551
  %v553 = vpop.f32.mrb[0].mxu0
  %554 = vmatprep.mubr.f32.mxu0 %v162
  %555 = vmatmul.mubr.f32.gmra.mrb[0].mxu0 %v161
  %v556 = vpop.f32.mrb[0].mxu0
  %v557 = vadd.f32 %v253, %v556
  %v558 = vpop.f32.mrb[0].mxu0
  %559 = vmatprep.mubr.f32.mxu0 %v165
  %560 = vmatmul.mubr.f32.gmra.mrb[0].mxu0 %v164
  %v561 = vpop.f32.mrb[0].mxu0
  %v562 = vadd.f32 %v253, %v561
  %v563 = vpop.f32.mrb[0].mxu0
  %564 = vmatprep.mubr.f32.mxu0 %v168
  %565 = vmatmul.mubr.f32.gmra.mrb[0].mxu0 %v167
  %v566 = vpop.f32.mrb[0].mxu0
  %v567 = vadd.f32 %v253, %v566
  %v568 = vpop.f32.mrb[0].mxu0
  %569 = vmatprep.mubr.f32.mxu0 %v171
  %570 = vmatmul.mubr.f32.gmra.mrb[0].mxu0 %v170
  %v571 = vpop.f32.mrb[0].mxu0
  %v572 = vadd.f32 %v253, %v571
  %v573 = vpop.f32.mrb[0].mxu0
  %574 = vmatprep.mubr.f32.mxu0 %v174
  %575 = vmatmul.mubr.f32.gmra.mrb[0].mxu0 %v173
  %v576 = vpop.f32.mrb[0].mxu0
  %v577 = vadd.f32 %v253, %v576
  %v578 = vpop.f32.mrb[0].mxu0
  %579 = vmatprep.mubr.f32.mxu0 %v177
  %580 = vmatmul.mubr.f32.gmra.mrb[0].mxu0 %v176
  %v581 = vpop.f32.mrb[0].mxu0
  %v582 = vadd.f32 %v253, %v581
  %v583 = vpop.f32.mrb[0].mxu0
  %584 = vmatprep.mubr.f32.mxu0 %v180
  %585 = vmatmul.mubr.f32.gmra.mrb[0].mxu0 %v179
  %v586 = vpop.f32.mrb[0].mxu0
  %v587 = vadd.f32 %v253, %v586
  %v588 = vpop.f32.mrb[0].mxu0
  %589 = vmatprep.mubr.f32.mxu0 %v183
  %590 = vmatmul.mubr.f32.gmra.mrb[0].mxu0 %v182
  %v591 = vpop.f32.mrb[0].mxu0
  %v592 = vadd.f32 %v253, %v591
  %v593 = vpop.f32.mrb[0].mxu0
  %594 = vmatprep.mubr.f32.mxu0 %v186
  %595 = vmatmul.mubr.f32.gmra.mrb[0].mxu0 %v185
  %v596 = vpop.f32.mrb[0].mxu0
  %v597 = vadd.f32 %v253, %v596
  %v598 = vpop.f32.mrb[0].mxu0
  %599 = vmatprep.mubr.f32.mxu0 %v189
  %600 = vmatmul.mubr.f32.gmra.mrb[0].mxu0 %v188
  %v601 = vpop.f32.mrb[0].mxu0
  %v602 = vadd.f32 %v253, %v601
  %v603 = vpop.f32.mrb[0].mxu0
  %604 = vmatprep.mubr.f32.mxu0 %v192
  %605 = vmatmul.mubr.f32.gmra.mrb[0].mxu0 %v191
  %v606 = vpop.f32.mrb[0].mxu0
  %v607 = vadd.f32 %v253, %v606
  %v608 = vpop.f32.mrb[0].mxu0
  %609 = vmatprep.mubr.f32.mxu0 %v195
  %610 = vmatmul.mubr.f32.gmra.mrb[0].mxu0 %v194
  %v611 = vpop.f32.mrb[0].mxu0
  %v612 = vadd.f32 %v253, %v611
  %v613 = vpop.f32.mrb[0].mxu0
  %614 = vmatprep.mubr.f32.mxu0 %v198
  %615 = vmatmul.mubr.f32.gmra.mrb[0].mxu0 %v197
  %v616 = vpop.f32.mrb[0].mxu0
  %v617 = vadd.f32 %v253, %v616
  %v618 = vpop.f32.mrb[0].mxu0
  %619 = vdwg.mxu0
  %620 = vmatprep.subr.mxu0 0.0
  %621 = vmatpush1.msra.mxu0 %v232
  %622 = vmatprep.subr.mxu0 0.0
  %623 = vmatpush1.msra.mxu0 %v233
  %624 = vmatprep.subr.mxu0 0.0
  %625 = vmatpush1.msra.mxu0 %v234
  %626 = vmatprep.subr.mxu0 0.0
  %627 = vmatpush1.msra.mxu0 %v235
  %628 = vmatprep.subr.mxu0 0.0
  %629 = vmatpush1.msra.mxu0 %v236
  %630 = vmatprep.subr.mxu0 0.0
  %631 = vmatpush1.msra.mxu0 %v237
  %632 = vmatprep.subr.mxu0 0.0
  %633 = vmatpush1.msra.mxu0 %v238
  %634 = vmatprep.subr.mxu0 0.0
  %635 = vmatpush1.msra.mxu0 %v239
  %636 = vmatprep.subr.mxu0 0.0
  %637 = vmatpush1.msra.mxu0 %v240
  %638 = vmatprep.subr.mxu0 0.0
  %639 = vmatpush1.msra.mxu0 %v241
  %640 = vmatprep.subr.mxu0 0.0
  %641 = vmatpush1.msra.mxu0 %v242
  %642 = vmatprep.subr.mxu0 0.0
  %643 = vmatpush1.msra.mxu0 %v243
  %644 = vmatprep.subr.mxu0 0.0
  %645 = vmatpush1.msra.mxu0 %v244
  %646 = vmatprep.subr.mxu0 0.0
  %647 = vmatpush1.msra.mxu0 %v245
  %648 = vmatprep.subr.mxu0 0.0
  %649 = vmatpush1.msra.mxu0 %v246
  %650 = vmatprep.subr.mxu0 0.0
  %651 = vmatpush1.msra.mxu0 %v247
  %652 = vmatprep.subr.mxu0 0.0
  %653 = vmatpush1.msra.mxu0 0.0
  %654 = vmatprep.subr.mxu0 0.0
  %655 = vmatpush1.msra.mxu0 0.0
  %656 = vmatprep.subr.mxu0 0.0
  %657 = vmatpush1.msra.mxu0 0.0
  %658 = vmatprep.subr.mxu0 0.0
  %659 = vmatpush1.msra.mxu0 0.0
  %660 = vmatprep.subr.mxu0 0.0
  %661 = vmatpush1.msra.mxu0 0.0
  %662 = vmatprep.subr.mxu0 0.0
  %663 = vmatpush1.msra.mxu0 0.0
  %664 = vmatprep.subr.mxu0 0.0
  %665 = vmatpush1.msra.mxu0 0.0
  %666 = vmatprep.subr.mxu0 0.0
  %667 = vmatpush1.msra.mxu0 0.0
  %668 = vmatprep.subr.mxu0 0.0
  %669 = vmatpush1.msra.mxu0 0.0
  %670 = vmatprep.subr.mxu0 0.0
  %671 = vmatpush1.msra.mxu0 0.0
  %672 = vmatprep.subr.mxu0 0.0
  %673 = vmatpush1.msra.mxu0 0.0
  %674 = vmatprep.subr.mxu0 0.0
  %675 = vmatpush1.msra.mxu0 0.0
  %676 = vmatprep.subr.mxu0 0.0
  %677 = vmatpush1.msra.mxu0 0.0
  %678 = vmatprep.subr.mxu0 0.0
  %679 = vmatpush1.msra.mxu0 0.0
  %680 = vmatprep.subr.mxu0 0.0
  %681 = vmatpush1.msra.mxu0 0.0
  %682 = vmatprep.subr.mxu0 0.0
  %683 = vmatpush1.msra.mxu0 0.0
  %684 = vmatprep.mubr.f32.mxu0 0.0
  %685 = vmatmul.mubr.f32.gmra.mrb[0].mxu0 %v22
  %v686 = vpop.f32.mrb[0].mxu0
  %v687 = vadd.f32 %v322, %v686
  %v688 = vpop.f32.mrb[0].mxu0
  %689 = vmatprep.mubr.f32.mxu0 0.0
  %690 = vmatmul.mubr.f32.gmra.mrb[0].mxu0 %v25
  %v691 = vpop.f32.mrb[0].mxu0
  %v692 = vadd.f32 %v327, %v691
  %v693 = vpop.f32.mrb[0].mxu0
  %694 = vmatprep.mubr.f32.mxu0 0.0
  %695 = vmatmul.mubr.f32.gmra.mrb[0].mxu0 %v28
  %v696 = vpop.f32.mrb[0].mxu0
  %v697 = vadd.f32 %v332, %v696
  %v698 = vpop.f32.mrb[0].mxu0
  %699 = vmatprep.mubr.f32.mxu0 0.0
  %700 = vmatmul.mubr.f32.gmra.mrb[0].mxu0 %v31
  %v701 = vpop.f32.mrb[0].mxu0
  %v702 = vadd.f32 %v337, %v701
  %v703 = vpop.f32.mrb[0].mxu0
  %704 = vmatprep.mubr.f32.mxu0 0.0
  %705 = vmatmul.mubr.f32.gmra.mrb[0].mxu0 %v34
  %v706 = vpop.f32.mrb[0].mxu0
  %v707 = vadd.f32 %v342, %v706
  %v708 = vpop.f32.mrb[0].mxu0
  %709 = vmatprep.mubr.f32.mxu0 0.0
  %710 = vmatmul.mubr.f32.gmra.mrb[0].mxu0 %v37
  %v711 = vpop.f32.mrb[0].mxu0
  %v712 = vadd.f32 %v347, %v711
  %v713 = vpop.f32.mrb[0].mxu0
  %714 = vmatprep.mubr.f32.mxu0 0.0
  %715 = vmatmul.mubr.f32.gmra.mrb[0].mxu0 %v40
  %v716 = vpop.f32.mrb[0].mxu0
  %v717 = vadd.f32 %v352, %v716
  %v718 = vpop.f32.mrb[0].mxu0
  %719 = vmatprep.mubr.f32.mxu0 0.0
  %720 = vmatmul.mubr.f32.gmra.mrb[0].mxu0 %v43
  %v721 = vpop.f32.mrb[0].mxu0
  %v722 = vadd.f32 %v357, %v721
  %v723 = vpop.f32.mrb[0].mxu0
  %724 = vmatprep.mubr.f32.mxu0 0.0
  %725 = vmatmul.mubr.f32.gmra.mrb[0].mxu0 %v46
  %v726 = vpop.f32.mrb[0].mxu0
  %v727 = vadd.f32 %v362, %v726
  %v728 = vpop.f32.mrb[0].mxu0
  %729 = vmatprep.mubr.f32.mxu0 0.0
  %730 = vmatmul.mubr.f32.gmra.mrb[0].mxu0 %v49
  %v731 = vpop.f32.mrb[0].mxu0
  %v732 = vadd.f32 %v367, %v731
  %v733 = vpop.f32.mrb[0].mxu0
  %734 = vmatprep.mubr.f32.mxu0 0.0
  %735 = vmatmul.mubr.f32.gmra.mrb[0].mxu0 %v52
  %v736 = vpop.f32.mrb[0].mxu0
  %v737 = vadd.f32 %v372, %v736
  %v738 = vpop.f32.mrb[0].mxu0
  %739 = vmatprep.mubr.f32.mxu0 0.0
  %740 = vmatmul.mubr.f32.gmra.mrb[0].mxu0 %v55
  %v741 = vpop.f32.mrb[0].mxu0
  %v742 = vadd.f32 %v377, %v741
  %v743 = vpop.f32.mrb[0].mxu0
  %744 = vmatprep.mubr.f32.mxu0 0.0
  %745 = vmatmul.mubr.f32.gmra.mrb[0].mxu0 %v58
  %v746 = vpop.f32.mrb[0].mxu0
  %v747 = vadd.f32 %v382, %v746
  %v748 = vpop.f32.mrb[0].mxu0
  %749 = vmatprep.mubr.f32.mxu0 0.0
  %750 = vmatmul.mubr.f32.gmra.mrb[0].mxu0 %v61
  %v751 = vpop.f32.mrb[0].mxu0
  %v752 = vadd.f32 %v387, %v751
  %v753 = vpop.f32.mrb[0].mxu0
  %754 = vmatprep.mubr.f32.mxu0 0.0
  %755 = vmatmul.mubr.f32.gmra.mrb[0].mxu0 %v64
  %v756 = vpop.f32.mrb[0].mxu0
  %v757 = vadd.f32 %v392, %v756
  %v758 = vpop.f32.mrb[0].mxu0
  %759 = vmatprep.mubr.f32.mxu0 0.0
  %760 = vmatmul.mubr.f32.gmra.mrb[0].mxu0 %v67
  %v761 = vpop.f32.mrb[0].mxu0
  %v762 = vadd.f32 %v397, %v761
  %v763 = vpop.f32.mrb[0].mxu0
  %764 = vmatprep.mubr.f32.mxu0 0.0
  %765 = vmatmul.mubr.f32.gmra.mrb[0].mxu0 %v70
  %v766 = vpop.f32.mrb[0].mxu0
  %v767 = vadd.f32 %v402, %v766
  %v768 = vpop.f32.mrb[0].mxu0
  %769 = vmatprep.mubr.f32.mxu0 0.0
  %770 = vmatmul.mubr.f32.gmra.mrb[0].mxu0 %v73
  %v771 = vpop.f32.mrb[0].mxu0
  %v772 = vadd.f32 %v407, %v771
  %v773 = vpop.f32.mrb[0].mxu0
  %774 = vmatprep.mubr.f32.mxu0 0.0
  %775 = vmatmul.mubr.f32.gmra.mrb[0].mxu0 %v76
  %v776 = vpop.f32.mrb[0].mxu0
  %v777 = vadd.f32 %v412, %v776
  %v778 = vpop.f32.mrb[0].mxu0
  %779 = vmatprep.mubr.f32.mxu0 0.0
  %780 = vmatmul.mubr.f32.gmra.mrb[0].mxu0 %v79
  %v781 = vpop.f32.mrb[0].mxu0
  %v782 = vadd.f32 %v417, %v781
  %v783 = vpop.f32.mrb[0].mxu0
  %784 = vmatprep.mubr.f32.mxu0 0.0
  %785 = vmatmul.mubr.f32.gmra.mrb[0].mxu0 %v82
  %v786 = vpop.f32.mrb[0].mxu0
  %v787 = vadd.f32 %v422, %v786
  %v788 = vpop.f32.mrb[0].mxu0
  %789 = vmatprep.mubr.f32.mxu0 0.0
  %790 = vmatmul.mubr.f32.gmra.mrb[0].mxu0 %v85
  %v791 = vpop.f32.mrb[0].mxu0
  %v792 = vadd.f32 %v427, %v791
  %v793 = vpop.f32.mrb[0].mxu0
  %794 = vmatprep.mubr.f32.mxu0 0.0
  %795 = vmatmul.mubr.f32.gmra.mrb[0].mxu0 %v88
  %v796 = vpop.f32.mrb[0].mxu0
  %v797 = vadd.f32 %v432, %v796
  %v798 = vpop.f32.mrb[0].mxu0
  %799 = vmatprep.mubr.f32.mxu0 0.0
  %800 = vmatmul.mubr.f32.gmra.mrb[0].mxu0 %v91
  %v801 = vpop.f32.mrb[0].mxu0
  %v802 = vadd.f32 %v437, %v801
  %v803 = vpop.f32.mrb[0].mxu0
  %804 = vmatprep.mubr.f32.mxu0 0.0
  %805 = vmatmul.mubr.f32.gmra.mrb[0].mxu0 %v94
  %v806 = vpop.f32.mrb[0].mxu0
  %v807 = vadd.f32 %v442, %v806
  %v808 = vpop.f32.mrb[0].mxu0
  %809 = vmatprep.mubr.f32.mxu0 0.0
  %810 = vmatmul.mubr.f32.gmra.mrb[0].mxu0 %v97
  %v811 = vpop.f32.mrb[0].mxu0
  %v812 = vadd.f32 %v447, %v811
  %v813 = vpop.f32.mrb[0].mxu0
  %814 = vmatprep.mubr.f32.mxu0 0.0
  %815 = vmatmul.mubr.f32.gmra.mrb[0].mxu0 %v100
  %v816 = vpop.f32.mrb[0].mxu0
  %v817 = vadd.f32 %v452, %v816
  %v818 = vpop.f32.mrb[0].mxu0
  %819 = vmatprep.mubr.f32.mxu0 0.0
  %820 = vmatmul.mubr.f32.gmra.mrb[0].mxu0 %v103
  %v821 = vpop.f32.mrb[0].mxu0
  %v822 = vadd.f32 %v457, %v821
  %v823 = vpop.f32.mrb[0].mxu0
  %824 = vmatprep.mubr.f32.mxu0 0.0
  %825 = vmatmul.mubr.f32.gmra.mrb[0].mxu0 %v106
  %v826 = vpop.f32.mrb[0].mxu0
  %v827 = vadd.f32 %v462, %v826
  %v828 = vpop.f32.mrb[0].mxu0
  %829 = vmatprep.mubr.f32.mxu0 0.0
  %830 = vmatmul.mubr.f32.gmra.mrb[0].mxu0 %v109
  %v831 = vpop.f32.mrb[0].mxu0
  %v832 = vadd.f32 %v467, %v831
  %v833 = vpop.f32.mrb[0].mxu0
  %834 = vmatprep.mubr.f32.mxu0 0.0
  %835 = vmatmul.mubr.f32.gmra.mrb[0].mxu0 %v112
  %v836 = vpop.f32.mrb[0].mxu0
  %v837 = vadd.f32 %v472, %v836
  %v838 = vpop.f32.mrb[0].mxu0
  %839 = vmatprep.mubr.f32.mxu0 0.0
  %840 = vmatmul.mubr.f32.gmra.mrb[0].mxu0 %v115
  %v841 = vpop.f32.mrb[0].mxu0
  %v842 = vadd.f32 %v477, %v841
  %v843 = vpop.f32.mrb[0].mxu0
  %844 = vmatprep.mubr.f32.mxu0 0.0
  %845 = vmatmul.mubr.f32.gmra.mrb[0].mxu0 %v118
  %v846 = vpop.f32.mrb[0].mxu0
  %v847 = vadd.f32 %v482, %v846
  %v848 = vpop.f32.mrb[0].mxu0
  %849 = vmatprep.mubr.f32.mxu0 0.0
  %850 = vmatmul.mubr.f32.gmra.mrb[0].mxu0 %v121
  %v851 = vpop.f32.mrb[0].mxu0
  %v852 = vadd.f32 %v487, %v851
  %v853 = vpop.f32.mrb[0].mxu0
  %854 = vmatprep.mubr.f32.mxu0 0.0
  %855 = vmatmul.mubr.f32.gmra.mrb[0].mxu0 %v124
  %v856 = vpop.f32.mrb[0].mxu0
  %v857 = vadd.f32 %v492, %v856
  %v858 = vpop.f32.mrb[0].mxu0
  %859 = vmatprep.mubr.f32.mxu0 0.0
  %860 = vmatmul.mubr.f32.gmra.mrb[0].mxu0 %v127
  %v861 = vpop.f32.mrb[0].mxu0
  %v862 = vadd.f32 %v497, %v861
  %v863 = vpop.f32.mrb[0].mxu0
  %864 = vmatprep.mubr.f32.mxu0 0.0
  %865 = vmatmul.mubr.f32.gmra.mrb[0].mxu0 %v130
  %v866 = vpop.f32.mrb[0].mxu0
  %v867 = vadd.f32 %v502, %v866
  %v868 = vpop.f32.mrb[0].mxu0
  %869 = vmatprep.mubr.f32.mxu0 0.0
  %870 = vmatmul.mubr.f32.gmra.mrb[0].mxu0 %v133
  %v871 = vpop.f32.mrb[0].mxu0
  %v872 = vadd.f32 %v507, %v871
  %v873 = vpop.f32.mrb[0].mxu0
  %874 = vmatprep.mubr.f32.mxu0 0.0
  %875 = vmatmul.mubr.f32.gmra.mrb[0].mxu0 %v136
  %v876 = vpop.f32.mrb[0].mxu0
  %v877 = vadd.f32 %v512, %v876
  %v878 = vpop.f32.mrb[0].mxu0
  %879 = vmatprep.mubr.f32.mxu0 0.0
  %880 = vmatmul.mubr.f32.gmra.mrb[0].mxu0 %v139
  %v881 = vpop.f32.mrb[0].mxu0
  %v882 = vadd.f32 %v517, %v881
  %v883 = vpop.f32.mrb[0].mxu0
  %884 = vmatprep.mubr.f32.mxu0 0.0
  %885 = vmatmul.mubr.f32.gmra.mrb[0].mxu0 %v142
  %v886 = vpop.f32.mrb[0].mxu0
  %v887 = vadd.f32 %v522, %v886
  %v888 = vpop.f32.mrb[0].mxu0
  %889 = vmatprep.mubr.f32.mxu0 0.0
  %890 = vmatmul.mubr.f32.gmra.mrb[0].mxu0 %v145
  %v891 = vpop.f32.mrb[0].mxu0
  %v892 = vadd.f32 %v527, %v891
  %v893 = vpop.f32.mrb[0].mxu0
  %894 = vmatprep.mubr.f32.mxu0 0.0
  %895 = vmatmul.mubr.f32.gmra.mrb[0].mxu0 %v148
  %v896 = vpop.f32.mrb[0].mxu0
  %v897 = vadd.f32 %v532, %v896
  %v898 = vpop.f32.mrb[0].mxu0
  %899 = vmatprep.mubr.f32.mxu0 0.0
  %900 = vmatmul.mubr.f32.gmra.mrb[0].mxu0 %v151
  %v901 = vpop.f32.mrb[0].mxu0
  %v902 = vadd.f32 %v537, %v901
  %v903 = vpop.f32.mrb[0].mxu0
  %904 = vmatprep.mubr.f32.mxu0 0.0
  %905 = vmatmul.mubr.f32.gmra.mrb[0].mxu0 %v154
  %v906 = vpop.f32.mrb[0].mxu0
  %v907 = vadd.f32 %v542, %v906
  %v908 = vpop.f32.mrb[0].mxu0
  %909 = vmatprep.mubr.f32.mxu0 0.0
  %910 = vmatmul.mubr.f32.gmra.mrb[0].mxu0 %v157
  %v911 = vpop.f32.mrb[0].mxu0
  %v912 = vadd.f32 %v547, %v911
  %v913 = vpop.f32.mrb[0].mxu0
  %914 = vmatprep.mubr.f32.mxu0 0.0
  %915 = vmatmul.mubr.f32.gmra.mrb[0].mxu0 %v160
  %v916 = vpop.f32.mrb[0].mxu0
  %v917 = vadd.f32 %v552, %v916
  %v918 = vpop.f32.mrb[0].mxu0
  %919 = vmatprep.mubr.f32.mxu0 0.0
  %920 = vmatmul.mubr.f32.gmra.mrb[0].mxu0 %v163
  %v921 = vpop.f32.mrb[0].mxu0
  %v922 = vadd.f32 %v557, %v921
  %v923 = vpop.f32.mrb[0].mxu0
  %924 = vmatprep.mubr.f32.mxu0 0.0
  %925 = vmatmul.mubr.f32.gmra.mrb[0].mxu0 %v166
  %v926 = vpop.f32.mrb[0].mxu0
  %v927 = vadd.f32 %v562, %v926
  %v928 = vpop.f32.mrb[0].mxu0
  %929 = vmatprep.mubr.f32.mxu0 0.0
  %930 = vmatmul.mubr.f32.gmra.mrb[0].mxu0 %v169
  %v931 = vpop.f32.mrb[0].mxu0
  %v932 = vadd.f32 %v567, %v931
  %v933 = vpop.f32.mrb[0].mxu0
  %934 = vmatprep.mubr.f32.mxu0 0.0
  %935 = vmatmul.mubr.f32.gmra.mrb[0].mxu0 %v172
  %v936 = vpop.f32.mrb[0].mxu0
  %v937 = vadd.f32 %v572, %v936
  %v938 = vpop.f32.mrb[0].mxu0
  %939 = vmatprep.mubr.f32.mxu0 0.0
  %940 = vmatmul.mubr.f32.gmra.mrb[0].mxu0 %v175
  %v941 = vpop.f32.mrb[0].mxu0
  %v942 = vadd.f32 %v577, %v941
  %v943 = vpop.f32.mrb[0].mxu0
  %944 = vmatprep.mubr.f32.mxu0 0.0
  %945 = vmatmul.mubr.f32.gmra.mrb[0].mxu0 %v178
  %v946 = vpop.f32.mrb[0].mxu0
  %v947 = vadd.f32 %v582, %v946
  %v948 = vpop.f32.mrb[0].mxu0
  %949 = vmatprep.mubr.f32.mxu0 0.0
  %950 = vmatmul.mubr.f32.gmra.mrb[0].mxu0 %v181
  %v951 = vpop.f32.mrb[0].mxu0
  %v952 = vadd.f32 %v587, %v951
  %v953 = vpop.f32.mrb[0].mxu0
  %954 = vmatprep.mubr.f32.mxu0 0.0
  %955 = vmatmul.mubr.f32.gmra.mrb[0].mxu0 %v184
  %v956 = vpop.f32.mrb[0].mxu0
  %v957 = vadd.f32 %v592, %v956
  %v958 = vpop.f32.mrb[0].mxu0
  %959 = vmatprep.mubr.f32.mxu0 0.0
  %960 = vmatmul.mubr.f32.gmra.mrb[0].mxu0 %v187
  %v961 = vpop.f32.mrb[0].mxu0
  %v962 = vadd.f32 %v597, %v961
  %v963 = vpop.f32.mrb[0].mxu0
  %964 = vmatprep.mubr.f32.mxu0 0.0
  %965 = vmatmul.mubr.f32.gmra.mrb[0].mxu0 %v190
  %v966 = vpop.f32.mrb[0].mxu0
  %v967 = vadd.f32 %v602, %v966
  %v968 = vpop.f32.mrb[0].mxu0
  %969 = vmatprep.mubr.f32.mxu0 0.0
  %970 = vmatmul.mubr.f32.gmra.mrb[0].mxu0 %v193
  %v971 = vpop.f32.mrb[0].mxu0
  %v972 = vadd.f32 %v607, %v971
  %v973 = vpop.f32.mrb[0].mxu0
  %974 = vmatprep.mubr.f32.mxu0 0.0
  %975 = vmatmul.mubr.f32.gmra.mrb[0].mxu0 %v196
  %v976 = vpop.f32.mrb[0].mxu0
  %v977 = vadd.f32 %v612, %v976
  %v978 = vpop.f32.mrb[0].mxu0
  %979 = vmatprep.mubr.f32.mxu0 0.0
  %980 = vmatmul.mubr.f32.gmra.mrb[0].mxu0 %v199
  %v981 = vpop.f32.mrb[0].mxu0
  %v982 = vadd.f32 %v617, %v981
  %v983 = vpop.f32.mrb[0].mxu0
  %984 = vdwg.mxu0
  %v985 = vmul.f32 %v687, 0.1
  %v986 = vmul.f32 %v692, 0.1
  %v987 = vmul.f32 %v697, 0.1
  %v988 = vmul.f32 %v702, 0.1
  %v989 = vmul.f32 %v707, 0.1
  %v990 = vmul.f32 %v712, 0.1
  %v991 = vmul.f32 %v717, 0.1
  %v992 = vmul.f32 %v722, 0.1
  %v993 = vmul.f32 %v727, 0.1
  %v994 = vmul.f32 %v732, 0.1
  %v995 = vmul.f32 %v737, 0.1
  %v996 = vmul.f32 %v742, 0.1
  %v997 = vmul.f32 %v747, 0.1
  %v998 = vmul.f32 %v752, 0.1
  %v999 = vmul.f32 %v757, 0.1
  %v1000 = vmul.f32 %v762, 0.1
  %v1001 = vmul.f32 %v767, 0.1
  %v1002 = vmul.f32 %v772, 0.1
  %v1003 = vmul.f32 %v777, 0.1
  %v1004 = vmul.f32 %v782, 0.1
  %v1005 = vmul.f32 %v787, 0.1
  %v1006 = vmul.f32 %v792, 0.1
  %v1007 = vmul.f32 %v797, 0.1
  %v1008 = vmul.f32 %v802, 0.1
  %v1009 = vmul.f32 %v807, 0.1
  %v1010 = vmul.f32 %v812, 0.1
  %v1011 = vmul.f32 %v817, 0.1
  %v1012 = vmul.f32 %v822, 0.1
  %v1013 = vmul.f32 %v827, 0.1
  %v1014 = vmul.f32 %v832, 0.1
  %v1015 = vmul.f32 %v837, 0.1
  %v1016 = vmul.f32 %v842, 0.1
  %v1017 = vmul.f32 %v847, 0.1
  %v1018 = vmul.f32 %v852, 0.1
  %v1019 = vmul.f32 %v857, 0.1
  %v1020 = vmul.f32 %v862, 0.1
  %v1021 = vmul.f32 %v867, 0.1
  %v1022 = vmul.f32 %v872, 0.1
  %v1023 = vmul.f32 %v877, 0.1
  %v1024 = vmul.f32 %v882, 0.1
  %v1025 = vmul.f32 %v887, 0.1
  %v1026 = vmul.f32 %v892, 0.1
  %v1027 = vmul.f32 %v897, 0.1
  %v1028 = vmul.f32 %v902, 0.1
  %v1029 = vmul.f32 %v907, 0.1
  %v1030 = vmul.f32 %v912, 0.1
  %v1031 = vmul.f32 %v917, 0.1
  %v1032 = vmul.f32 %v922, 0.1
  %v1033 = vmul.f32 %v927, 0.1
  %v1034 = vmul.f32 %v932, 0.1
  %v1035 = vmul.f32 %v937, 0.1
  %v1036 = vmul.f32 %v942, 0.1
  %v1037 = vmul.f32 %v947, 0.1
  %v1038 = vmul.f32 %v952, 0.1
  %v1039 = vmul.f32 %v957, 0.1
  %v1040 = vmul.f32 %v962, 0.1
  %v1041 = vmul.f32 %v967, 0.1
  %v1042 = vmul.f32 %v972, 0.1
  %v1043 = vmul.f32 %v977, 0.1
  %v1044 = vmul.f32 %v982, 0.1
  %v1045 = vmax.f32 %v687, %v985
  %v1046 = vmax.f32 %v692, %v986
  %v1047 = vmax.f32 %v697, %v987
  %v1048 = vmax.f32 %v702, %v988
  %v1049 = vmax.f32 %v707, %v989
  %v1050 = vmax.f32 %v712, %v990
  %v1051 = vmax.f32 %v717, %v991
  %v1052 = vmax.f32 %v722, %v992
  %v1053 = vmax.f32 %v727, %v993
  %v1054 = vmax.f32 %v732, %v994
  %v1055 = vmax.f32 %v737, %v995
  %v1056 = vmax.f32 %v742, %v996
  %v1057 = vmax.f32 %v747, %v997
  %v1058 = vmax.f32 %v752, %v998
  %v1059 = vmax.f32 %v757, %v999
  %v1060 = vmax.f32 %v762, %v1000
  %v1061 = vmax.f32 %v767, %v1001
  %v1062 = vmax.f32 %v772, %v1002
  %v1063 = vmax.f32 %v777, %v1003
  %v1064 = vmax.f32 %v782, %v1004
  %v1065 = vmax.f32 %v787, %v1005
  %v1066 = vmax.f32 %v792, %v1006
  %v1067 = vmax.f32 %v797, %v1007
  %v1068 = vmax.f32 %v802, %v1008
  %v1069 = vmax.f32 %v807, %v1009
  %v1070 = vmax.f32 %v812, %v1010
  %v1071 = vmax.f32 %v817, %v1011
  %v1072 = vmax.f32 %v822, %v1012
  %v1073 = vmax.f32 %v827, %v1013
  %v1074 = vmax.f32 %v832, %v1014
  %v1075 = vmax.f32 %v837, %v1015
  %v1076 = vmax.f32 %v842, %v1016
  %v1077 = vmax.f32 %v847, %v1017
  %v1078 = vmax.f32 %v852, %v1018
  %v1079 = vmax.f32 %v857, %v1019
  %v1080 = vmax.f32 %v862, %v1020
  %v1081 = vmax.f32 %v867, %v1021
  %v1082 = vmax.f32 %v872, %v1022
  %v1083 = vmax.f32 %v877, %v1023
  %v1084 = vmax.f32 %v882, %v1024
  %v1085 = vmax.f32 %v887, %v1025
  %v1086 = vmax.f32 %v892, %v1026
  %v1087 = vmax.f32 %v897, %v1027
  %v1088 = vmax.f32 %v902, %v1028
  %v1089 = vmax.f32 %v907, %v1029
  %v1090 = vmax.f32 %v912, %v1030
  %v1091 = vmax.f32 %v917, %v1031
  %v1092 = vmax.f32 %v922, %v1032
  %v1093 = vmax.f32 %v927, %v1033
  %v1094 = vmax.f32 %v932, %v1034
  %v1095 = vmax.f32 %v937, %v1035
  %v1096 = vmax.f32 %v942, %v1036
  %v1097 = vmax.f32 %v947, %v1037
  %v1098 = vmax.f32 %v952, %v1038
  %v1099 = vmax.f32 %v957, %v1039
  %v1100 = vmax.f32 %v962, %v1040
  %v1101 = vmax.f32 %v967, %v1041
  %v1102 = vmax.f32 %v972, %v1042
  %v1103 = vmax.f32 %v977, %v1043
  %v1104 = vmax.f32 %v982, %v1044
  %vm1105 = vcmask 261120
  %v1106 = vsel %vm1105, %v1045, 0.0
  %v1107 = vsel %vm1105, %v1046, 0.0
  %v1108 = vadd.f32 %v1106, %v1107
  %v1109 = vsel %vm1105, %v1047, 0.0
  %v1110 = vadd.f32 %v1108, %v1109
  %v1111 = vsel %vm1105, %v1048, 0.0
  %v1112 = vadd.f32 %v1110, %v1111
  %v1113 = vsel %vm1105, %v1049, 0.0
  %v1114 = vadd.f32 %v1112, %v1113
  %v1115 = vsel %vm1105, %v1050, 0.0
  %v1116 = vadd.f32 %v1114, %v1115
  %v1117 = vsel %vm1105, %v1051, 0.0
  %v1118 = vadd.f32 %v1116, %v1117
  %v1119 = vsel %vm1105, %v1052, 0.0
  %v1120 = vadd.f32 %v1118, %v1119
  %v1121 = vsel %vm1105, %v1053, 0.0
  %v1122 = vadd.f32 %v1120, %v1121
  %v1123 = vsel %vm1105, %v1054, 0.0
  %v1124 = vadd.f32 %v1122, %v1123
  %v1125 = vsel %vm1105, %v1055, 0.0
  %v1126 = vadd.f32 %v1124, %v1125
  %v1127 = vsel %vm1105, %v1056, 0.0
  %v1128 = vadd.f32 %v1126, %v1127
  %v1129 = vsel %vm1105, %v1057, 0.0
  %v1130 = vadd.f32 %v1128, %v1129
  %v1131 = vsel %vm1105, %v1058, 0.0
  %v1132 = vadd.f32 %v1130, %v1131
  %v1133 = vsel %vm1105, %v1059, 0.0
  %v1134 = vadd.f32 %v1132, %v1133
  %v1135 = vsel %vm1105, %v1060, 0.0
  %v1136 = vadd.f32 %v1134, %v1135
  %v1137 = vsel %vm1105, %v1061, 0.0
  %v1138 = vadd.f32 %v1136, %v1137
  %v1139 = vsel %vm1105, %v1062, 0.0
  %v1140 = vadd.f32 %v1138, %v1139
  %v1141 = vsel %vm1105, %v1063, 0.0
  %v1142 = vadd.f32 %v1140, %v1141
  %v1143 = vsel %vm1105, %v1064, 0.0
  %v1144 = vadd.f32 %v1142, %v1143
  %v1145 = vsel %vm1105, %v1065, 0.0
  %v1146 = vadd.f32 %v1144, %v1145
  %v1147 = vsel %vm1105, %v1066, 0.0
  %v1148 = vadd.f32 %v1146, %v1147
  %v1149 = vsel %vm1105, %v1067, 0.0
  %v1150 = vadd.f32 %v1148, %v1149
  %v1151 = vsel %vm1105, %v1068, 0.0
  %v1152 = vadd.f32 %v1150, %v1151
  %v1153 = vsel %vm1105, %v1069, 0.0
  %v1154 = vadd.f32 %v1152, %v1153
  %v1155 = vsel %vm1105, %v1070, 0.0
  %v1156 = vadd.f32 %v1154, %v1155
  %v1157 = vsel %vm1105, %v1071, 0.0
  %v1158 = vadd.f32 %v1156, %v1157
  %v1159 = vsel %vm1105, %v1072, 0.0
  %v1160 = vadd.f32 %v1158, %v1159
  %v1161 = vsel %vm1105, %v1073, 0.0
  %v1162 = vadd.f32 %v1160, %v1161
  %v1163 = vsel %vm1105, %v1074, 0.0
  %v1164 = vadd.f32 %v1162, %v1163
  %v1165 = vsel %vm1105, %v1075, 0.0
  %v1166 = vadd.f32 %v1164, %v1165
  %v1167 = vsel %vm1105, %v1076, 0.0
  %v1168 = vadd.f32 %v1166, %v1167
  %v1169 = vsel %vm1105, %v1077, 0.0
  %v1170 = vadd.f32 %v1168, %v1169
  %v1171 = vsel %vm1105, %v1078, 0.0
  %v1172 = vadd.f32 %v1170, %v1171
  %v1173 = vsel %vm1105, %v1079, 0.0
  %v1174 = vadd.f32 %v1172, %v1173
  %v1175 = vsel %vm1105, %v1080, 0.0
  %v1176 = vadd.f32 %v1174, %v1175
  %v1177 = vsel %vm1105, %v1081, 0.0
  %v1178 = vadd.f32 %v1176, %v1177
  %v1179 = vsel %vm1105, %v1082, 0.0
  %v1180 = vadd.f32 %v1178, %v1179
  %v1181 = vsel %vm1105, %v1083, 0.0
  %v1182 = vadd.f32 %v1180, %v1181
  %v1183 = vsel %vm1105, %v1084, 0.0
  %v1184 = vadd.f32 %v1182, %v1183
  %v1185 = vsel %vm1105, %v1085, 0.0
  %v1186 = vadd.f32 %v1184, %v1185
  %v1187 = vsel %vm1105, %v1086, 0.0
  %v1188 = vadd.f32 %v1186, %v1187
  %v1189 = vsel %vm1105, %v1087, 0.0
  %v1190 = vadd.f32 %v1188, %v1189
  %v1191 = vsel %vm1105, %v1088, 0.0
  %v1192 = vadd.f32 %v1190, %v1191
  %v1193 = vsel %vm1105, %v1089, 0.0
  %v1194 = vadd.f32 %v1192, %v1193
  %v1195 = vsel %vm1105, %v1090, 0.0
  %v1196 = vadd.f32 %v1194, %v1195
  %v1197 = vsel %vm1105, %v1091, 0.0
  %v1198 = vadd.f32 %v1196, %v1197
  %v1199 = vsel %vm1105, %v1092, 0.0
  %v1200 = vadd.f32 %v1198, %v1199
  %v1201 = vsel %vm1105, %v1093, 0.0
  %v1202 = vadd.f32 %v1200, %v1201
  %v1203 = vsel %vm1105, %v1094, 0.0
  %v1204 = vadd.f32 %v1202, %v1203
  %v1205 = vsel %vm1105, %v1095, 0.0
  %v1206 = vadd.f32 %v1204, %v1205
  %v1207 = vsel %vm1105, %v1096, 0.0
  %v1208 = vadd.f32 %v1206, %v1207
  %v1209 = vsel %vm1105, %v1097, 0.0
  %v1210 = vadd.f32 %v1208, %v1209
  %v1211 = vsel %vm1105, %v1098, 0.0
  %v1212 = vadd.f32 %v1210, %v1211
  %v1213 = vsel %vm1105, %v1099, 0.0
  %v1214 = vadd.f32 %v1212, %v1213
  %v1215 = vsel %vm1105, %v1100, 0.0
  %v1216 = vadd.f32 %v1214, %v1215
  %v1217 = vsel %vm1105, %v1101, 0.0
  %v1218 = vadd.f32 %v1216, %v1217
  %v1219 = vsel %vm1105, %v1102, 0.0
  %v1220 = vadd.f32 %v1218, %v1219
  %v1221 = vsel %vm1105, %v1103, 0.0
  %v1222 = vadd.f32 %v1220, %v1221
  %v1223 = vsel %vm1105, %v1104, 0.0
  %v1224 = vadd.f32 %v1222, %v1223
  %v1225 = vrot.slane %v1224, 4
  %v1226 = vadd.f32 %v1224, %v1225
  %v1227 = vrot.slane %v1226, 2
  %v1228 = vadd.f32 %v1226, %v1227
  %v1229 = vrot.slane %v1228, 1
  %v1230 = vadd.f32 %v1228, %v1229
  %v1231 = vmul.f32 %v1230, 0.0020833334
  %v1232 = vmul.f32 %v1045, %v1045
  %v1233 = vmul.f32 %v1046, %v1046
  %v1234 = vmul.f32 %v1047, %v1047
  %v1235 = vmul.f32 %v1048, %v1048
  %v1236 = vmul.f32 %v1049, %v1049
  %v1237 = vmul.f32 %v1050, %v1050
  %v1238 = vmul.f32 %v1051, %v1051
  %v1239 = vmul.f32 %v1052, %v1052
  %v1240 = vmul.f32 %v1053, %v1053
  %v1241 = vmul.f32 %v1054, %v1054
  %v1242 = vmul.f32 %v1055, %v1055
  %v1243 = vmul.f32 %v1056, %v1056
  %v1244 = vmul.f32 %v1057, %v1057
  %v1245 = vmul.f32 %v1058, %v1058
  %v1246 = vmul.f32 %v1059, %v1059
  %v1247 = vmul.f32 %v1060, %v1060
  %v1248 = vmul.f32 %v1061, %v1061
  %v1249 = vmul.f32 %v1062, %v1062
  %v1250 = vmul.f32 %v1063, %v1063
  %v1251 = vmul.f32 %v1064, %v1064
  %v1252 = vmul.f32 %v1065, %v1065
  %v1253 = vmul.f32 %v1066, %v1066
  %v1254 = vmul.f32 %v1067, %v1067
  %v1255 = vmul.f32 %v1068, %v1068
  %v1256 = vmul.f32 %v1069, %v1069
  %v1257 = vmul.f32 %v1070, %v1070
  %v1258 = vmul.f32 %v1071, %v1071
  %v1259 = vmul.f32 %v1072, %v1072
  %v1260 = vmul.f32 %v1073, %v1073
  %v1261 = vmul.f32 %v1074, %v1074
  %v1262 = vmul.f32 %v1075, %v1075
  %v1263 = vmul.f32 %v1076, %v1076
  %v1264 = vmul.f32 %v1077, %v1077
  %v1265 = vmul.f32 %v1078, %v1078
  %v1266 = vmul.f32 %v1079, %v1079
  %v1267 = vmul.f32 %v1080, %v1080
  %v1268 = vmul.f32 %v1081, %v1081
  %v1269 = vmul.f32 %v1082, %v1082
  %v1270 = vmul.f32 %v1083, %v1083
  %v1271 = vmul.f32 %v1084, %v1084
  %v1272 = vmul.f32 %v1085, %v1085
  %v1273 = vmul.f32 %v1086, %v1086
  %v1274 = vmul.f32 %v1087, %v1087
  %v1275 = vmul.f32 %v1088, %v1088
  %v1276 = vmul.f32 %v1089, %v1089
  %v1277 = vmul.f32 %v1090, %v1090
  %v1278 = vmul.f32 %v1091, %v1091
  %v1279 = vmul.f32 %v1092, %v1092
  %v1280 = vmul.f32 %v1093, %v1093
  %v1281 = vmul.f32 %v1094, %v1094
  %v1282 = vmul.f32 %v1095, %v1095
  %v1283 = vmul.f32 %v1096, %v1096
  %v1284 = vmul.f32 %v1097, %v1097
  %v1285 = vmul.f32 %v1098, %v1098
  %v1286 = vmul.f32 %v1099, %v1099
  %v1287 = vmul.f32 %v1100, %v1100
  %v1288 = vmul.f32 %v1101, %v1101
  %v1289 = vmul.f32 %v1102, %v1102
  %v1290 = vmul.f32 %v1103, %v1103
  %v1291 = vmul.f32 %v1104, %v1104
  %v1292 = vsel %vm1105, %v1232, 0.0
  %v1293 = vsel %vm1105, %v1233, 0.0
  %v1294 = vadd.f32 %v1292, %v1293
  %v1295 = vsel %vm1105, %v1234, 0.0
  %v1296 = vadd.f32 %v1294, %v1295
  %v1297 = vsel %vm1105, %v1235, 0.0
  %v1298 = vadd.f32 %v1296, %v1297
  %v1299 = vsel %vm1105, %v1236, 0.0
  %v1300 = vadd.f32 %v1298, %v1299
  %v1301 = vsel %vm1105, %v1237, 0.0
  %v1302 = vadd.f32 %v1300, %v1301
  %v1303 = vsel %vm1105, %v1238, 0.0
  %v1304 = vadd.f32 %v1302, %v1303
  %v1305 = vsel %vm1105, %v1239, 0.0
  %v1306 = vadd.f32 %v1304, %v1305
  %v1307 = vsel %vm1105, %v1240, 0.0
  %v1308 = vadd.f32 %v1306, %v1307
  %v1309 = vsel %vm1105, %v1241, 0.0
  %v1310 = vadd.f32 %v1308, %v1309
  %v1311 = vsel %vm1105, %v1242, 0.0
  %v1312 = vadd.f32 %v1310, %v1311
  %v1313 = vsel %vm1105, %v1243, 0.0
  %v1314 = vadd.f32 %v1312, %v1313
  %v1315 = vsel %vm1105, %v1244, 0.0
  %v1316 = vadd.f32 %v1314, %v1315
  %v1317 = vsel %vm1105, %v1245, 0.0
  %v1318 = vadd.f32 %v1316, %v1317
  %v1319 = vsel %vm1105, %v1246, 0.0
  %v1320 = vadd.f32 %v1318, %v1319
  %v1321 = vsel %vm1105, %v1247, 0.0
  %v1322 = vadd.f32 %v1320, %v1321
  %v1323 = vsel %vm1105, %v1248, 0.0
  %v1324 = vadd.f32 %v1322, %v1323
  %v1325 = vsel %vm1105, %v1249, 0.0
  %v1326 = vadd.f32 %v1324, %v1325
  %v1327 = vsel %vm1105, %v1250, 0.0
  %v1328 = vadd.f32 %v1326, %v1327
  %v1329 = vsel %vm1105, %v1251, 0.0
  %v1330 = vadd.f32 %v1328, %v1329
  %v1331 = vsel %vm1105, %v1252, 0.0
  %v1332 = vadd.f32 %v1330, %v1331
  %v1333 = vsel %vm1105, %v1253, 0.0
  %v1334 = vadd.f32 %v1332, %v1333
  %v1335 = vsel %vm1105, %v1254, 0.0
  %v1336 = vadd.f32 %v1334, %v1335
  %v1337 = vsel %vm1105, %v1255, 0.0
  %v1338 = vadd.f32 %v1336, %v1337
  %v1339 = vsel %vm1105, %v1256, 0.0
  %v1340 = vadd.f32 %v1338, %v1339
  %v1341 = vsel %vm1105, %v1257, 0.0
  %v1342 = vadd.f32 %v1340, %v1341
  %v1343 = vsel %vm1105, %v1258, 0.0
  %v1344 = vadd.f32 %v1342, %v1343
  %v1345 = vsel %vm1105, %v1259, 0.0
  %v1346 = vadd.f32 %v1344, %v1345
  %v1347 = vsel %vm1105, %v1260, 0.0
  %v1348 = vadd.f32 %v1346, %v1347
  %v1349 = vsel %vm1105, %v1261, 0.0
  %v1350 = vadd.f32 %v1348, %v1349
  %v1351 = vsel %vm1105, %v1262, 0.0
  %v1352 = vadd.f32 %v1350, %v1351
  %v1353 = vsel %vm1105, %v1263, 0.0
  %v1354 = vadd.f32 %v1352, %v1353
  %v1355 = vsel %vm1105, %v1264, 0.0
  %v1356 = vadd.f32 %v1354, %v1355
  %v1357 = vsel %vm1105, %v1265, 0.0
  %v1358 = vadd.f32 %v1356, %v1357
  %v1359 = vsel %vm1105, %v1266, 0.0
  %v1360 = vadd.f32 %v1358, %v1359
  %v1361 = vsel %vm1105, %v1267, 0.0
  %v1362 = vadd.f32 %v1360, %v1361
  %v1363 = vsel %vm1105, %v1268, 0.0
  %v1364 = vadd.f32 %v1362, %v1363
  %v1365 = vsel %vm1105, %v1269, 0.0
  %v1366 = vadd.f32 %v1364, %v1365
  %v1367 = vsel %vm1105, %v1270, 0.0
  %v1368 = vadd.f32 %v1366, %v1367
  %v1369 = vsel %vm1105, %v1271, 0.0
  %v1370 = vadd.f32 %v1368, %v1369
  %v1371 = vsel %vm1105, %v1272, 0.0
  %v1372 = vadd.f32 %v1370, %v1371
  %v1373 = vsel %vm1105, %v1273, 0.0
  %v1374 = vadd.f32 %v1372, %v1373
  %v1375 = vsel %vm1105, %v1274, 0.0
  %v1376 = vadd.f32 %v1374, %v1375
  %v1377 = vsel %vm1105, %v1275, 0.0
  %v1378 = vadd.f32 %v1376, %v1377
  %v1379 = vsel %vm1105, %v1276, 0.0
  %v1380 = vadd.f32 %v1378, %v1379
  %v1381 = vsel %vm1105, %v1277, 0.0
  %v1382 = vadd.f32 %v1380, %v1381
  %v1383 = vsel %vm1105, %v1278, 0.0
  %v1384 = vadd.f32 %v1382, %v1383
  %v1385 = vsel %vm1105, %v1279, 0.0
  %v1386 = vadd.f32 %v1384, %v1385
  %v1387 = vsel %vm1105, %v1280, 0.0
  %v1388 = vadd.f32 %v1386, %v1387
  %v1389 = vsel %vm1105, %v1281, 0.0
  %v1390 = vadd.f32 %v1388, %v1389
  %v1391 = vsel %vm1105, %v1282, 0.0
  %v1392 = vadd.f32 %v1390, %v1391
  %v1393 = vsel %vm1105, %v1283, 0.0
  %v1394 = vadd.f32 %v1392, %v1393
  %v1395 = vsel %vm1105, %v1284, 0.0
  %v1396 = vadd.f32 %v1394, %v1395
  %v1397 = vsel %vm1105, %v1285, 0.0
  %v1398 = vadd.f32 %v1396, %v1397
  %v1399 = vsel %vm1105, %v1286, 0.0
  %v1400 = vadd.f32 %v1398, %v1399
  %v1401 = vsel %vm1105, %v1287, 0.0
  %v1402 = vadd.f32 %v1400, %v1401
  %v1403 = vsel %vm1105, %v1288, 0.0
  %v1404 = vadd.f32 %v1402, %v1403
  %v1405 = vsel %vm1105, %v1289, 0.0
  %v1406 = vadd.f32 %v1404, %v1405
  %v1407 = vsel %vm1105, %v1290, 0.0
  %v1408 = vadd.f32 %v1406, %v1407
  %v1409 = vsel %vm1105, %v1291, 0.0
  %v1410 = vadd.f32 %v1408, %v1409
  %v1411 = vrot.slane %v1410, 4
  %v1412 = vadd.f32 %v1410, %v1411
  %v1413 = vrot.slane %v1412, 2
  %v1414 = vadd.f32 %v1412, %v1413
  %v1415 = vrot.slane %v1414, 1
  %v1416 = vadd.f32 %v1414, %v1415
  %v1417 = vmul.f32 %v1416, 0.0020833334
  %v1418 = vmul.f32 %v1231, %v1231
  %v1419 = vsub.f32 %v1417, %v1418
  %v1420 = vadd.f32 %v1419, 1e-05
  %v1421 = vrsqrt.pop %v1420
  %v1422 = vsub.f32 %v1045, %v1231
  %v1423 = vsub.f32 %v1046, %v1231
  %v1424 = vsub.f32 %v1047, %v1231
  %v1425 = vsub.f32 %v1048, %v1231
  %v1426 = vsub.f32 %v1049, %v1231
  %v1427 = vsub.f32 %v1050, %v1231
  %v1428 = vsub.f32 %v1051, %v1231
  %v1429 = vsub.f32 %v1052, %v1231
  %v1430 = vsub.f32 %v1053, %v1231
  %v1431 = vsub.f32 %v1054, %v1231
  %v1432 = vsub.f32 %v1055, %v1231
  %v1433 = vsub.f32 %v1056, %v1231
  %v1434 = vsub.f32 %v1057, %v1231
  %v1435 = vsub.f32 %v1058, %v1231
  %v1436 = vsub.f32 %v1059, %v1231
  %v1437 = vsub.f32 %v1060, %v1231
  %v1438 = vsub.f32 %v1061, %v1231
  %v1439 = vsub.f32 %v1062, %v1231
  %v1440 = vsub.f32 %v1063, %v1231
  %v1441 = vsub.f32 %v1064, %v1231
  %v1442 = vsub.f32 %v1065, %v1231
  %v1443 = vsub.f32 %v1066, %v1231
  %v1444 = vsub.f32 %v1067, %v1231
  %v1445 = vsub.f32 %v1068, %v1231
  %v1446 = vsub.f32 %v1069, %v1231
  %v1447 = vsub.f32 %v1070, %v1231
  %v1448 = vsub.f32 %v1071, %v1231
  %v1449 = vsub.f32 %v1072, %v1231
  %v1450 = vsub.f32 %v1073, %v1231
  %v1451 = vsub.f32 %v1074, %v1231
  %v1452 = vsub.f32 %v1075, %v1231
  %v1453 = vsub.f32 %v1076, %v1231
  %v1454 = vsub.f32 %v1077, %v1231
  %v1455 = vsub.f32 %v1078, %v1231
  %v1456 = vsub.f32 %v1079, %v1231
  %v1457 = vsub.f32 %v1080, %v1231
  %v1458 = vsub.f32 %v1081, %v1231
  %v1459 = vsub.f32 %v1082, %v1231
  %v1460 = vsub.f32 %v1083, %v1231
  %v1461 = vsub.f32 %v1084, %v1231
  %v1462 = vsub.f32 %v1085, %v1231
  %v1463 = vsub.f32 %v1086, %v1231
  %v1464 = vsub.f32 %v1087, %v1231
  %v1465 = vsub.f32 %v1088, %v1231
  %v1466 = vsub.f32 %v1089, %v1231
  %v1467 = vsub.f32 %v1090, %v1231
  %v1468 = vsub.f32 %v1091, %v1231
  %v1469 = vsub.f32 %v1092, %v1231
  %v1470 = vsub.f32 %v1093, %v1231
  %v1471 = vsub.f32 %v1094, %v1231
  %v1472 = vsub.f32 %v1095, %v1231
  %v1473 = vsub.f32 %v1096, %v1231
  %v1474 = vsub.f32 %v1097, %v1231
  %v1475 = vsub.f32 %v1098, %v1231
  %v1476 = vsub.f32 %v1099, %v1231
  %v1477 = vsub.f32 %v1100, %v1231
  %v1478 = vsub.f32 %v1101, %v1231
  %v1479 = vsub.f32 %v1102, %v1231
  %v1480 = vsub.f32 %v1103, %v1231
  %v1481 = vsub.f32 %v1104, %v1231
  %v1482 = vld [vmem:[%s3] sm:$0x1]
  %v1483 = vmul.f32 %v1421, %v1482
  %v1484 = vlaneseq
  %v1485 = vshrl.u32 %v1484, 7
  %v1486 = vsub.s32 0, %v1485
  %v1487 = vrot.slane %v1483, %v1486
  %v1488 = vmul.f32 %v1422, %v1487
  %v1489 = vmul.f32 %v1423, %v1487
  %v1490 = vmul.f32 %v1424, %v1487
  %v1491 = vmul.f32 %v1425, %v1487
  %v1492 = vmul.f32 %v1426, %v1487
  %v1493 = vmul.f32 %v1427, %v1487
  %v1494 = vmul.f32 %v1428, %v1487
  %v1495 = vmul.f32 %v1429, %v1487
  %v1496 = vmul.f32 %v1430, %v1487
  %v1497 = vmul.f32 %v1431, %v1487
  %v1498 = vmul.f32 %v1432, %v1487
  %v1499 = vmul.f32 %v1433, %v1487
  %v1500 = vmul.f32 %v1434, %v1487
  %v1501 = vmul.f32 %v1435, %v1487
  %v1502 = vmul.f32 %v1436, %v1487
  %v1503 = vmul.f32 %v1437, %v1487
  %v1504 = vmul.f32 %v1438, %v1487
  %v1505 = vmul.f32 %v1439, %v1487
  %v1506 = vmul.f32 %v1440, %v1487
  %v1507 = vmul.f32 %v1441, %v1487
  %v1508 = vmul.f32 %v1442, %v1487
  %v1509 = vmul.f32 %v1443, %v1487
  %v1510 = vmul.f32 %v1444, %v1487
  %v1511 = vmul.f32 %v1445, %v1487
  %v1512 = vmul.f32 %v1446, %v1487
  %v1513 = vmul.f32 %v1447, %v1487
  %v1514 = vmul.f32 %v1448, %v1487
  %v1515 = vmul.f32 %v1449, %v1487
  %v1516 = vmul.f32 %v1450, %v1487
  %v1517 = vmul.f32 %v1451, %v1487
  %v1518 = vmul.f32 %v1452, %v1487
  %v1519 = vmul.f32 %v1453, %v1487
  %v1520 = vmul.f32 %v1454, %v1487
  %v1521 = vmul.f32 %v1455, %v1487
  %v1522 = vmul.f32 %v1456, %v1487
  %v1523 = vmul.f32 %v1457, %v1487
  %v1524 = vmul.f32 %v1458, %v1487
  %v1525 = vmul.f32 %v1459, %v1487
  %v1526 = vmul.f32 %v1460, %v1487
  %v1527 = vmul.f32 %v1461, %v1487
  %v1528 = vmul.f32 %v1462, %v1487
  %v1529 = vmul.f32 %v1463, %v1487
  %v1530 = vmul.f32 %v1464, %v1487
  %v1531 = vmul.f32 %v1465, %v1487
  %v1532 = vmul.f32 %v1466, %v1487
  %v1533 = vmul.f32 %v1467, %v1487
  %v1534 = vmul.f32 %v1468, %v1487
  %v1535 = vmul.f32 %v1469, %v1487
  %v1536 = vmul.f32 %v1470, %v1487
  %v1537 = vmul.f32 %v1471, %v1487
  %v1538 = vmul.f32 %v1472, %v1487
  %v1539 = vmul.f32 %v1473, %v1487
  %v1540 = vmul.f32 %v1474, %v1487
  %v1541 = vmul.f32 %v1475, %v1487
  %v1542 = vmul.f32 %v1476, %v1487
  %v1543 = vmul.f32 %v1477, %v1487
  %v1544 = vmul.f32 %v1478, %v1487
  %v1545 = vmul.f32 %v1479, %v1487
  %v1546 = vmul.f32 %v1480, %v1487
  %v1547 = vmul.f32 %v1481, %v1487
  %v1548 = vld [vmem:[%s4] sm:$0x1]
  %v1550 = vlaneseq
  %v1551 = vshrl.u32 %v1550, 7
  %v1552 = vsub.s32 0, %v1551
  %v1553 = vrot.slane %v1548, %v1552
  %v1555 = vadd.f32 %v1488, %v1553
  %v1556 = vadd.f32 %v1489, %v1553
  %v1557 = vadd.f32 %v1490, %v1553
  %v1558 = vadd.f32 %v1491, %v1553
  %v1559 = vadd.f32 %v1492, %v1553
  %v1560 = vadd.f32 %v1493, %v1553
  %v1561 = vadd.f32 %v1494, %v1553
  %v1562 = vadd.f32 %v1495, %v1553
  %v1563 = vadd.f32 %v1496, %v1553
  %v1564 = vadd.f32 %v1497, %v1553
  %v1565 = vadd.f32 %v1498, %v1553
  %v1566 = vadd.f32 %v1499, %v1553
  %v1567 = vadd.f32 %v1500, %v1553
  %v1568 = vadd.f32 %v1501, %v1553
  %v1569 = vadd.f32 %v1502, %v1553
  %v1570 = vadd.f32 %v1503, %v1553
  %v1571 = vadd.f32 %v1504, %v1553
  %v1572 = vadd.f32 %v1505, %v1553
  %v1573 = vadd.f32 %v1506, %v1553
  %v1574 = vadd.f32 %v1507, %v1553
  %v1575 = vadd.f32 %v1508, %v1553
  %v1576 = vadd.f32 %v1509, %v1553
  %v1577 = vadd.f32 %v1510, %v1553
  %v1578 = vadd.f32 %v1511, %v1553
  %v1579 = vadd.f32 %v1512, %v1553
  %v1580 = vadd.f32 %v1513, %v1553
  %v1581 = vadd.f32 %v1514, %v1553
  %v1582 = vadd.f32 %v1515, %v1553
  %v1583 = vadd.f32 %v1516, %v1553
  %v1584 = vadd.f32 %v1517, %v1553
  %v1585 = vadd.f32 %v1518, %v1553
  %v1586 = vadd.f32 %v1519, %v1553
  %v1587 = vadd.f32 %v1520, %v1553
  %v1588 = vadd.f32 %v1521, %v1553
  %v1589 = vadd.f32 %v1522, %v1553
  %v1590 = vadd.f32 %v1523, %v1553
  %v1591 = vadd.f32 %v1524, %v1553
  %v1592 = vadd.f32 %v1525, %v1553
  %v1593 = vadd.f32 %v1526, %v1553
  %v1594 = vadd.f32 %v1527, %v1553
  %v1595 = vadd.f32 %v1528, %v1553
  %v1596 = vadd.f32 %v1529, %v1553
  %v1597 = vadd.f32 %v1530, %v1553
  %v1598 = vadd.f32 %v1531, %v1553
  %v1599 = vadd.f32 %v1532, %v1553
  %v1600 = vadd.f32 %v1533, %v1553
  %v1601 = vadd.f32 %v1534, %v1553
  %v1602 = vadd.f32 %v1535, %v1553
  %v1603 = vadd.f32 %v1536, %v1553
  %v1604 = vadd.f32 %v1537, %v1553
  %v1605 = vadd.f32 %v1538, %v1553
  %v1606 = vadd.f32 %v1539, %v1553
  %v1607 = vadd.f32 %v1540, %v1553
  %v1608 = vadd.f32 %v1541, %v1553
  %v1609 = vadd.f32 %v1542, %v1553
  %v1610 = vadd.f32 %v1543, %v1553
  %v1611 = vadd.f32 %v1544, %v1553
  %v1612 = vadd.f32 %v1545, %v1553
  %v1613 = vadd.f32 %v1546, %v1553
  %v1614 = vadd.f32 %v1547, %v1553
  %1615 = vst.msk [vmem:[%s5] sm:$0xff] %vm1105, %v1555
  %1616 = vst.msk [vmem:[%s5 + $0x8] sm:$0xff] %vm1105, %v1556
  %1617 = vst.msk [vmem:[%s5 + $0x10] sm:$0xff] %vm1105, %v1557
  %1618 = vst.msk [vmem:[%s5 + $0x18] sm:$0xff] %vm1105, %v1558
  %1619 = vst.msk [vmem:[%s5 + $0x20] sm:$0xff] %vm1105, %v1559
  %1620 = vst.msk [vmem:[%s5 + $0x28] sm:$0xff] %vm1105, %v1560
  %1621 = vst.msk [vmem:[%s5 + $0x30] sm:$0xff] %vm1105, %v1561
  %1622 = vst.msk [vmem:[%s5 + $0x38] sm:$0xff] %vm1105, %v1562
  %1623 = vst.msk [vmem:[%s5 + $0x40] sm:$0xff] %vm1105, %v1563
  %1624 = vst.msk [vmem:[%s5 + $0x48] sm:$0xff] %vm1105, %v1564
  %1625 = vst.msk [vmem:[%s5 + $0x50] sm:$0xff] %vm1105, %v1565
  %1626 = vst.msk [vmem:[%s5 + $0x58] sm:$0xff] %vm1105, %v1566
  %1627 = vst.msk [vmem:[%s5 + $0x60] sm:$0xff] %vm1105, %v1567
  %1628 = vst.msk [vmem:[%s5 + $0x68] sm:$0xff] %vm1105, %v1568
  %1629 = vst.msk [vmem:[%s5 + $0x70] sm:$0xff] %vm1105, %v1569
  %1630 = vst.msk [vmem:[%s5 + $0x78] sm:$0xff] %vm1105, %v1570
  %1631 = vst.msk [vmem:[%s5 + $0x80] sm:$0xff] %vm1105, %v1571
  %1632 = vst.msk [vmem:[%s5 + $0x88] sm:$0xff] %vm1105, %v1572
  %1633 = vst.msk [vmem:[%s5 + $0x90] sm:$0xff] %vm1105, %v1573
  %1634 = vst.msk [vmem:[%s5 + $0x98] sm:$0xff] %vm1105, %v1574
  %1635 = vst.msk [vmem:[%s5 + $0xa0] sm:$0xff] %vm1105, %v1575
  %1636 = vst.msk [vmem:[%s5 + $0xa8] sm:$0xff] %vm1105, %v1576
  %1637 = vst.msk [vmem:[%s5 + $0xb0] sm:$0xff] %vm1105, %v1577
  %1638 = vst.msk [vmem:[%s5 + $0xb8] sm:$0xff] %vm1105, %v1578
  %1639 = vst.msk [vmem:[%s5 + $0xc0] sm:$0xff] %vm1105, %v1579
  %1640 = vst.msk [vmem:[%s5 + $0xc8] sm:$0xff] %vm1105, %v1580
  %1641 = vst.msk [vmem:[%s5 + $0xd0] sm:$0xff] %vm1105, %v1581
  %1642 = vst.msk [vmem:[%s5 + $0xd8] sm:$0xff] %vm1105, %v1582
  %1643 = vst.msk [vmem:[%s5 + $0xe0] sm:$0xff] %vm1105, %v1583
  %1644 = vst.msk [vmem:[%s5 + $0xe8] sm:$0xff] %vm1105, %v1584
  %1645 = vst.msk [vmem:[%s5 + $0xf0] sm:$0xff] %vm1105, %v1585
  %1646 = vst.msk [vmem:[%s5 + $0xf8] sm:$0xff] %vm1105, %v1586
  %1647 = vst.msk [vmem:[%s5 + $0x100] sm:$0xff] %vm1105, %v1587
  %1648 = vst.msk [vmem:[%s5 + $0x108] sm:$0xff] %vm1105, %v1588
  %1649 = vst.msk [vmem:[%s5 + $0x110] sm:$0xff] %vm1105, %v1589
  %1650 = vst.msk [vmem:[%s5 + $0x118] sm:$0xff] %vm1105, %v1590
  %1651 = vst.msk [vmem:[%s5 + $0x120] sm:$0xff] %vm1105, %v1591
  %1652 = vst.msk [vmem:[%s5 + $0x128] sm:$0xff] %vm1105, %v1592
  %1653 = vst.msk [vmem:[%s5 + $0x130] sm:$0xff] %vm1105, %v1593
  %1654 = vst.msk [vmem:[%s5 + $0x138] sm:$0xff] %vm1105, %v1594
  %1655 = vst.msk [vmem:[%s5 + $0x140] sm:$0xff] %vm1105, %v1595
  %1656 = vst.msk [vmem:[%s5 + $0x148] sm:$0xff] %vm1105, %v1596
  %1657 = vst.msk [vmem:[%s5 + $0x150] sm:$0xff] %vm1105, %v1597
  %1658 = vst.msk [vmem:[%s5 + $0x158] sm:$0xff] %vm1105, %v1598
  %1659 = vst.msk [vmem:[%s5 + $0x160] sm:$0xff] %vm1105, %v1599
  %1660 = vst.msk [vmem:[%s5 + $0x168] sm:$0xff] %vm1105, %v1600
  %1661 = vst.msk [vmem:[%s5 + $0x170] sm:$0xff] %vm1105, %v1601
  %1662 = vst.msk [vmem:[%s5 + $0x178] sm:$0xff] %vm1105, %v1602
  %1663 = vst.msk [vmem:[%s5 + $0x180] sm:$0xff] %vm1105, %v1603
  %1664 = vst.msk [vmem:[%s5 + $0x188] sm:$0xff] %vm1105, %v1604
  %1665 = vst.msk [vmem:[%s5 + $0x190] sm:$0xff] %vm1105, %v1605
  %1666 = vst.msk [vmem:[%s5 + $0x198] sm:$0xff] %vm1105, %v1606
  %1667 = vst.msk [vmem:[%s5 + $0x1a0] sm:$0xff] %vm1105, %v1607
  %1668 = vst.msk [vmem:[%s5 + $0x1a8] sm:$0xff] %vm1105, %v1608
  %1669 = vst.msk [vmem:[%s5 + $0x1b0] sm:$0xff] %vm1105, %v1609
  %1670 = vst.msk [vmem:[%s5 + $0x1b8] sm:$0xff] %vm1105, %v1610
  %1671 = vst.msk [vmem:[%s5 + $0x1c0] sm:$0xff] %vm1105, %v1611
  %1672 = vst.msk [vmem:[%s5 + $0x1c8] sm:$0xff] %vm1105, %v1612
  %1673 = vst.msk [vmem:[%s5 + $0x1d0] sm:$0xff] %vm1105, %v1613
  %1674 = vst.msk [vmem:[%s5 + $0x1d8] sm:$0xff] %vm1105, %v1614
  // Predicated region
  $region22: #{encoder_forward.6} parent=0 // pred_check
    _
  $region23: #{encoder_forward.6} parent=0 // pred_check_branch
    %1676 = sbr.rel (0) target = $region25
  $region24: #{encoder_forward.6} parent=0 // pred_region
    _
  $region25: #{encoder_forward.6} parent=0 // pred_fallthru
    _
  // Predicated region
  $region26: #{encoder_forward.6} parent=0 // pred_check
    _
  $region27: #{encoder_forward.6} parent=0 // pred_check_branch
    %1678 = sbr.rel (0) target = $region29
  $region28: #{encoder_forward.6} parent=0 // pred_region
    _
  $region29: #{encoder_forward.6} parent=0 // pred_fallthru
    _

// kernel: encoder_forward.7
$region0: #{encoder_forward.7}
  #allocation0 [shape = 'u32[]', space=smem, size = 0x4, offset = 0x4, fixed_abs, tag = 'smem constant byte address 0x4 - core index']
  #allocation1 [shape = 'u32[144,128]{1,0:T(1,128)}', space=vmem, size = 0x12000, scoped, tag = 'internal scratch']
  %s0 = inlined_call_operand.vmem [shape: f32[98,384], index: 0, kind: input, shape index: {}]
  %s1 = inlined_call_operand.vmem [shape: f32[384,64], index: 1, kind: input, shape index: {}]
  %s2 = inlined_call_operand.vmem [shape: f32[1,64], index: 2, kind: input, shape index: {}]
  %s3 = inlined_call_operand.vmem [shape: f32[1,64], index: 3, kind: input, shape index: {}]
  %s4 = inlined_call_operand.vmem [shape: f32[1,64], index: 4, kind: input, shape index: {}]
  %s5 = inlined_call_operand.vmem [shape: f32[98,64], index: 5, kind: output, shape index: {}]
  %s6 = sld [smem:[#allocation0]]
  $region30: #{encoder_forward.7} parent=0
    _
  %s8 = ssub.s32 1, %s6
  %s9 = scalar_select 0, %s8, %s6
  // Predicated region
  $region2: #{encoder_forward.7} parent=0 // pred_check
    _
  $region3: #{encoder_forward.7} parent=0 // pred_check_branch
    %11 = sbr.rel (0) target = $region5
  $region4: #{encoder_forward.7} parent=0 // pred_region
    _
  $region5: #{encoder_forward.7} parent=0 // pred_fallthru
    _
  // Predicated region
  $region6: #{encoder_forward.7} parent=0 // pred_check
    _
  $region7: #{encoder_forward.7} parent=0 // pred_check_branch
    %13 = sbr.rel (0) target = $region9
  $region8: #{encoder_forward.7} parent=0 // pred_region
    _
  $region9: #{encoder_forward.7} parent=0 // pred_fallthru
    _
  // Predicated region
  $region10: #{encoder_forward.7} parent=0 // pred_check
    _
  $region11: #{encoder_forward.7} parent=0 // pred_check_branch
    %15 = sbr.rel (0) target = $region13
  $region12: #{encoder_forward.7} parent=0 // pred_region
    _
  $region13: #{encoder_forward.7} parent=0 // pred_fallthru
    _
  // Predicated region
  $region14: #{encoder_forward.7} parent=0 // pred_check
    _
  $region15: #{encoder_forward.7} parent=0 // pred_check_branch
    %17 = sbr.rel (0) target = $region17
  $region16: #{encoder_forward.7} parent=0 // pred_region
    _
  $region17: #{encoder_forward.7} parent=0 // pred_fallthru
    _
  // Predicated region
  $region18: #{encoder_forward.7} parent=0 // pred_check
    _
  $region19: #{encoder_forward.7} parent=0 // pred_check_branch
    %19 = sbr.rel (0) target = $region21
  $region20: #{encoder_forward.7} parent=0 // pred_region
    _
  $region21: #{encoder_forward.7} parent=0 // pred_fallthru
    _
  %v20 = vld [vmem:[%s0] sm:$0xff]
  %v21 = vld [vmem:[%s0 + $0x8] sm:$0xff]
  %v22 = vld [vmem:[%s0 + $0x10] sm:$0xff]
  %v23 = vld [vmem:[%s0 + $0x18] sm:$0xff]
  %v24 = vld [vmem:[%s0 + $0x20] sm:$0xff]
  %v25 = vld [vmem:[%s0 + $0x28] sm:$0xff]
  %v26 = vld [vmem:[%s0 + $0x30] sm:$0xff]
  %v27 = vld [vmem:[%s0 + $0x38] sm:$0xff]
  %v28 = vld [vmem:[%s0 + $0x40] sm:$0xff]
  %v29 = vld [vmem:[%s0 + $0x48] sm:$0xff]
  %v30 = vld [vmem:[%s0 + $0x50] sm:$0xff]
  %v31 = vld [vmem:[%s0 + $0x58] sm:$0xff]
  %v32 = vld [vmem:[%s0 + $0x60] sm:$0xff]
  %v33 = vld [vmem:[%s0 + $0x68] sm:$0xff]
  %v34 = vld [vmem:[%s0 + $0x70] sm:$0xff]
  %v35 = vld [vmem:[%s0 + $0x78] sm:$0xff]
  %v36 = vld [vmem:[%s0 + $0x80] sm:$0xff]
  %v37 = vld [vmem:[%s0 + $0x88] sm:$0xff]
  %v38 = vld [vmem:[%s0 + $0x90] sm:$0xff]
  %v39 = vld [vmem:[%s0 + $0x98] sm:$0xff]
  %v40 = vld [vmem:[%s0 + $0xa0] sm:$0xff]
  %v41 = vld [vmem:[%s0 + $0xa8] sm:$0xff]
  %v42 = vld [vmem:[%s0 + $0xb0] sm:$0xff]
  %v43 = vld [vmem:[%s0 + $0xb8] sm:$0xff]
  %v44 = vld [vmem:[%s0 + $0xc0] sm:$0xff]
  %v45 = vld [vmem:[%s0 + $0xc8] sm:$0xff]
  %v46 = vld [vmem:[%s0 + $0xd0] sm:$0xff]
  %v47 = vld [vmem:[%s0 + $0xd8] sm:$0xff]
  %v48 = vld [vmem:[%s0 + $0xe0] sm:$0xff]
  %v49 = vld [vmem:[%s0 + $0xe8] sm:$0xff]
  %v50 = vld [vmem:[%s0 + $0xf0] sm:$0xff]
  %v51 = vld [vmem:[%s0 + $0xf8] sm:$0xff]
  %v52 = vld [vmem:[%s0 + $0x100] sm:$0xff]
  %v53 = vld [vmem:[%s0 + $0x108] sm:$0xff]
  %v54 = vld [vmem:[%s0 + $0x110] sm:$0xff]
  %v55 = vld [vmem:[%s0 + $0x118] sm:$0xff]
  %v56 = vld [vmem:[%s0 + $0x120] sm:$0x3]
  %v57 = vld [vmem:[%s0 + $0x128] sm:$0x3]
  %v58 = vld [vmem:[%s0 + $0x130] sm:$0x3]
  %v59 = vld [vmem:[%s1] sm:$0xff]
  %v60 = vld [vmem:[%s1 + $0x8] sm:$0xff]
  %v61 = vld [vmem:[%s1 + $0x10] sm:$0xff]
  %v62 = vld [vmem:[%s1 + $0x18] sm:$0xff]
  %v63 = vld [vmem:[%s1 + $0x20] sm:$0xff]
  %v64 = vld [vmem:[%s1 + $0x28] sm:$0xff]
  %v65 = vld [vmem:[%s1 + $0x30] sm:$0xff]
  %v66 = vld [vmem:[%s1 + $0x38] sm:$0xff]
  %v67 = vld [vmem:[%s1 + $0x40] sm:$0xff]
  %v68 = vld [vmem:[%s1 + $0x48] sm:$0xff]
  %v69 = vld [vmem:[%s1 + $0x50] sm:$0xff]
  %v70 = vld [vmem:[%s1 + $0x58] sm:$0xff]
  %v71 = vld [vmem:[%s1 + $0x60] sm:$0xff]
  %v72 = vld [vmem:[%s1 + $0x68] sm:$0xff]
  %v73 = vld [vmem:[%s1 + $0x70] sm:$0xff]
  %v74 = vld [vmem:[%s1 + $0x78] sm:$0xff]
  %v75 = vld [vmem:[%s1 + $0x80] sm:$0xff]
  %v76 = vld [vmem:[%s1 + $0x88] sm:$0xff]
  %v77 = vld [vmem:[%s1 + $0x90] sm:$0xff]
  %v78 = vld [vmem:[%s1 + $0x98] sm:$0xff]
  %v79 = vld [vmem:[%s1 + $0xa0] sm:$0xff]
  %v80 = vld [vmem:[%s1 + $0xa8] sm:$0xff]
  %v81 = vld [vmem:[%s1 + $0xb0] sm:$0xff]
  %v82 = vld [vmem:[%s1 + $0xb8] sm:$0xff]
  %v83 = vld [vmem:[%s1 + $0xc0] sm:$0xff]
  %v84 = vld [vmem:[%s1 + $0xc8] sm:$0xff]
  %v85 = vld [vmem:[%s1 + $0xd0] sm:$0xff]
  %v86 = vld [vmem:[%s1 + $0xd8] sm:$0xff]
  %v87 = vld [vmem:[%s1 + $0xe0] sm:$0xff]
  %v88 = vld [vmem:[%s1 + $0xe8] sm:$0xff]
  %v89 = vld [vmem:[%s1 + $0xf0] sm:$0xff]
  %v90 = vld [vmem:[%s1 + $0xf8] sm:$0xff]
  %v91 = vld [vmem:[%s1 + $0x100] sm:$0xff]
  %v92 = vld [vmem:[%s1 + $0x108] sm:$0xff]
  %v93 = vld [vmem:[%s1 + $0x110] sm:$0xff]
  %v94 = vld [vmem:[%s1 + $0x118] sm:$0xff]
  %v95 = vld [vmem:[%s1 + $0x120] sm:$0xff]
  %v96 = vld [vmem:[%s1 + $0x128] sm:$0xff]
  %v97 = vld [vmem:[%s1 + $0x130] sm:$0xff]
  %v98 = vld [vmem:[%s1 + $0x138] sm:$0xff]
  %v99 = vld [vmem:[%s1 + $0x140] sm:$0xff]
  %v100 = vld [vmem:[%s1 + $0x148] sm:$0xff]
  %v101 = vld [vmem:[%s1 + $0x150] sm:$0xff]
  %v102 = vld [vmem:[%s1 + $0x158] sm:$0xff]
  %v103 = vld [vmem:[%s1 + $0x160] sm:$0xff]
  %v104 = vld [vmem:[%s1 + $0x168] sm:$0xff]
  %v105 = vld [vmem:[%s1 + $0x170] sm:$0xff]
  %v106 = vld [vmem:[%s1 + $0x178] sm:$0xff]
  %v107 = vld [vmem:[%s2] sm:$0x1]
  %v109 = vlaneseq
  %v110 = vshrl.u32 %v109, 7
  %v111 = vsub.s32 0, %v110
  %v112 = vrot.slane %v107, %v111
  %114 = vmatprep.subr.mxu0 0.0
  %115 = vmatpush1.msra.mxu0 %v59
  %116 = vmatprep.subr.mxu0 0.0
  %117 = vmatpush1.msra.mxu0 %v60
  %118 = vmatprep.subr.mxu0 0.0
  %119 = vmatpush1.msra.mxu0 %v61
  %120 = vmatprep.subr.mxu0 0.0
  %121 = vmatpush1.msra.mxu0 %v62
  %122 = vmatprep.subr.mxu0 0.0
  %123 = vmatpush1.msra.mxu0 %v63
  %124 = vmatprep.subr.mxu0 0.0
  %125 = vmatpush1.msra.mxu0 %v64
  %126 = vmatprep.subr.mxu0 0.0
  %127 = vmatpush1.msra.mxu0 %v65
  %128 = vmatprep.subr.mxu0 0.0
  %129 = vmatpush1.msra.mxu0 %v66
  %130 = vmatprep.subr.mxu0 0.0
  %131 = vmatpush1.msra.mxu0 %v67
  %132 = vmatprep.subr.mxu0 0.0
  %133 = vmatpush1.msra.mxu0 %v68
  %134 = vmatprep.subr.mxu0 0.0
  %135 = vmatpush1.msra.mxu0 %v69
  %136 = vmatprep.subr.mxu0 0.0
  %137 = vmatpush1.msra.mxu0 %v70
  %138 = vmatprep.subr.mxu0 0.0
  %139 = vmatpush1.msra.mxu0 %v71
  %140 = vmatprep.subr.mxu0 0.0
  %141 = vmatpush1.msra.mxu0 %v72
  %142 = vmatprep.subr.mxu0 0.0
  %143 = vmatpush1.msra.mxu0 %v73
  %144 = vmatprep.subr.mxu0 0.0
  %145 = vmatpush1.msra.mxu0 %v74
  %146 = vmatprep.subr.mxu0 0.0
  %147 = vmatpush1.msra.mxu0 %v75
  %148 = vmatprep.subr.mxu0 0.0
  %149 = vmatpush1.msra.mxu0 %v76
  %150 = vmatprep.subr.mxu0 0.0
  %151 = vmatpush1.msra.mxu0 %v77
  %152 = vmatprep.subr.mxu0 0.0
  %153 = vmatpush1.msra.mxu0 %v78
  %154 = vmatprep.subr.mxu0 0.0
  %155 = vmatpush1.msra.mxu0 %v79
  %156 = vmatprep.subr.mxu0 0.0
  %157 = vmatpush1.msra.mxu0 %v80
  %158 = vmatprep.subr.mxu0 0.0
  %159 = vmatpush1.msra.mxu0 %v81
  %160 = vmatprep.subr.mxu0 0.0
  %161 = vmatpush1.msra.mxu0 %v82
  %162 = vmatprep.subr.mxu0 0.0
  %163 = vmatpush1.msra.mxu0 %v83
  %164 = vmatprep.subr.mxu0 0.0
  %165 = vmatpush1.msra.mxu0 %v84
  %166 = vmatprep.subr.mxu0 0.0
  %167 = vmatpush1.msra.mxu0 %v85
  %168 = vmatprep.subr.mxu0 0.0
  %169 = vmatpush1.msra.mxu0 %v86
  %170 = vmatprep.subr.mxu0 0.0
  %171 = vmatpush1.msra.mxu0 %v87
  %172 = vmatprep.subr.mxu0 0.0
  %173 = vmatpush1.msra.mxu0 %v88
  %174 = vmatprep.subr.mxu0 0.0
  %175 = vmatpush1.msra.mxu0 %v89
  %176 = vmatprep.subr.mxu0 0.0
  %177 = vmatpush1.msra.mxu0 %v90
  %178 = vmatprep.mubr.f32.mxu0 %v21
  %179 = vmatmul.mubr.f32.gmra.mrb[0].mxu0 %v20
  %v180 = vpop.f32.mrb[0].mxu0
  %v181 = vadd.f32 %v112, %v180
  %v182 = vpop.f32.mrb[0].mxu0
  %183 = vmatprep.mubr.f32.mxu0 %v24
  %184 = vmatmul.mubr.f32.gmra.mrb[0].mxu0 %v23
  %v185 = vpop.f32.mrb[0].mxu0
  %v186 = vadd.f32 %v112, %v185
  %v187 = vpop.f32.mrb[0].mxu0
  %188 = vmatprep.mubr.f32.mxu0 %v27
  %189 = vmatmul.mubr.f32.gmra.mrb[0].mxu0 %v26
  %v190 = vpop.f32.mrb[0].mxu0
  %v191 = vadd.f32 %v112, %v190
  %v192 = vpop.f32.mrb[0].mxu0
  %193 = vmatprep.mubr.f32.mxu0 %v30
  %194 = vmatmul.mubr.f32.gmra.mrb[0].mxu0 %v29
  %v195 = vpop.f32.mrb[0].mxu0
  %v196 = vadd.f32 %v112, %v195
  %v197 = vpop.f32.mrb[0].mxu0
  %198 = vmatprep.mubr.f32.mxu0 %v33
  %199 = vmatmul.mubr.f32.gmra.mrb[0].mxu0 %v32
  %v200 = vpop.f32.mrb[0].mxu0
  %v201 = vadd.f32 %v112, %v200
  %v202 = vpop.f32.mrb[0].mxu0
  %203 = vmatprep.mubr.f32.mxu0 %v36
  %204 = vmatmul.mubr.f32.gmra.mrb[0].mxu0 %v35
  %v205 = vpop.f32.mrb[0].mxu0
  %v206 = vadd.f32 %v112, %v205
  %v207 = vpop.f32.mrb[0].mxu0
  %208 = vmatprep.mubr.f32.mxu0 %v39
  %209 = vmatmul.mubr.f32.gmra.mrb[0].mxu0 %v38
  %v210 = vpop.f32.mrb[0].mxu0
  %v211 = vadd.f32 %v112, %v210
  %v212 = vpop.f32.mrb[0].mxu0
  %213 = vmatprep.mubr.f32.mxu0 %v42
  %214 = vmatmul.mubr.f32.gmra.mrb[0].mxu0 %v41
  %v215 = vpop.f32.mrb[0].mxu0
  %v216 = vadd.f32 %v112, %v215
  %v217 = vpop.f32.mrb[0].mxu0
  %218 = vmatprep.mubr.f32.mxu0 %v45
  %219 = vmatmul.mubr.f32.gmra.mrb[0].mxu0 %v44
  %v220 = vpop.f32.mrb[0].mxu0
  %v221 = vadd.f32 %v112, %v220
  %v222 = vpop.f32.mrb[0].mxu0
  %223 = vmatprep.mubr.f32.mxu0 %v48
  %224 = vmatmul.mubr.f32.gmra.mrb[0].mxu0 %v47
  %v225 = vpop.f32.mrb[0].mxu0
  %v226 = vadd.f32 %v112, %v225
  %v227 = vpop.f32.mrb[0].mxu0
  %228 = vmatprep.mubr.f32.mxu0 %v51
  %229 = vmatmul.mubr.f32.gmra.mrb[0].mxu0 %v50
  %v230 = vpop.f32.mrb[0].mxu0
  %v231 = vadd.f32 %v112, %v230
  %v232 = vpop.f32.mrb[0].mxu0
  %233 = vmatprep.mubr.f32.mxu0 %v54
  %234 = vmatmul.mubr.f32.gmra.mrb[0].mxu0 %v53
  %v235 = vpop.f32.mrb[0].mxu0
  %v236 = vadd.f32 %v112, %v235
  %v237 = vpop.f32.mrb[0].mxu0
  %238 = vmatprep.mubr.f32.mxu0 %v57
  %239 = vmatmul.mubr.f32.gmra.mrb[0].mxu0 %v56
  %v240 = vpop.f32.mrb[0].mxu0
  %v241 = vadd.f32 %v112, %v240
  %v242 = vpop.f32.mrb[0].mxu0
  %243 = vdwg.mxu0
  %244 = vmatprep.subr.mxu0 0.0
  %245 = vmatpush1.msra.mxu0 %v91
  %246 = vmatprep.subr.mxu0 0.0
  %247 = vmatpush1.msra.mxu0 %v92
  %248 = vmatprep.subr.mxu0 0.0
  %249 = vmatpush1.msra.mxu0 %v93
  %250 = vmatprep.subr.mxu0 0.0
  %251 = vmatpush1.msra.mxu0 %v94
  %252 = vmatprep.subr.mxu0 0.0
  %253 = vmatpush1.msra.mxu0 %v95
  %254 = vmatprep.subr.mxu0 0.0
  %255 = vmatpush1.msra.mxu0 %v96
  %256 = vmatprep.subr.mxu0 0.0
  %257 = vmatpush1.msra.mxu0 %v97
  %258 = vmatprep.subr.mxu0 0.0
  %259 = vmatpush1.msra.mxu0 %v98
  %260 = vmatprep.subr.mxu0 0.0
  %261 = vmatpush1.msra.mxu0 %v99
  %262 = vmatprep.subr.mxu0 0.0
  %263 = vmatpush1.msra.mxu0 %v100
  %264 = vmatprep.subr.mxu0 0.0
  %265 = vmatpush1.msra.mxu0 %v101
  %266 = vmatprep.subr.mxu0 0.0
  %267 = vmatpush1.msra.mxu0 %v102
  %268 = vmatprep.subr.mxu0 0.0
  %269 = vmatpush1.msra.mxu0 %v103
  %270 = vmatprep.subr.mxu0 0.0
  %271 = vmatpush1.msra.mxu0 %v104
  %272 = vmatprep.subr.mxu0 0.0
  %273 = vmatpush1.msra.mxu0 %v105
  %274 = vmatprep.subr.mxu0 0.0
  %275 = vmatpush1.msra.mxu0 %v106
  %276 = vmatprep.subr.mxu0 0.0
  %277 = vmatpush1.msra.mxu0 0.0
  %278 = vmatprep.subr.mxu0 0.0
  %279 = vmatpush1.msra.mxu0 0.0
  %280 = vmatprep.subr.mxu0 0.0
  %281 = vmatpush1.msra.mxu0 0.0
  %282 = vmatprep.subr.mxu0 0.0
  %283 = vmatpush1.msra.mxu0 0.0
  %284 = vmatprep.subr.mxu0 0.0
  %285 = vmatpush1.msra.mxu0 0.0
  %286 = vmatprep.subr.mxu0 0.0
  %287 = vmatpush1.msra.mxu0 0.0
  %288 = vmatprep.subr.mxu0 0.0
  %289 = vmatpush1.msra.mxu0 0.0
  %290 = vmatprep.subr.mxu0 0.0
  %291 = vmatpush1.msra.mxu0 0.0
  %292 = vmatprep.subr.mxu0 0.0
  %293 = vmatpush1.msra.mxu0 0.0
  %294 = vmatprep.subr.mxu0 0.0
  %295 = vmatpush1.msra.mxu0 0.0
  %296 = vmatprep.subr.mxu0 0.0
  %297 = vmatpush1.msra.mxu0 0.0
  %298 = vmatprep.subr.mxu0 0.0
  %299 = vmatpush1.msra.mxu0 0.0
  %300 = vmatprep.subr.mxu0 0.0
  %301 = vmatpush1.msra.mxu0 0.0
  %302 = vmatprep.subr.mxu0 0.0
  %303 = vmatpush1.msra.mxu0 0.0
  %304 = vmatprep.subr.mxu0 0.0
  %305 = vmatpush1.msra.mxu0 0.0
  %306 = vmatprep.subr.mxu0 0.0
  %307 = vmatpush1.msra.mxu0 0.0
  %308 = vmatprep.mubr.f32.mxu0 0.0
  %309 = vmatmul.mubr.f32.gmra.mrb[0].mxu0 %v22
  %v310 = vpop.f32.mrb[0].mxu0
  %v311 = vadd.f32 %v181, %v310
  %v312 = vpop.f32.mrb[0].mxu0
  %313 = vmatprep.mubr.f32.mxu0 0.0
  %314 = vmatmul.mubr.f32.gmra.mrb[0].mxu0 %v25
  %v315 = vpop.f32.mrb[0].mxu0
  %v316 = vadd.f32 %v186, %v315
  %v317 = vpop.f32.mrb[0].mxu0
  %318 = vmatprep.mubr.f32.mxu0 0.0
  %319 = vmatmul.mubr.f32.gmra.mrb[0].mxu0 %v28
  %v320 = vpop.f32.mrb[0].mxu0
  %v321 = vadd.f32 %v191, %v320
  %v322 = vpop.f32.mrb[0].mxu0
  %323 = vmatprep.mubr.f32.mxu0 0.0
  %324 = vmatmul.mubr.f32.gmra.mrb[0].mxu0 %v31
  %v325 = vpop.f32.mrb[0].mxu0
  %v326 = vadd.f32 %v196, %v325
  %v327 = vpop.f32.mrb[0].mxu0
  %328 = vmatprep.mubr.f32.mxu0 0.0
  %329 = vmatmul.mubr.f32.gmra.mrb[0].mxu0 %v34
  %v330 = vpop.f32.mrb[0].mxu0
  %v331 = vadd.f32 %v201, %v330
  %v332 = vpop.f32.mrb[0].mxu0
  %333 = vmatprep.mubr.f32.mxu0 0.0
  %334 = vmatmul.mubr.f32.gmra.mrb[0].mxu0 %v37
  %v335 = vpop.f32.mrb[0].mxu0
  %v336 = vadd.f32 %v206, %v335
  %v337 = vpop.f32.mrb[0].mxu0
  %338 = vmatprep.mubr.f32.mxu0 0.0
  %339 = vmatmul.mubr.f32.gmra.mrb[0].mxu0 %v40
  %v340 = vpop.f32.mrb[0].mxu0
  %v341 = vadd.f32 %v211, %v340
  %v342 = vpop.f32.mrb[0].mxu0
  %343 = vmatprep.mubr.f32.mxu0 0.0
  %344 = vmatmul.mubr.f32.gmra.mrb[0].mxu0 %v43
  %v345 = vpop.f32.mrb[0].mxu0
  %v346 = vadd.f32 %v216, %v345
  %v347 = vpop.f32.mrb[0].mxu0
  %348 = vmatprep.mubr.f32.mxu0 0.0
  %349 = vmatmul.mubr.f32.gmra.mrb[0].mxu0 %v46
  %v350 = vpop.f32.mrb[0].mxu0
  %v351 = vadd.f32 %v221, %v350
  %v352 = vpop.f32.mrb[0].mxu0
  %353 = vmatprep.mubr.f32.mxu0 0.0
  %354 = vmatmul.mubr.f32.gmra.mrb[0].mxu0 %v49
  %v355 = vpop.f32.mrb[0].mxu0
  %v356 = vadd.f32 %v226, %v355
  %v357 = vpop.f32.mrb[0].mxu0
  %358 = vmatprep.mubr.f32.mxu0 0.0
  %359 = vmatmul.mubr.f32.gmra.mrb[0].mxu0 %v52
  %v360 = vpop.f32.mrb[0].mxu0
  %v361 = vadd.f32 %v231, %v360
  %v362 = vpop.f32.mrb[0].mxu0
  %363 = vmatprep.mubr.f32.mxu0 0.0
  %364 = vmatmul.mubr.f32.gmra.mrb[0].mxu0 %v55
  %v365 = vpop.f32.mrb[0].mxu0
  %v366 = vadd.f32 %v236, %v365
  %v367 = vpop.f32.mrb[0].mxu0
  %368 = vmatprep.mubr.f32.mxu0 0.0
  %369 = vmatmul.mubr.f32.gmra.mrb[0].mxu0 %v58
  %v370 = vpop.f32.mrb[0].mxu0
  %v371 = vadd.f32 %v241, %v370
  %v372 = vpop.f32.mrb[0].mxu0
  %373 = vdwg.mxu0
  %v374 = vmul.f32 %v311, 0.1
  %v375 = vmul.f32 %v316, 0.1
  %v376 = vmul.f32 %v321, 0.1
  %v377 = vmul.f32 %v326, 0.1
  %v378 = vmul.f32 %v331, 0.1
  %v379 = vmul.f32 %v336, 0.1
  %v380 = vmul.f32 %v341, 0.1
  %v381 = vmul.f32 %v346, 0.1
  %v382 = vmul.f32 %v351, 0.1
  %v383 = vmul.f32 %v356, 0.1
  %v384 = vmul.f32 %v361, 0.1
  %v385 = vmul.f32 %v366, 0.1
  %v386 = vmul.f32 %v371, 0.1
  %v387 = vmax.f32 %v311, %v374
  %v388 = vmax.f32 %v316, %v375
  %v389 = vmax.f32 %v321, %v376
  %v390 = vmax.f32 %v326, %v377
  %v391 = vmax.f32 %v331, %v378
  %v392 = vmax.f32 %v336, %v379
  %v393 = vmax.f32 %v341, %v380
  %v394 = vmax.f32 %v346, %v381
  %v395 = vmax.f32 %v351, %v382
  %v396 = vmax.f32 %v356, %v383
  %v397 = vmax.f32 %v361, %v384
  %v398 = vmax.f32 %v366, %v385
  %v399 = vmax.f32 %v371, %v386
  %vm400 = vcmask 523264
  %v401 = vsel %vm400, %v387, 0.0
  %v402 = vsel %vm400, %v388, 0.0
  %v403 = vadd.f32 %v401, %v402
  %v404 = vsel %vm400, %v389, 0.0
  %v405 = vadd.f32 %v403, %v404
  %v406 = vsel %vm400, %v390, 0.0
  %v407 = vadd.f32 %v405, %v406
  %v408 = vsel %vm400, %v391, 0.0
  %v409 = vadd.f32 %v407, %v408
  %v410 = vsel %vm400, %v392, 0.0
  %v411 = vadd.f32 %v409, %v410
  %v412 = vsel %vm400, %v393, 0.0
  %v413 = vadd.f32 %v411, %v412
  %v414 = vsel %vm400, %v394, 0.0
  %v415 = vadd.f32 %v413, %v414
  %v416 = vsel %vm400, %v395, 0.0
  %v417 = vadd.f32 %v415, %v416
  %v418 = vsel %vm400, %v396, 0.0
  %v419 = vadd.f32 %v417, %v418
  %v420 = vsel %vm400, %v397, 0.0
  %v421 = vadd.f32 %v419, %v420
  %v422 = vsel %vm400, %v398, 0.0
  %v423 = vadd.f32 %v421, %v422
  %vm424 = vcmask 517120
  %v425 = vsel %vm424, %v399, 0.0
  %v426 = vadd.f32 %v423, %v425
  %v427 = vrot.slane %v426, 4
  %v428 = vadd.f32 %v426, %v427
  %v429 = vrot.slane %v428, 2
  %v430 = vadd.f32 %v428, %v429
  %v431 = vrot.slane %v430, 1
  %v432 = vadd.f32 %v430, %v431
  %v433 = vmul.f32 %v432, 0.010204081
  %v434 = vmul.f32 %v387, %v387
  %v435 = vmul.f32 %v388, %v388
  %v436 = vmul.f32 %v389, %v389
  %v437 = vmul.f32 %v390, %v390
  %v438 = vmul.f32 %v391, %v391
  %v439 = vmul.f32 %v392, %v392
  %v440 = vmul.f32 %v393, %v393
  %v441 = vmul.f32 %v394, %v394
  %v442 = vmul.f32 %v395, %v395
  %v443 = vmul.f32 %v396, %v396
  %v444 = vmul.f32 %v397, %v397
  %v445 = vmul.f32 %v398, %v398
  %v446 = vmul.f32 %v399, %v399
  %v447 = vsel %vm400, %v434, 0.0
  %v448 = vsel %vm400, %v435, 0.0
  %v449 = vadd.f32 %v447, %v448
  %v450 = vsel %vm400, %v436, 0.0
  %v451 = vadd.f32 %v449, %v450
  %v452 = vsel %vm400, %v437, 0.0
  %v453 = vadd.f32 %v451, %v452
  %v454 = vsel %vm400, %v438, 0.0
  %v455 = vadd.f32 %v453, %v454
  %v456 = vsel %vm400, %v439, 0.0
  %v457 = vadd.f32 %v455, %v456
  %v458 = vsel %vm400, %v440, 0.0
  %v459 = vadd.f32 %v457, %v458
  %v460 = vsel %vm400, %v441, 0.0
  %v461 = vadd.f32 %v459, %v460
  %v462 = vsel %vm400, %v442, 0.0
  %v463 = vadd.f32 %v461, %v462
  %v464 = vsel %vm400, %v443, 0.0
  %v465 = vadd.f32 %v463, %v464
  %v466 = vsel %vm400, %v444, 0.0
  %v467 = vadd.f32 %v465, %v466
  %v468 = vsel %vm400, %v445, 0.0
  %v469 = vadd.f32 %v467, %v468
  %v470 = vsel %vm424, %v446, 0.0
  %v471 = vadd.f32 %v469, %v470
  %v472 = vrot.slane %v471, 4
  %v473 = vadd.f32 %v471, %v472
  %v474 = vrot.slane %v473, 2
  %v475 = vadd.f32 %v473, %v474
  %v476 = vrot.slane %v475, 1
  %v477 = vadd.f32 %v475, %v476
  %v478 = vmul.f32 %v477, 0.010204081
  %v479 = vmul.f32 %v433, %v433
  %v480 = vsub.f32 %v478, %v479
  %v481 = vadd.f32 %v480, 1e-05
  %v482 = vrsqrt.pop %v481
  %v483 = vsub.f32 %v387, %v433
  %v484 = vsub.f32 %v388, %v433
  %v485 = vsub.f32 %v389, %v433
  %v486 = vsub.f32 %v390, %v433
  %v487 = vsub.f32 %v391, %v433
  %v488 = vsub.f32 %v392, %v433
  %v489 = vsub.f32 %v393, %v433
  %v490 = vsub.f32 %v394, %v433
  %v491 = vsub.f32 %v395, %v433
  %v492 = vsub.f32 %v396, %v433
  %v493 = vsub.f32 %v397, %v433
  %v494 = vsub.f32 %v398, %v433
  %v495 = vsub.f32 %v399, %v433
  %v496 = vld [vmem:[%s3] sm:$0x1]
  %v497 = vmul.f32 %v482, %v496
  %v498 = vlaneseq
  %v499 = vshrl.u32 %v498, 7
  %v500 = vsub.s32 0, %v499
  %v501 = vrot.slane %v497, %v500
  %v502 = vmul.f32 %v483, %v501
  %v503 = vmul.f32 %v484, %v501
  %v504 = vmul.f32 %v485, %v501
  %v505 = vmul.f32 %v486, %v501
  %v506 = vmul.f32 %v487, %v501
  %v507 = vmul.f32 %v488, %v501
  %v508 = vmul.f32 %v489, %v501
  %v509 = vmul.f32 %v490, %v501
  %v510 = vmul.f32 %v491, %v501
  %v511 = vmul.f32 %v492, %v501
  %v512 = vmul.f32 %v493, %v501
  %v513 = vmul.f32 %v494, %v501
  %v514 = vmul.f32 %v495, %v501
  %v515 = vld [vmem:[%s4] sm:$0x1]
  %v517 = vlaneseq
  %v518 = vshrl.u32 %v517, 7
  %v519 = vsub.s32 0, %v518
  %v520 = vrot.slane %v515, %v519
  %v522 = vadd.f32 %v502, %v520
  %v523 = vadd.f32 %v503, %v520
  %v524 = vadd.f32 %v504, %v520
  %v525 = vadd.f32 %v505, %v520
  %v526 = vadd.f32 %v506, %v520
  %v527 = vadd.f32 %v507, %v520
  %v528 = vadd.f32 %v508, %v520
  %v529 = vadd.f32 %v509, %v520
  %v530 = vadd.f32 %v510, %v520
  %v531 = vadd.f32 %v511, %v520
  %v532 = vadd.f32 %v512, %v520
  %v533 = vadd.f32 %v513, %v520
  %v534 = vadd.f32 %v514, %v520
  %535 = vst.msk [vmem:[%s5] sm:$0xff] %vm400, %v522
  %536 = vst.msk [vmem:[%s5 + $0x8] sm:$0xff] %vm400, %v523
  %537 = vst.msk [vmem:[%s5 + $0x10] sm:$0xff] %vm400, %v524
  %538 = vst.msk [vmem:[%s5 + $0x18] sm:$0xff] %vm400, %v525
  %539 = vst.msk [vmem:[%s5 + $0x20] sm:$0xff] %vm400, %v526
  %540 = vst.msk [vmem:[%s5 + $0x28] sm:$0xff] %vm400, %v527
  %541 = vst.msk [vmem:[%s5 + $0x30] sm:$0xff] %vm400, %v528
  %542 = vst.msk [vmem:[%s5 + $0x38] sm:$0xff] %vm400, %v529
  %543 = vst.msk [vmem:[%s5 + $0x40] sm:$0xff] %vm400, %v530
  %544 = vst.msk [vmem:[%s5 + $0x48] sm:$0xff] %vm400, %v531
  %545 = vst.msk [vmem:[%s5 + $0x50] sm:$0xff] %vm400, %v532
  %546 = vst.msk [vmem:[%s5 + $0x58] sm:$0xff] %vm400, %v533
  %547 = vst.msk [vmem:[%s5 + $0x60] sm:$0x3] %vm424, %v534
  // Predicated region
  $region22: #{encoder_forward.7} parent=0 // pred_check
    _
  $region23: #{encoder_forward.7} parent=0 // pred_check_branch
    %549 = sbr.rel (0) target = $region25
  $region24: #{encoder_forward.7} parent=0 // pred_region
    _
  $region25: #{encoder_forward.7} parent=0 // pred_fallthru
    _
  // Predicated region
  $region26: #{encoder_forward.7} parent=0 // pred_check
    _
  $region27: #{encoder_forward.7} parent=0 // pred_check_branch
    %551 = sbr.rel (0) target = $region29
  $region28: #{encoder_forward.7} parent=0 // pred_region
    _
  $region29: #{encoder_forward.7} parent=0 // pred_fallthru
    _

// kernel: encoder_forward.8
$region0: #{encoder_forward.8}
  #allocation0 [shape = 'u32[]', space=smem, size = 0x4, offset = 0x4, fixed_abs, tag = 'smem constant byte address 0x4 - core index']
  #allocation1 [shape = 'u32[144,128]{1,0:T(1,128)}', space=vmem, size = 0x12000, scoped, tag = 'internal scratch']
  %s0 = inlined_call_operand.vmem [shape: f32[18,1024], index: 0, kind: input, shape index: {}]
  %s1 = inlined_call_operand.vmem [shape: f32[1024,128], index: 1, kind: input, shape index: {}]
  %s2 = inlined_call_operand.vmem [shape: f32[1,128], index: 2, kind: input, shape index: {}]
  %s3 = inlined_call_operand.vmem [shape: f32[1,128], index: 3, kind: input, shape index: {}]
  %s4 = inlined_call_operand.vmem [shape: f32[1,128], index: 4, kind: input, shape index: {}]
  %s5 = inlined_call_operand.vmem [shape: f32[18,128], index: 5, kind: output, shape index: {}]
  %s6 = sld [smem:[#allocation0]]
  $region30: #{encoder_forward.8} parent=0
    _
  %s8 = ssub.s32 1, %s6
  %s9 = scalar_select 0, %s8, %s6
  // Predicated region
  $region2: #{encoder_forward.8} parent=0 // pred_check
    _
  $region3: #{encoder_forward.8} parent=0 // pred_check_branch
    %11 = sbr.rel (0) target = $region5
  $region4: #{encoder_forward.8} parent=0 // pred_region
    _
  $region5: #{encoder_forward.8} parent=0 // pred_fallthru
    _
  // Predicated region
  $region6: #{encoder_forward.8} parent=0 // pred_check
    _
  $region7: #{encoder_forward.8} parent=0 // pred_check_branch
    %13 = sbr.rel (0) target = $region9
  $region8: #{encoder_forward.8} parent=0 // pred_region
    _
  $region9: #{encoder_forward.8} parent=0 // pred_fallthru
    _
  // Predicated region
  $region10: #{encoder_forward.8} parent=0 // pred_check
    _
  $region11: #{encoder_forward.8} parent=0 // pred_check_branch
    %15 = sbr.rel (0) target = $region13
  $region12: #{encoder_forward.8} parent=0 // pred_region
    _
  $region13: #{encoder_forward.8} parent=0 // pred_fallthru
    _
  // Predicated region
  $region14: #{encoder_forward.8} parent=0 // pred_check
    _
  $region15: #{encoder_forward.8} parent=0 // pred_check_branch
    %17 = sbr.rel (0) target = $region17
  $region16: #{encoder_forward.8} parent=0 // pred_region
    _
  $region17: #{encoder_forward.8} parent=0 // pred_fallthru
    _
  // Predicated region
  $region18: #{encoder_forward.8} parent=0 // pred_check
    _
  $region19: #{encoder_forward.8} parent=0 // pred_check_branch
    %19 = sbr.rel (0) target = $region21
  $region20: #{encoder_forward.8} parent=0 // pred_region
    _
  $region21: #{encoder_forward.8} parent=0 // pred_fallthru
    _
  %v20 = vld [vmem:[%s0] sm:$0xff]
  %v21 = vld [vmem:[%s0 + $0x8] sm:$0xff]
  %v22 = vld [vmem:[%s0 + $0x10] sm:$0xff]
  %v23 = vld [vmem:[%s0 + $0x18] sm:$0xff]
  %v24 = vld [vmem:[%s0 + $0x20] sm:$0xff]
  %v25 = vld [vmem:[%s0 + $0x28] sm:$0xff]
  %v26 = vld [vmem:[%s0 + $0x30] sm:$0xff]
  %v27 = vld [vmem:[%s0 + $0x38] sm:$0xff]
  %v28 = vld [vmem:[%s0 + $0x40] sm:$0xff]
  %v29 = vld [vmem:[%s0 + $0x48] sm:$0xff]
  %v30 = vld [vmem:[%s0 + $0x50] sm:$0xff]
  %v31 = vld [vmem:[%s0 + $0x58] sm:$0xff]
  %v32 = vld [vmem:[%s0 + $0x60] sm:$0xff]
  %v33 = vld [vmem:[%s0 + $0x68] sm:$0xff]
  %v34 = vld [vmem:[%s0 + $0x70] sm:$0xff]
  %v35 = vld [vmem:[%s0 + $0x78] sm:$0xff]
  %v36 = vld [vmem:[%s0 + $0x80] sm:$0x3]
  %v37 = vld [vmem:[%s0 + $0x88] sm:$0x3]
  %v38 = vld [vmem:[%s0 + $0x90] sm:$0x3]
  %v39 = vld [vmem:[%s0 + $0x98] sm:$0x3]
  %v40 = vld [vmem:[%s0 + $0xa0] sm:$0x3]
  %v41 = vld [vmem:[%s0 + $0xa8] sm:$0x3]
  %v42 = vld [vmem:[%s0 + $0xb0] sm:$0x3]
  %v43 = vld [vmem:[%s0 + $0xb8] sm:$0x3]
  %v44 = vld [vmem:[%s1] sm:$0xff]
  %v45 = vld [vmem:[%s1 + $0x8] sm:$0xff]
  %v46 = vld [vmem:[%s1 + $0x10] sm:$0xff]
  %v47 = vld [vmem:[%s1 + $0x18] sm:$0xff]
  %v48 = vld [vmem:[%s1 + $0x20] sm:$0xff]
  %v49 = vld [vmem:[%s1 + $0x28] sm:$0xff]
  %v50 = vld [vmem:[%s1 + $0x30] sm:$0xff]
  %v51 = vld [vmem:[%s1 + $0x38] sm:$0xff]
  %v52 = vld [vmem:[%s1 + $0x40] sm:$0xff]
  %v53 = vld [vmem:[%s1 + $0x48] sm:$0xff]
  %v54 = vld [vmem:[%s1 + $0x50] sm:$0xff]
  %v55 = vld [vmem:[%s1 + $0x58] sm:$0xff]
  %v56 = vld [vmem:[%s1 + $0x60] sm:$0xff]
  %v57 = vld [vmem:[%s1 + $0x68] sm:$0xff]
  %v58 = vld [vmem:[%s1 + $0x70] sm:$0xff]
  %v59 = vld [vmem:[%s1 + $0x78] sm:$0xff]
  %v60 = vld [vmem:[%s1 + $0x80] sm:$0xff]
  %v61 = vld [vmem:[%s1 + $0x88] sm:$0xff]
  %v62 = vld [vmem:[%s1 + $0x90] sm:$0xff]
  %v63 = vld [vmem:[%s1 + $0x98] sm:$0xff]
  %v64 = vld [vmem:[%s1 + $0xa0] sm:$0xff]
  %v65 = vld [vmem:[%s1 + $0xa8] sm:$0xff]
  %v66 = vld [vmem:[%s1 + $0xb0] sm:$0xff]
  %v67 = vld [vmem:[%s1 + $0xb8] sm:$0xff]
  %v68 = vld [vmem:[%s1 + $0xc0] sm:$0xff]
  %v69 = vld [vmem:[%s1 + $0xc8] sm:$0xff]
  %v70 = vld [vmem:[%s1 + $0xd0] sm:$0xff]
  %v71 = vld [vmem:[%s1 + $0xd8] sm:$0xff]
  %v72 = vld [vmem:[%s1 + $0xe0] sm:$0xff]
  %v73 = vld [vmem:[%s1 + $0xe8] sm:$0xff]
  %v74 = vld [vmem:[%s1 + $0xf0] sm:$0xff]
  %v75 = vld [vmem:[%s1 + $0xf8] sm:$0xff]
  %v76 = vld [vmem:[%s1 + $0x100] sm:$0xff]
  %v77 = vld [vmem:[%s1 + $0x108] sm:$0xff]
  %v78 = vld [vmem:[%s1 + $0x110] sm:$0xff]
  %v79 = vld [vmem:[%s1 + $0x118] sm:$0xff]
  %v80 = vld [vmem:[%s1 + $0x120] sm:$0xff]
  %v81 = vld [vmem:[%s1 + $0x128] sm:$0xff]
  %v82 = vld [vmem:[%s1 + $0x130] sm:$0xff]
  %v83 = vld [vmem:[%s1 + $0x138] sm:$0xff]
  %v84 = vld [vmem:[%s1 + $0x140] sm:$0xff]
  %v85 = vld [vmem:[%s1 + $0x148] sm:$0xff]
  %v86 = vld [vmem:[%s1 + $0x150] sm:$0xff]
  %v87 = vld [vmem:[%s1 + $0x158] sm:$0xff]
  %v88 = vld [vmem:[%s1 + $0x160] sm:$0xff]
  %v89 = vld [vmem:[%s1 + $0x168] sm:$0xff]
  %v90 = vld [vmem:[%s1 + $0x170] sm:$0xff]
  %v91 = vld [vmem:[%s1 + $0x178] sm:$0xff]
  %v92 = vld [vmem:[%s1 + $0x180] sm:$0xff]
  %v93 = vld [vmem:[%s1 + $0x188] sm:$0xff]
  %v94 = vld [vmem:[%s1 + $0x190] sm:$0xff]
  %v95 = vld [vmem:[%s1 + $0x198] sm:$0xff]
  %v96 = vld [vmem:[%s1 + $0x1a0] sm:$0xff]
  %v97 = vld [vmem:[%s1 + $0x1a8] sm:$0xff]
  %v98 = vld [vmem:[%s1 + $0x1b0] sm:$0xff]
  %v99 = vld [vmem:[%s1 + $0x1b8] sm:$0xff]
  %v100 = vld [vmem:[%s1 + $0x1c0] sm:$0xff]
  %v101 = vld [vmem:[%s1 + $0x1c8] sm:$0xff]
  %v102 = vld [vmem:[%s1 + $0x1d0] sm:$0xff]
  %v103 = vld [vmem:[%s1 + $0x1d8] sm:$0xff]
  %v104 = vld [vmem:[%s1 + $0x1e0] sm:$0xff]
  %v105 = vld [vmem:[%s1 + $0x1e8] sm:$0xff]
  %v106 = vld [vmem:[%s1 + $0x1f0] sm:$0xff]
  %v107 = vld [vmem:[%s1 + $0x1f8] sm:$0xff]
  %v108 = vld [vmem:[%s1 + $0x200] sm:$0xff]
  %v109 = vld [vmem:[%s1 + $0x208] sm:$0xff]
  %v110 = vld [vmem:[%s1 + $0x210] sm:$0xff]
  %v111 = vld [vmem:[%s1 + $0x218] sm:$0xff]
  %v112 = vld [vmem:[%s1 + $0x220] sm:$0xff]
  %v113 = vld [vmem:[%s1 + $0x228] sm:$0xff]
  %v114 = vld [vmem:[%s1 + $0x230] sm:$0xff]
  %v115 = vld [vmem:[%s1 + $0x238] sm:$0xff]
  %v116 = vld [vmem:[%s1 + $0x240] sm:$0xff]
  %v117 = vld [vmem:[%s1 + $0x248] sm:$0xff]
  %v118 = vld [vmem:[%s1 + $0x250] sm:$0xff]
  %v119 = vld [vmem:[%s1 + $0x258] sm:$0xff]
  %v120 = vld [vmem:[%s1 + $0x260] sm:$0xff]
  %v121 = vld [vmem:[%s1 + $0x268] sm:$0xff]
  %v122 = vld [vmem:[%s1 + $0x270] sm:$0xff]
  %v123 = vld [vmem:[%s1 + $0x278] sm:$0xff]
  %v124 = vld [vmem:[%s1 + $0x280] sm:$0xff]
  %v125 = vld [vmem:[%s1 + $0x288] sm:$0xff]
  %v126 = vld [vmem:[%s1 + $0x290] sm:$0xff]
  %v127 = vld [vmem:[%s1 + $0x298] sm:$0xff]
  %v128 = vld [vmem:[%s1 + $0x2a0] sm:$0xff]
  %v129 = vld [vmem:[%s1 + $0x2a8] sm:$0xff]
  %v130 = vld [vmem:[%s1 + $0x2b0] sm:$0xff]
  %v131 = vld [vmem:[%s1 + $0x2b8] sm:$0xff]
  %v132 = vld [vmem:[%s1 + $0x2c0] sm:$0xff]
  %v133 = vld [vmem:[%s1 + $0x2c8] sm:$0xff]
  %v134 = vld [vmem:[%s1 + $0x2d0] sm:$0xff]
  %v135 = vld [vmem:[%s1 + $0x2d8] sm:$0xff]
  %v136 = vld [vmem:[%s1 + $0x2e0] sm:$0xff]
  %v137 = vld [vmem:[%s1 + $0x2e8] sm:$0xff]
  %v138 = vld [vmem:[%s1 + $0x2f0] sm:$0xff]
  %v139 = vld [vmem:[%s1 + $0x2f8] sm:$0xff]
  %v140 = vld [vmem:[%s1 + $0x300] sm:$0xff]
  %v141 = vld [vmem:[%s1 + $0x308] sm:$0xff]
  %v142 = vld [vmem:[%s1 + $0x310] sm:$0xff]
  %v143 = vld [vmem:[%s1 + $0x318] sm:$0xff]
  %v144 = vld [vmem:[%s1 + $0x320] sm:$0xff]
  %v145 = vld [vmem:[%s1 + $0x328] sm:$0xff]
  %v146 = vld [vmem:[%s1 + $0x330] sm:$0xff]
  %v147 = vld [vmem:[%s1 + $0x338] sm:$0xff]
  %v148 = vld [vmem:[%s1 + $0x340] sm:$0xff]
  %v149 = vld [vmem:[%s1 + $0x348] sm:$0xff]
  %v150 = vld [vmem:[%s1 + $0x350] sm:$0xff]
  %v151 = vld [vmem:[%s1 + $0x358] sm:$0xff]
  %v152 = vld [vmem:[%s1 + $0x360] sm:$0xff]
  %v153 = vld [vmem:[%s1 + $0x368] sm:$0xff]
  %v154 = vld [vmem:[%s1 + $0x370] sm:$0xff]
  %v155 = vld [vmem:[%s1 + $0x378] sm:$0xff]
  %v156 = vld [vmem:[%s1 + $0x380] sm:$0xff]
  %v157 = vld [vmem:[%s1 + $0x388] sm:$0xff]
  %v158 = vld [vmem:[%s1 + $0x390] sm:$0xff]
  %v159 = vld [vmem:[%s1 + $0x398] sm:$0xff]
  %v160 = vld [vmem:[%s1 + $0x3a0] sm:$0xff]
  %v161 = vld [vmem:[%s1 + $0x3a8] sm:$0xff]
  %v162 = vld [vmem:[%s1 + $0x3b0] sm:$0xff]
  %v163 = vld [vmem:[%s1 + $0x3b8] sm:$0xff]
  %v164 = vld [vmem:[%s1 + $0x3c0] sm:$0xff]
  %v165 = vld [vmem:[%s1 + $0x3c8] sm:$0xff]
  %v166 = vld [vmem:[%s1 + $0x3d0] sm:$0xff]
  %v167 = vld [vmem:[%s1 + $0x3d8] sm:$0xff]
  %v168 = vld [vmem:[%s1 + $0x3e0] sm:$0xff]
  %v169 = vld [vmem:[%s1 + $0x3e8] sm:$0xff]
  %v170 = vld [vmem:[%s1 + $0x3f0] sm:$0xff]
  %v171 = vld [vmem:[%s1 + $0x3f8] sm:$0xff]
  %v172 = vld [vmem:[%s2] sm:$0x1]
  %v174 = vlaneseq
  %v175 = vshrl.u32 %v174, 7
  %v176 = vsub.s32 0, %v175
  %v177 = vrot.slane %v172, %v176
  %179 = vmatprep.subr.mxu0 0.0
  %180 = vmatpush1.msra.mxu0 %v44
  %181 = vmatprep.subr.mxu0 0.0
  %182 = vmatpush1.msra.mxu0 %v45
  %183 = vmatprep.subr.mxu0 0.0
  %184 = vmatpush1.msra.mxu0 %v46
  %185 = vmatprep.subr.mxu0 0.0
  %186 = vmatpush1.msra.mxu0 %v47
  %187 = vmatprep.subr.mxu0 0.0
  %188 = vmatpush1.msra.mxu0 %v48
  %189 = vmatprep.subr.mxu0 0.0
  %190 = vmatpush1.msra.mxu0 %v49
  %191 = vmatprep.subr.mxu0 0.0
  %192 = vmatpush1.msra.mxu0 %v50
  %193 = vmatprep.subr.mxu0 0.0
  %194 = vmatpush1.msra.mxu0 %v51
  %195 = vmatprep.subr.mxu0 0.0
  %196 = vmatpush1.msra.mxu0 %v52
  %197 = vmatprep.subr.mxu0 0.0
  %198 = vmatpush1.msra.mxu0 %v53
  %199 = vmatprep.subr.mxu0 0.0
  %200 = vmatpush1.msra.mxu0 %v54
  %201 = vmatprep.subr.mxu0 0.0
  %202 = vmatpush1.msra.mxu0 %v55
  %203 = vmatprep.subr.mxu0 0.0
  %204 = vmatpush1.msra.mxu0 %v56
  %205 = vmatprep.subr.mxu0 0.0
  %206 = vmatpush1.msra.mxu0 %v57
  %207 = vmatprep.subr.mxu0 0.0
  %208 = vmatpush1.msra.mxu0 %v58
  %209 = vmatprep.subr.mxu0 0.0
  %210 = vmatpush1.msra.mxu0 %v59
  %211 = vmatprep.subr.mxu0 0.0
  %212 = vmatpush1.msra.mxu0 %v60
  %213 = vmatprep.subr.mxu0 0.0
  %214 = vmatpush1.msra.mxu0 %v61
  %215 = vmatprep.subr.mxu0 0.0
  %216 = vmatpush1.msra.mxu0 %v62
  %217 = vmatprep.subr.mxu0 0.0
  %218 = vmatpush1.msra.mxu0 %v63
  %219 = vmatprep.subr.mxu0 0.0
  %220 = vmatpush1.msra.mxu0 %v64
  %221 = vmatprep.subr.mxu0 0.0
  %222 = vmatpush1.msra.mxu0 %v65
  %223 = vmatprep.subr.mxu0 0.0
  %224 = vmatpush1.msra.mxu0 %v66
  %225 = vmatprep.subr.mxu0 0.0
  %226 = vmatpush1.msra.mxu0 %v67
  %227 = vmatprep.subr.mxu0 0.0
  %228 = vmatpush1.msra.mxu0 %v68
  %229 = vmatprep.subr.mxu0 0.0
  %230 = vmatpush1.msra.mxu0 %v69
  %231 = vmatprep.subr.mxu0 0.0
  %232 = vmatpush1.msra.mxu0 %v70
  %233 = vmatprep.subr.mxu0 0.0
  %234 = vmatpush1.msra.mxu0 %v71
  %235 = vmatprep.subr.mxu0 0.0
  %236 = vmatpush1.msra.mxu0 %v72
  %237 = vmatprep.subr.mxu0 0.0
  %238 = vmatpush1.msra.mxu0 %v73
  %239 = vmatprep.subr.mxu0 0.0
  %240 = vmatpush1.msra.mxu0 %v74
  %241 = vmatprep.subr.mxu0 0.0
  %242 = vmatpush1.msra.mxu0 %v75
  %243 = vmatprep.mubr.f32.mxu0 %v21
  %244 = vmatmul.mubr.f32.gmra.mrb[0].mxu0 %v20
  %v245 = vpop.f32.mrb[0].mxu0
  %v246 = vadd.f32 %v177, %v245
  %v247 = vpop.f32.mrb[0].mxu0
  %248 = vmatprep.mubr.f32.mxu0 %v29
  %249 = vmatmul.mubr.f32.gmra.mrb[0].mxu0 %v28
  %v250 = vpop.f32.mrb[0].mxu0
  %v251 = vadd.f32 %v177, %v250
  %v252 = vpop.f32.mrb[0].mxu0
  %253 = vmatprep.mubr.f32.mxu0 %v37
  %254 = vmatmul.mubr.f32.gmra.mrb[0].mxu0 %v36
  %v255 = vpop.f32.mrb[0].mxu0
  %v256 = vadd.f32 %v177, %v255
  %v257 = vpop.f32.mrb[0].mxu0
  %258 = vdwg.mxu0
  %259 = vmatprep.subr.mxu0 0.0
  %260 = vmatpush1.msra.mxu0 %v76
  %261 = vmatprep.subr.mxu0 0.0
  %262 = vmatpush1.msra.mxu0 %v77
  %263 = vmatprep.subr.mxu0 0.0
  %264 = vmatpush1.msra.mxu0 %v78
  %265 = vmatprep.subr.mxu0 0.0
  %266 = vmatpush1.msra.mxu0 %v79
  %267 = vmatprep.subr.mxu0 0.0
  %268 = vmatpush1.msra.mxu0 %v80
  %269 = vmatprep.subr.mxu0 0.0
  %270 = vmatpush1.msra.mxu0 %v81
  %271 = vmatprep.subr.mxu0 0.0
  %272 = vmatpush1.msra.mxu0 %v82
  %273 = vmatprep.subr.mxu0 0.0
  %274 = vmatpush1.msra.mxu0 %v83
  %275 = vmatprep.subr.mxu0 0.0
  %276 = vmatpush1.msra.mxu0 %v84
  %277 = vmatprep.subr.mxu0 0.0
  %278 = vmatpush1.msra.mxu0 %v85
  %279 = vmatprep.subr.mxu0 0.0
  %280 = vmatpush1.msra.mxu0 %v86
  %281 = vmatprep.subr.mxu0 0.0
  %282 = vmatpush1.msra.mxu0 %v87
  %283 = vmatprep.subr.mxu0 0.0
  %284 = vmatpush1.msra.mxu0 %v88
  %285 = vmatprep.subr.mxu0 0.0
  %286 = vmatpush1.msra.mxu0 %v89
  %287 = vmatprep.subr.mxu0 0.0
  %288 = vmatpush1.msra.mxu0 %v90
  %289 = vmatprep.subr.mxu0 0.0
  %290 = vmatpush1.msra.mxu0 %v91
  %291 = vmatprep.subr.mxu0 0.0
  %292 = vmatpush1.msra.mxu0 %v92
  %293 = vmatprep.subr.mxu0 0.0
  %294 = vmatpush1.msra.mxu0 %v93
  %295 = vmatprep.subr.mxu0 0.0
  %296 = vmatpush1.msra.mxu0 %v94
  %297 = vmatprep.subr.mxu0 0.0
  %298 = vmatpush1.msra.mxu0 %v95
  %299 = vmatprep.subr.mxu0 0.0
  %300 = vmatpush1.msra.mxu0 %v96
  %301 = vmatprep.subr.mxu0 0.0
  %302 = vmatpush1.msra.mxu0 %v97
  %303 = vmatprep.subr.mxu0 0.0
  %304 = vmatpush1.msra.mxu0 %v98
  %305 = vmatprep.subr.mxu0 0.0
  %306 = vmatpush1.msra.mxu0 %v99
  %307 = vmatprep.subr.mxu0 0.0
  %308 = vmatpush1.msra.mxu0 %v100
  %309 = vmatprep.subr.mxu0 0.0
  %310 = vmatpush1.msra.mxu0 %v101
  %311 = vmatprep.subr.mxu0 0.0
  %312 = vmatpush1.msra.mxu0 %v102
  %313 = vmatprep.subr.mxu0 0.0
  %314 = vmatpush1.msra.mxu0 %v103
  %315 = vmatprep.subr.mxu0 0.0
  %316 = vmatpush1.msra.mxu0 %v104
  %317 = vmatprep.subr.mxu0 0.0
  %318 = vmatpush1.msra.mxu0 %v105
  %319 = vmatprep.subr.mxu0 0.0
  %320 = vmatpush1.msra.mxu0 %v106
  %321 = vmatprep.subr.mxu0 0.0
  %322 = vmatpush1.msra.mxu0 %v107
  %323 = vmatprep.mubr.f32.mxu0 %v23
  %324 = vmatmul.mubr.f32.gmra.mrb[0].mxu0 %v22
  %v325 = vpop.f32.mrb[0].mxu0
  %v326 = vadd.f32 %v246, %v325
  %v327 = vpop.f32.mrb[0].mxu0
  %328 = vmatprep.mubr.f32.mxu0 %v31
  %329 = vmatmul.mubr.f32.gmra.mrb[0].mxu0 %v30
  %v330 = vpop.f32.mrb[0].mxu0
  %v331 = vadd.f32 %v251, %v330
  %v332 = vpop.f32.mrb[0].mxu0
  %333 = vmatprep.mubr.f32.mxu0 %v39
  %334 = vmatmul.mubr.f32.gmra.mrb[0].mxu0 %v38
  %v335 = vpop.f32.mrb[0].mxu0
  %v336 = vadd.f32 %v256, %v335
  %v337 = vpop.f32.mrb[0].mxu0
  %338 = vdwg.mxu0
  %339 = vmatprep.subr.mxu0 0.0
  %340 = vmatpush1.msra.mxu0 %v108
  %341 = vmatprep.subr.mxu0 0.0
  %342 = vmatpush1.msra.mxu0 %v109
  %343 = vmatprep.subr.mxu0 0.0
  %344 = vmatpush1.msra.mxu0 %v110
  %345 = vmatprep.subr.mxu0 0.0
  %346 = vmatpush1.msra.mxu0 %v111
  %347 = vmatprep.subr.mxu0 0.0
  %348 = vmatpush1.msra.mxu0 %v112
  %349 = vmatprep.subr.mxu0 0.0
  %350 = vmatpush1.msra.mxu0 %v113
  %351 = vmatprep.subr.mxu0 0.0
  %352 = vmatpush1.msra.mxu0 %v114
  %353 = vmatprep.subr.mxu0 0.0
  %354 = vmatpush1.msra.mxu0 %v115
  %355 = vmatprep.subr.mxu0 0.0
  %356 = vmatpush1.msra.mxu0 %v116
  %357 = vmatprep.subr.mxu0 0.0
  %358 = vmatpush1.msra.mxu0 %v117
  %359 = vmatprep.subr.mxu0 0.0
  %360 = vmatpush1.msra.mxu0 %v118
  %361 = vmatprep.subr.mxu0 0.0
  %362 = vmatpush1.msra.mxu0 %v119
  %363 = vmatprep.subr.mxu0 0.0
  %364 = vmatpush1.msra.mxu0 %v120
  %365 = vmatprep.subr.mxu0 0.0
  %366 = vmatpush1.msra.mxu0 %v121
  %367 = vmatprep.subr.mxu0 0.0
  %368 = vmatpush1.msra.mxu0 %v122
  %369 = vmatprep.subr.mxu0 0.0
  %370 = vmatpush1.msra.mxu0 %v123
  %371 = vmatprep.subr.mxu0 0.0
  %372 = vmatpush1.msra.mxu0 %v124
  %373 = vmatprep.subr.mxu0 0.0
  %374 = vmatpush1.msra.mxu0 %v125
  %375 = vmatprep.subr.mxu0 0.0
  %376 = vmatpush1.msra.mxu0 %v126
  %377 = vmatprep.subr.mxu0 0.0
  %378 = vmatpush1.msra.mxu0 %v127
  %379 = vmatprep.subr.mxu0 0.0
  %380 = vmatpush1.msra.mxu0 %v128
  %381 = vmatprep.subr.mxu0 0.0
  %382 = vmatpush1.msra.mxu0 %v129
  %383 = vmatprep.subr.mxu0 0.0
  %384 = vmatpush1.msra.mxu0 %v130
  %385 = vmatprep.subr.mxu0 0.0
  %386 = vmatpush1.msra.mxu0 %v131
  %387 = vmatprep.subr.mxu0 0.0
  %388 = vmatpush1.msra.mxu0 %v132
  %389 = vmatprep.subr.mxu0 0.0
  %390 = vmatpush1.msra.mxu0 %v133
  %391 = vmatprep.subr.mxu0 0.0
  %392 = vmatpush1.msra.mxu0 %v134
  %393 = vmatprep.subr.mxu0 0.0
  %394 = vmatpush1.msra.mxu0 %v135
  %395 = vmatprep.subr.mxu0 0.0
  %396 = vmatpush1.msra.mxu0 %v136
  %397 = vmatprep.subr.mxu0 0.0
  %398 = vmatpush1.msra.mxu0 %v137
  %399 = vmatprep.subr.mxu0 0.0
  %400 = vmatpush1.msra.mxu0 %v138
  %401 = vmatprep.subr.mxu0 0.0
  %402 = vmatpush1.msra.mxu0 %v139
  %403 = vmatprep.mubr.f32.mxu0 %v25
  %404 = vmatmul.mubr.f32.gmra.mrb[0].mxu0 %v24
  %v405 = vpop.f32.mrb[0].mxu0
  %v406 = vadd.f32 %v326, %v405
  %v407 = vpop.f32.mrb[0].mxu0
  %408 = vmatprep.mubr.f32.mxu0 %v33
  %409 = vmatmul.mubr.f32.gmra.mrb[0].mxu0 %v32
  %v410 = vpop.f32.mrb[0].mxu0
  %v411 = vadd.f32 %v331, %v410
  %v412 = vpop.f32.mrb[0].mxu0
  %413 = vmatprep.mubr.f32.mxu0 %v41
  %414 = vmatmul.mubr.f32.gmra.mrb[0].mxu0 %v40
  %v415 = vpop.f32.mrb[0].mxu0
  %v416 = vadd.f32 %v336, %v415
  %v417 = vpop.f32.mrb[0].mxu0
  %418 = vdwg.mxu0
  %419 = vmatprep.subr.mxu0 0.0
  %420 = vmatpush1.msra.mxu0 %v140
  %421 = vmatprep.subr.mxu0 0.0
  %422 = vmatpush1.msra.mxu0 %v141
  %423 = vmatprep.subr.mxu0 0.0
  %424 = vmatpush1.msra.mxu0 %v142
  %425 = vmatprep.subr.mxu0 0.0
  %426 = vmatpush1.msra.mxu0 %v143
  %427 = vmatprep.subr.mxu0 0.0
  %428 = vmatpush1.msra.mxu0 %v144
  %429 = vmatprep.subr.mxu0 0.0
  %430 = vmatpush1.msra.mxu0 %v145
  %431 = vmatprep.subr.mxu0 0.0
  %432 = vmatpush1.msra.mxu0 %v146
  %433 = vmatprep.subr.mxu0 0.0
  %434 = vmatpush1.msra.mxu0 %v147
  %435 = vmatprep.subr.mxu0 0.0
  %436 = vmatpush1.msra.mxu0 %v148
  %437 = vmatprep.subr.mxu0 0.0
  %438 = vmatpush1.msra.mxu0 %v149
  %439 = vmatprep.subr.mxu0 0.0
  %440 = vmatpush1.msra.mxu0 %v150
  %441 = vmatprep.subr.mxu0 0.0
  %442 = vmatpush1.msra.mxu0 %v151
  %443 = vmatprep.subr.mxu0 0.0
  %444 = vmatpush1.msra.mxu0 %v152
  %445 = vmatprep.subr.mxu0 0.0
  %446 = vmatpush1.msra.mxu0 %v153
  %447 = vmatprep.subr.mxu0 0.0
  %448 = vmatpush1.msra.mxu0 %v154
  %449 = vmatprep.subr.mxu0 0.0
  %450 = vmatpush1.msra.mxu0 %v155
  %451 = vmatprep.subr.mxu0 0.0
  %452 = vmatpush1.msra.mxu0 %v156
  %453 = vmatprep.subr.mxu0 0.0
  %454 = vmatpush1.msra.mxu0 %v157
  %455 = vmatprep.subr.mxu0 0.0
  %456 = vmatpush1.msra.mxu0 %v158
  %457 = vmatprep.subr.mxu0 0.0
  %458 = vmatpush1.msra.mxu0 %v159
  %459 = vmatprep.subr.mxu0 0.0
  %460 = vmatpush1.msra.mxu0 %v160
  %461 = vmatprep.subr.mxu0 0.0
  %462 = vmatpush1.msra.mxu0 %v161
  %463 = vmatprep.subr.mxu0 0.0
  %464 = vmatpush1.msra.mxu0 %v162
  %465 = vmatprep.subr.mxu0 0.0
  %466 = vmatpush1.msra.mxu0 %v163
  %467 = vmatprep.subr.mxu0 0.0
  %468 = vmatpush1.msra.mxu0 %v164
  %469 = vmatprep.subr.mxu0 0.0
  %470 = vmatpush1.msra.mxu0 %v165
  %471 = vmatprep.subr.mxu0 0.0
  %472 = vmatpush1.msra.mxu0 %v166
  %473 = vmatprep.subr.mxu0 0.0
  %474 = vmatpush1.msra.mxu0 %v167
  %475 = vmatprep.subr.mxu0 0.0
  %476 = vmatpush1.msra.mxu0 %v168
  %477 = vmatprep.subr.mxu0 0.0
  %478 = vmatpush1.msra.mxu0 %v169
  %479 = vmatprep.subr.mxu0 0.0
  %480 = vmatpush1.msra.mxu0 %v170
  %481 = vmatprep.subr.mxu0 0.0
  %482 = vmatpush1.msra.mxu0 %v171
  %483 = vmatprep.mubr.f32.mxu0 %v27
  %484 = vmatmul.mubr.f32.gmra.mrb[0].mxu0 %v26
  %v485 = vpop.f32.mrb[0].mxu0
  %v486 = vadd.f32 %v406, %v485
  %v487 = vpop.f32.mrb[0].mxu0
  %488 = vmatprep.mubr.f32.mxu0 %v35
  %489 = vmatmul.mubr.f32.gmra.mrb[0].mxu0 %v34
  %v490 = vpop.f32.mrb[0].mxu0
  %v491 = vadd.f32 %v411, %v490
  %v492 = vpop.f32.mrb[0].mxu0
  %493 = vmatprep.mubr.f32.mxu0 %v43
  %494 = vmatmul.mubr.f32.gmra.mrb[0].mxu0 %v42
  %v495 = vpop.f32.mrb[0].mxu0
  %v496 = vadd.f32 %v416, %v495
  %v497 = vpop.f32.mrb[0].mxu0
  %498 = vdwg.mxu0
  %v499 = vmul.f32 %v486, 0.1
  %v500 = vmul.f32 %v491, 0.1
  %v501 = vmul.f32 %v496, 0.1
  %v502 = vmax.f32 %v486, %v499
  %v503 = vmax.f32 %v491, %v500
  %v504 = vmax.f32 %v496, %v501
  %v505 = vadd.f32 %v502, %v503
  %vm506 = vcmask 1041408
  %v507 = vsel %vm506, %v504, 0.0
  %v508 = vadd.f32 %v505, %v507
  %v509 = vrot.slane %v508, 4
  %v510 = vadd.f32 %v508, %v509
  %v511 = vrot.slane %v510, 2
  %v512 = vadd.f32 %v510, %v511
  %v513 = vrot.slane %v512, 1
  %v514 = vadd.f32 %v512, %v513
  %v515 = vmul.f32 %v514, 0.055555556
  %v516 = vmul.f32 %v502, %v502
  %v517 = vmul.f32 %v503, %v503
  %v518 = vmul.f32 %v504, %v504
  %v519 = vadd.f32 %v516, %v517
  %v520 = vsel %vm506, %v518, 0.0
  %v521 = vadd.f32 %v519, %v520
  %v522 = vrot.slane %v521, 4
  %v523 = vadd.f32 %v521, %v522
  %v524 = vrot.slane %v523, 2
  %v525 = vadd.f32 %v523, %v524
  %v526 = vrot.slane %v525, 1
  %v527 = vadd.f32 %v525, %v526
  %v528 = vmul.f32 %v527, 0.055555556
  %v529 = vmul.f32 %v515, %v515
  %v530 = vsub.f32 %v528, %v529
  %v531 = vadd.f32 %v530, 1e-05
  %v532 = vrsqrt.pop %v531
  %v533 = vsub.f32 %v502, %v515
  %v534 = vsub.f32 %v503, %v515
  %v535 = vsub.f32 %v504, %v515
  %v536 = vld [vmem:[%s3] sm:$0x1]
  %v537 = vmul.f32 %v532, %v536
  %v538 = vlaneseq
  %v539 = vshrl.u32 %v538, 7
  %v540 = vsub.s32 0, %v539
  %v541 = vrot.slane %v537, %v540
  %v542 = vmul.f32 %v533, %v541
  %v543 = vmul.f32 %v534, %v541
  %v544 = vmul.f32 %v535, %v541
  %v545 = vld [vmem:[%s4] sm:$0x1]
  %v547 = vlaneseq
  %v548 = vshrl.u32 %v547, 7
  %v549 = vsub.s32 0, %v548
  %v550 = vrot.slane %v545, %v549
  %v552 = vadd.f32 %v542, %v550
  %v553 = vadd.f32 %v543, %v550
  %v554 = vadd.f32 %v544, %v550
  %555 = vst [vmem:[%s5] sm:$0xff] %v552
  %556 = vst [vmem:[%s5 + $0x8] sm:$0xff] %v553
  %557 = vst [vmem:[%s5 + $0x10] sm:$0x3] %v554
  // Predicated region
  $region22: #{encoder_forward.8} parent=0 // pred_check
    _
  $region23: #{encoder_forward.8} parent=0 // pred_check_branch
    %559 = sbr.rel (0) target = $region25
  $region24: #{encoder_forward.8} parent=0 // pred_region
    _
  $region25: #{encoder_forward.8} parent=0 // pred_fallthru
    _
  // Predicated region
  $region26: #{encoder_forward.8} parent=0 // pred_check
    _
  $region27: #{encoder_forward.8} parent=0 // pred_check_branch
    %561 = sbr.rel (0) target = $region29
  $region28: #{encoder_forward.8} parent=0 // pred_region
    _
  $region29: #{encoder_forward.8} parent=0 // pred_fallthru
    _

// kernel: encoder_forward.9
$region0: #{encoder_forward.9}
  #allocation0 [shape = 'u32[]', space=smem, size = 0x4, offset = 0x4, fixed_abs, tag = 'smem constant byte address 0x4 - core index']
  #allocation1 [shape = 'u32[144,128]{1,0:T(1,128)}', space=vmem, size = 0x12000, scoped, tag = 'internal scratch']
  %s0 = inlined_call_operand.vmem [shape: f32[2,2048], index: 0, kind: input, shape index: {}]
  %s1 = inlined_call_operand.vmem [shape: f32[2048,128], index: 1, kind: input, shape index: {}]
  %s2 = inlined_call_operand.vmem [shape: f32[1,128], index: 2, kind: input, shape index: {}]
  %s3 = inlined_call_operand.vmem [shape: f32[128,32], index: 3, kind: input, shape index: {}]
  %s4 = inlined_call_operand.vmem [shape: f32[1,32], index: 4, kind: input, shape index: {}]
  %s5 = inlined_call_operand.vmem [shape: f32[2,32], index: 5, kind: output, shape index: {}]
  %s6 = sld [smem:[#allocation0]]
  $region30: #{encoder_forward.9} parent=0
    _
  %s8 = ssub.s32 1, %s6
  %s9 = scalar_select 0, %s8, %s6
  // Predicated region
  $region2: #{encoder_forward.9} parent=0 // pred_check
    _
  $region3: #{encoder_forward.9} parent=0 // pred_check_branch
    %11 = sbr.rel (0) target = $region5
  $region4: #{encoder_forward.9} parent=0 // pred_region
    _
  $region5: #{encoder_forward.9} parent=0 // pred_fallthru
    _
  // Predicated region
  $region6: #{encoder_forward.9} parent=0 // pred_check
    _
  $region7: #{encoder_forward.9} parent=0 // pred_check_branch
    %13 = sbr.rel (0) target = $region9
  $region8: #{encoder_forward.9} parent=0 // pred_region
    _
  $region9: #{encoder_forward.9} parent=0 // pred_fallthru
    _
  // Predicated region
  $region10: #{encoder_forward.9} parent=0 // pred_check
    _
  $region11: #{encoder_forward.9} parent=0 // pred_check_branch
    %15 = sbr.rel (0) target = $region13
  $region12: #{encoder_forward.9} parent=0 // pred_region
    _
  $region13: #{encoder_forward.9} parent=0 // pred_fallthru
    _
  // Predicated region
  $region14: #{encoder_forward.9} parent=0 // pred_check
    _
  $region15: #{encoder_forward.9} parent=0 // pred_check_branch
    %17 = sbr.rel (0) target = $region17
  $region16: #{encoder_forward.9} parent=0 // pred_region
    _
  $region17: #{encoder_forward.9} parent=0 // pred_fallthru
    _
  // Predicated region
  $region18: #{encoder_forward.9} parent=0 // pred_check
    _
  $region19: #{encoder_forward.9} parent=0 // pred_check_branch
    %19 = sbr.rel (0) target = $region21
  $region20: #{encoder_forward.9} parent=0 // pred_region
    _
  $region21: #{encoder_forward.9} parent=0 // pred_fallthru
    _
  %v20 = vld [vmem:[%s0] sm:$0xff]
  %v21 = vld [vmem:[%s0 + $0x8] sm:$0xff]
  %v22 = vld [vmem:[%s0 + $0x10] sm:$0xff]
  %v23 = vld [vmem:[%s0 + $0x18] sm:$0xff]
  %v24 = vld [vmem:[%s1] sm:$0xff]
  %v25 = vld [vmem:[%s1 + $0x8] sm:$0xff]
  %v26 = vld [vmem:[%s1 + $0x10] sm:$0xff]
  %v27 = vld [vmem:[%s1 + $0x18] sm:$0xff]
  %v28 = vld [vmem:[%s1 + $0x20] sm:$0xff]
  %v29 = vld [vmem:[%s1 + $0x28] sm:$0xff]
  %v30 = vld [vmem:[%s1 + $0x30] sm:$0xff]
  %v31 = vld [vmem:[%s1 + $0x38] sm:$0xff]
  %v32 = vld [vmem:[%s1 + $0x40] sm:$0xff]
  %v33 = vld [vmem:[%s1 + $0x48] sm:$0xff]
  %v34 = vld [vmem:[%s1 + $0x50] sm:$0xff]
  %v35 = vld [vmem:[%s1 + $0x58] sm:$0xff]
  %v36 = vld [vmem:[%s1 + $0x60] sm:$0xff]
  %v37 = vld [vmem:[%s1 + $0x68] sm:$0xff]
  %v38 = vld [vmem:[%s1 + $0x70] sm:$0xff]
  %v39 = vld [vmem:[%s1 + $0x78] sm:$0xff]
  %v40 = vld [vmem:[%s1 + $0x80] sm:$0xff]
  %v41 = vld [vmem:[%s1 + $0x88] sm:$0xff]
  %v42 = vld [vmem:[%s1 + $0x90] sm:$0xff]
  %v43 = vld [vmem:[%s1 + $0x98] sm:$0xff]
  %v44 = vld [vmem:[%s1 + $0xa0] sm:$0xff]
  %v45 = vld [vmem:[%s1 + $0xa8] sm:$0xff]
  %v46 = vld [vmem:[%s1 + $0xb0] sm:$0xff]
  %v47 = vld [vmem:[%s1 + $0xb8] sm:$0xff]
  %v48 = vld [vmem:[%s1 + $0xc0] sm:$0xff]
  %v49 = vld [vmem:[%s1 + $0xc8] sm:$0xff]
  %v50 = vld [vmem:[%s1 + $0xd0] sm:$0xff]
  %v51 = vld [vmem:[%s1 + $0xd8] sm:$0xff]
  %v52 = vld [vmem:[%s1 + $0xe0] sm:$0xff]
  %v53 = vld [vmem:[%s1 + $0xe8] sm:$0xff]
  %v54 = vld [vmem:[%s1 + $0xf0] sm:$0xff]
  %v55 = vld [vmem:[%s1 + $0xf8] sm:$0xff]
  %v56 = vld [vmem:[%s1 + $0x100] sm:$0xff]
  %v57 = vld [vmem:[%s1 + $0x108] sm:$0xff]
  %v58 = vld [vmem:[%s1 + $0x110] sm:$0xff]
  %v59 = vld [vmem:[%s1 + $0x118] sm:$0xff]
  %v60 = vld [vmem:[%s1 + $0x120] sm:$0xff]
  %v61 = vld [vmem:[%s1 + $0x128] sm:$0xff]
  %v62 = vld [vmem:[%s1 + $0x130] sm:$0xff]
  %v63 = vld [vmem:[%s1 + $0x138] sm:$0xff]
  %v64 = vld [vmem:[%s1 + $0x140] sm:$0xff]
  %v65 = vld [vmem:[%s1 + $0x148] sm:$0xff]
  %v66 = vld [vmem:[%s1 + $0x150] sm:$0xff]
  %v67 = vld [vmem:[%s1 + $0x158] sm:$0xff]
  %v68 = vld [vmem:[%s1 + $0x160] sm:$0xff]
  %v69 = vld [vmem:[%s1 + $0x168] sm:$0xff]
  %v70 = vld [vmem:[%s1 + $0x170] sm:$0xff]
  %v71 = vld [vmem:[%s1 + $0x178] sm:$0xff]
  %v72 = vld [vmem:[%s1 + $0x180] sm:$0xff]
  %v73 = vld [vmem:[%s1 + $0x188] sm:$0xff]
  %v74 = vld [vmem:[%s1 + $0x190] sm:$0xff]
  %v75 = vld [vmem:[%s1 + $0x198] sm:$0xff]
  %v76 = vld [vmem:[%s1 + $0x1a0] sm:$0xff]
  %v77 = vld [vmem:[%s1 + $0x1a8] sm:$0xff]
  %v78 = vld [vmem:[%s1 + $0x1b0] sm:$0xff]
  %v79 = vld [vmem:[%s1 + $0x1b8] sm:$0xff]
  %v80 = vld [vmem:[%s1 + $0x1c0] sm:$0xff]
  %v81 = vld [vmem:[%s1 + $0x1c8] sm:$0xff]
  %v82 = vld [vmem:[%s1 + $0x1d0] sm:$0xff]
  %v83 = vld [vmem:[%s1 + $0x1d8] sm:$0xff]
  %v84 = vld [vmem:[%s1 + $0x1e0] sm:$0xff]
  %v85 = vld [vmem:[%s1 + $0x1e8] sm:$0xff]
  %v86 = vld [vmem:[%s1 + $0x1f0] sm:$0xff]
  %v87 = vld [vmem:[%s1 + $0x1f8] sm:$0xff]
  %v88 = vld [vmem:[%s1 + $0x200] sm:$0xff]
  %v89 = vld [vmem:[%s1 + $0x208] sm:$0xff]
  %v90 = vld [vmem:[%s1 + $0x210] sm:$0xff]
  %v91 = vld [vmem:[%s1 + $0x218] sm:$0xff]
  %v92 = vld [vmem:[%s1 + $0x220] sm:$0xff]
  %v93 = vld [vmem:[%s1 + $0x228] sm:$0xff]
  %v94 = vld [vmem:[%s1 + $0x230] sm:$0xff]
  %v95 = vld [vmem:[%s1 + $0x238] sm:$0xff]
  %v96 = vld [vmem:[%s1 + $0x240] sm:$0xff]
  %v97 = vld [vmem:[%s1 + $0x248] sm:$0xff]
  %v98 = vld [vmem:[%s1 + $0x250] sm:$0xff]
  %v99 = vld [vmem:[%s1 + $0x258] sm:$0xff]
  %v100 = vld [vmem:[%s1 + $0x260] sm:$0xff]
  %v101 = vld [vmem:[%s1 + $0x268] sm:$0xff]
  %v102 = vld [vmem:[%s1 + $0x270] sm:$0xff]
  %v103 = vld [vmem:[%s1 + $0x278] sm:$0xff]
  %v104 = vld [vmem:[%s1 + $0x280] sm:$0xff]
  %v105 = vld [vmem:[%s1 + $0x288] sm:$0xff]
  %v106 = vld [vmem:[%s1 + $0x290] sm:$0xff]
  %v107 = vld [vmem:[%s1 + $0x298] sm:$0xff]
  %v108 = vld [vmem:[%s1 + $0x2a0] sm:$0xff]
  %v109 = vld [vmem:[%s1 + $0x2a8] sm:$0xff]
  %v110 = vld [vmem:[%s1 + $0x2b0] sm:$0xff]
  %v111 = vld [vmem:[%s1 + $0x2b8] sm:$0xff]
  %v112 = vld [vmem:[%s1 + $0x2c0] sm:$0xff]
  %v113 = vld [vmem:[%s1 + $0x2c8] sm:$0xff]
  %v114 = vld [vmem:[%s1 + $0x2d0] sm:$0xff]
  %v115 = vld [vmem:[%s1 + $0x2d8] sm:$0xff]
  %v116 = vld [vmem:[%s1 + $0x2e0] sm:$0xff]
  %v117 = vld [vmem:[%s1 + $0x2e8] sm:$0xff]
  %v118 = vld [vmem:[%s1 + $0x2f0] sm:$0xff]
  %v119 = vld [vmem:[%s1 + $0x2f8] sm:$0xff]
  %v120 = vld [vmem:[%s1 + $0x300] sm:$0xff]
  %v121 = vld [vmem:[%s1 + $0x308] sm:$0xff]
  %v122 = vld [vmem:[%s1 + $0x310] sm:$0xff]
  %v123 = vld [vmem:[%s1 + $0x318] sm:$0xff]
  %v124 = vld [vmem:[%s1 + $0x320] sm:$0xff]
  %v125 = vld [vmem:[%s1 + $0x328] sm:$0xff]
  %v126 = vld [vmem:[%s1 + $0x330] sm:$0xff]
  %v127 = vld [vmem:[%s1 + $0x338] sm:$0xff]
  %v128 = vld [vmem:[%s1 + $0x340] sm:$0xff]
  %v129 = vld [vmem:[%s1 + $0x348] sm:$0xff]
  %v130 = vld [vmem:[%s1 + $0x350] sm:$0xff]
  %v131 = vld [vmem:[%s1 + $0x358] sm:$0xff]
  %v132 = vld [vmem:[%s1 + $0x360] sm:$0xff]
  %v133 = vld [vmem:[%s1 + $0x368] sm:$0xff]
  %v134 = vld [vmem:[%s1 + $0x370] sm:$0xff]
  %v135 = vld [vmem:[%s1 + $0x378] sm:$0xff]
  %v136 = vld [vmem:[%s1 + $0x380] sm:$0xff]
  %v137 = vld [vmem:[%s1 + $0x388] sm:$0xff]
  %v138 = vld [vmem:[%s1 + $0x390] sm:$0xff]
  %v139 = vld [vmem:[%s1 + $0x398] sm:$0xff]
  %v140 = vld [vmem:[%s1 + $0x3a0] sm:$0xff]
  %v141 = vld [vmem:[%s1 + $0x3a8] sm:$0xff]
  %v142 = vld [vmem:[%s1 + $0x3b0] sm:$0xff]
  %v143 = vld [vmem:[%s1 + $0x3b8] sm:$0xff]
  %v144 = vld [vmem:[%s1 + $0x3c0] sm:$0xff]
  %v145 = vld [vmem:[%s1 + $0x3c8] sm:$0xff]
  %v146 = vld [vmem:[%s1 + $0x3d0] sm:$0xff]
  %v147 = vld [vmem:[%s1 + $0x3d8] sm:$0xff]
  %v148 = vld [vmem:[%s1 + $0x3e0] sm:$0xff]
  %v149 = vld [vmem:[%s1 + $0x3e8] sm:$0xff]
  %v150 = vld [vmem:[%s1 + $0x3f0] sm:$0xff]
  %v151 = vld [vmem:[%s1 + $0x3f8] sm:$0xff]
  %v152 = vld [vmem:[%s1 + $0x400] sm:$0xff]
  %v153 = vld [vmem:[%s1 + $0x408] sm:$0xff]
  %v154 = vld [vmem:[%s1 + $0x410] sm:$0xff]
  %v155 = vld [vmem:[%s1 + $0x418] sm:$0xff]
  %v156 = vld [vmem:[%s1 + $0x420] sm:$0xff]
  %v157 = vld [vmem:[%s1 + $0x428] sm:$0xff]
  %v158 = vld [vmem:[%s1 + $0x430] sm:$0xff]
  %v159 = vld [vmem:[%s1 + $0x438] sm:$0xff]
  %v160 = vld [vmem:[%s1 + $0x440] sm:$0xff]
  %v161 = vld [vmem:[%s1 + $0x448] sm:$0xff]
  %v162 = vld [vmem:[%s1 + $0x450] sm:$0xff]
  %v163 = vld [vmem:[%s1 + $0x458] sm:$0xff]
  %v164 = vld [vmem:[%s1 + $0x460] sm:$0xff]
  %v165 = vld [vmem:[%s1 + $0x468] sm:$0xff]
  %v166 = vld [vmem:[%s1 + $0x470] sm:$0xff]
  %v167 = vld [vmem:[%s1 + $0x478] sm:$0xff]
  %v168 = vld [vmem:[%s1 + $0x480] sm:$0xff]
  %v169 = vld [vmem:[%s1 + $0x488] sm:$0xff]
  %v170 = vld [vmem:[%s1 + $0x490] sm:$0xff]
  %v171 = vld [vmem:[%s1 + $0x498] sm:$0xff]
  %v172 = vld [vmem:[%s1 + $0x4a0] sm:$0xff]
  %v173 = vld [vmem:[%s1 + $0x4a8] sm:$0xff]
  %v174 = vld [vmem:[%s1 + $0x4b0] sm:$0xff]
  %v175 = vld [vmem:[%s1 + $0x4b8] sm:$0xff]
  %v176 = vld [vmem:[%s1 + $0x4c0] sm:$0xff]
  %v177 = vld [vmem:[%s1 + $0x4c8] sm:$0xff]
  %v178 = vld [vmem:[%s1 + $0x4d0] sm:$0xff]
  %v179 = vld [vmem:[%s1 + $0x4d8] sm:$0xff]
  %v180 = vld [vmem:[%s1 + $0x4e0] sm:$0xff]
  %v181 = vld [vmem:[%s1 + $0x4e8] sm:$0xff]
  %v182 = vld [vmem:[%s1 + $0x4f0] sm:$0xff]
  %v183 = vld [vmem:[%s1 + $0x4f8] sm:$0xff]
  %v184 = vld [vmem:[%s1 + $0x500] sm:$0xff]
  %v185 = vld [vmem:[%s1 + $0x508] sm:$0xff]
  %v186 = vld [vmem:[%s1 + $0x510] sm:$0xff]
  %v187 = vld [vmem:[%s1 + $0x518] sm:$0xff]
  %v188 = vld [vmem:[%s1 + $0x520] sm:$0xff]
  %v189 = vld [vmem:[%s1 + $0x528] sm:$0xff]
  %v190 = vld [vmem:[%s1 + $0x530] sm:$0xff]
  %v191 = vld [vmem:[%s1 + $0x538] sm:$0xff]
  %v192 = vld [vmem:[%s1 + $0x540] sm:$0xff]
  %v193 = vld [vmem:[%s1 + $0x548] sm:$0xff]
  %v194 = vld [vmem:[%s1 + $0x550] sm:$0xff]
  %v195 = vld [vmem:[%s1 + $0x558] sm:$0xff]
  %v196 = vld [vmem:[%s1 + $0x560] sm:$0xff]
  %v197 = vld [vmem:[%s1 + $0x568] sm:$0xff]
  %v198 = vld [vmem:[%s1 + $0x570] sm:$0xff]
  %v199 = vld [vmem:[%s1 + $0x578] sm:$0xff]
  %v200 = vld [vmem:[%s1 + $0x580] sm:$0xff]
  %v201 = vld [vmem:[%s1 + $0x588] sm:$0xff]
  %v202 = vld [vmem:[%s1 + $0x590] sm:$0xff]
  %v203 = vld [vmem:[%s1 + $0x598] sm:$0xff]
  %v204 = vld [vmem:[%s1 + $0x5a0] sm:$0xff]
  %v205 = vld [vmem:[%s1 + $0x5a8] sm:$0xff]
  %v206 = vld [vmem:[%s1 + $0x5b0] sm:$0xff]
  %v207 = vld [vmem:[%s1 + $0x5b8] sm:$0xff]
  %v208 = vld [vmem:[%s1 + $0x5c0] sm:$0xff]
  %v209 = vld [vmem:[%s1 + $0x5c8] sm:$0xff]
  %v210 = vld [vmem:[%s1 + $0x5d0] sm:$0xff]
  %v211 = vld [vmem:[%s1 + $0x5d8] sm:$0xff]
  %v212 = vld [vmem:[%s1 + $0x5e0] sm:$0xff]
  %v213 = vld [vmem:[%s1 + $0x5e8] sm:$0xff]
  %v214 = vld [vmem:[%s1 + $0x5f0] sm:$0xff]
  %v215 = vld [vmem:[%s1 + $0x5f8] sm:$0xff]
  %v216 = vld [vmem:[%s1 + $0x600] sm:$0xff]
  %v217 = vld [vmem:[%s1 + $0x608] sm:$0xff]
  %v218 = vld [vmem:[%s1 + $0x610] sm:$0xff]
  %v219 = vld [vmem:[%s1 + $0x618] sm:$0xff]
  %v220 = vld [vmem:[%s1 + $0x620] sm:$0xff]
  %v221 = vld [vmem:[%s1 + $0x628] sm:$0xff]
  %v222 = vld [vmem:[%s1 + $0x630] sm:$0xff]
  %v223 = vld [vmem:[%s1 + $0x638] sm:$0xff]
  %v224 = vld [vmem:[%s1 + $0x640] sm:$0xff]
  %v225 = vld [vmem:[%s1 + $0x648] sm:$0xff]
  %v226 = vld [vmem:[%s1 + $0x650] sm:$0xff]
  %v227 = vld [vmem:[%s1 + $0x658] sm:$0xff]
  %v228 = vld [vmem:[%s1 + $0x660] sm:$0xff]
  %v229 = vld [vmem:[%s1 + $0x668] sm:$0xff]
  %v230 = vld [vmem:[%s1 + $0x670] sm:$0xff]
  %v231 = vld [vmem:[%s1 + $0x678] sm:$0xff]
  %v232 = vld [vmem:[%s1 + $0x680] sm:$0xff]
  %v233 = vld [vmem:[%s1 + $0x688] sm:$0xff]
  %v234 = vld [vmem:[%s1 + $0x690] sm:$0xff]
  %v235 = vld [vmem:[%s1 + $0x698] sm:$0xff]
  %v236 = vld [vmem:[%s1 + $0x6a0] sm:$0xff]
  %v237 = vld [vmem:[%s1 + $0x6a8] sm:$0xff]
  %v238 = vld [vmem:[%s1 + $0x6b0] sm:$0xff]
  %v239 = vld [vmem:[%s1 + $0x6b8] sm:$0xff]
  %v240 = vld [vmem:[%s1 + $0x6c0] sm:$0xff]
  %v241 = vld [vmem:[%s1 + $0x6c8] sm:$0xff]
  %v242 = vld [vmem:[%s1 + $0x6d0] sm:$0xff]
  %v243 = vld [vmem:[%s1 + $0x6d8] sm:$0xff]
  %v244 = vld [vmem:[%s1 + $0x6e0] sm:$0xff]
  %v245 = vld [vmem:[%s1 + $0x6e8] sm:$0xff]
  %v246 = vld [vmem:[%s1 + $0x6f0] sm:$0xff]
  %v247 = vld [vmem:[%s1 + $0x6f8] sm:$0xff]
  %v248 = vld [vmem:[%s1 + $0x700] sm:$0xff]
  %v249 = vld [vmem:[%s1 + $0x708] sm:$0xff]
  %v250 = vld [vmem:[%s1 + $0x710] sm:$0xff]
  %v251 = vld [vmem:[%s1 + $0x718] sm:$0xff]
  %v252 = vld [vmem:[%s1 + $0x720] sm:$0xff]
  %v253 = vld [vmem:[%s1 + $0x728] sm:$0xff]
  %v254 = vld [vmem:[%s1 + $0x730] sm:$0xff]
  %v255 = vld [vmem:[%s1 + $0x738] sm:$0xff]
  %v256 = vld [vmem:[%s1 + $0x740] sm:$0xff]
  %v257 = vld [vmem:[%s1 + $0x748] sm:$0xff]
  %v258 = vld [vmem:[%s1 + $0x750] sm:$0xff]
  %v259 = vld [vmem:[%s1 + $0x758] sm:$0xff]
  %v260 = vld [vmem:[%s1 + $0x760] sm:$0xff]
  %v261 = vld [vmem:[%s1 + $0x768] sm:$0xff]
  %v262 = vld [vmem:[%s1 + $0x770] sm:$0xff]
  %v263 = vld [vmem:[%s1 + $0x778] sm:$0xff]
  %v264 = vld [vmem:[%s1 + $0x780] sm:$0xff]
  %v265 = vld [vmem:[%s1 + $0x788] sm:$0xff]
  %v266 = vld [vmem:[%s1 + $0x790] sm:$0xff]
  %v267 = vld [vmem:[%s1 + $0x798] sm:$0xff]
  %v268 = vld [vmem:[%s1 + $0x7a0] sm:$0xff]
  %v269 = vld [vmem:[%s1 + $0x7a8] sm:$0xff]
  %v270 = vld [vmem:[%s1 + $0x7b0] sm:$0xff]
  %v271 = vld [vmem:[%s1 + $0x7b8] sm:$0xff]
  %v272 = vld [vmem:[%s1 + $0x7c0] sm:$0xff]
  %v273 = vld [vmem:[%s1 + $0x7c8] sm:$0xff]
  %v274 = vld [vmem:[%s1 + $0x7d0] sm:$0xff]
  %v275 = vld [vmem:[%s1 + $0x7d8] sm:$0xff]
  %v276 = vld [vmem:[%s1 + $0x7e0] sm:$0xff]
  %v277 = vld [vmem:[%s1 + $0x7e8] sm:$0xff]
  %v278 = vld [vmem:[%s1 + $0x7f0] sm:$0xff]
  %v279 = vld [vmem:[%s1 + $0x7f8] sm:$0xff]
  %v280 = vld [vmem:[%s2] sm:$0x1]
  %v282 = vlaneseq
  %v283 = vshrl.u32 %v282, 7
  %v284 = vsub.s32 0, %v283
  %v285 = vrot.slane %v280, %v284
  %v291 = vcombine.high %v20, %v20
  %v293 = vunpack.c.l.s4 1983009808
  %v294 = vunpack.c.0.s8 %v293
  %v295 = vlaneseq
  %v296 = vshrl.u32 %v295, 7
  %v297 = vsub.s32 %v294, %v296
  %v298 = vrot.slane %v20, %v297
  %v300 = vunpack.c.l.s4 1983009808
  %v301 = vunpack.c.0.s8 %v300
  %v302 = vlaneseq
  %v303 = vshrl.u32 %v302, 7
  %v304 = vsub.s32 %v301, %v303
  %v305 = vrot.slane %v291, %v304
  %v306 = vcombine.high %v298, %v298
  %v307 = vcombine.high %v305, %v305
  %v308 = vcombine.high %v21, %v21
  %v310 = vunpack.c.l.s4 1983009808
  %v311 = vunpack.c.0.s8 %v310
  %v312 = vlaneseq
  %v313 = vshrl.u32 %v312, 7
  %v314 = vsub.s32 %v311, %v313
  %v315 = vrot.slane %v21, %v314
  %v317 = vunpack.c.l.s4 1983009808
  %v318 = vunpack.c.0.s8 %v317
  %v319 = vlaneseq
  %v320 = vshrl.u32 %v319, 7
  %v321 = vsub.s32 %v318, %v320
  %v322 = vrot.slane %v308, %v321
  %v323 = vcombine.high %v315, %v315
  %v324 = vcombine.high %v322, %v322
  %v325 = vcombine.high %v22, %v22
  %v327 = vunpack.c.l.s4 1983009808
  %v328 = vunpack.c.0.s8 %v327
  %v329 = vlaneseq
  %v330 = vshrl.u32 %v329, 7
  %v331 = vsub.s32 %v328, %v330
  %v332 = vrot.slane %v22, %v331
  %v334 = vunpack.c.l.s4 1983009808
  %v335 = vunpack.c.0.s8 %v334
  %v336 = vlaneseq
  %v337 = vshrl.u32 %v336, 7
  %v338 = vsub.s32 %v335, %v337
  %v339 = vrot.slane %v325, %v338
  %v340 = vcombine.high %v332, %v332
  %v341 = vcombine.high %v339, %v339
  %v342 = vcombine.high %v23, %v23
  %v344 = vunpack.c.l.s4 1983009808
  %v345 = vunpack.c.0.s8 %v344
  %v346 = vlaneseq
  %v347 = vshrl.u32 %v346, 7
  %v348 = vsub.s32 %v345, %v347
  %v349 = vrot.slane %v23, %v348
  %v351 = vunpack.c.l.s4 1983009808
  %v352 = vunpack.c.0.s8 %v351
  %v353 = vlaneseq
  %v354 = vshrl.u32 %v353, 7
  %v355 = vsub.s32 %v352, %v354
  %v356 = vrot.slane %v342, %v355
  %v357 = vcombine.high %v349, %v349
  %v358 = vcombine.high %v356, %v356
  %375 = vmatprep.subr.mxu0 0.0
  %376 = vmatpush1.msra.mxu0 %v24
  %377 = vmatprep.subr.mxu0 0.0
  %378 = vmatpush1.msra.mxu0 %v25
  %379 = vmatprep.subr.mxu0 0.0
  %380 = vmatpush1.msra.mxu0 %v26
  %381 = vmatprep.subr.mxu0 0.0
  %382 = vmatpush1.msra.mxu0 %v27
  %383 = vmatprep.subr.mxu0 0.0
  %384 = vmatpush1.msra.mxu0 %v28
  %385 = vmatprep.subr.mxu0 0.0
  %386 = vmatpush1.msra.mxu0 %v29
  %387 = vmatprep.subr.mxu0 0.0
  %388 = vmatpush1.msra.mxu0 %v30
  %389 = vmatprep.subr.mxu0 0.0
  %390 = vmatpush1.msra.mxu0 %v31
  %391 = vmatprep.subr.mxu0 0.0
  %392 = vmatpush1.msra.mxu0 %v32
  %393 = vmatprep.subr.mxu0 0.0
  %394 = vmatpush1.msra.mxu0 %v33
  %395 = vmatprep.subr.mxu0 0.0
  %396 = vmatpush1.msra.mxu0 %v34
  %397 = vmatprep.subr.mxu0 0.0
  %398 = vmatpush1.msra.mxu0 %v35
  %399 = vmatprep.subr.mxu0 0.0
  %400 = vmatpush1.msra.mxu0 %v36
  %401 = vmatprep.subr.mxu0 0.0
  %402 = vmatpush1.msra.mxu0 %v37
  %403 = vmatprep.subr.mxu0 0.0
  %404 = vmatpush1.msra.mxu0 %v38
  %405 = vmatprep.subr.mxu0 0.0
  %406 = vmatpush1.msra.mxu0 %v39
  %407 = vmatprep.subr.mxu0 0.0
  %408 = vmatpush1.msra.mxu0 %v40
  %409 = vmatprep.subr.mxu0 0.0
  %410 = vmatpush1.msra.mxu0 %v41
  %411 = vmatprep.subr.mxu0 0.0
  %412 = vmatpush1.msra.mxu0 %v42
  %413 = vmatprep.subr.mxu0 0.0
  %414 = vmatpush1.msra.mxu0 %v43
  %415 = vmatprep.subr.mxu0 0.0
  %416 = vmatpush1.msra.mxu0 %v44
  %417 = vmatprep.subr.mxu0 0.0
  %418 = vmatpush1.msra.mxu0 %v45
  %419 = vmatprep.subr.mxu0 0.0
  %420 = vmatpush1.msra.mxu0 %v46
  %421 = vmatprep.subr.mxu0 0.0
  %422 = vmatpush1.msra.mxu0 %v47
  %423 = vmatprep.subr.mxu0 0.0
  %424 = vmatpush1.msra.mxu0 %v48
  %425 = vmatprep.subr.mxu0 0.0
  %426 = vmatpush1.msra.mxu0 %v49
  %427 = vmatprep.subr.mxu0 0.0
  %428 = vmatpush1.msra.mxu0 %v50
  %429 = vmatprep.subr.mxu0 0.0
  %430 = vmatpush1.msra.mxu0 %v51
  %431 = vmatprep.subr.mxu0 0.0
  %432 = vmatpush1.msra.mxu0 %v52
  %433 = vmatprep.subr.mxu0 0.0
  %434 = vmatpush1.msra.mxu0 %v53
  %435 = vmatprep.subr.mxu0 0.0
  %436 = vmatpush1.msra.mxu0 %v54
  %437 = vmatprep.subr.mxu0 0.0
  %438 = vmatpush1.msra.mxu0 %v55
  %439 = vmatprep.mubr.f32.mxu0 %v306
  %440 = vmatmul.mubr.f32.gmra.mrb[0].mxu0 %v298
  %v441 = vpop.f32.mrb[0].mxu0
  %v442 = vadd.f32 %v285, %v441
  %v443 = vpop.f32.mrb[0].mxu0
  %444 = vdwg.mxu0
  %445 = vmatprep.subr.mxu0 0.0
  %446 = vmatpush1.msra.mxu0 %v56
  %447 = vmatprep.subr.mxu0 0.0
  %448 = vmatpush1.msra.mxu0 %v57
  %449 = vmatprep.subr.mxu0 0.0
  %450 = vmatpush1.msra.mxu0 %v58
  %451 = vmatprep.subr.mxu0 0.0
  %452 = vmatpush1.msra.mxu0 %v59
  %453 = vmatprep.subr.mxu0 0.0
  %454 = vmatpush1.msra.mxu0 %v60
  %455 = vmatprep.subr.mxu0 0.0
  %456 = vmatpush1.msra.mxu0 %v61
  %457 = vmatprep.subr.mxu0 0.0
  %458 = vmatpush1.msra.mxu0 %v62
  %459 = vmatprep.subr.mxu0 0.0
  %460 = vmatpush1.msra.mxu0 %v63
  %461 = vmatprep.subr.mxu0 0.0
  %462 = vmatpush1.msra.mxu0 %v64
  %463 = vmatprep.subr.mxu0 0.0
  %464 = vmatpush1.msra.mxu0 %v65
  %465 = vmatprep.subr.mxu0 0.0
  %466 = vmatpush1.msra.mxu0 %v66
  %467 = vmatprep.subr.mxu0 0.0
  %468 = vmatpush1.msra.mxu0 %v67
  %469 = vmatprep.subr.mxu0 0.0
  %470 = vmatpush1.msra.mxu0 %v68
  %471 = vmatprep.subr.mxu0 0.0
  %472 = vmatpush1.msra.mxu0 %v69
  %473 = vmatprep.subr.mxu0 0.0
  %474 = vmatpush1.msra.mxu0 %v70
  %475 = vmatprep.subr.mxu0 0.0
  %476 = vmatpush1.msra.mxu0 %v71
  %477 = vmatprep.subr.mxu0 0.0
  %478 = vmatpush1.msra.mxu0 %v72
  %479 = vmatprep.subr.mxu0 0.0
  %480 = vmatpush1.msra.mxu0 %v73
  %481 = vmatprep.subr.mxu0 0.0
  %482 = vmatpush1.msra.mxu0 %v74
  %483 = vmatprep.subr.mxu0 0.0
  %484 = vmatpush1.msra.mxu0 %v75
  %485 = vmatprep.subr.mxu0 0.0
  %486 = vmatpush1.msra.mxu0 %v76
  %487 = vmatprep.subr.mxu0 0.0
  %488 = vmatpush1.msra.mxu0 %v77
  %489 = vmatprep.subr.mxu0 0.0
  %490 = vmatpush1.msra.mxu0 %v78
  %491 = vmatprep.subr.mxu0 0.0
  %492 = vmatpush1.msra.mxu0 %v79
  %493 = vmatprep.subr.mxu0 0.0
  %494 = vmatpush1.msra.mxu0 %v80
  %495 = vmatprep.subr.mxu0 0.0
  %496 = vmatpush1.msra.mxu0 %v81
  %497 = vmatprep.subr.mxu0 0.0
  %498 = vmatpush1.msra.mxu0 %v82
  %499 = vmatprep.subr.mxu0 0.0
  %500 = vmatpush1.msra.mxu0 %v83
  %501 = vmatprep.subr.mxu0 0.0
  %502 = vmatpush1.msra.mxu0 %v84
  %503 = vmatprep.subr.mxu0 0.0
  %504 = vmatpush1.msra.mxu0 %v85
  %505 = vmatprep.subr.mxu0 0.0
  %506 = vmatpush1.msra.mxu0 %v86
  %507 = vmatprep.subr.mxu0 0.0
  %508 = vmatpush1.msra.mxu0 %v87
  %509 = vmatprep.mubr.f32.mxu0 %v307
  %510 = vmatmul.mubr.f32.gmra.mrb[0].mxu0 %v305
  %v511 = vpop.f32.mrb[0].mxu0
  %v512 = vadd.f32 %v442, %v511
  %v513 = vpop.f32.mrb[0].mxu0
  %514 = vdwg.mxu0
  %515 = vmatprep.subr.mxu0 0.0
  %516 = vmatpush1.msra.mxu0 %v88
  %517 = vmatprep.subr.mxu0 0.0
  %518 = vmatpush1.msra.mxu0 %v89
  %519 = vmatprep.subr.mxu0 0.0
  %520 = vmatpush1.msra.mxu0 %v90
  %521 = vmatprep.subr.mxu0 0.0
  %522 = vmatpush1.msra.mxu0 %v91
  %523 = vmatprep.subr.mxu0 0.0
  %524 = vmatpush1.msra.mxu0 %v92
  %525 = vmatprep.subr.mxu0 0.0
  %526 = vmatpush1.msra.mxu0 %v93
  %527 = vmatprep.subr.mxu0 0.0
  %528 = vmatpush1.msra.mxu0 %v94
  %529 = vmatprep.subr.mxu0 0.0
  %530 = vmatpush1.msra.mxu0 %v95
  %531 = vmatprep.subr.mxu0 0.0
  %532 = vmatpush1.msra.mxu0 %v96
  %533 = vmatprep.subr.mxu0 0.0
  %534 = vmatpush1.msra.mxu0 %v97
  %535 = vmatprep.subr.mxu0 0.0
  %536 = vmatpush1.msra.mxu0 %v98
  %537 = vmatprep.subr.mxu0 0.0
  %538 = vmatpush1.msra.mxu0 %v99
  %539 = vmatprep.subr.mxu0 0.0
  %540 = vmatpush1.msra.mxu0 %v100
  %541 = vmatprep.subr.mxu0 0.0
  %542 = vmatpush1.msra.mxu0 %v101
  %543 = vmatprep.subr.mxu0 0.0
  %544 = vmatpush1.msra.mxu0 %v102
  %545 = vmatprep.subr.mxu0 0.0
  %546 = vmatpush1.msra.mxu0 %v103
  %547 = vmatprep.subr.mxu0 0.0
  %548 = vmatpush1.msra.mxu0 %v104
  %549 = vmatprep.subr.mxu0 0.0
  %550 = vmatpush1.msra.mxu0 %v105
  %551 = vmatprep.subr.mxu0 0.0
  %552 = vmatpush1.msra.mxu0 %v106
  %553 = vmatprep.subr.mxu0 0.0
  %554 = vmatpush1.msra.mxu0 %v107
  %555 = vmatprep.subr.mxu0 0.0
  %556 = vmatpush1.msra.mxu0 %v108
  %557 = vmatprep.subr.mxu0 0.0
  %558 = vmatpush1.msra.mxu0 %v109
  %559 = vmatprep.subr.mxu0 0.0
  %560 = vmatpush1.msra.mxu0 %v110
  %561 = vmatprep.subr.mxu0 0.0
  %562 = vmatpush1.msra.mxu0 %v111
  %563 = vmatprep.subr.mxu0 0.0
  %564 = vmatpush1.msra.mxu0 %v112
  %565 = vmatprep.subr.mxu0 0.0
  %566 = vmatpush1.msra.mxu0 %v113
  %567 = vmatprep.subr.mxu0 0.0
  %568 = vmatpush1.msra.mxu0 %v114
  %569 = vmatprep.subr.mxu0 0.0
  %570 = vmatpush1.msra.mxu0 %v115
  %571 = vmatprep.subr.mxu0 0.0
  %572 = vmatpush1.msra.mxu0 %v116
  %573 = vmatprep.subr.mxu0 0.0
  %574 = vmatpush1.msra.mxu0 %v117
  %575 = vmatprep.subr.mxu0 0.0
  %576 = vmatpush1.msra.mxu0 %v118
  %577 = vmatprep.subr.mxu0 0.0
  %578 = vmatpush1.msra.mxu0 %v119
  %579 = vmatprep.mubr.f32.mxu0 %v323
  %580 = vmatmul.mubr.f32.gmra.mrb[0].mxu0 %v315
  %v581 = vpop.f32.mrb[0].mxu0
  %v582 = vadd.f32 %v512, %v581
  %v583 = vpop.f32.mrb[0].mxu0
  %584 = vdwg.mxu0
  %585 = vmatprep.subr.mxu0 0.0
  %586 = vmatpush1.msra.mxu0 %v120
  %587 = vmatprep.subr.mxu0 0.0
  %588 = vmatpush1.msra.mxu0 %v121
  %589 = vmatprep.subr.mxu0 0.0
  %590 = vmatpush1.msra.mxu0 %v122
  %591 = vmatprep.subr.mxu0 0.0
  %592 = vmatpush1.msra.mxu0 %v123
  %593 = vmatprep.subr.mxu0 0.0
  %594 = vmatpush1.msra.mxu0 %v124
  %595 = vmatprep.subr.mxu0 0.0
  %596 = vmatpush1.msra.mxu0 %v125
  %597 = vmatprep.subr.mxu0 0.0
  %598 = vmatpush1.msra.mxu0 %v126
  %599 = vmatprep.subr.mxu0 0.0
  %600 = vmatpush1.msra.mxu0 %v127
  %601 = vmatprep.subr.mxu0 0.0
  %602 = vmatpush1.msra.mxu0 %v128
  %603 = vmatprep.subr.mxu0 0.0
  %604 = vmatpush1.msra.mxu0 %v129
  %605 = vmatprep.subr.mxu0 0.0
  %606 = vmatpush1.msra.mxu0 %v130
  %607 = vmatprep.subr.mxu0 0.0
  %608 = vmatpush1.msra.mxu0 %v131
  %609 = vmatprep.subr.mxu0 0.0
  %610 = vmatpush1.msra.mxu0 %v132
  %611 = vmatprep.subr.mxu0 0.0
  %612 = vmatpush1.msra.mxu0 %v133
  %613 = vmatprep.subr.mxu0 0.0
  %614 = vmatpush1.msra.mxu0 %v134
  %615 = vmatprep.subr.mxu0 0.0
  %616 = vmatpush1.msra.mxu0 %v135
  %617 = vmatprep.subr.mxu0 0.0
  %618 = vmatpush1.msra.mxu0 %v136
  %619 = vmatprep.subr.mxu0 0.0
  %620 = vmatpush1.msra.mxu0 %v137
  %621 = vmatprep.subr.mxu0 0.0
  %622 = vmatpush1.msra.mxu0 %v138
  %623 = vmatprep.subr.mxu0 0.0
  %624 = vmatpush1.msra.mxu0 %v139
  %625 = vmatprep.subr.mxu0 0.0
  %626 = vmatpush1.msra.mxu0 %v140
  %627 = vmatprep.subr.mxu0 0.0
  %628 = vmatpush1.msra.mxu0 %v141
  %629 = vmatprep.subr.mxu0 0.0
  %630 = vmatpush1.msra.mxu0 %v142
  %631 = vmatprep.subr.mxu0 0.0
  %632 = vmatpush1.msra.mxu0 %v143
  %633 = vmatprep.subr.mxu0 0.0
  %634 = vmatpush1.msra.mxu0 %v144
  %635 = vmatprep.subr.mxu0 0.0
  %636 = vmatpush1.msra.mxu0 %v145
  %637 = vmatprep.subr.mxu0 0.0
  %638 = vmatpush1.msra.mxu0 %v146
  %639 = vmatprep.subr.mxu0 0.0
  %640 = vmatpush1.msra.mxu0 %v147
  %641 = vmatprep.subr.mxu0 0.0
  %642 = vmatpush1.msra.mxu0 %v148
  %643 = vmatprep.subr.mxu0 0.0
  %644 = vmatpush1.msra.mxu0 %v149
  %645 = vmatprep.subr.mxu0 0.0
  %646 = vmatpush1.msra.mxu0 %v150
  %647 = vmatprep.subr.mxu0 0.0
  %648 = vmatpush1.msra.mxu0 %v151
  %649 = vmatprep.mubr.f32.mxu0 %v324
  %650 = vmatmul.mubr.f32.gmra.mrb[0].mxu0 %v322
  %v651 = vpop.f32.mrb[0].mxu0
  %v652 = vadd.f32 %v582, %v651
  %v653 = vpop.f32.mrb[0].mxu0
  %654 = vdwg.mxu0
  %655 = vmatprep.subr.mxu0 0.0
  %656 = vmatpush1.msra.mxu0 %v152
  %657 = vmatprep.subr.mxu0 0.0
  %658 = vmatpush1.msra.mxu0 %v153
  %659 = vmatprep.subr.mxu0 0.0
  %660 = vmatpush1.msra.mxu0 %v154
  %661 = vmatprep.subr.mxu0 0.0
  %662 = vmatpush1.msra.mxu0 %v155
  %663 = vmatprep.subr.mxu0 0.0
  %664 = vmatpush1.msra.mxu0 %v156
  %665 = vmatprep.subr.mxu0 0.0
  %666 = vmatpush1.msra.mxu0 %v157
  %667 = vmatprep.subr.mxu0 0.0
  %668 = vmatpush1.msra.mxu0 %v158
  %669 = vmatprep.subr.mxu0 0.0
  %670 = vmatpush1.msra.mxu0 %v159
  %671 = vmatprep.subr.mxu0 0.0
  %672 = vmatpush1.msra.mxu0 %v160
  %673 = vmatprep.subr.mxu0 0.0
  %674 = vmatpush1.msra.mxu0 %v161
  %675 = vmatprep.subr.mxu0 0.0
  %676 = vmatpush1.msra.mxu0 %v162
  %677 = vmatprep.subr.mxu0 0.0
  %678 = vmatpush1.msra.mxu0 %v163
  %679 = vmatprep.subr.mxu0 0.0
  %680 = vmatpush1.msra.mxu0 %v164
  %681 = vmatprep.subr.mxu0 0.0
  %682 = vmatpush1.msra.mxu0 %v165
  %683 = vmatprep.subr.mxu0 0.0
  %684 = vmatpush1.msra.mxu0 %v166
  %685 = vmatprep.subr.mxu0 0.0
  %686 = vmatpush1.msra.mxu0 %v167
  %687 = vmatprep.subr.mxu0 0.0
  %688 = vmatpush1.msra.mxu0 %v168
  %689 = vmatprep.subr.mxu0 0.0
  %690 = vmatpush1.msra.mxu0 %v169
  %691 = vmatprep.subr.mxu0 0.0
  %692 = vmatpush1.msra.mxu0 %v170
  %693 = vmatprep.subr.mxu0 0.0
  %694 = vmatpush1.msra.mxu0 %v171
  %695 = vmatprep.subr.mxu0 0.0
  %696 = vmatpush1.msra.mxu0 %v172
  %697 = vmatprep.subr.mxu0 0.0
  %698 = vmatpush1.msra.mxu0 %v173
  %699 = vmatprep.subr.mxu0 0.0
  %700 = vmatpush1.msra.mxu0 %v174
  %701 = vmatprep.subr.mxu0 0.0
  %702 = vmatpush1.msra.mxu0 %v175
  %703 = vmatprep.subr.mxu0 0.0
  %704 = vmatpush1.msra.mxu0 %v176
  %705 = vmatprep.subr.mxu0 0.0
  %706 = vmatpush1.msra.mxu0 %v177
  %707 = vmatprep.subr.mxu0 0.0
  %708 = vmatpush1.msra.mxu0 %v178
  %709 = vmatprep.subr.mxu0 0.0
  %710 = vmatpush1.msra.mxu0 %v179
  %711 = vmatprep.subr.mxu0 0.0
  %712 = vmatpush1.msra.mxu0 %v180
  %713 = vmatprep.subr.mxu0 0.0
  %714 = vmatpush1.msra.mxu0 %v181
  %715 = vmatprep.subr.mxu0 0.0
  %716 = vmatpush1.msra.mxu0 %v182
  %717 = vmatprep.subr.mxu0 0.0
  %718 = vmatpush1.msra.mxu0 %v183
  %719 = vmatprep.mubr.f32.mxu0 %v340
  %720 = vmatmul.mubr.f32.gmra.mrb[0].mxu0 %v332
  %v721 = vpop.f32.mrb[0].mxu0
  %v722 = vadd.f32 %v652, %v721
  %v723 = vpop.f32.mrb[0].mxu0
  %724 = vdwg.mxu0
  %725 = vmatprep.subr.mxu0 0.0
  %726 = vmatpush1.msra.mxu0 %v184
  %727 = vmatprep.subr.mxu0 0.0
  %728 = vmatpush1.msra.mxu0 %v185
  %729 = vmatprep.subr.mxu0 0.0
  %730 = vmatpush1.msra.mxu0 %v186
  %731 = vmatprep.subr.mxu0 0.0
  %732 = vmatpush1.msra.mxu0 %v187
  %733 = vmatprep.subr.mxu0 0.0
  %734 = vmatpush1.msra.mxu0 %v188
  %735 = vmatprep.subr.mxu0 0.0
  %736 = vmatpush1.msra.mxu0 %v189
  %737 = vmatprep.subr.mxu0 0.0
  %738 = vmatpush1.msra.mxu0 %v190
  %739 = vmatprep.subr.mxu0 0.0
  %740 = vmatpush1.msra.mxu0 %v191
  %741 = vmatprep.subr.mxu0 0.0
  %742 = vmatpush1.msra.mxu0 %v192
  %743 = vmatprep.subr.mxu0 0.0
  %744 = vmatpush1.msra.mxu0 %v193
  %745 = vmatprep.subr.mxu0 0.0
  %746 = vmatpush1.msra.mxu0 %v194
  %747 = vmatprep.subr.mxu0 0.0
  %748 = vmatpush1.msra.mxu0 %v195
  %749 = vmatprep.subr.mxu0 0.0
  %750 = vmatpush1.msra.mxu0 %v196
  %751 = vmatprep.subr.mxu0 0.0
  %752 = vmatpush1.msra.mxu0 %v197
  %753 = vmatprep.subr.mxu0 0.0
  %754 = vmatpush1.msra.mxu0 %v198
  %755 = vmatprep.subr.mxu0 0.0
  %756 = vmatpush1.msra.mxu0 %v199
  %757 = vmatprep.subr.mxu0 0.0
  %758 = vmatpush1.msra.mxu0 %v200
  %759 = vmatprep.subr.mxu0 0.0
  %760 = vmatpush1.msra.mxu0 %v201
  %761 = vmatprep.subr.mxu0 0.0
  %762 = vmatpush1.msra.mxu0 %v202
  %763 = vmatprep.subr.mxu0 0.0
  %764 = vmatpush1.msra.mxu0 %v203
  %765 = vmatprep.subr.mxu0 0.0
  %766 = vmatpush1.msra.mxu0 %v204
  %767 = vmatprep.subr.mxu0 0.0
  %768 = vmatpush1.msra.mxu0 %v205
  %769 = vmatprep.subr.mxu0 0.0
  %770 = vmatpush1.msra.mxu0 %v206
  %771 = vmatprep.subr.mxu0 0.0
  %772 = vmatpush1.msra.mxu0 %v207
  %773 = vmatprep.subr.mxu0 0.0
  %774 = vmatpush1.msra.mxu0 %v208
  %775 = vmatprep.subr.mxu0 0.0
  %776 = vmatpush1.msra.mxu0 %v209
  %777 = vmatprep.subr.mxu0 0.0
  %778 = vmatpush1.msra.mxu0 %v210
  %779 = vmatprep.subr.mxu0 0.0
  %780 = vmatpush1.msra.mxu0 %v211
  %781 = vmatprep.subr.mxu0 0.0
  %782 = vmatpush1.msra.mxu0 %v212
  %783 = vmatprep.subr.mxu0 0.0
  %784 = vmatpush1.msra.mxu0 %v213
  %785 = vmatprep.subr.mxu0 0.0
  %786 = vmatpush1.msra.mxu0 %v214
  %787 = vmatprep.subr.mxu0 0.0
  %788 = vmatpush1.msra.mxu0 %v215
  %789 = vmatprep.mubr.f32.mxu0 %v341
  %790 = vmatmul.mubr.f32.gmra.mrb[0].mxu0 %v339
  %v791 = vpop.f32.mrb[0].mxu0
  %v792 = vadd.f32 %v722, %v791
  %v793 = vpop.f32.mrb[0].mxu0
  %794 = vdwg.mxu0
  %795 = vmatprep.subr.mxu0 0.0
  %796 = vmatpush1.msra.mxu0 %v216
  %797 = vmatprep.subr.mxu0 0.0
  %798 = vmatpush1.msra.mxu0 %v217
  %799 = vmatprep.subr.mxu0 0.0
  %800 = vmatpush1.msra.mxu0 %v218
  %801 = vmatprep.subr.mxu0 0.0
  %802 = vmatpush1.msra.mxu0 %v219
  %803 = vmatprep.subr.mxu0 0.0
  %804 = vmatpush1.msra.mxu0 %v220
  %805 = vmatprep.subr.mxu0 0.0
  %806 = vmatpush1.msra.mxu0 %v221
  %807 = vmatprep.subr.mxu0 0.0
  %808 = vmatpush1.msra.mxu0 %v222
  %809 = vmatprep.subr.mxu0 0.0
  %810 = vmatpush1.msra.mxu0 %v223
  %811 = vmatprep.subr.mxu0 0.0
  %812 = vmatpush1.msra.mxu0 %v224
  %813 = vmatprep.subr.mxu0 0.0
  %814 = vmatpush1.msra.mxu0 %v225
  %815 = vmatprep.subr.mxu0 0.0
  %816 = vmatpush1.msra.mxu0 %v226
  %817 = vmatprep.subr.mxu0 0.0
  %818 = vmatpush1.msra.mxu0 %v227
  %819 = vmatprep.subr.mxu0 0.0
  %820 = vmatpush1.msra.mxu0 %v228
  %821 = vmatprep.subr.mxu0 0.0
  %822 = vmatpush1.msra.mxu0 %v229
  %823 = vmatprep.subr.mxu0 0.0
  %824 = vmatpush1.msra.mxu0 %v230
  %825 = vmatprep.subr.mxu0 0.0
  %826 = vmatpush1.msra.mxu0 %v231
  %827 = vmatprep.subr.mxu0 0.0
  %828 = vmatpush1.msra.mxu0 %v232
  %829 = vmatprep.subr.mxu0 0.0
  %830 = vmatpush1.msra.mxu0 %v233
  %831 = vmatprep.subr.mxu0 0.0
  %832 = vmatpush1.msra.mxu0 %v234
  %833 = vmatprep.subr.mxu0 0.0
  %834 = vmatpush1.msra.mxu0 %v235
  %835 = vmatprep.subr.mxu0 0.0
  %836 = vmatpush1.msra.mxu0 %v236
  %837 = vmatprep.subr.mxu0 0.0
  %838 = vmatpush1.msra.mxu0 %v237
  %839 = vmatprep.subr.mxu0 0.0
  %840 = vmatpush1.msra.mxu0 %v238
  %841 = vmatprep.subr.mxu0 0.0
  %842 = vmatpush1.msra.mxu0 %v239
  %843 = vmatprep.subr.mxu0 0.0
  %844 = vmatpush1.msra.mxu0 %v240
  %845 = vmatprep.subr.mxu0 0.0
  %846 = vmatpush1.msra.mxu0 %v241
  %847 = vmatprep.subr.mxu0 0.0
  %848 = vmatpush1.msra.mxu0 %v242
  %849 = vmatprep.subr.mxu0 0.0
  %850 = vmatpush1.msra.mxu0 %v243
  %851 = vmatprep.subr.mxu0 0.0
  %852 = vmatpush1.msra.mxu0 %v244
  %853 = vmatprep.subr.mxu0 0.0
  %854 = vmatpush1.msra.mxu0 %v245
  %855 = vmatprep.subr.mxu0 0.0
  %856 = vmatpush1.msra.mxu0 %v246
  %857 = vmatprep.subr.mxu0 0.0
  %858 = vmatpush1.msra.mxu0 %v247
  %859 = vmatprep.mubr.f32.mxu0 %v357
  %860 = vmatmul.mubr.f32.gmra.mrb[0].mxu0 %v349
  %v861 = vpop.f32.mrb[0].mxu0
  %v862 = vadd.f32 %v792, %v861
  %v863 = vpop.f32.mrb[0].mxu0
  %864 = vdwg.mxu0
  %865 = vmatprep.subr.mxu0 0.0
  %866 = vmatpush1.msra.mxu0 %v248
  %867 = vmatprep.subr.mxu0 0.0
  %868 = vmatpush1.msra.mxu0 %v249
  %869 = vmatprep.subr.mxu0 0.0
  %870 = vmatpush1.msra.mxu0 %v250
  %871 = vmatprep.subr.mxu0 0.0
  %872 = vmatpush1.msra.mxu0 %v251
  %873 = vmatprep.subr.mxu0 0.0
  %874 = vmatpush1.msra.mxu0 %v252
  %875 = vmatprep.subr.mxu0 0.0
  %876 = vmatpush1.msra.mxu0 %v253
  %877 = vmatprep.subr.mxu0 0.0
  %878 = vmatpush1.msra.mxu0 %v254
  %879 = vmatprep.subr.mxu0 0.0
  %880 = vmatpush1.msra.mxu0 %v255
  %881 = vmatprep.subr.mxu0 0.0
  %882 = vmatpush1.msra.mxu0 %v256
  %883 = vmatprep.subr.mxu0 0.0
  %884 = vmatpush1.msra.mxu0 %v257
  %885 = vmatprep.subr.mxu0 0.0
  %886 = vmatpush1.msra.mxu0 %v258
  %887 = vmatprep.subr.mxu0 0.0
  %888 = vmatpush1.msra.mxu0 %v259
  %889 = vmatprep.subr.mxu0 0.0
  %890 = vmatpush1.msra.mxu0 %v260
  %891 = vmatprep.subr.mxu0 0.0
  %892 = vmatpush1.msra.mxu0 %v261
  %893 = vmatprep.subr.mxu0 0.0
  %894 = vmatpush1.msra.mxu0 %v262
  %895 = vmatprep.subr.mxu0 0.0
  %896 = vmatpush1.msra.mxu0 %v263
  %897 = vmatprep.subr.mxu0 0.0
  %898 = vmatpush1.msra.mxu0 %v264
  %899 = vmatprep.subr.mxu0 0.0
  %900 = vmatpush1.msra.mxu0 %v265
  %901 = vmatprep.subr.mxu0 0.0
  %902 = vmatpush1.msra.mxu0 %v266
  %903 = vmatprep.subr.mxu0 0.0
  %904 = vmatpush1.msra.mxu0 %v267
  %905 = vmatprep.subr.mxu0 0.0
  %906 = vmatpush1.msra.mxu0 %v268
  %907 = vmatprep.subr.mxu0 0.0
  %908 = vmatpush1.msra.mxu0 %v269
  %909 = vmatprep.subr.mxu0 0.0
  %910 = vmatpush1.msra.mxu0 %v270
  %911 = vmatprep.subr.mxu0 0.0
  %912 = vmatpush1.msra.mxu0 %v271
  %913 = vmatprep.subr.mxu0 0.0
  %914 = vmatpush1.msra.mxu0 %v272
  %915 = vmatprep.subr.mxu0 0.0
  %916 = vmatpush1.msra.mxu0 %v273
  %917 = vmatprep.subr.mxu0 0.0
  %918 = vmatpush1.msra.mxu0 %v274
  %919 = vmatprep.subr.mxu0 0.0
  %920 = vmatpush1.msra.mxu0 %v275
  %921 = vmatprep.subr.mxu0 0.0
  %922 = vmatpush1.msra.mxu0 %v276
  %923 = vmatprep.subr.mxu0 0.0
  %924 = vmatpush1.msra.mxu0 %v277
  %925 = vmatprep.subr.mxu0 0.0
  %926 = vmatpush1.msra.mxu0 %v278
  %927 = vmatprep.subr.mxu0 0.0
  %928 = vmatpush1.msra.mxu0 %v279
  %929 = vmatprep.mubr.f32.mxu0 %v358
  %930 = vmatmul.mubr.f32.gmra.mrb[0].mxu0 %v356
  %v931 = vpop.f32.mrb[0].mxu0
  %v932 = vadd.f32 %v862, %v931
  %v933 = vpop.f32.mrb[0].mxu0
  %934 = vdwg.mxu0
  %v935 = vmul.f32 %v932, 0.1
  %v936 = vmax.f32 %v932, %v935
  %v937 = vld [vmem:[%s3] sm:$0xff]
  %v938 = vld [vmem:[%s3 + $0x8] sm:$0xff]
  %v939 = vld [vmem:[%s3 + $0x10] sm:$0xff]
  %v940 = vld [vmem:[%s3 + $0x18] sm:$0xff]
  %v941 = vld [vmem:[%s3 + $0x20] sm:$0xff]
  %v942 = vld [vmem:[%s3 + $0x28] sm:$0xff]
  %v943 = vld [vmem:[%s3 + $0x30] sm:$0xff]
  %v944 = vld [vmem:[%s3 + $0x38] sm:$0xff]
  %v945 = vld [vmem:[%s3 + $0x40] sm:$0xff]
  %v946 = vld [vmem:[%s3 + $0x48] sm:$0xff]
  %v947 = vld [vmem:[%s3 + $0x50] sm:$0xff]
  %v948 = vld [vmem:[%s3 + $0x58] sm:$0xff]
  %v949 = vld [vmem:[%s3 + $0x60] sm:$0xff]
  %v950 = vld [vmem:[%s3 + $0x68] sm:$0xff]
  %v951 = vld [vmem:[%s3 + $0x70] sm:$0xff]
  %v952 = vld [vmem:[%s3 + $0x78] sm:$0xff]
  %v953 = vld [vmem:[%s4] sm:$0x1]
  %v955 = vlaneseq
  %v956 = vshrl.u32 %v955, 7
  %v957 = vsub.s32 0, %v956
  %v958 = vrot.slane %v953, %v957
  %960 = vmatprep.subr.mxu0 0.0
  %961 = vmatpush1.msra.mxu0 %v937
  %962 = vmatprep.subr.mxu0 0.0
  %963 = vmatpush1.msra.mxu0 %v938
  %964 = vmatprep.subr.mxu0 0.0
  %965 = vmatpush1.msra.mxu0 %v939
  %966 = vmatprep.subr.mxu0 0.0
  %967 = vmatpush1.msra.mxu0 %v940
  %968 = vmatprep.subr.mxu0 0.0
  %969 = vmatpush1.msra.mxu0 %v941
  %970 = vmatprep.subr.mxu0 0.0
  %971 = vmatpush1.msra.mxu0 %v942
  %972 = vmatprep.subr.mxu0 0.0
  %973 = vmatpush1.msra.mxu0 %v943
  %974 = vmatprep.subr.mxu0 0.0
  %975 = vmatpush1.msra.mxu0 %v944
  %976 = vmatprep.subr.mxu0 0.0
  %977 = vmatpush1.msra.mxu0 %v945
  %978 = vmatprep.subr.mxu0 0.0
  %979 = vmatpush1.msra.mxu0 %v946
  %980 = vmatprep.subr.mxu0 0.0
  %981 = vmatpush1.msra.mxu0 %v947
  %982 = vmatprep.subr.mxu0 0.0
  %983 = vmatpush1.msra.mxu0 %v948
  %984 = vmatprep.subr.mxu0 0.0
  %985 = vmatpush1.msra.mxu0 %v949
  %986 = vmatprep.subr.mxu0 0.0
  %987 = vmatpush1.msra.mxu0 %v950
  %988 = vmatprep.subr.mxu0 0.0
  %989 = vmatpush1.msra.mxu0 %v951
  %990 = vmatprep.subr.mxu0 0.0
  %991 = vmatpush1.msra.mxu0 %v952
  %992 = vmatprep.subr.mxu0 0.0
  %993 = vmatpush1.msra.mxu0 0.0
  %994 = vmatprep.subr.mxu0 0.0
  %995 = vmatpush1.msra.mxu0 0.0
  %996 = vmatprep.subr.mxu0 0.0
  %997 = vmatpush1.msra.mxu0 0.0
  %998 = vmatprep.subr.mxu0 0.0
  %999 = vmatpush1.msra.mxu0 0.0
  %1000 = vmatprep.subr.mxu0 0.0
  %1001 = vmatpush1.msra.mxu0 0.0
  %1002 = vmatprep.subr.mxu0 0.0
  %1003 = vmatpush1.msra.mxu0 0.0
  %1004 = vmatprep.subr.mxu0 0.0
  %1005 = vmatpush1.msra.mxu0 0.0
  %1006 = vmatprep.subr.mxu0 0.0
  %1007 = vmatpush1.msra.mxu0 0.0
  %1008 = vmatprep.subr.mxu0 0.0
  %1009 = vmatpush1.msra.mxu0 0.0
  %1010 = vmatprep.subr.mxu0 0.0
  %1011 = vmatpush1.msra.mxu0 0.0
  %1012 = vmatprep.subr.mxu0 0.0
  %1013 = vmatpush1.msra.mxu0 0.0
  %1014 = vmatprep.subr.mxu0 0.0
  %1015 = vmatpush1.msra.mxu0 0.0
  %1016 = vmatprep.subr.mxu0 0.0
  %1017 = vmatpush1.msra.mxu0 0.0
  %1018 = vmatprep.subr.mxu0 0.0
  %1019 = vmatpush1.msra.mxu0 0.0
  %1020 = vmatprep.subr.mxu0 0.0
  %1021 = vmatpush1.msra.mxu0 0.0
  %1022 = vmatprep.subr.mxu0 0.0
  %1023 = vmatpush1.msra.mxu0 0.0
  %1024 = vmatprep.mubr.f32.mxu0 0.0
  %1025 = vmatmul.mubr.f32.gmra.mrb[0].mxu0 %v936
  %v1026 = vpop.f32.mrb[0].mxu0
  %v1027 = vadd.f32 %v958, %v1026
  %v1028 = vpop.f32.mrb[0].mxu0
  %1029 = vdwg.mxu0
  %vm1030 = vcmask 254976
  %1031 = vst.msk [vmem:[%s5] sm:$0x3] %vm1030, %v1027
  // Predicated region
  $region22: #{encoder_forward.9} parent=0 // pred_check
    _
  $region23: #{encoder_forward.9} parent=0 // pred_check_branch
    %1033 = sbr.rel (0) target = $region25
  $region24: #{encoder_forward.9} parent=0 // pred_region
    _
  $region25: #{encoder_forward.9} parent=0 // pred_fallthru
    _
  // Predicated region
  $region26: #{encoder_forward.9} parent=0 // pred_check
    _
  $region27: #{encoder_forward.9} parent=0 // pred_check_branch
    %1035 = sbr.rel (0) target = $region29
  $region28: #{encoder_forward.9} parent=0 // pred_region
    _
  $region29: #{encoder_forward.9} parent=0 // pred_fallthru
    _

</llo_original>
